<compile_context>
chip_gen: v5e
topology: v5e:2x2
jax: 0.10.0
libtpu: 0.0.40
codegen_flags: <defaults>
</compile_context>

<pallas_src>
import functools
import math

import jax
import jax.numpy as jnp
from jax.experimental import pallas as pl
from jax.experimental.pallas import tpu as pltpu  # noqa: F401  (TPU backend)

UNKID = 3

CFG = dict(
    vocab_size=128,
    d_model=128,
    num_heads=4,
    ffn_dim=256,
    enc_layers=2,
    dec_layers=2,
    max_pos=64,
    pad_token_id=1,
)

NEG_INF = jnp.float32(-1e9)


# ----------------------------------------------------------------------------
# In-kernel helpers
# ----------------------------------------------------------------------------
def _layernorm(h, g, b):
    mean = jnp.mean(h, axis=-1, keepdims=True)
    var = jnp.mean((h - mean) ** 2, axis=-1, keepdims=True)
    return (h - mean) * jax.lax.rsqrt(var + 1e-5) * g + b


def _gelu(x):
    # TODO(synk): HF BART uses the exact erf-based GELU; tanh approximation used here.
    return 0.5 * x * (1.0 + jnp.tanh(0.7978845608028654 * (x + 0.044715 * x * x * x)))


def _make_head_masks(d, num_heads):
    """nH disjoint 0/1 lane masks (1, D), hoisted once per kernel."""
    lane = jax.lax.broadcasted_iota(jnp.int32, (1, d), 1)
    dh = d // num_heads
    return [((lane >= h * dh) & (lane < (h + 1) * dh)).astype(jnp.float32)
            for h in range(num_heads)]


def _make_key_masks(mk, num_heads):
    """nH boolean column masks (1, nH*Mk) selecting each head's score segment."""
    col = jax.lax.broadcasted_iota(jnp.int32, (1, num_heads * mk), 1)
    return [(col >= h * mk) & (col < (h + 1) * mk) for h in range(num_heads)]


def _mha_fused(q_all, k_all, v_all, mask_tiled, scale, head_masks, key_masks):
    """All-head attention with exactly two MXU pushes.

    K/V are replicated per head with disjoint lane masks and stacked along the
    key-row axis (K_cat/V_cat: (nH*Mk, D)).  One dot produces every head's
    score tile side by side (M, nH*Mk); a segmented softmax (per-head column
    masks) normalizes; one dot against V_cat writes each head's context into
    its own lanes of the (M, D) result.
    """
    k_cat = jnp.concatenate([k_all * hm for hm in head_masks], axis=0)   # (nH*Mk, D)
    v_cat = jnp.concatenate([v_all * hm for hm in head_masks], axis=0)   # (nH*Mk, D)
    s = jax.lax.dot_general(q_all, k_cat, (((1,), (1,)), ((), ())),
                            preferred_element_type=jnp.float32)
    s = s * scale + mask_tiled                                           # (M, nH*Mk)

    very_neg = jnp.float32(-1e30)
    m_bc = jnp.zeros_like(s)
    for km in key_masks:                       # per-head segment max (stability)
        m_h = jnp.max(jnp.where(km, s, very_neg), axis=-1, keepdims=True)
        m_bc = m_bc + jnp.where(km, m_h, 0.0)
    e = jnp.exp(s - m_bc)
    inv_bc = jnp.zeros_like(s)
    for km in key_masks:                       # per-head segment denominator
        d_h = jnp.sum(jnp.where(km, e, 0.0), axis=-1, keepdims=True)
        inv_bc = inv_bc + jnp.where(km, pl.reciprocal(d_h, approx=True), 0.0)
    p = e * inv_bc
    return jnp.dot(p, v_cat, preferred_element_type=jnp.float32)         # (M, D)


# ----------------------------------------------------------------------------
# Fused encoder-stack kernel
# ----------------------------------------------------------------------------
def _encoder_kernel(x_ref, mask_ref, g0_ref, b0_ref,
                    wqkv_ref, bqkv_ref, wo_ref, bo_ref, g1_ref, b1_ref,
                    w1_ref, c1_ref, w2_ref, c2_ref, g2_ref, b2_ref,
                    o_ref, *, num_heads, scale, num_layers):
    m, d = x_ref.shape
    head_masks = _make_head_masks(d, num_heads)
    key_masks = _make_key_masks(m, num_heads)
    mask = mask_ref[...]                                    # (M, nH*M) additive f32

    x = _layernorm(x_ref[...], g0_ref[...], b0_ref[...])    # embedding LayerNorm
    for l in range(num_layers):
        # ---- self attention (post-LN) ----
        qkv = jnp.dot(x.astype(jnp.bfloat16), wqkv_ref[l],
                      preferred_element_type=jnp.float32) + bqkv_ref[l]
        q_all, k_all, v_all = qkv[:, :d], qkv[:, d:2 * d], qkv[:, 2 * d:]
        ctx = _mha_fused(q_all, k_all, v_all, mask, scale, head_masks, key_masks)
        attn = jnp.dot(ctx.astype(jnp.bfloat16), wo_ref[l],
                       preferred_element_type=jnp.float32) + bo_ref[l]
        x = _layernorm(x + attn, g1_ref[l], b1_ref[l])
        # ---- feed forward (post-LN) ----
        h = _gelu(jnp.dot(x.astype(jnp.bfloat16), w1_ref[l],
                          preferred_element_type=jnp.float32) + c1_ref[l])
        ff = jnp.dot(h.astype(jnp.bfloat16), w2_ref[l],
                     preferred_element_type=jnp.float32) + c2_ref[l]
        x = _layernorm(x + ff, g2_ref[l], b2_ref[l])
    o_ref[...] = x.astype(o_ref.dtype)


# ----------------------------------------------------------------------------
# Fused decoder-stack + LM head + metrics kernel
# ----------------------------------------------------------------------------
def _decoder_kernel(y_ref, enc_ref, gold_ref, smask_ref, xmask_ref,
                    g0_ref, b0_ref,
                    swqkv_ref, sbqkv_ref, swo_ref, sbo_ref, g1_ref, b1_ref,
                    cwq_ref, cbq_ref, cwkv_ref, cbkv_ref, cwo_ref, cbo_ref,
                    g2_ref, b2_ref,
                    w1_ref, c1_ref, w2_ref, c2_ref, g3_ref, b3_ref,
                    wout_ref, bout_ref,
                    dec_ref, logits_ref, met_ref,
                    *, num_heads, scale, num_layers, batch, tgt_len,
                    pad_id, unk_id):
    md, d = y_ref.shape
    me = enc_ref.shape[0]
    head_masks = _make_head_masks(d, num_heads)
    self_key_masks = _make_key_masks(md, num_heads)
    cross_key_masks = _make_key_masks(me, num_heads)
    smask = smask_ref[...]                                  # (Md, nH*Md)
    xmask = xmask_ref[...]                                  # (Md, nH*Me)
    enc = enc_ref[...]
    enc_bf = enc.astype(jnp.bfloat16)                       # hoisted cast

    y = _layernorm(y_ref[...], g0_ref[...], b0_ref[...])    # embedding LayerNorm
    for l in range(num_layers):
        # ---- masked self attention ----
        qkv = jnp.dot(y.astype(jnp.bfloat16), swqkv_ref[l],
                      preferred_element_type=jnp.float32) + sbqkv_ref[l]
        q_all, k_all, v_all = qkv[:, :d], qkv[:, d:2 * d], qkv[:, 2 * d:]
        ctx = _mha_fused(q_all, k_all, v_all, smask, scale,
                         head_masks, self_key_masks)
        attn = jnp.dot(ctx.astype(jnp.bfloat16), swo_ref[l],
                       preferred_element_type=jnp.float32) + sbo_ref[l]
        y = _layernorm(y + attn, g1_ref[l], b1_ref[l])
        # ---- cross attention ----
        q_all = jnp.dot(y.astype(jnp.bfloat16), cwq_ref[l],
                        preferred_element_type=jnp.float32) + cbq_ref[l]
        kv = jnp.dot(enc_bf, cwkv_ref[l],
                     preferred_element_type=jnp.float32) + cbkv_ref[l]
        k_all, v_all = kv[:, :d], kv[:, d:]
        ctx = _mha_fused(q_all, k_all, v_all, xmask, scale,
                         head_masks, cross_key_masks)
        attn = jnp.dot(ctx.astype(jnp.bfloat16), cwo_ref[l],
                       preferred_element_type=jnp.float32) + cbo_ref[l]
        y = _layernorm(y + attn, g2_ref[l], b2_ref[l])
        # ---- feed forward ----
        h = _gelu(jnp.dot(y.astype(jnp.bfloat16), w1_ref[l],
                          preferred_element_type=jnp.float32) + c1_ref[l])
        ff = jnp.dot(h.astype(jnp.bfloat16), w2_ref[l],
                     preferred_element_type=jnp.float32) + c2_ref[l]
        y = _layernorm(y + ff, g3_ref[l], b3_ref[l])

    dec_ref[...] = y.astype(dec_ref.dtype)

    # ---- LM head: single bf16 matmul, logits kept in vregs for the metrics ----
    logits = jnp.dot(y.astype(jnp.bfloat16), wout_ref[...],
                     preferred_element_type=jnp.float32) + bout_ref[...]
    logits_ref[...] = logits                                # written once, not re-read

    m_rows, vocab = logits.shape
    mrow = jnp.max(logits, axis=-1, keepdims=True)
    iota_v = jax.lax.broadcasted_iota(jnp.int32, (m_rows, vocab), 1)
    pred = jnp.min(jnp.where(logits >= mrow, iota_v, vocab),
                   axis=-1, keepdims=True).astype(jnp.int32)    # first argmax

    # cross entropy with ignore_index = pad_id, smoothing = 0
    gold = gold_ref[...]                                        # (M, 1) int32
    lse = jnp.log(jnp.sum(jnp.exp(logits - mrow), axis=-1, keepdims=True)) + mrow
    gold_logit = jnp.sum((iota_v == gold).astype(jnp.float32) * logits,
                         axis=-1, keepdims=True)
    nll = lse - gold_logit                                      # (M, 1)

    maskb = gold != pad_id
    maskf = maskb.astype(jnp.float32)
    ce_sum = jnp.sum(nll * maskf)
    ce_cnt = jnp.sum(maskf)

    # element / sequence accuracies (unk predictions count as wrong)
    samef = ((pred == gold) & (pred != unk_id)).astype(jnp.float32)
    el_ok = jnp.sum(samef * maskf)
    el_cnt = jnp.sum(maskf)              # SeqAccuracies uses the same pad mask as CE

    row_ok = jnp.where(maskb, samef, 1.0)                       # (M, 1)
    sq_ok = jnp.float32(0.0)
    for b in range(batch):               # static unrolled; rows of sequence b
        sq_ok = sq_ok + jnp.min(row_ok[b * tgt_len:(b + 1) * tgt_len, :])
    # note: an all-pad gold row counts as correct, matching the torch reference.

    lane128 = jax.lax.broadcasted_iota(jnp.int32, (1, 128), 1)
    met = (jnp.where(lane128 == 0, ce_sum, 0.0)
           + jnp.where(lane128 == 1, ce_cnt, 0.0)
           + jnp.where(lane128 == 2, el_ok, 0.0)
           + jnp.where(lane128 == 3, el_cnt, 0.0)
           + jnp.where(lane128 == 4, sq_ok, 0.0)
           + jnp.where(lane128 == 5, jnp.float32(batch), 0.0))
    met_ref[...] = met.astype(jnp.float32)


# ----------------------------------------------------------------------------
# Wrappers (mask construction + embedding gathers stay in JAX)
# ----------------------------------------------------------------------------
def encoder_forward(params, input_ids, attn_mask, cfg):
    B, T = input_ids.shape
    D = cfg["d_model"]
    nH = cfg["num_heads"]
    M = B * T

    emb = jnp.take(params["shared_emb"], input_ids, axis=0)          # (B, T, D)
    pos = params["enc_pos"][jnp.arange(T) + 2]                       # BART offset 2
    x = (emb + pos[None]).reshape(M, D).astype(jnp.float32)

    bidx = jnp.repeat(jnp.arange(B), T)
    key_ok = attn_mask.reshape(M)
    mask = jnp.where((bidx[:, None] == bidx[None, :]) & key_ok[None, :],
                     0.0, NEG_INF).astype(jnp.float32)               # (M, M)
    mask_tiled = jnp.tile(mask, (1, nH))                             # (M, nH*M)

    ep = params["enc"]
    scale = 1.0 / math.sqrt(D // nH)
    kern = functools.partial(_encoder_kernel, num_heads=nH, scale=scale,
                             num_layers=cfg["enc_layers"])
    return pl.pallas_call(
        kern,
        out_shape=jax.ShapeDtypeStruct((M, D), jnp.float32),
    )(x, mask_tiled, params["enc_ln_emb"]["g"], params["enc_ln_emb"]["b"],
      ep["wqkv"], ep["bqkv"], ep["wo"], ep["bo"], ep["g1"], ep["b1"],
      ep["w1"], ep["c1"], ep["w2"], ep["c2"], ep["g2"], ep["b2"])


def decoder_lmhead_forward(params, output_ids, enc_out_flat, enc_attn_mask, gold, cfg):
    B, T = output_ids.shape
    D = cfg["d_model"]
    V = cfg["vocab_size"]
    nH = cfg["num_heads"]
    pad = cfg["pad_token_id"]
    Md = B * T
    Me = enc_out_flat.shape[0]
    Tsrc = Me // B

    emb = jnp.take(params["shared_emb"], output_ids, axis=0)
    pos = params["dec_pos"][jnp.arange(T) + 2]
    y = (emb + pos[None]).reshape(Md, D).astype(jnp.float32)

    bidx_d = jnp.repeat(jnp.arange(B), T)
    bidx_e = jnp.repeat(jnp.arange(B), Tsrc)
    tpos = jnp.tile(jnp.arange(T), B)
    dec_key_ok = (output_ids != pad).reshape(Md)
    enc_key_ok = enc_attn_mask.reshape(Me)

    smask = jnp.where((bidx_d[:, None] == bidx_d[None, :])
                      & (tpos[:, None] >= tpos[None, :])
                      & dec_key_ok[None, :], 0.0, NEG_INF).astype(jnp.float32)
    xmask = jnp.where((bidx_d[:, None] == bidx_e[None, :])
                      & enc_key_ok[None, :], 0.0, NEG_INF).astype(jnp.float32)
    smask_tiled = jnp.tile(smask, (1, nH))                           # (Md, nH*Md)
    xmask_tiled = jnp.tile(xmask, (1, nH))                           # (Md, nH*Me)

    dp = params["dec"]
    scale = 1.0 / math.sqrt(D // nH)
    kern = functools.partial(
        _decoder_kernel, num_heads=nH, scale=scale,
        num_layers=cfg["dec_layers"], batch=B, tgt_len=T,
        pad_id=pad, unk_id=UNKID)
    dec, logits, met = pl.pallas_call(
        kern,
        out_shape=(jax.ShapeDtypeStruct((Md, D), jnp.float32),
                   jax.ShapeDtypeStruct((Md, V), jnp.float32),
                   jax.ShapeDtypeStruct((1, 128), jnp.float32)),
    )(y, enc_out_flat, gold.reshape(Md, 1).astype(jnp.int32),
      smask_tiled, xmask_tiled,
      params["dec_ln_emb"]["g"], params["dec_ln_emb"]["b"],
      dp["swqkv"], dp["sbqkv"], dp["swo"], dp["sbo"], dp["g1"], dp["b1"],
      dp["cwq"], dp["cbq"], dp["cwkv"], dp["cbkv"], dp["cwo"], dp["cbo"],
      dp["g2"], dp["b2"],
      dp["w1"], dp["c1"], dp["w2"], dp["c2"], dp["g3"], dp["b3"],
      params["out_w"], params["out_b"])
    return dec, logits, met


def bart_generator_train_forward(params, input_ids, output_ids, cfg):
    pad = cfg["pad_token_id"]
    B, Tsrc = input_ids.shape
    Ttgt = output_ids.shape[1]
    D, V = cfg["d_model"], cfg["vocab_size"]

    attn_mask = input_ids != pad
    enc_out_flat = encoder_forward(params, input_ids, attn_mask, cfg)   # (B*Tsrc, D)

    # gold = output_ids[:, 1:] padded back to full length (extra slot is pad and
    # ignored in-kernel) -> keeps the metrics tiles sublane aligned.
    gold = jnp.concatenate(
        [output_ids[:, 1:], jnp.full((B, 1), pad, output_ids.dtype)], axis=1)

    dec_flat, logits_flat, met = decoder_lmhead_forward(
        params, output_ids, enc_out_flat, attn_mask, gold, cfg)

    ce_sum, ce_cnt = met[0, 0], met[0, 1]
    el_ok, el_cnt = met[0, 2], met[0, 3]
    sq_ok, sq_cnt = met[0, 4], met[0, 5]
    metrics = {
        "loss": ce_sum / jnp.maximum(ce_cnt, 1.0),     # CELoss(ignore_index=pad, smoothing=0)
        "elem_acc": el_ok / jnp.maximum(el_cnt, 1.0),  # SeqAccuracies element accuracy
        "seq_acc": sq_ok / jnp.maximum(sq_cnt, 1.0),   # SeqAccuracies sequence accuracy
    }
    # TODO(synk): TreeAccuracy requires host-side tensor2tree string parsing / tree comparison.
    lm_logits = logits_flat.reshape(B, Ttgt, V)
    dec_out = dec_flat.reshape(B, Ttgt, D)
    enc_out = enc_out_flat.reshape(B, Tsrc, D)
    return metrics, (lm_logits, dec_out, enc_out)


# ----------------------------------------------------------------------------
# Deterministic parameter init (layer weights stacked; matrices stored bf16)
# ----------------------------------------------------------------------------
def init_params(key, cfg):
    D, V, F = cfg["d_model"], cfg["vocab_size"], cfg["ffn_dim"]
    Le, Ld = cfg["enc_layers"], cfg["dec_layers"]
    ki = iter(jax.random.split(key, 32))

    def nrm(shape, dtype=jnp.float32):
        return (jax.random.normal(next(ki), shape, jnp.float32) * 0.02).astype(dtype)

    def ones(shape):
        return jnp.ones(shape, jnp.float32)

    def zeros(shape):
        return jnp.zeros(shape, jnp.float32)

    enc = dict(
        wqkv=nrm((Le, D, 3 * D), jnp.bfloat16), bqkv=zeros((Le, 1, 3 * D)),
        wo=nrm((Le, D, D), jnp.bfloat16), bo=zeros((Le, 1, D)),
        g1=ones((Le, 1, D)), b1=zeros((Le, 1, D)),
        w1=nrm((Le, D, F), jnp.bfloat16), c1=zeros((Le, 1, F)),
        w2=nrm((Le, F, D), jnp.bfloat16), c2=zeros((Le, 1, D)),
        g2=ones((Le, 1, D)), b2=zeros((Le, 1, D)),
    )
    dec = dict(
        swqkv=nrm((Ld, D, 3 * D), jnp.bfloat16), sbqkv=zeros((Ld, 1, 3 * D)),
        swo=nrm((Ld, D, D), jnp.bfloat16), sbo=zeros((Ld, 1, D)),
        g1=ones((Ld, 1, D)), b1=zeros((Ld, 1, D)),
        cwq=nrm((Ld, D, D), jnp.bfloat16), cbq=zeros((Ld, 1, D)),
        cwkv=nrm((Ld, D, 2 * D), jnp.bfloat16), cbkv=zeros((Ld, 1, 2 * D)),
        cwo=nrm((Ld, D, D), jnp.bfloat16), cbo=zeros((Ld, 1, D)),
        g2=ones((Ld, 1, D)), b2=zeros((Ld, 1, D)),
        w1=nrm((Ld, D, F), jnp.bfloat16), c1=zeros((Ld, 1, F)),
        w2=nrm((Ld, F, D), jnp.bfloat16), c2=zeros((Ld, 1, D)),
        g3=ones((Ld, 1, D)), b3=zeros((Ld, 1, D)),
    )
    return {
        "shared_emb": nrm((V, D)),
        "enc_pos": nrm((cfg["max_pos"] + 2, D)),
        "dec_pos": nrm((cfg["max_pos"] + 2, D)),
        "enc_ln_emb": {"g": ones((1, D)), "b": zeros((1, D))},
        "dec_ln_emb": {"g": ones((1, D)), "b": zeros((1, D))},
        "enc": enc,
        "dec": dec,
        "out_w": nrm((D, V), jnp.bfloat16),
        "out_b": zeros((1, V)),
    }


# ----------------------------------------------------------------------------
if __name__ == "__main__":
    cfg = CFG
    key = jax.random.PRNGKey(0)
    pkey, dkey1, dkey2 = jax.random.split(key, 3)
    params = init_params(pkey, cfg)

    B, Tsrc, Ttgt = 2, 8, 8
    pad = cfg["pad_token_id"]
    input_ids = jax.random.randint(dkey1, (B, Tsrc), 4, cfg["vocab_size"], dtype=jnp.int32)
    output_ids = jax.random.randint(dkey2, (B, Ttgt), 4, cfg["vocab_size"], dtype=jnp.int32)
    output_ids = output_ids.at[:, 0].set(0)     # BOS at decoder start
    input_ids = input_ids.at[1, 6:].set(pad)    # pad tail of second source
    output_ids = output_ids.at[0, 6:].set(pad)  # pad tail of first target

    fwd = jax.jit(functools.partial(bart_generator_train_forward, cfg=cfg))
    metrics, ret = fwd(params, input_ids, output_ids)
    jax.block_until_ready(metrics)
    jax.block_until_ready(ret)
    print("KERNEL_OK")
</pallas_src>

<mosaic_0001>
module attributes {stable_mosaic.version = 11 : i64} {
  func.func @_encoder_kernel(%arg0: memref<16x128xf32, #tpu.memory_space<vmem>>, %arg1: memref<16x64xf32, #tpu.memory_space<vmem>>, %arg2: memref<1x128xf32, #tpu.memory_space<vmem>>, %arg3: memref<1x128xf32, #tpu.memory_space<vmem>>, %arg4: memref<2x128x384xbf16, #tpu.memory_space<vmem>>, %arg5: memref<2x1x384xf32, #tpu.memory_space<vmem>>, %arg6: memref<2x128x128xbf16, #tpu.memory_space<vmem>>, %arg7: memref<2x1x128xf32, #tpu.memory_space<vmem>>, %arg8: memref<2x1x128xf32, #tpu.memory_space<vmem>>, %arg9: memref<2x1x128xf32, #tpu.memory_space<vmem>>, %arg10: memref<2x128x256xbf16, #tpu.memory_space<vmem>>, %arg11: memref<2x1x256xf32, #tpu.memory_space<vmem>>, %arg12: memref<2x256x128xbf16, #tpu.memory_space<vmem>>, %arg13: memref<2x1x128xf32, #tpu.memory_space<vmem>>, %arg14: memref<2x1x128xf32, #tpu.memory_space<vmem>>, %arg15: memref<2x1x128xf32, #tpu.memory_space<vmem>>, %arg16: memref<16x128xf32, #tpu.memory_space<vmem>>) attributes {dimension_semantics = [], scalar_prefetch = 0 : i64, scratch_operands = 0 : i64, tpu.core_type = #tpu.core_type<tc>} {
    %0 = tpu.iota {dimensions = array<i32: 1>} : vector<1x128xi32>
    %c0_i32 = arith.constant 0 : i32
    %1 = vector.broadcast %c0_i32 : i32 to vector<1x128xi32>
    %2 = arith.cmpi sge, %0, %1 : vector<1x128xi32>
    %c32_i32 = arith.constant 32 : i32
    %3 = vector.broadcast %c32_i32 : i32 to vector<1x128xi32>
    %4 = arith.cmpi slt, %0, %3 : vector<1x128xi32>
    %5 = arith.andi %2, %4 : vector<1x128xi1>
    %6 = arith.extui %5 : vector<1x128xi1> to vector<1x128xi32>
    %7 = arith.sitofp %6 : vector<1x128xi32> to vector<1x128xf32>
    %c32_i32_0 = arith.constant 32 : i32
    %8 = vector.broadcast %c32_i32_0 : i32 to vector<1x128xi32>
    %9 = arith.cmpi sge, %0, %8 : vector<1x128xi32>
    %c64_i32 = arith.constant 64 : i32
    %10 = vector.broadcast %c64_i32 : i32 to vector<1x128xi32>
    %11 = arith.cmpi slt, %0, %10 : vector<1x128xi32>
    %12 = arith.andi %9, %11 : vector<1x128xi1>
    %13 = arith.extui %12 : vector<1x128xi1> to vector<1x128xi32>
    %14 = arith.sitofp %13 : vector<1x128xi32> to vector<1x128xf32>
    %c64_i32_1 = arith.constant 64 : i32
    %15 = vector.broadcast %c64_i32_1 : i32 to vector<1x128xi32>
    %16 = arith.cmpi sge, %0, %15 : vector<1x128xi32>
    %c96_i32 = arith.constant 96 : i32
    %17 = vector.broadcast %c96_i32 : i32 to vector<1x128xi32>
    %18 = arith.cmpi slt, %0, %17 : vector<1x128xi32>
    %19 = arith.andi %16, %18 : vector<1x128xi1>
    %20 = arith.extui %19 : vector<1x128xi1> to vector<1x128xi32>
    %21 = arith.sitofp %20 : vector<1x128xi32> to vector<1x128xf32>
    %c96_i32_2 = arith.constant 96 : i32
    %22 = vector.broadcast %c96_i32_2 : i32 to vector<1x128xi32>
    %23 = arith.cmpi sge, %0, %22 : vector<1x128xi32>
    %c128_i32 = arith.constant 128 : i32
    %24 = vector.broadcast %c128_i32 : i32 to vector<1x128xi32>
    %25 = arith.cmpi slt, %0, %24 : vector<1x128xi32>
    %26 = arith.andi %23, %25 : vector<1x128xi1>
    %27 = arith.extui %26 : vector<1x128xi1> to vector<1x128xi32>
    %28 = arith.sitofp %27 : vector<1x128xi32> to vector<1x128xf32>
    %29 = tpu.iota {dimensions = array<i32: 1>} : vector<1x64xi32>
    %c0_i32_3 = arith.constant 0 : i32
    %30 = vector.broadcast %c0_i32_3 : i32 to vector<1x64xi32>
    %31 = arith.cmpi sge, %29, %30 : vector<1x64xi32>
    %c16_i32 = arith.constant 16 : i32
    %32 = vector.broadcast %c16_i32 : i32 to vector<1x64xi32>
    %33 = arith.cmpi slt, %29, %32 : vector<1x64xi32>
    %34 = arith.andi %31, %33 : vector<1x64xi1>
    %c16_i32_4 = arith.constant 16 : i32
    %35 = vector.broadcast %c16_i32_4 : i32 to vector<1x64xi32>
    %36 = arith.cmpi sge, %29, %35 : vector<1x64xi32>
    %c32_i32_5 = arith.constant 32 : i32
    %37 = vector.broadcast %c32_i32_5 : i32 to vector<1x64xi32>
    %38 = arith.cmpi slt, %29, %37 : vector<1x64xi32>
    %39 = arith.andi %36, %38 : vector<1x64xi1>
    %c32_i32_6 = arith.constant 32 : i32
    %40 = vector.broadcast %c32_i32_6 : i32 to vector<1x64xi32>
    %41 = arith.cmpi sge, %29, %40 : vector<1x64xi32>
    %c48_i32 = arith.constant 48 : i32
    %42 = vector.broadcast %c48_i32 : i32 to vector<1x64xi32>
    %43 = arith.cmpi slt, %29, %42 : vector<1x64xi32>
    %44 = arith.andi %41, %43 : vector<1x64xi1>
    %c48_i32_7 = arith.constant 48 : i32
    %45 = vector.broadcast %c48_i32_7 : i32 to vector<1x64xi32>
    %46 = arith.cmpi sge, %29, %45 : vector<1x64xi32>
    %c64_i32_8 = arith.constant 64 : i32
    %47 = vector.broadcast %c64_i32_8 : i32 to vector<1x64xi32>
    %48 = arith.cmpi slt, %29, %47 : vector<1x64xi32>
    %49 = arith.andi %46, %48 : vector<1x64xi1>
    %c0 = arith.constant 0 : index
    %c0_9 = arith.constant 0 : index
    %50 = vector.load %arg1[%c0, %c0_9] : memref<16x64xf32, #tpu.memory_space<vmem>>, vector<16x64xf32>
    %c0_10 = arith.constant 0 : index
    %c0_11 = arith.constant 0 : index
    %51 = vector.load %arg0[%c0_10, %c0_11] : memref<16x128xf32, #tpu.memory_space<vmem>>, vector<16x128xf32>
    %c0_12 = arith.constant 0 : index
    %c0_13 = arith.constant 0 : index
    %52 = vector.load %arg2[%c0_12, %c0_13] : memref<1x128xf32, #tpu.memory_space<vmem>>, vector<1x128xf32>
    %c0_14 = arith.constant 0 : index
    %c0_15 = arith.constant 0 : index
    %53 = vector.load %arg3[%c0_14, %c0_15] : memref<1x128xf32, #tpu.memory_space<vmem>>, vector<1x128xf32>
    %cst = arith.constant dense<0.000000e+00> : vector<16xf32>
    %54 = vector.multi_reduction <add>, %51, %cst [1] : vector<16x128xf32> to vector<16xf32>
    %55 = vector.shape_cast %54 : vector<16xf32> to vector<16x1xf32>
    %cst_16 = arith.constant 1.280000e+02 : f32
    %56 = vector.broadcast %cst_16 : f32 to vector<16x1xf32>
    %57 = arith.divf %55, %56 : vector<16x1xf32>
    %58 = vector.broadcast %57 : vector<16x1xf32> to vector<16x128xf32>
    %59 = arith.subf %51, %58 : vector<16x128xf32>
    %60 = arith.mulf %59, %59 : vector<16x128xf32>
    %cst_17 = arith.constant dense<0.000000e+00> : vector<16xf32>
    %61 = vector.multi_reduction <add>, %60, %cst_17 [1] : vector<16x128xf32> to vector<16xf32>
    %62 = vector.shape_cast %61 : vector<16xf32> to vector<16x1xf32>
    %cst_18 = arith.constant 1.280000e+02 : f32
    %63 = vector.broadcast %cst_18 : f32 to vector<16x1xf32>
    %64 = arith.divf %62, %63 : vector<16x1xf32>
    %65 = vector.broadcast %57 : vector<16x1xf32> to vector<16x128xf32>
    %66 = arith.subf %51, %65 : vector<16x128xf32>
    %cst_19 = arith.constant 9.99999974E-6 : f32
    %67 = vector.broadcast %cst_19 : f32 to vector<16x1xf32>
    %68 = arith.addf %64, %67 : vector<16x1xf32>
    %69 = math.rsqrt %68 : vector<16x1xf32>
    %70 = vector.broadcast %69 : vector<16x1xf32> to vector<16x128xf32>
    %71 = arith.mulf %66, %70 : vector<16x128xf32>
    %72 = vector.broadcast %52 : vector<1x128xf32> to vector<16x128xf32>
    %73 = arith.mulf %71, %72 : vector<16x128xf32>
    %74 = vector.broadcast %53 : vector<1x128xf32> to vector<16x128xf32>
    %75 = arith.addf %73, %74 : vector<16x128xf32>
    %76 = arith.truncf %75 : vector<16x128xf32> to vector<16x128xbf16>
    %c0_20 = arith.constant 0 : index
    %c0_21 = arith.constant 0 : index
    %c0_22 = arith.constant 0 : index
    %77 = vector.load %arg4[%c0_20, %c0_21, %c0_22] : memref<2x128x384xbf16, #tpu.memory_space<vmem>>, vector<1x128x384xbf16>
    %78 = vector.shape_cast %77 : vector<1x128x384xbf16> to vector<128x384xbf16>
    %cst_23 = arith.constant dense<0.000000e+00> : vector<16x384xf32>
    %79 = tpu.matmul %76, %78, %cst_23 {dimension_numbers = #tpu.dot_dimension_numbers<[1], [0], [0], [1], [0, 0, 1, 1], [], []>} : vector<16x128xbf16>, vector<128x384xbf16>, vector<16x384xf32> -> vector<16x384xf32>
    %c0_24 = arith.constant 0 : index
    %c0_25 = arith.constant 0 : index
    %c0_26 = arith.constant 0 : index
    %80 = vector.load %arg5[%c0_24, %c0_25, %c0_26] : memref<2x1x384xf32, #tpu.memory_space<vmem>>, vector<1x1x384xf32>
    %81 = vector.shape_cast %80 : vector<1x1x384xf32> to vector<1x384xf32>
    %82 = vector.broadcast %81 : vector<1x384xf32> to vector<16x384xf32>
    %83 = arith.addf %79, %82 : vector<16x384xf32>
    %84 = vector.extract_strided_slice %83 {offsets = [0, 0], sizes = [16, 128], strides = [1, 1]} : vector<16x384xf32> to vector<16x128xf32>
    %85 = vector.extract_strided_slice %83 {offsets = [0, 128], sizes = [16, 128], strides = [1, 1]} : vector<16x384xf32> to vector<16x128xf32>
    %86 = vector.extract_strided_slice %83 {offsets = [0, 256], sizes = [16, 128], strides = [1, 1]} : vector<16x384xf32> to vector<16x128xf32>
    %87 = vector.broadcast %7 : vector<1x128xf32> to vector<16x128xf32>
    %88 = arith.mulf %85, %87 : vector<16x128xf32>
    %89 = vector.broadcast %14 : vector<1x128xf32> to vector<16x128xf32>
    %90 = arith.mulf %85, %89 : vector<16x128xf32>
    %91 = vector.broadcast %21 : vector<1x128xf32> to vector<16x128xf32>
    %92 = arith.mulf %85, %91 : vector<16x128xf32>
    %93 = vector.broadcast %28 : vector<1x128xf32> to vector<16x128xf32>
    %94 = arith.mulf %85, %93 : vector<16x128xf32>
    %95 = tpu.concatenate %88, %90, %92, %94 in 0 : vector<16x128xf32>, vector<16x128xf32>, vector<16x128xf32>, vector<16x128xf32> -> vector<64x128xf32>
    %96 = vector.broadcast %7 : vector<1x128xf32> to vector<16x128xf32>
    %97 = arith.mulf %86, %96 : vector<16x128xf32>
    %98 = vector.broadcast %14 : vector<1x128xf32> to vector<16x128xf32>
    %99 = arith.mulf %86, %98 : vector<16x128xf32>
    %100 = vector.broadcast %21 : vector<1x128xf32> to vector<16x128xf32>
    %101 = arith.mulf %86, %100 : vector<16x128xf32>
    %102 = vector.broadcast %28 : vector<1x128xf32> to vector<16x128xf32>
    %103 = arith.mulf %86, %102 : vector<16x128xf32>
    %104 = tpu.concatenate %97, %99, %101, %103 in 0 : vector<16x128xf32>, vector<16x128xf32>, vector<16x128xf32>, vector<16x128xf32> -> vector<64x128xf32>
    %cst_27 = arith.constant dense<0.000000e+00> : vector<16x64xf32>
    %105 = tpu.matmul %84, %95, %cst_27 {dimension_numbers = #tpu.dot_dimension_numbers<[1], [1], [0], [0], [0, 0, 1, 0], [], []>} : vector<16x128xf32>, vector<64x128xf32>, vector<16x64xf32> -> vector<16x64xf32>
    %cst_28 = arith.constant 0.176776692 : f32
    %106 = vector.broadcast %cst_28 : f32 to vector<16x64xf32>
    %107 = arith.mulf %105, %106 : vector<16x64xf32>
    %108 = arith.addf %107, %50 : vector<16x64xf32>
    %cst_29 = arith.constant 0.000000e+00 : f32
    %109 = vector.broadcast %cst_29 : f32 to vector<16x64xf32>
    %cst_30 = arith.constant -1.000000e+30 : f32
    %110 = vector.shape_cast %34 : vector<1x64xi1> to vector<1x64xi1>
    %111 = vector.broadcast %110 : vector<1x64xi1> to vector<16x64xi1>
    %112 = vector.broadcast %cst_30 : f32 to vector<16x64xf32>
    %113 = arith.select %111, %108, %112 : vector<16x64xi1>, vector<16x64xf32>
    %cst_31 = arith.constant dense<0xFF800000> : vector<16xf32>
    %114 = vector.multi_reduction <maximumf>, %113, %cst_31 [1] : vector<16x64xf32> to vector<16xf32>
    %115 = vector.shape_cast %114 : vector<16xf32> to vector<16x1xf32>
    %cst_32 = arith.constant 0.000000e+00 : f32
    %116 = vector.shape_cast %34 : vector<1x64xi1> to vector<1x64xi1>
    %117 = vector.broadcast %116 : vector<1x64xi1> to vector<16x64xi1>
    %118 = vector.shape_cast %115 : vector<16x1xf32> to vector<16x1xf32>
    %119 = vector.broadcast %118 : vector<16x1xf32> to vector<16x64xf32>
    %120 = vector.broadcast %cst_32 : f32 to vector<16x64xf32>
    %121 = arith.select %117, %119, %120 : vector<16x64xi1>, vector<16x64xf32>
    %122 = arith.addf %109, %121 : vector<16x64xf32>
    %cst_33 = arith.constant -1.000000e+30 : f32
    %123 = vector.shape_cast %39 : vector<1x64xi1> to vector<1x64xi1>
    %124 = vector.broadcast %123 : vector<1x64xi1> to vector<16x64xi1>
    %125 = vector.broadcast %cst_33 : f32 to vector<16x64xf32>
    %126 = arith.select %124, %108, %125 : vector<16x64xi1>, vector<16x64xf32>
    %cst_34 = arith.constant dense<0xFF800000> : vector<16xf32>
    %127 = vector.multi_reduction <maximumf>, %126, %cst_34 [1] : vector<16x64xf32> to vector<16xf32>
    %128 = vector.shape_cast %127 : vector<16xf32> to vector<16x1xf32>
    %cst_35 = arith.constant 0.000000e+00 : f32
    %129 = vector.shape_cast %39 : vector<1x64xi1> to vector<1x64xi1>
    %130 = vector.broadcast %129 : vector<1x64xi1> to vector<16x64xi1>
    %131 = vector.shape_cast %128 : vector<16x1xf32> to vector<16x1xf32>
    %132 = vector.broadcast %131 : vector<16x1xf32> to vector<16x64xf32>
    %133 = vector.broadcast %cst_35 : f32 to vector<16x64xf32>
    %134 = arith.select %130, %132, %133 : vector<16x64xi1>, vector<16x64xf32>
    %135 = arith.addf %122, %134 : vector<16x64xf32>
    %cst_36 = arith.constant -1.000000e+30 : f32
    %136 = vector.shape_cast %44 : vector<1x64xi1> to vector<1x64xi1>
    %137 = vector.broadcast %136 : vector<1x64xi1> to vector<16x64xi1>
    %138 = vector.broadcast %cst_36 : f32 to vector<16x64xf32>
    %139 = arith.select %137, %108, %138 : vector<16x64xi1>, vector<16x64xf32>
    %cst_37 = arith.constant dense<0xFF800000> : vector<16xf32>
    %140 = vector.multi_reduction <maximumf>, %139, %cst_37 [1] : vector<16x64xf32> to vector<16xf32>
    %141 = vector.shape_cast %140 : vector<16xf32> to vector<16x1xf32>
    %cst_38 = arith.constant 0.000000e+00 : f32
    %142 = vector.shape_cast %44 : vector<1x64xi1> to vector<1x64xi1>
    %143 = vector.broadcast %142 : vector<1x64xi1> to vector<16x64xi1>
    %144 = vector.shape_cast %141 : vector<16x1xf32> to vector<16x1xf32>
    %145 = vector.broadcast %144 : vector<16x1xf32> to vector<16x64xf32>
    %146 = vector.broadcast %cst_38 : f32 to vector<16x64xf32>
    %147 = arith.select %143, %145, %146 : vector<16x64xi1>, vector<16x64xf32>
    %148 = arith.addf %135, %147 : vector<16x64xf32>
    %cst_39 = arith.constant -1.000000e+30 : f32
    %149 = vector.shape_cast %49 : vector<1x64xi1> to vector<1x64xi1>
    %150 = vector.broadcast %149 : vector<1x64xi1> to vector<16x64xi1>
    %151 = vector.broadcast %cst_39 : f32 to vector<16x64xf32>
    %152 = arith.select %150, %108, %151 : vector<16x64xi1>, vector<16x64xf32>
    %cst_40 = arith.constant dense<0xFF800000> : vector<16xf32>
    %153 = vector.multi_reduction <maximumf>, %152, %cst_40 [1] : vector<16x64xf32> to vector<16xf32>
    %154 = vector.shape_cast %153 : vector<16xf32> to vector<16x1xf32>
    %cst_41 = arith.constant 0.000000e+00 : f32
    %155 = vector.shape_cast %49 : vector<1x64xi1> to vector<1x64xi1>
    %156 = vector.broadcast %155 : vector<1x64xi1> to vector<16x64xi1>
    %157 = vector.shape_cast %154 : vector<16x1xf32> to vector<16x1xf32>
    %158 = vector.broadcast %157 : vector<16x1xf32> to vector<16x64xf32>
    %159 = vector.broadcast %cst_41 : f32 to vector<16x64xf32>
    %160 = arith.select %156, %158, %159 : vector<16x64xi1>, vector<16x64xf32>
    %161 = arith.addf %148, %160 : vector<16x64xf32>
    %162 = arith.subf %108, %161 : vector<16x64xf32>
    %163 = math.exp %162 : vector<16x64xf32>
    %cst_42 = arith.constant 0.000000e+00 : f32
    %164 = vector.broadcast %cst_42 : f32 to vector<16x64xf32>
    %cst_43 = arith.constant 0.000000e+00 : f32
    %165 = vector.shape_cast %34 : vector<1x64xi1> to vector<1x64xi1>
    %166 = vector.broadcast %165 : vector<1x64xi1> to vector<16x64xi1>
    %167 = vector.broadcast %cst_43 : f32 to vector<16x64xf32>
    %168 = arith.select %166, %163, %167 : vector<16x64xi1>, vector<16x64xf32>
    %cst_44 = arith.constant dense<0.000000e+00> : vector<16xf32>
    %169 = vector.multi_reduction <add>, %168, %cst_44 [1] : vector<16x64xf32> to vector<16xf32>
    %170 = vector.shape_cast %169 : vector<16xf32> to vector<16x1xf32>
    %171 = tpu.reciprocal %170 {approx = true} : vector<16x1xf32> -> vector<16x1xf32>
    %cst_45 = arith.constant 0.000000e+00 : f32
    %172 = vector.shape_cast %34 : vector<1x64xi1> to vector<1x64xi1>
    %173 = vector.broadcast %172 : vector<1x64xi1> to vector<16x64xi1>
    %174 = vector.shape_cast %171 : vector<16x1xf32> to vector<16x1xf32>
    %175 = vector.broadcast %174 : vector<16x1xf32> to vector<16x64xf32>
    %176 = vector.broadcast %cst_45 : f32 to vector<16x64xf32>
    %177 = arith.select %173, %175, %176 : vector<16x64xi1>, vector<16x64xf32>
    %178 = arith.addf %164, %177 : vector<16x64xf32>
    %cst_46 = arith.constant 0.000000e+00 : f32
    %179 = vector.shape_cast %39 : vector<1x64xi1> to vector<1x64xi1>
    %180 = vector.broadcast %179 : vector<1x64xi1> to vector<16x64xi1>
    %181 = vector.broadcast %cst_46 : f32 to vector<16x64xf32>
    %182 = arith.select %180, %163, %181 : vector<16x64xi1>, vector<16x64xf32>
    %cst_47 = arith.constant dense<0.000000e+00> : vector<16xf32>
    %183 = vector.multi_reduction <add>, %182, %cst_47 [1] : vector<16x64xf32> to vector<16xf32>
    %184 = vector.shape_cast %183 : vector<16xf32> to vector<16x1xf32>
    %185 = tpu.reciprocal %184 {approx = true} : vector<16x1xf32> -> vector<16x1xf32>
    %cst_48 = arith.constant 0.000000e+00 : f32
    %186 = vector.shape_cast %39 : vector<1x64xi1> to vector<1x64xi1>
    %187 = vector.broadcast %186 : vector<1x64xi1> to vector<16x64xi1>
    %188 = vector.shape_cast %185 : vector<16x1xf32> to vector<16x1xf32>
    %189 = vector.broadcast %188 : vector<16x1xf32> to vector<16x64xf32>
    %190 = vector.broadcast %cst_48 : f32 to vector<16x64xf32>
    %191 = arith.select %187, %189, %190 : vector<16x64xi1>, vector<16x64xf32>
    %192 = arith.addf %178, %191 : vector<16x64xf32>
    %cst_49 = arith.constant 0.000000e+00 : f32
    %193 = vector.shape_cast %44 : vector<1x64xi1> to vector<1x64xi1>
    %194 = vector.broadcast %193 : vector<1x64xi1> to vector<16x64xi1>
    %195 = vector.broadcast %cst_49 : f32 to vector<16x64xf32>
    %196 = arith.select %194, %163, %195 : vector<16x64xi1>, vector<16x64xf32>
    %cst_50 = arith.constant dense<0.000000e+00> : vector<16xf32>
    %197 = vector.multi_reduction <add>, %196, %cst_50 [1] : vector<16x64xf32> to vector<16xf32>
    %198 = vector.shape_cast %197 : vector<16xf32> to vector<16x1xf32>
    %199 = tpu.reciprocal %198 {approx = true} : vector<16x1xf32> -> vector<16x1xf32>
    %cst_51 = arith.constant 0.000000e+00 : f32
    %200 = vector.shape_cast %44 : vector<1x64xi1> to vector<1x64xi1>
    %201 = vector.broadcast %200 : vector<1x64xi1> to vector<16x64xi1>
    %202 = vector.shape_cast %199 : vector<16x1xf32> to vector<16x1xf32>
    %203 = vector.broadcast %202 : vector<16x1xf32> to vector<16x64xf32>
    %204 = vector.broadcast %cst_51 : f32 to vector<16x64xf32>
    %205 = arith.select %201, %203, %204 : vector<16x64xi1>, vector<16x64xf32>
    %206 = arith.addf %192, %205 : vector<16x64xf32>
    %cst_52 = arith.constant 0.000000e+00 : f32
    %207 = vector.shape_cast %49 : vector<1x64xi1> to vector<1x64xi1>
    %208 = vector.broadcast %207 : vector<1x64xi1> to vector<16x64xi1>
    %209 = vector.broadcast %cst_52 : f32 to vector<16x64xf32>
    %210 = arith.select %208, %163, %209 : vector<16x64xi1>, vector<16x64xf32>
    %cst_53 = arith.constant dense<0.000000e+00> : vector<16xf32>
    %211 = vector.multi_reduction <add>, %210, %cst_53 [1] : vector<16x64xf32> to vector<16xf32>
    %212 = vector.shape_cast %211 : vector<16xf32> to vector<16x1xf32>
    %213 = tpu.reciprocal %212 {approx = true} : vector<16x1xf32> -> vector<16x1xf32>
    %cst_54 = arith.constant 0.000000e+00 : f32
    %214 = vector.shape_cast %49 : vector<1x64xi1> to vector<1x64xi1>
    %215 = vector.broadcast %214 : vector<1x64xi1> to vector<16x64xi1>
    %216 = vector.shape_cast %213 : vector<16x1xf32> to vector<16x1xf32>
    %217 = vector.broadcast %216 : vector<16x1xf32> to vector<16x64xf32>
    %218 = vector.broadcast %cst_54 : f32 to vector<16x64xf32>
    %219 = arith.select %215, %217, %218 : vector<16x64xi1>, vector<16x64xf32>
    %220 = arith.addf %206, %219 : vector<16x64xf32>
    %221 = arith.mulf %163, %220 : vector<16x64xf32>
    %cst_55 = arith.constant dense<0.000000e+00> : vector<16x128xf32>
    %222 = tpu.matmul %221, %104, %cst_55 {dimension_numbers = #tpu.dot_dimension_numbers<[1], [0], [0], [1], [0, 0, 1, 1], [], []>} : vector<16x64xf32>, vector<64x128xf32>, vector<16x128xf32> -> vector<16x128xf32>
    %223 = arith.truncf %222 : vector<16x128xf32> to vector<16x128xbf16>
    %c0_56 = arith.constant 0 : index
    %c0_57 = arith.constant 0 : index
    %c0_58 = arith.constant 0 : index
    %224 = vector.load %arg6[%c0_56, %c0_57, %c0_58] : memref<2x128x128xbf16, #tpu.memory_space<vmem>>, vector<1x128x128xbf16>
    %225 = vector.shape_cast %224 : vector<1x128x128xbf16> to vector<128x128xbf16>
    %cst_59 = arith.constant dense<0.000000e+00> : vector<16x128xf32>
    %226 = tpu.matmul %223, %225, %cst_59 {dimension_numbers = #tpu.dot_dimension_numbers<[1], [0], [0], [1], [0, 0, 1, 1], [], []>} : vector<16x128xbf16>, vector<128x128xbf16>, vector<16x128xf32> -> vector<16x128xf32>
    %c0_60 = arith.constant 0 : index
    %c0_61 = arith.constant 0 : index
    %c0_62 = arith.constant 0 : index
    %227 = vector.load %arg7[%c0_60, %c0_61, %c0_62] : memref<2x1x128xf32, #tpu.memory_space<vmem>>, vector<1x1x128xf32>
    %228 = vector.shape_cast %227 : vector<1x1x128xf32> to vector<1x128xf32>
    %229 = vector.broadcast %228 : vector<1x128xf32> to vector<16x128xf32>
    %230 = arith.addf %226, %229 : vector<16x128xf32>
    %231 = arith.addf %75, %230 : vector<16x128xf32>
    %c0_63 = arith.constant 0 : index
    %c0_64 = arith.constant 0 : index
    %c0_65 = arith.constant 0 : index
    %232 = vector.load %arg8[%c0_63, %c0_64, %c0_65] : memref<2x1x128xf32, #tpu.memory_space<vmem>>, vector<1x1x128xf32>
    %233 = vector.shape_cast %232 : vector<1x1x128xf32> to vector<1x128xf32>
    %c0_66 = arith.constant 0 : index
    %c0_67 = arith.constant 0 : index
    %c0_68 = arith.constant 0 : index
    %234 = vector.load %arg9[%c0_66, %c0_67, %c0_68] : memref<2x1x128xf32, #tpu.memory_space<vmem>>, vector<1x1x128xf32>
    %235 = vector.shape_cast %234 : vector<1x1x128xf32> to vector<1x128xf32>
    %cst_69 = arith.constant dense<0.000000e+00> : vector<16xf32>
    %236 = vector.multi_reduction <add>, %231, %cst_69 [1] : vector<16x128xf32> to vector<16xf32>
    %237 = vector.shape_cast %236 : vector<16xf32> to vector<16x1xf32>
    %cst_70 = arith.constant 1.280000e+02 : f32
    %238 = vector.broadcast %cst_70 : f32 to vector<16x1xf32>
    %239 = arith.divf %237, %238 : vector<16x1xf32>
    %240 = vector.broadcast %239 : vector<16x1xf32> to vector<16x128xf32>
    %241 = arith.subf %231, %240 : vector<16x128xf32>
    %242 = arith.mulf %241, %241 : vector<16x128xf32>
    %cst_71 = arith.constant dense<0.000000e+00> : vector<16xf32>
    %243 = vector.multi_reduction <add>, %242, %cst_71 [1] : vector<16x128xf32> to vector<16xf32>
    %244 = vector.shape_cast %243 : vector<16xf32> to vector<16x1xf32>
    %cst_72 = arith.constant 1.280000e+02 : f32
    %245 = vector.broadcast %cst_72 : f32 to vector<16x1xf32>
    %246 = arith.divf %244, %245 : vector<16x1xf32>
    %247 = vector.broadcast %239 : vector<16x1xf32> to vector<16x128xf32>
    %248 = arith.subf %231, %247 : vector<16x128xf32>
    %cst_73 = arith.constant 9.99999974E-6 : f32
    %249 = vector.broadcast %cst_73 : f32 to vector<16x1xf32>
    %250 = arith.addf %246, %249 : vector<16x1xf32>
    %251 = math.rsqrt %250 : vector<16x1xf32>
    %252 = vector.broadcast %251 : vector<16x1xf32> to vector<16x128xf32>
    %253 = arith.mulf %248, %252 : vector<16x128xf32>
    %254 = vector.broadcast %233 : vector<1x128xf32> to vector<16x128xf32>
    %255 = arith.mulf %253, %254 : vector<16x128xf32>
    %256 = vector.broadcast %235 : vector<1x128xf32> to vector<16x128xf32>
    %257 = arith.addf %255, %256 : vector<16x128xf32>
    %258 = arith.truncf %257 : vector<16x128xf32> to vector<16x128xbf16>
    %c0_74 = arith.constant 0 : index
    %c0_75 = arith.constant 0 : index
    %c0_76 = arith.constant 0 : index
    %259 = vector.load %arg10[%c0_74, %c0_75, %c0_76] : memref<2x128x256xbf16, #tpu.memory_space<vmem>>, vector<1x128x256xbf16>
    %260 = vector.shape_cast %259 : vector<1x128x256xbf16> to vector<128x256xbf16>
    %cst_77 = arith.constant dense<0.000000e+00> : vector<16x256xf32>
    %261 = tpu.matmul %258, %260, %cst_77 {dimension_numbers = #tpu.dot_dimension_numbers<[1], [0], [0], [1], [0, 0, 1, 1], [], []>} : vector<16x128xbf16>, vector<128x256xbf16>, vector<16x256xf32> -> vector<16x256xf32>
    %c0_78 = arith.constant 0 : index
    %c0_79 = arith.constant 0 : index
    %c0_80 = arith.constant 0 : index
    %262 = vector.load %arg11[%c0_78, %c0_79, %c0_80] : memref<2x1x256xf32, #tpu.memory_space<vmem>>, vector<1x1x256xf32>
    %263 = vector.shape_cast %262 : vector<1x1x256xf32> to vector<1x256xf32>
    %264 = vector.broadcast %263 : vector<1x256xf32> to vector<16x256xf32>
    %265 = arith.addf %261, %264 : vector<16x256xf32>
    %cst_81 = arith.constant 5.000000e-01 : f32
    %266 = vector.broadcast %cst_81 : f32 to vector<16x256xf32>
    %267 = arith.mulf %266, %265 : vector<16x256xf32>
    %cst_82 = arith.constant 4.471500e-02 : f32
    %268 = vector.broadcast %cst_82 : f32 to vector<16x256xf32>
    %269 = arith.mulf %268, %265 : vector<16x256xf32>
    %270 = arith.mulf %269, %265 : vector<16x256xf32>
    %271 = arith.mulf %270, %265 : vector<16x256xf32>
    %272 = arith.addf %265, %271 : vector<16x256xf32>
    %cst_83 = arith.constant 0.797884583 : f32
    %273 = vector.broadcast %cst_83 : f32 to vector<16x256xf32>
    %274 = arith.mulf %273, %272 : vector<16x256xf32>
    %275 = math.tanh %274 : vector<16x256xf32>
    %cst_84 = arith.constant 1.000000e+00 : f32
    %276 = vector.broadcast %cst_84 : f32 to vector<16x256xf32>
    %277 = arith.addf %276, %275 : vector<16x256xf32>
    %278 = arith.mulf %267, %277 : vector<16x256xf32>
    %279 = arith.truncf %278 : vector<16x256xf32> to vector<16x256xbf16>
    %c0_85 = arith.constant 0 : index
    %c0_86 = arith.constant 0 : index
    %c0_87 = arith.constant 0 : index
    %280 = vector.load %arg12[%c0_85, %c0_86, %c0_87] : memref<2x256x128xbf16, #tpu.memory_space<vmem>>, vector<1x256x128xbf16>
    %281 = vector.shape_cast %280 : vector<1x256x128xbf16> to vector<256x128xbf16>
    %cst_88 = arith.constant dense<0.000000e+00> : vector<16x128xf32>
    %282 = tpu.matmul %279, %281, %cst_88 {dimension_numbers = #tpu.dot_dimension_numbers<[1], [0], [0], [1], [0, 0, 1, 1], [], []>} : vector<16x256xbf16>, vector<256x128xbf16>, vector<16x128xf32> -> vector<16x128xf32>
    %c0_89 = arith.constant 0 : index
    %c0_90 = arith.constant 0 : index
    %c0_91 = arith.constant 0 : index
    %283 = vector.load %arg13[%c0_89, %c0_90, %c0_91] : memref<2x1x128xf32, #tpu.memory_space<vmem>>, vector<1x1x128xf32>
    %284 = vector.shape_cast %283 : vector<1x1x128xf32> to vector<1x128xf32>
    %285 = vector.broadcast %284 : vector<1x128xf32> to vector<16x128xf32>
    %286 = arith.addf %282, %285 : vector<16x128xf32>
    %287 = arith.addf %257, %286 : vector<16x128xf32>
    %c0_92 = arith.constant 0 : index
    %c0_93 = arith.constant 0 : index
    %c0_94 = arith.constant 0 : index
    %288 = vector.load %arg14[%c0_92, %c0_93, %c0_94] : memref<2x1x128xf32, #tpu.memory_space<vmem>>, vector<1x1x128xf32>
    %289 = vector.shape_cast %288 : vector<1x1x128xf32> to vector<1x128xf32>
    %c0_95 = arith.constant 0 : index
    %c0_96 = arith.constant 0 : index
    %c0_97 = arith.constant 0 : index
    %290 = vector.load %arg15[%c0_95, %c0_96, %c0_97] : memref<2x1x128xf32, #tpu.memory_space<vmem>>, vector<1x1x128xf32>
    %291 = vector.shape_cast %290 : vector<1x1x128xf32> to vector<1x128xf32>
    %cst_98 = arith.constant dense<0.000000e+00> : vector<16xf32>
    %292 = vector.multi_reduction <add>, %287, %cst_98 [1] : vector<16x128xf32> to vector<16xf32>
    %293 = vector.shape_cast %292 : vector<16xf32> to vector<16x1xf32>
    %cst_99 = arith.constant 1.280000e+02 : f32
    %294 = vector.broadcast %cst_99 : f32 to vector<16x1xf32>
    %295 = arith.divf %293, %294 : vector<16x1xf32>
    %296 = vector.broadcast %295 : vector<16x1xf32> to vector<16x128xf32>
    %297 = arith.subf %287, %296 : vector<16x128xf32>
    %298 = arith.mulf %297, %297 : vector<16x128xf32>
    %cst_100 = arith.constant dense<0.000000e+00> : vector<16xf32>
    %299 = vector.multi_reduction <add>, %298, %cst_100 [1] : vector<16x128xf32> to vector<16xf32>
    %300 = vector.shape_cast %299 : vector<16xf32> to vector<16x1xf32>
    %cst_101 = arith.constant 1.280000e+02 : f32
    %301 = vector.broadcast %cst_101 : f32 to vector<16x1xf32>
    %302 = arith.divf %300, %301 : vector<16x1xf32>
    %303 = vector.broadcast %295 : vector<16x1xf32> to vector<16x128xf32>
    %304 = arith.subf %287, %303 : vector<16x128xf32>
    %cst_102 = arith.constant 9.99999974E-6 : f32
    %305 = vector.broadcast %cst_102 : f32 to vector<16x1xf32>
    %306 = arith.addf %302, %305 : vector<16x1xf32>
    %307 = math.rsqrt %306 : vector<16x1xf32>
    %308 = vector.broadcast %307 : vector<16x1xf32> to vector<16x128xf32>
    %309 = arith.mulf %304, %308 : vector<16x128xf32>
    %310 = vector.broadcast %289 : vector<1x128xf32> to vector<16x128xf32>
    %311 = arith.mulf %309, %310 : vector<16x128xf32>
    %312 = vector.broadcast %291 : vector<1x128xf32> to vector<16x128xf32>
    %313 = arith.addf %311, %312 : vector<16x128xf32>
    %314 = arith.truncf %313 : vector<16x128xf32> to vector<16x128xbf16>
    %c1 = arith.constant 1 : index
    %c0_103 = arith.constant 0 : index
    %c0_104 = arith.constant 0 : index
    %315 = vector.load %arg4[%c1, %c0_103, %c0_104] : memref<2x128x384xbf16, #tpu.memory_space<vmem>>, vector<1x128x384xbf16>
    %316 = vector.shape_cast %315 : vector<1x128x384xbf16> to vector<128x384xbf16>
    %cst_105 = arith.constant dense<0.000000e+00> : vector<16x384xf32>
    %317 = tpu.matmul %314, %316, %cst_105 {dimension_numbers = #tpu.dot_dimension_numbers<[1], [0], [0], [1], [0, 0, 1, 1], [], []>} : vector<16x128xbf16>, vector<128x384xbf16>, vector<16x384xf32> -> vector<16x384xf32>
    %c1_106 = arith.constant 1 : index
    %c0_107 = arith.constant 0 : index
    %c0_108 = arith.constant 0 : index
    %318 = vector.load %arg5[%c1_106, %c0_107, %c0_108] : memref<2x1x384xf32, #tpu.memory_space<vmem>>, vector<1x1x384xf32>
    %319 = vector.shape_cast %318 : vector<1x1x384xf32> to vector<1x384xf32>
    %320 = vector.broadcast %319 : vector<1x384xf32> to vector<16x384xf32>
    %321 = arith.addf %317, %320 : vector<16x384xf32>
    %322 = vector.extract_strided_slice %321 {offsets = [0, 0], sizes = [16, 128], strides = [1, 1]} : vector<16x384xf32> to vector<16x128xf32>
    %323 = vector.extract_strided_slice %321 {offsets = [0, 128], sizes = [16, 128], strides = [1, 1]} : vector<16x384xf32> to vector<16x128xf32>
    %324 = vector.extract_strided_slice %321 {offsets = [0, 256], sizes = [16, 128], strides = [1, 1]} : vector<16x384xf32> to vector<16x128xf32>
    %325 = vector.broadcast %7 : vector<1x128xf32> to vector<16x128xf32>
    %326 = arith.mulf %323, %325 : vector<16x128xf32>
    %327 = vector.broadcast %14 : vector<1x128xf32> to vector<16x128xf32>
    %328 = arith.mulf %323, %327 : vector<16x128xf32>
    %329 = vector.broadcast %21 : vector<1x128xf32> to vector<16x128xf32>
    %330 = arith.mulf %323, %329 : vector<16x128xf32>
    %331 = vector.broadcast %28 : vector<1x128xf32> to vector<16x128xf32>
    %332 = arith.mulf %323, %331 : vector<16x128xf32>
    %333 = tpu.concatenate %326, %328, %330, %332 in 0 : vector<16x128xf32>, vector<16x128xf32>, vector<16x128xf32>, vector<16x128xf32> -> vector<64x128xf32>
    %334 = vector.broadcast %7 : vector<1x128xf32> to vector<16x128xf32>
    %335 = arith.mulf %324, %334 : vector<16x128xf32>
    %336 = vector.broadcast %14 : vector<1x128xf32> to vector<16x128xf32>
    %337 = arith.mulf %324, %336 : vector<16x128xf32>
    %338 = vector.broadcast %21 : vector<1x128xf32> to vector<16x128xf32>
    %339 = arith.mulf %324, %338 : vector<16x128xf32>
    %340 = vector.broadcast %28 : vector<1x128xf32> to vector<16x128xf32>
    %341 = arith.mulf %324, %340 : vector<16x128xf32>
    %342 = tpu.concatenate %335, %337, %339, %341 in 0 : vector<16x128xf32>, vector<16x128xf32>, vector<16x128xf32>, vector<16x128xf32> -> vector<64x128xf32>
    %cst_109 = arith.constant dense<0.000000e+00> : vector<16x64xf32>
    %343 = tpu.matmul %322, %333, %cst_109 {dimension_numbers = #tpu.dot_dimension_numbers<[1], [1], [0], [0], [0, 0, 1, 0], [], []>} : vector<16x128xf32>, vector<64x128xf32>, vector<16x64xf32> -> vector<16x64xf32>
    %cst_110 = arith.constant 0.176776692 : f32
    %344 = vector.broadcast %cst_110 : f32 to vector<16x64xf32>
    %345 = arith.mulf %343, %344 : vector<16x64xf32>
    %346 = arith.addf %345, %50 : vector<16x64xf32>
    %cst_111 = arith.constant 0.000000e+00 : f32
    %347 = vector.broadcast %cst_111 : f32 to vector<16x64xf32>
    %cst_112 = arith.constant -1.000000e+30 : f32
    %348 = vector.shape_cast %34 : vector<1x64xi1> to vector<1x64xi1>
    %349 = vector.broadcast %348 : vector<1x64xi1> to vector<16x64xi1>
    %350 = vector.broadcast %cst_112 : f32 to vector<16x64xf32>
    %351 = arith.select %349, %346, %350 : vector<16x64xi1>, vector<16x64xf32>
    %cst_113 = arith.constant dense<0xFF800000> : vector<16xf32>
    %352 = vector.multi_reduction <maximumf>, %351, %cst_113 [1] : vector<16x64xf32> to vector<16xf32>
    %353 = vector.shape_cast %352 : vector<16xf32> to vector<16x1xf32>
    %cst_114 = arith.constant 0.000000e+00 : f32
    %354 = vector.shape_cast %34 : vector<1x64xi1> to vector<1x64xi1>
    %355 = vector.broadcast %354 : vector<1x64xi1> to vector<16x64xi1>
    %356 = vector.shape_cast %353 : vector<16x1xf32> to vector<16x1xf32>
    %357 = vector.broadcast %356 : vector<16x1xf32> to vector<16x64xf32>
    %358 = vector.broadcast %cst_114 : f32 to vector<16x64xf32>
    %359 = arith.select %355, %357, %358 : vector<16x64xi1>, vector<16x64xf32>
    %360 = arith.addf %347, %359 : vector<16x64xf32>
    %cst_115 = arith.constant -1.000000e+30 : f32
    %361 = vector.shape_cast %39 : vector<1x64xi1> to vector<1x64xi1>
    %362 = vector.broadcast %361 : vector<1x64xi1> to vector<16x64xi1>
    %363 = vector.broadcast %cst_115 : f32 to vector<16x64xf32>
    %364 = arith.select %362, %346, %363 : vector<16x64xi1>, vector<16x64xf32>
    %cst_116 = arith.constant dense<0xFF800000> : vector<16xf32>
    %365 = vector.multi_reduction <maximumf>, %364, %cst_116 [1] : vector<16x64xf32> to vector<16xf32>
    %366 = vector.shape_cast %365 : vector<16xf32> to vector<16x1xf32>
    %cst_117 = arith.constant 0.000000e+00 : f32
    %367 = vector.shape_cast %39 : vector<1x64xi1> to vector<1x64xi1>
    %368 = vector.broadcast %367 : vector<1x64xi1> to vector<16x64xi1>
    %369 = vector.shape_cast %366 : vector<16x1xf32> to vector<16x1xf32>
    %370 = vector.broadcast %369 : vector<16x1xf32> to vector<16x64xf32>
    %371 = vector.broadcast %cst_117 : f32 to vector<16x64xf32>
    %372 = arith.select %368, %370, %371 : vector<16x64xi1>, vector<16x64xf32>
    %373 = arith.addf %360, %372 : vector<16x64xf32>
    %cst_118 = arith.constant -1.000000e+30 : f32
    %374 = vector.shape_cast %44 : vector<1x64xi1> to vector<1x64xi1>
    %375 = vector.broadcast %374 : vector<1x64xi1> to vector<16x64xi1>
    %376 = vector.broadcast %cst_118 : f32 to vector<16x64xf32>
    %377 = arith.select %375, %346, %376 : vector<16x64xi1>, vector<16x64xf32>
    %cst_119 = arith.constant dense<0xFF800000> : vector<16xf32>
    %378 = vector.multi_reduction <maximumf>, %377, %cst_119 [1] : vector<16x64xf32> to vector<16xf32>
    %379 = vector.shape_cast %378 : vector<16xf32> to vector<16x1xf32>
    %cst_120 = arith.constant 0.000000e+00 : f32
    %380 = vector.shape_cast %44 : vector<1x64xi1> to vector<1x64xi1>
    %381 = vector.broadcast %380 : vector<1x64xi1> to vector<16x64xi1>
    %382 = vector.shape_cast %379 : vector<16x1xf32> to vector<16x1xf32>
    %383 = vector.broadcast %382 : vector<16x1xf32> to vector<16x64xf32>
    %384 = vector.broadcast %cst_120 : f32 to vector<16x64xf32>
    %385 = arith.select %381, %383, %384 : vector<16x64xi1>, vector<16x64xf32>
    %386 = arith.addf %373, %385 : vector<16x64xf32>
    %cst_121 = arith.constant -1.000000e+30 : f32
    %387 = vector.shape_cast %49 : vector<1x64xi1> to vector<1x64xi1>
    %388 = vector.broadcast %387 : vector<1x64xi1> to vector<16x64xi1>
    %389 = vector.broadcast %cst_121 : f32 to vector<16x64xf32>
    %390 = arith.select %388, %346, %389 : vector<16x64xi1>, vector<16x64xf32>
    %cst_122 = arith.constant dense<0xFF800000> : vector<16xf32>
    %391 = vector.multi_reduction <maximumf>, %390, %cst_122 [1] : vector<16x64xf32> to vector<16xf32>
    %392 = vector.shape_cast %391 : vector<16xf32> to vector<16x1xf32>
    %cst_123 = arith.constant 0.000000e+00 : f32
    %393 = vector.shape_cast %49 : vector<1x64xi1> to vector<1x64xi1>
    %394 = vector.broadcast %393 : vector<1x64xi1> to vector<16x64xi1>
    %395 = vector.shape_cast %392 : vector<16x1xf32> to vector<16x1xf32>
    %396 = vector.broadcast %395 : vector<16x1xf32> to vector<16x64xf32>
    %397 = vector.broadcast %cst_123 : f32 to vector<16x64xf32>
    %398 = arith.select %394, %396, %397 : vector<16x64xi1>, vector<16x64xf32>
    %399 = arith.addf %386, %398 : vector<16x64xf32>
    %400 = arith.subf %346, %399 : vector<16x64xf32>
    %401 = math.exp %400 : vector<16x64xf32>
    %cst_124 = arith.constant 0.000000e+00 : f32
    %402 = vector.broadcast %cst_124 : f32 to vector<16x64xf32>
    %cst_125 = arith.constant 0.000000e+00 : f32
    %403 = vector.shape_cast %34 : vector<1x64xi1> to vector<1x64xi1>
    %404 = vector.broadcast %403 : vector<1x64xi1> to vector<16x64xi1>
    %405 = vector.broadcast %cst_125 : f32 to vector<16x64xf32>
    %406 = arith.select %404, %401, %405 : vector<16x64xi1>, vector<16x64xf32>
    %cst_126 = arith.constant dense<0.000000e+00> : vector<16xf32>
    %407 = vector.multi_reduction <add>, %406, %cst_126 [1] : vector<16x64xf32> to vector<16xf32>
    %408 = vector.shape_cast %407 : vector<16xf32> to vector<16x1xf32>
    %409 = tpu.reciprocal %408 {approx = true} : vector<16x1xf32> -> vector<16x1xf32>
    %cst_127 = arith.constant 0.000000e+00 : f32
    %410 = vector.shape_cast %34 : vector<1x64xi1> to vector<1x64xi1>
    %411 = vector.broadcast %410 : vector<1x64xi1> to vector<16x64xi1>
    %412 = vector.shape_cast %409 : vector<16x1xf32> to vector<16x1xf32>
    %413 = vector.broadcast %412 : vector<16x1xf32> to vector<16x64xf32>
    %414 = vector.broadcast %cst_127 : f32 to vector<16x64xf32>
    %415 = arith.select %411, %413, %414 : vector<16x64xi1>, vector<16x64xf32>
    %416 = arith.addf %402, %415 : vector<16x64xf32>
    %cst_128 = arith.constant 0.000000e+00 : f32
    %417 = vector.shape_cast %39 : vector<1x64xi1> to vector<1x64xi1>
    %418 = vector.broadcast %417 : vector<1x64xi1> to vector<16x64xi1>
    %419 = vector.broadcast %cst_128 : f32 to vector<16x64xf32>
    %420 = arith.select %418, %401, %419 : vector<16x64xi1>, vector<16x64xf32>
    %cst_129 = arith.constant dense<0.000000e+00> : vector<16xf32>
    %421 = vector.multi_reduction <add>, %420, %cst_129 [1] : vector<16x64xf32> to vector<16xf32>
    %422 = vector.shape_cast %421 : vector<16xf32> to vector<16x1xf32>
    %423 = tpu.reciprocal %422 {approx = true} : vector<16x1xf32> -> vector<16x1xf32>
    %cst_130 = arith.constant 0.000000e+00 : f32
    %424 = vector.shape_cast %39 : vector<1x64xi1> to vector<1x64xi1>
    %425 = vector.broadcast %424 : vector<1x64xi1> to vector<16x64xi1>
    %426 = vector.shape_cast %423 : vector<16x1xf32> to vector<16x1xf32>
    %427 = vector.broadcast %426 : vector<16x1xf32> to vector<16x64xf32>
    %428 = vector.broadcast %cst_130 : f32 to vector<16x64xf32>
    %429 = arith.select %425, %427, %428 : vector<16x64xi1>, vector<16x64xf32>
    %430 = arith.addf %416, %429 : vector<16x64xf32>
    %cst_131 = arith.constant 0.000000e+00 : f32
    %431 = vector.shape_cast %44 : vector<1x64xi1> to vector<1x64xi1>
    %432 = vector.broadcast %431 : vector<1x64xi1> to vector<16x64xi1>
    %433 = vector.broadcast %cst_131 : f32 to vector<16x64xf32>
    %434 = arith.select %432, %401, %433 : vector<16x64xi1>, vector<16x64xf32>
    %cst_132 = arith.constant dense<0.000000e+00> : vector<16xf32>
    %435 = vector.multi_reduction <add>, %434, %cst_132 [1] : vector<16x64xf32> to vector<16xf32>
    %436 = vector.shape_cast %435 : vector<16xf32> to vector<16x1xf32>
    %437 = tpu.reciprocal %436 {approx = true} : vector<16x1xf32> -> vector<16x1xf32>
    %cst_133 = arith.constant 0.000000e+00 : f32
    %438 = vector.shape_cast %44 : vector<1x64xi1> to vector<1x64xi1>
    %439 = vector.broadcast %438 : vector<1x64xi1> to vector<16x64xi1>
    %440 = vector.shape_cast %437 : vector<16x1xf32> to vector<16x1xf32>
    %441 = vector.broadcast %440 : vector<16x1xf32> to vector<16x64xf32>
    %442 = vector.broadcast %cst_133 : f32 to vector<16x64xf32>
    %443 = arith.select %439, %441, %442 : vector<16x64xi1>, vector<16x64xf32>
    %444 = arith.addf %430, %443 : vector<16x64xf32>
    %cst_134 = arith.constant 0.000000e+00 : f32
    %445 = vector.shape_cast %49 : vector<1x64xi1> to vector<1x64xi1>
    %446 = vector.broadcast %445 : vector<1x64xi1> to vector<16x64xi1>
    %447 = vector.broadcast %cst_134 : f32 to vector<16x64xf32>
    %448 = arith.select %446, %401, %447 : vector<16x64xi1>, vector<16x64xf32>
    %cst_135 = arith.constant dense<0.000000e+00> : vector<16xf32>
    %449 = vector.multi_reduction <add>, %448, %cst_135 [1] : vector<16x64xf32> to vector<16xf32>
    %450 = vector.shape_cast %449 : vector<16xf32> to vector<16x1xf32>
    %451 = tpu.reciprocal %450 {approx = true} : vector<16x1xf32> -> vector<16x1xf32>
    %cst_136 = arith.constant 0.000000e+00 : f32
    %452 = vector.shape_cast %49 : vector<1x64xi1> to vector<1x64xi1>
    %453 = vector.broadcast %452 : vector<1x64xi1> to vector<16x64xi1>
    %454 = vector.shape_cast %451 : vector<16x1xf32> to vector<16x1xf32>
    %455 = vector.broadcast %454 : vector<16x1xf32> to vector<16x64xf32>
    %456 = vector.broadcast %cst_136 : f32 to vector<16x64xf32>
    %457 = arith.select %453, %455, %456 : vector<16x64xi1>, vector<16x64xf32>
    %458 = arith.addf %444, %457 : vector<16x64xf32>
    %459 = arith.mulf %401, %458 : vector<16x64xf32>
    %cst_137 = arith.constant dense<0.000000e+00> : vector<16x128xf32>
    %460 = tpu.matmul %459, %342, %cst_137 {dimension_numbers = #tpu.dot_dimension_numbers<[1], [0], [0], [1], [0, 0, 1, 1], [], []>} : vector<16x64xf32>, vector<64x128xf32>, vector<16x128xf32> -> vector<16x128xf32>
    %461 = arith.truncf %460 : vector<16x128xf32> to vector<16x128xbf16>
    %c1_138 = arith.constant 1 : index
    %c0_139 = arith.constant 0 : index
    %c0_140 = arith.constant 0 : index
    %462 = vector.load %arg6[%c1_138, %c0_139, %c0_140] : memref<2x128x128xbf16, #tpu.memory_space<vmem>>, vector<1x128x128xbf16>
    %463 = vector.shape_cast %462 : vector<1x128x128xbf16> to vector<128x128xbf16>
    %cst_141 = arith.constant dense<0.000000e+00> : vector<16x128xf32>
    %464 = tpu.matmul %461, %463, %cst_141 {dimension_numbers = #tpu.dot_dimension_numbers<[1], [0], [0], [1], [0, 0, 1, 1], [], []>} : vector<16x128xbf16>, vector<128x128xbf16>, vector<16x128xf32> -> vector<16x128xf32>
    %c1_142 = arith.constant 1 : index
    %c0_143 = arith.constant 0 : index
    %c0_144 = arith.constant 0 : index
    %465 = vector.load %arg7[%c1_142, %c0_143, %c0_144] : memref<2x1x128xf32, #tpu.memory_space<vmem>>, vector<1x1x128xf32>
    %466 = vector.shape_cast %465 : vector<1x1x128xf32> to vector<1x128xf32>
    %467 = vector.broadcast %466 : vector<1x128xf32> to vector<16x128xf32>
    %468 = arith.addf %464, %467 : vector<16x128xf32>
    %469 = arith.addf %313, %468 : vector<16x128xf32>
    %c1_145 = arith.constant 1 : index
    %c0_146 = arith.constant 0 : index
    %c0_147 = arith.constant 0 : index
    %470 = vector.load %arg8[%c1_145, %c0_146, %c0_147] : memref<2x1x128xf32, #tpu.memory_space<vmem>>, vector<1x1x128xf32>
    %471 = vector.shape_cast %470 : vector<1x1x128xf32> to vector<1x128xf32>
    %c1_148 = arith.constant 1 : index
    %c0_149 = arith.constant 0 : index
    %c0_150 = arith.constant 0 : index
    %472 = vector.load %arg9[%c1_148, %c0_149, %c0_150] : memref<2x1x128xf32, #tpu.memory_space<vmem>>, vector<1x1x128xf32>
    %473 = vector.shape_cast %472 : vector<1x1x128xf32> to vector<1x128xf32>
    %cst_151 = arith.constant dense<0.000000e+00> : vector<16xf32>
    %474 = vector.multi_reduction <add>, %469, %cst_151 [1] : vector<16x128xf32> to vector<16xf32>
    %475 = vector.shape_cast %474 : vector<16xf32> to vector<16x1xf32>
    %cst_152 = arith.constant 1.280000e+02 : f32
    %476 = vector.broadcast %cst_152 : f32 to vector<16x1xf32>
    %477 = arith.divf %475, %476 : vector<16x1xf32>
    %478 = vector.broadcast %477 : vector<16x1xf32> to vector<16x128xf32>
    %479 = arith.subf %469, %478 : vector<16x128xf32>
    %480 = arith.mulf %479, %479 : vector<16x128xf32>
    %cst_153 = arith.constant dense<0.000000e+00> : vector<16xf32>
    %481 = vector.multi_reduction <add>, %480, %cst_153 [1] : vector<16x128xf32> to vector<16xf32>
    %482 = vector.shape_cast %481 : vector<16xf32> to vector<16x1xf32>
    %cst_154 = arith.constant 1.280000e+02 : f32
    %483 = vector.broadcast %cst_154 : f32 to vector<16x1xf32>
    %484 = arith.divf %482, %483 : vector<16x1xf32>
    %485 = vector.broadcast %477 : vector<16x1xf32> to vector<16x128xf32>
    %486 = arith.subf %469, %485 : vector<16x128xf32>
    %cst_155 = arith.constant 9.99999974E-6 : f32
    %487 = vector.broadcast %cst_155 : f32 to vector<16x1xf32>
    %488 = arith.addf %484, %487 : vector<16x1xf32>
    %489 = math.rsqrt %488 : vector<16x1xf32>
    %490 = vector.broadcast %489 : vector<16x1xf32> to vector<16x128xf32>
    %491 = arith.mulf %486, %490 : vector<16x128xf32>
    %492 = vector.broadcast %471 : vector<1x128xf32> to vector<16x128xf32>
    %493 = arith.mulf %491, %492 : vector<16x128xf32>
    %494 = vector.broadcast %473 : vector<1x128xf32> to vector<16x128xf32>
    %495 = arith.addf %493, %494 : vector<16x128xf32>
    %496 = arith.truncf %495 : vector<16x128xf32> to vector<16x128xbf16>
    %c1_156 = arith.constant 1 : index
    %c0_157 = arith.constant 0 : index
    %c0_158 = arith.constant 0 : index
    %497 = vector.load %arg10[%c1_156, %c0_157, %c0_158] : memref<2x128x256xbf16, #tpu.memory_space<vmem>>, vector<1x128x256xbf16>
    %498 = vector.shape_cast %497 : vector<1x128x256xbf16> to vector<128x256xbf16>
    %cst_159 = arith.constant dense<0.000000e+00> : vector<16x256xf32>
    %499 = tpu.matmul %496, %498, %cst_159 {dimension_numbers = #tpu.dot_dimension_numbers<[1], [0], [0], [1], [0, 0, 1, 1], [], []>} : vector<16x128xbf16>, vector<128x256xbf16>, vector<16x256xf32> -> vector<16x256xf32>
    %c1_160 = arith.constant 1 : index
    %c0_161 = arith.constant 0 : index
    %c0_162 = arith.constant 0 : index
    %500 = vector.load %arg11[%c1_160, %c0_161, %c0_162] : memref<2x1x256xf32, #tpu.memory_space<vmem>>, vector<1x1x256xf32>
    %501 = vector.shape_cast %500 : vector<1x1x256xf32> to vector<1x256xf32>
    %502 = vector.broadcast %501 : vector<1x256xf32> to vector<16x256xf32>
    %503 = arith.addf %499, %502 : vector<16x256xf32>
    %cst_163 = arith.constant 5.000000e-01 : f32
    %504 = vector.broadcast %cst_163 : f32 to vector<16x256xf32>
    %505 = arith.mulf %504, %503 : vector<16x256xf32>
    %cst_164 = arith.constant 4.471500e-02 : f32
    %506 = vector.broadcast %cst_164 : f32 to vector<16x256xf32>
    %507 = arith.mulf %506, %503 : vector<16x256xf32>
    %508 = arith.mulf %507, %503 : vector<16x256xf32>
    %509 = arith.mulf %508, %503 : vector<16x256xf32>
    %510 = arith.addf %503, %509 : vector<16x256xf32>
    %cst_165 = arith.constant 0.797884583 : f32
    %511 = vector.broadcast %cst_165 : f32 to vector<16x256xf32>
    %512 = arith.mulf %511, %510 : vector<16x256xf32>
    %513 = math.tanh %512 : vector<16x256xf32>
    %cst_166 = arith.constant 1.000000e+00 : f32
    %514 = vector.broadcast %cst_166 : f32 to vector<16x256xf32>
    %515 = arith.addf %514, %513 : vector<16x256xf32>
    %516 = arith.mulf %505, %515 : vector<16x256xf32>
    %517 = arith.truncf %516 : vector<16x256xf32> to vector<16x256xbf16>
    %c1_167 = arith.constant 1 : index
    %c0_168 = arith.constant 0 : index
    %c0_169 = arith.constant 0 : index
    %518 = vector.load %arg12[%c1_167, %c0_168, %c0_169] : memref<2x256x128xbf16, #tpu.memory_space<vmem>>, vector<1x256x128xbf16>
    %519 = vector.shape_cast %518 : vector<1x256x128xbf16> to vector<256x128xbf16>
    %cst_170 = arith.constant dense<0.000000e+00> : vector<16x128xf32>
    %520 = tpu.matmul %517, %519, %cst_170 {dimension_numbers = #tpu.dot_dimension_numbers<[1], [0], [0], [1], [0, 0, 1, 1], [], []>} : vector<16x256xbf16>, vector<256x128xbf16>, vector<16x128xf32> -> vector<16x128xf32>
    %c1_171 = arith.constant 1 : index
    %c0_172 = arith.constant 0 : index
    %c0_173 = arith.constant 0 : index
    %521 = vector.load %arg13[%c1_171, %c0_172, %c0_173] : memref<2x1x128xf32, #tpu.memory_space<vmem>>, vector<1x1x128xf32>
    %522 = vector.shape_cast %521 : vector<1x1x128xf32> to vector<1x128xf32>
    %523 = vector.broadcast %522 : vector<1x128xf32> to vector<16x128xf32>
    %524 = arith.addf %520, %523 : vector<16x128xf32>
    %525 = arith.addf %495, %524 : vector<16x128xf32>
    %c1_174 = arith.constant 1 : index
    %c0_175 = arith.constant 0 : index
    %c0_176 = arith.constant 0 : index
    %526 = vector.load %arg14[%c1_174, %c0_175, %c0_176] : memref<2x1x128xf32, #tpu.memory_space<vmem>>, vector<1x1x128xf32>
    %527 = vector.shape_cast %526 : vector<1x1x128xf32> to vector<1x128xf32>
    %c1_177 = arith.constant 1 : index
    %c0_178 = arith.constant 0 : index
    %c0_179 = arith.constant 0 : index
    %528 = vector.load %arg15[%c1_177, %c0_178, %c0_179] : memref<2x1x128xf32, #tpu.memory_space<vmem>>, vector<1x1x128xf32>
    %529 = vector.shape_cast %528 : vector<1x1x128xf32> to vector<1x128xf32>
    %cst_180 = arith.constant dense<0.000000e+00> : vector<16xf32>
    %530 = vector.multi_reduction <add>, %525, %cst_180 [1] : vector<16x128xf32> to vector<16xf32>
    %531 = vector.shape_cast %530 : vector<16xf32> to vector<16x1xf32>
    %cst_181 = arith.constant 1.280000e+02 : f32
    %532 = vector.broadcast %cst_181 : f32 to vector<16x1xf32>
    %533 = arith.divf %531, %532 : vector<16x1xf32>
    %534 = vector.broadcast %533 : vector<16x1xf32> to vector<16x128xf32>
    %535 = arith.subf %525, %534 : vector<16x128xf32>
    %536 = arith.mulf %535, %535 : vector<16x128xf32>
    %cst_182 = arith.constant dense<0.000000e+00> : vector<16xf32>
    %537 = vector.multi_reduction <add>, %536, %cst_182 [1] : vector<16x128xf32> to vector<16xf32>
    %538 = vector.shape_cast %537 : vector<16xf32> to vector<16x1xf32>
    %cst_183 = arith.constant 1.280000e+02 : f32
    %539 = vector.broadcast %cst_183 : f32 to vector<16x1xf32>
    %540 = arith.divf %538, %539 : vector<16x1xf32>
    %541 = vector.broadcast %533 : vector<16x1xf32> to vector<16x128xf32>
    %542 = arith.subf %525, %541 : vector<16x128xf32>
    %cst_184 = arith.constant 9.99999974E-6 : f32
    %543 = vector.broadcast %cst_184 : f32 to vector<16x1xf32>
    %544 = arith.addf %540, %543 : vector<16x1xf32>
    %545 = math.rsqrt %544 : vector<16x1xf32>
    %546 = vector.broadcast %545 : vector<16x1xf32> to vector<16x128xf32>
    %547 = arith.mulf %542, %546 : vector<16x128xf32>
    %548 = vector.broadcast %527 : vector<1x128xf32> to vector<16x128xf32>
    %549 = arith.mulf %547, %548 : vector<16x128xf32>
    %550 = vector.broadcast %529 : vector<1x128xf32> to vector<16x128xf32>
    %551 = arith.addf %549, %550 : vector<16x128xf32>
    %c0_185 = arith.constant 0 : index
    %c0_186 = arith.constant 0 : index
    %552 = vector.load %arg16[%c0_185, %c0_186] : memref<16x128xf32, #tpu.memory_space<vmem>>, vector<16x128xf32>
    tpu.vector_store %arg16[%c0_185, %c0_186], %551 {strides = array<i32>} : memref<16x128xf32, #tpu.memory_space<vmem>>, vector<16x128xf32>,
    return
  }
}

module attributes {stable_mosaic.version = 11 : i64} {
  func.func @_decoder_kernel(%arg0: memref<16x128xf32, #tpu.memory_space<vmem>>, %arg1: memref<16x128xf32, #tpu.memory_space<vmem>>, %arg2: memref<16x1xi32, #tpu.memory_space<vmem>>, %arg3: memref<16x64xf32, #tpu.memory_space<vmem>>, %arg4: memref<16x64xf32, #tpu.memory_space<vmem>>, %arg5: memref<1x128xf32, #tpu.memory_space<vmem>>, %arg6: memref<1x128xf32, #tpu.memory_space<vmem>>, %arg7: memref<2x128x384xbf16, #tpu.memory_space<vmem>>, %arg8: memref<2x1x384xf32, #tpu.memory_space<vmem>>, %arg9: memref<2x128x128xbf16, #tpu.memory_space<vmem>>, %arg10: memref<2x1x128xf32, #tpu.memory_space<vmem>>, %arg11: memref<2x1x128xf32, #tpu.memory_space<vmem>>, %arg12: memref<2x1x128xf32, #tpu.memory_space<vmem>>, %arg13: memref<2x128x128xbf16, #tpu.memory_space<vmem>>, %arg14: memref<2x1x128xf32, #tpu.memory_space<vmem>>, %arg15: memref<2x128x256xbf16, #tpu.memory_space<vmem>>, %arg16: memref<2x1x256xf32, #tpu.memory_space<vmem>>, %arg17: memref<2x128x128xbf16, #tpu.memory_space<vmem>>, %arg18: memref<2x1x128xf32, #tpu.memory_space<vmem>>, %arg19: memref<2x1x128xf32, #tpu.memory_space<vmem>>, %arg20: memref<2x1x128xf32, #tpu.memory_space<vmem>>, %arg21: memref<2x128x256xbf16, #tpu.memory_space<vmem>>, %arg22: memref<2x1x256xf32, #tpu.memory_space<vmem>>, %arg23: memref<2x256x128xbf16, #tpu.memory_space<vmem>>, %arg24: memref<2x1x128xf32, #tpu.memory_space<vmem>>, %arg25: memref<2x1x128xf32, #tpu.memory_space<vmem>>, %arg26: memref<2x1x128xf32, #tpu.memory_space<vmem>>, %arg27: memref<128x128xbf16, #tpu.memory_space<vmem>>, %arg28: memref<1x128xf32, #tpu.memory_space<vmem>>, %arg29: memref<16x128xf32, #tpu.memory_space<vmem>>, %arg30: memref<16x128xf32, #tpu.memory_space<vmem>>, %arg31: memref<1x128xf32, #tpu.memory_space<vmem>>) attributes {dimension_semantics = [], scalar_prefetch = 0 : i64, scratch_operands = 0 : i64, tpu.core_type = #tpu.core_type<tc>} {
    %0 = tpu.iota {dimensions = array<i32: 1>} : vector<1x128xi32>
    %c0_i32 = arith.constant 0 : i32
    %1 = vector.broadcast %c0_i32 : i32 to vector<1x128xi32>
    %2 = arith.cmpi sge, %0, %1 : vector<1x128xi32>
    %c32_i32 = arith.constant 32 : i32
    %3 = vector.broadcast %c32_i32 : i32 to vector<1x128xi32>
    %4 = arith.cmpi slt, %0, %3 : vector<1x128xi32>
    %5 = arith.andi %2, %4 : vector<1x128xi1>
    %6 = arith.extui %5 : vector<1x128xi1> to vector<1x128xi32>
    %7 = arith.sitofp %6 : vector<1x128xi32> to vector<1x128xf32>
    %c32_i32_0 = arith.constant 32 : i32
    %8 = vector.broadcast %c32_i32_0 : i32 to vector<1x128xi32>
    %9 = arith.cmpi sge, %0, %8 : vector<1x128xi32>
    %c64_i32 = arith.constant 64 : i32
    %10 = vector.broadcast %c64_i32 : i32 to vector<1x128xi32>
    %11 = arith.cmpi slt, %0, %10 : vector<1x128xi32>
    %12 = arith.andi %9, %11 : vector<1x128xi1>
    %13 = arith.extui %12 : vector<1x128xi1> to vector<1x128xi32>
    %14 = arith.sitofp %13 : vector<1x128xi32> to vector<1x128xf32>
    %c64_i32_1 = arith.constant 64 : i32
    %15 = vector.broadcast %c64_i32_1 : i32 to vector<1x128xi32>
    %16 = arith.cmpi sge, %0, %15 : vector<1x128xi32>
    %c96_i32 = arith.constant 96 : i32
    %17 = vector.broadcast %c96_i32 : i32 to vector<1x128xi32>
    %18 = arith.cmpi slt, %0, %17 : vector<1x128xi32>
    %19 = arith.andi %16, %18 : vector<1x128xi1>
    %20 = arith.extui %19 : vector<1x128xi1> to vector<1x128xi32>
    %21 = arith.sitofp %20 : vector<1x128xi32> to vector<1x128xf32>
    %c96_i32_2 = arith.constant 96 : i32
    %22 = vector.broadcast %c96_i32_2 : i32 to vector<1x128xi32>
    %23 = arith.cmpi sge, %0, %22 : vector<1x128xi32>
    %c128_i32 = arith.constant 128 : i32
    %24 = vector.broadcast %c128_i32 : i32 to vector<1x128xi32>
    %25 = arith.cmpi slt, %0, %24 : vector<1x128xi32>
    %26 = arith.andi %23, %25 : vector<1x128xi1>
    %27 = arith.extui %26 : vector<1x128xi1> to vector<1x128xi32>
    %28 = arith.sitofp %27 : vector<1x128xi32> to vector<1x128xf32>
    %29 = tpu.iota {dimensions = array<i32: 1>} : vector<1x64xi32>
    %c0_i32_3 = arith.constant 0 : i32
    %30 = vector.broadcast %c0_i32_3 : i32 to vector<1x64xi32>
    %31 = arith.cmpi sge, %29, %30 : vector<1x64xi32>
    %c16_i32 = arith.constant 16 : i32
    %32 = vector.broadcast %c16_i32 : i32 to vector<1x64xi32>
    %33 = arith.cmpi slt, %29, %32 : vector<1x64xi32>
    %34 = arith.andi %31, %33 : vector<1x64xi1>
    %c16_i32_4 = arith.constant 16 : i32
    %35 = vector.broadcast %c16_i32_4 : i32 to vector<1x64xi32>
    %36 = arith.cmpi sge, %29, %35 : vector<1x64xi32>
    %c32_i32_5 = arith.constant 32 : i32
    %37 = vector.broadcast %c32_i32_5 : i32 to vector<1x64xi32>
    %38 = arith.cmpi slt, %29, %37 : vector<1x64xi32>
    %39 = arith.andi %36, %38 : vector<1x64xi1>
    %c32_i32_6 = arith.constant 32 : i32
    %40 = vector.broadcast %c32_i32_6 : i32 to vector<1x64xi32>
    %41 = arith.cmpi sge, %29, %40 : vector<1x64xi32>
    %c48_i32 = arith.constant 48 : i32
    %42 = vector.broadcast %c48_i32 : i32 to vector<1x64xi32>
    %43 = arith.cmpi slt, %29, %42 : vector<1x64xi32>
    %44 = arith.andi %41, %43 : vector<1x64xi1>
    %c48_i32_7 = arith.constant 48 : i32
    %45 = vector.broadcast %c48_i32_7 : i32 to vector<1x64xi32>
    %46 = arith.cmpi sge, %29, %45 : vector<1x64xi32>
    %c64_i32_8 = arith.constant 64 : i32
    %47 = vector.broadcast %c64_i32_8 : i32 to vector<1x64xi32>
    %48 = arith.cmpi slt, %29, %47 : vector<1x64xi32>
    %49 = arith.andi %46, %48 : vector<1x64xi1>
    %50 = tpu.iota {dimensions = array<i32: 1>} : vector<1x64xi32>
    %c0_i32_9 = arith.constant 0 : i32
    %51 = vector.broadcast %c0_i32_9 : i32 to vector<1x64xi32>
    %52 = arith.cmpi sge, %50, %51 : vector<1x64xi32>
    %c16_i32_10 = arith.constant 16 : i32
    %53 = vector.broadcast %c16_i32_10 : i32 to vector<1x64xi32>
    %54 = arith.cmpi slt, %50, %53 : vector<1x64xi32>
    %55 = arith.andi %52, %54 : vector<1x64xi1>
    %c16_i32_11 = arith.constant 16 : i32
    %56 = vector.broadcast %c16_i32_11 : i32 to vector<1x64xi32>
    %57 = arith.cmpi sge, %50, %56 : vector<1x64xi32>
    %c32_i32_12 = arith.constant 32 : i32
    %58 = vector.broadcast %c32_i32_12 : i32 to vector<1x64xi32>
    %59 = arith.cmpi slt, %50, %58 : vector<1x64xi32>
    %60 = arith.andi %57, %59 : vector<1x64xi1>
    %c32_i32_13 = arith.constant 32 : i32
    %61 = vector.broadcast %c32_i32_13 : i32 to vector<1x64xi32>
    %62 = arith.cmpi sge, %50, %61 : vector<1x64xi32>
    %c48_i32_14 = arith.constant 48 : i32
    %63 = vector.broadcast %c48_i32_14 : i32 to vector<1x64xi32>
    %64 = arith.cmpi slt, %50, %63 : vector<1x64xi32>
    %65 = arith.andi %62, %64 : vector<1x64xi1>
    %c48_i32_15 = arith.constant 48 : i32
    %66 = vector.broadcast %c48_i32_15 : i32 to vector<1x64xi32>
    %67 = arith.cmpi sge, %50, %66 : vector<1x64xi32>
    %c64_i32_16 = arith.constant 64 : i32
    %68 = vector.broadcast %c64_i32_16 : i32 to vector<1x64xi32>
    %69 = arith.cmpi slt, %50, %68 : vector<1x64xi32>
    %70 = arith.andi %67, %69 : vector<1x64xi1>
    %c0 = arith.constant 0 : index
    %c0_17 = arith.constant 0 : index
    %71 = vector.load %arg3[%c0, %c0_17] : memref<16x64xf32, #tpu.memory_space<vmem>>, vector<16x64xf32>
    %c0_18 = arith.constant 0 : index
    %c0_19 = arith.constant 0 : index
    %72 = vector.load %arg4[%c0_18, %c0_19] : memref<16x64xf32, #tpu.memory_space<vmem>>, vector<16x64xf32>
    %c0_20 = arith.constant 0 : index
    %c0_21 = arith.constant 0 : index
    %73 = vector.load %arg1[%c0_20, %c0_21] : memref<16x128xf32, #tpu.memory_space<vmem>>, vector<16x128xf32>
    %74 = arith.truncf %73 : vector<16x128xf32> to vector<16x128xbf16>
    %c0_22 = arith.constant 0 : index
    %c0_23 = arith.constant 0 : index
    %75 = vector.load %arg0[%c0_22, %c0_23] : memref<16x128xf32, #tpu.memory_space<vmem>>, vector<16x128xf32>
    %c0_24 = arith.constant 0 : index
    %c0_25 = arith.constant 0 : index
    %76 = vector.load %arg5[%c0_24, %c0_25] : memref<1x128xf32, #tpu.memory_space<vmem>>, vector<1x128xf32>
    %c0_26 = arith.constant 0 : index
    %c0_27 = arith.constant 0 : index
    %77 = vector.load %arg6[%c0_26, %c0_27] : memref<1x128xf32, #tpu.memory_space<vmem>>, vector<1x128xf32>
    %cst = arith.constant dense<0.000000e+00> : vector<16xf32>
    %78 = vector.multi_reduction <add>, %75, %cst [1] : vector<16x128xf32> to vector<16xf32>
    %79 = vector.shape_cast %78 : vector<16xf32> to vector<16x1xf32>
    %cst_28 = arith.constant 1.280000e+02 : f32
    %80 = vector.broadcast %cst_28 : f32 to vector<16x1xf32>
    %81 = arith.divf %79, %80 : vector<16x1xf32>
    %82 = vector.broadcast %81 : vector<16x1xf32> to vector<16x128xf32>
    %83 = arith.subf %75, %82 : vector<16x128xf32>
    %84 = arith.mulf %83, %83 : vector<16x128xf32>
    %cst_29 = arith.constant dense<0.000000e+00> : vector<16xf32>
    %85 = vector.multi_reduction <add>, %84, %cst_29 [1] : vector<16x128xf32> to vector<16xf32>
    %86 = vector.shape_cast %85 : vector<16xf32> to vector<16x1xf32>
    %cst_30 = arith.constant 1.280000e+02 : f32
    %87 = vector.broadcast %cst_30 : f32 to vector<16x1xf32>
    %88 = arith.divf %86, %87 : vector<16x1xf32>
    %89 = vector.broadcast %81 : vector<16x1xf32> to vector<16x128xf32>
    %90 = arith.subf %75, %89 : vector<16x128xf32>
    %cst_31 = arith.constant 9.99999974E-6 : f32
    %91 = vector.broadcast %cst_31 : f32 to vector<16x1xf32>
    %92 = arith.addf %88, %91 : vector<16x1xf32>
    %93 = math.rsqrt %92 : vector<16x1xf32>
    %94 = vector.broadcast %93 : vector<16x1xf32> to vector<16x128xf32>
    %95 = arith.mulf %90, %94 : vector<16x128xf32>
    %96 = vector.broadcast %76 : vector<1x128xf32> to vector<16x128xf32>
    %97 = arith.mulf %95, %96 : vector<16x128xf32>
    %98 = vector.broadcast %77 : vector<1x128xf32> to vector<16x128xf32>
    %99 = arith.addf %97, %98 : vector<16x128xf32>
    %100 = arith.truncf %99 : vector<16x128xf32> to vector<16x128xbf16>
    %c0_32 = arith.constant 0 : index
    %c0_33 = arith.constant 0 : index
    %c0_34 = arith.constant 0 : index
    %101 = vector.load %arg7[%c0_32, %c0_33, %c0_34] : memref<2x128x384xbf16, #tpu.memory_space<vmem>>, vector<1x128x384xbf16>
    %102 = vector.shape_cast %101 : vector<1x128x384xbf16> to vector<128x384xbf16>
    %cst_35 = arith.constant dense<0.000000e+00> : vector<16x384xf32>
    %103 = tpu.matmul %100, %102, %cst_35 {dimension_numbers = #tpu.dot_dimension_numbers<[1], [0], [0], [1], [0, 0, 1, 1], [], []>} : vector<16x128xbf16>, vector<128x384xbf16>, vector<16x384xf32> -> vector<16x384xf32>
    %c0_36 = arith.constant 0 : index
    %c0_37 = arith.constant 0 : index
    %c0_38 = arith.constant 0 : index
    %104 = vector.load %arg8[%c0_36, %c0_37, %c0_38] : memref<2x1x384xf32, #tpu.memory_space<vmem>>, vector<1x1x384xf32>
    %105 = vector.shape_cast %104 : vector<1x1x384xf32> to vector<1x384xf32>
    %106 = vector.broadcast %105 : vector<1x384xf32> to vector<16x384xf32>
    %107 = arith.addf %103, %106 : vector<16x384xf32>
    %108 = vector.extract_strided_slice %107 {offsets = [0, 0], sizes = [16, 128], strides = [1, 1]} : vector<16x384xf32> to vector<16x128xf32>
    %109 = vector.extract_strided_slice %107 {offsets = [0, 128], sizes = [16, 128], strides = [1, 1]} : vector<16x384xf32> to vector<16x128xf32>
    %110 = vector.extract_strided_slice %107 {offsets = [0, 256], sizes = [16, 128], strides = [1, 1]} : vector<16x384xf32> to vector<16x128xf32>
    %111 = vector.broadcast %7 : vector<1x128xf32> to vector<16x128xf32>
    %112 = arith.mulf %109, %111 : vector<16x128xf32>
    %113 = vector.broadcast %14 : vector<1x128xf32> to vector<16x128xf32>
    %114 = arith.mulf %109, %113 : vector<16x128xf32>
    %115 = vector.broadcast %21 : vector<1x128xf32> to vector<16x128xf32>
    %116 = arith.mulf %109, %115 : vector<16x128xf32>
    %117 = vector.broadcast %28 : vector<1x128xf32> to vector<16x128xf32>
    %118 = arith.mulf %109, %117 : vector<16x128xf32>
    %119 = tpu.concatenate %112, %114, %116, %118 in 0 : vector<16x128xf32>, vector<16x128xf32>, vector<16x128xf32>, vector<16x128xf32> -> vector<64x128xf32>
    %120 = vector.broadcast %7 : vector<1x128xf32> to vector<16x128xf32>
    %121 = arith.mulf %110, %120 : vector<16x128xf32>
    %122 = vector.broadcast %14 : vector<1x128xf32> to vector<16x128xf32>
    %123 = arith.mulf %110, %122 : vector<16x128xf32>
    %124 = vector.broadcast %21 : vector<1x128xf32> to vector<16x128xf32>
    %125 = arith.mulf %110, %124 : vector<16x128xf32>
    %126 = vector.broadcast %28 : vector<1x128xf32> to vector<16x128xf32>
    %127 = arith.mulf %110, %126 : vector<16x128xf32>
    %128 = tpu.concatenate %121, %123, %125, %127 in 0 : vector<16x128xf32>, vector<16x128xf32>, vector<16x128xf32>, vector<16x128xf32> -> vector<64x128xf32>
    %cst_39 = arith.constant dense<0.000000e+00> : vector<16x64xf32>
    %129 = tpu.matmul %108, %119, %cst_39 {dimension_numbers = #tpu.dot_dimension_numbers<[1], [1], [0], [0], [0, 0, 1, 0], [], []>} : vector<16x128xf32>, vector<64x128xf32>, vector<16x64xf32> -> vector<16x64xf32>
    %cst_40 = arith.constant 0.176776692 : f32
    %130 = vector.broadcast %cst_40 : f32 to vector<16x64xf32>
    %131 = arith.mulf %129, %130 : vector<16x64xf32>
    %132 = arith.addf %131, %71 : vector<16x64xf32>
    %cst_41 = arith.constant 0.000000e+00 : f32
    %133 = vector.broadcast %cst_41 : f32 to vector<16x64xf32>
    %cst_42 = arith.constant -1.000000e+30 : f32
    %134 = vector.shape_cast %34 : vector<1x64xi1> to vector<1x64xi1>
    %135 = vector.broadcast %134 : vector<1x64xi1> to vector<16x64xi1>
    %136 = vector.broadcast %cst_42 : f32 to vector<16x64xf32>
    %137 = arith.select %135, %132, %136 : vector<16x64xi1>, vector<16x64xf32>
    %cst_43 = arith.constant dense<0xFF800000> : vector<16xf32>
    %138 = vector.multi_reduction <maximumf>, %137, %cst_43 [1] : vector<16x64xf32> to vector<16xf32>
    %139 = vector.shape_cast %138 : vector<16xf32> to vector<16x1xf32>
    %cst_44 = arith.constant 0.000000e+00 : f32
    %140 = vector.shape_cast %34 : vector<1x64xi1> to vector<1x64xi1>
    %141 = vector.broadcast %140 : vector<1x64xi1> to vector<16x64xi1>
    %142 = vector.shape_cast %139 : vector<16x1xf32> to vector<16x1xf32>
    %143 = vector.broadcast %142 : vector<16x1xf32> to vector<16x64xf32>
    %144 = vector.broadcast %cst_44 : f32 to vector<16x64xf32>
    %145 = arith.select %141, %143, %144 : vector<16x64xi1>, vector<16x64xf32>
    %146 = arith.addf %133, %145 : vector<16x64xf32>
    %cst_45 = arith.constant -1.000000e+30 : f32
    %147 = vector.shape_cast %39 : vector<1x64xi1> to vector<1x64xi1>
    %148 = vector.broadcast %147 : vector<1x64xi1> to vector<16x64xi1>
    %149 = vector.broadcast %cst_45 : f32 to vector<16x64xf32>
    %150 = arith.select %148, %132, %149 : vector<16x64xi1>, vector<16x64xf32>
    %cst_46 = arith.constant dense<0xFF800000> : vector<16xf32>
    %151 = vector.multi_reduction <maximumf>, %150, %cst_46 [1] : vector<16x64xf32> to vector<16xf32>
    %152 = vector.shape_cast %151 : vector<16xf32> to vector<16x1xf32>
    %cst_47 = arith.constant 0.000000e+00 : f32
    %153 = vector.shape_cast %39 : vector<1x64xi1> to vector<1x64xi1>
    %154 = vector.broadcast %153 : vector<1x64xi1> to vector<16x64xi1>
    %155 = vector.shape_cast %152 : vector<16x1xf32> to vector<16x1xf32>
    %156 = vector.broadcast %155 : vector<16x1xf32> to vector<16x64xf32>
    %157 = vector.broadcast %cst_47 : f32 to vector<16x64xf32>
    %158 = arith.select %154, %156, %157 : vector<16x64xi1>, vector<16x64xf32>
    %159 = arith.addf %146, %158 : vector<16x64xf32>
    %cst_48 = arith.constant -1.000000e+30 : f32
    %160 = vector.shape_cast %44 : vector<1x64xi1> to vector<1x64xi1>
    %161 = vector.broadcast %160 : vector<1x64xi1> to vector<16x64xi1>
    %162 = vector.broadcast %cst_48 : f32 to vector<16x64xf32>
    %163 = arith.select %161, %132, %162 : vector<16x64xi1>, vector<16x64xf32>
    %cst_49 = arith.constant dense<0xFF800000> : vector<16xf32>
    %164 = vector.multi_reduction <maximumf>, %163, %cst_49 [1] : vector<16x64xf32> to vector<16xf32>
    %165 = vector.shape_cast %164 : vector<16xf32> to vector<16x1xf32>
    %cst_50 = arith.constant 0.000000e+00 : f32
    %166 = vector.shape_cast %44 : vector<1x64xi1> to vector<1x64xi1>
    %167 = vector.broadcast %166 : vector<1x64xi1> to vector<16x64xi1>
    %168 = vector.shape_cast %165 : vector<16x1xf32> to vector<16x1xf32>
    %169 = vector.broadcast %168 : vector<16x1xf32> to vector<16x64xf32>
    %170 = vector.broadcast %cst_50 : f32 to vector<16x64xf32>
    %171 = arith.select %167, %169, %170 : vector<16x64xi1>, vector<16x64xf32>
    %172 = arith.addf %159, %171 : vector<16x64xf32>
    %cst_51 = arith.constant -1.000000e+30 : f32
    %173 = vector.shape_cast %49 : vector<1x64xi1> to vector<1x64xi1>
    %174 = vector.broadcast %173 : vector<1x64xi1> to vector<16x64xi1>
    %175 = vector.broadcast %cst_51 : f32 to vector<16x64xf32>
    %176 = arith.select %174, %132, %175 : vector<16x64xi1>, vector<16x64xf32>
    %cst_52 = arith.constant dense<0xFF800000> : vector<16xf32>
    %177 = vector.multi_reduction <maximumf>, %176, %cst_52 [1] : vector<16x64xf32> to vector<16xf32>
    %178 = vector.shape_cast %177 : vector<16xf32> to vector<16x1xf32>
    %cst_53 = arith.constant 0.000000e+00 : f32
    %179 = vector.shape_cast %49 : vector<1x64xi1> to vector<1x64xi1>
    %180 = vector.broadcast %179 : vector<1x64xi1> to vector<16x64xi1>
    %181 = vector.shape_cast %178 : vector<16x1xf32> to vector<16x1xf32>
    %182 = vector.broadcast %181 : vector<16x1xf32> to vector<16x64xf32>
    %183 = vector.broadcast %cst_53 : f32 to vector<16x64xf32>
    %184 = arith.select %180, %182, %183 : vector<16x64xi1>, vector<16x64xf32>
    %185 = arith.addf %172, %184 : vector<16x64xf32>
    %186 = arith.subf %132, %185 : vector<16x64xf32>
    %187 = math.exp %186 : vector<16x64xf32>
    %cst_54 = arith.constant 0.000000e+00 : f32
    %188 = vector.broadcast %cst_54 : f32 to vector<16x64xf32>
    %cst_55 = arith.constant 0.000000e+00 : f32
    %189 = vector.shape_cast %34 : vector<1x64xi1> to vector<1x64xi1>
    %190 = vector.broadcast %189 : vector<1x64xi1> to vector<16x64xi1>
    %191 = vector.broadcast %cst_55 : f32 to vector<16x64xf32>
    %192 = arith.select %190, %187, %191 : vector<16x64xi1>, vector<16x64xf32>
    %cst_56 = arith.constant dense<0.000000e+00> : vector<16xf32>
    %193 = vector.multi_reduction <add>, %192, %cst_56 [1] : vector<16x64xf32> to vector<16xf32>
    %194 = vector.shape_cast %193 : vector<16xf32> to vector<16x1xf32>
    %195 = tpu.reciprocal %194 {approx = true} : vector<16x1xf32> -> vector<16x1xf32>
    %cst_57 = arith.constant 0.000000e+00 : f32
    %196 = vector.shape_cast %34 : vector<1x64xi1> to vector<1x64xi1>
    %197 = vector.broadcast %196 : vector<1x64xi1> to vector<16x64xi1>
    %198 = vector.shape_cast %195 : vector<16x1xf32> to vector<16x1xf32>
    %199 = vector.broadcast %198 : vector<16x1xf32> to vector<16x64xf32>
    %200 = vector.broadcast %cst_57 : f32 to vector<16x64xf32>
    %201 = arith.select %197, %199, %200 : vector<16x64xi1>, vector<16x64xf32>
    %202 = arith.addf %188, %201 : vector<16x64xf32>
    %cst_58 = arith.constant 0.000000e+00 : f32
    %203 = vector.shape_cast %39 : vector<1x64xi1> to vector<1x64xi1>
    %204 = vector.broadcast %203 : vector<1x64xi1> to vector<16x64xi1>
    %205 = vector.broadcast %cst_58 : f32 to vector<16x64xf32>
    %206 = arith.select %204, %187, %205 : vector<16x64xi1>, vector<16x64xf32>
    %cst_59 = arith.constant dense<0.000000e+00> : vector<16xf32>
    %207 = vector.multi_reduction <add>, %206, %cst_59 [1] : vector<16x64xf32> to vector<16xf32>
    %208 = vector.shape_cast %207 : vector<16xf32> to vector<16x1xf32>
    %209 = tpu.reciprocal %208 {approx = true} : vector<16x1xf32> -> vector<16x1xf32>
    %cst_60 = arith.constant 0.000000e+00 : f32
    %210 = vector.shape_cast %39 : vector<1x64xi1> to vector<1x64xi1>
    %211 = vector.broadcast %210 : vector<1x64xi1> to vector<16x64xi1>
    %212 = vector.shape_cast %209 : vector<16x1xf32> to vector<16x1xf32>
    %213 = vector.broadcast %212 : vector<16x1xf32> to vector<16x64xf32>
    %214 = vector.broadcast %cst_60 : f32 to vector<16x64xf32>
    %215 = arith.select %211, %213, %214 : vector<16x64xi1>, vector<16x64xf32>
    %216 = arith.addf %202, %215 : vector<16x64xf32>
    %cst_61 = arith.constant 0.000000e+00 : f32
    %217 = vector.shape_cast %44 : vector<1x64xi1> to vector<1x64xi1>
    %218 = vector.broadcast %217 : vector<1x64xi1> to vector<16x64xi1>
    %219 = vector.broadcast %cst_61 : f32 to vector<16x64xf32>
    %220 = arith.select %218, %187, %219 : vector<16x64xi1>, vector<16x64xf32>
    %cst_62 = arith.constant dense<0.000000e+00> : vector<16xf32>
    %221 = vector.multi_reduction <add>, %220, %cst_62 [1] : vector<16x64xf32> to vector<16xf32>
    %222 = vector.shape_cast %221 : vector<16xf32> to vector<16x1xf32>
    %223 = tpu.reciprocal %222 {approx = true} : vector<16x1xf32> -> vector<16x1xf32>
    %cst_63 = arith.constant 0.000000e+00 : f32
    %224 = vector.shape_cast %44 : vector<1x64xi1> to vector<1x64xi1>
    %225 = vector.broadcast %224 : vector<1x64xi1> to vector<16x64xi1>
    %226 = vector.shape_cast %223 : vector<16x1xf32> to vector<16x1xf32>
    %227 = vector.broadcast %226 : vector<16x1xf32> to vector<16x64xf32>
    %228 = vector.broadcast %cst_63 : f32 to vector<16x64xf32>
    %229 = arith.select %225, %227, %228 : vector<16x64xi1>, vector<16x64xf32>
    %230 = arith.addf %216, %229 : vector<16x64xf32>
    %cst_64 = arith.constant 0.000000e+00 : f32
    %231 = vector.shape_cast %49 : vector<1x64xi1> to vector<1x64xi1>
    %232 = vector.broadcast %231 : vector<1x64xi1> to vector<16x64xi1>
    %233 = vector.broadcast %cst_64 : f32 to vector<16x64xf32>
    %234 = arith.select %232, %187, %233 : vector<16x64xi1>, vector<16x64xf32>
    %cst_65 = arith.constant dense<0.000000e+00> : vector<16xf32>
    %235 = vector.multi_reduction <add>, %234, %cst_65 [1] : vector<16x64xf32> to vector<16xf32>
    %236 = vector.shape_cast %235 : vector<16xf32> to vector<16x1xf32>
    %237 = tpu.reciprocal %236 {approx = true} : vector<16x1xf32> -> vector<16x1xf32>
    %cst_66 = arith.constant 0.000000e+00 : f32
    %238 = vector.shape_cast %49 : vector<1x64xi1> to vector<1x64xi1>
    %239 = vector.broadcast %238 : vector<1x64xi1> to vector<16x64xi1>
    %240 = vector.shape_cast %237 : vector<16x1xf32> to vector<16x1xf32>
    %241 = vector.broadcast %240 : vector<16x1xf32> to vector<16x64xf32>
    %242 = vector.broadcast %cst_66 : f32 to vector<16x64xf32>
    %243 = arith.select %239, %241, %242 : vector<16x64xi1>, vector<16x64xf32>
    %244 = arith.addf %230, %243 : vector<16x64xf32>
    %245 = arith.mulf %187, %244 : vector<16x64xf32>
    %cst_67 = arith.constant dense<0.000000e+00> : vector<16x128xf32>
    %246 = tpu.matmul %245, %128, %cst_67 {dimension_numbers = #tpu.dot_dimension_numbers<[1], [0], [0], [1], [0, 0, 1, 1], [], []>} : vector<16x64xf32>, vector<64x128xf32>, vector<16x128xf32> -> vector<16x128xf32>
    %247 = arith.truncf %246 : vector<16x128xf32> to vector<16x128xbf16>
    %c0_68 = arith.constant 0 : index
    %c0_69 = arith.constant 0 : index
    %c0_70 = arith.constant 0 : index
    %248 = vector.load %arg9[%c0_68, %c0_69, %c0_70] : memref<2x128x128xbf16, #tpu.memory_space<vmem>>, vector<1x128x128xbf16>
    %249 = vector.shape_cast %248 : vector<1x128x128xbf16> to vector<128x128xbf16>
    %cst_71 = arith.constant dense<0.000000e+00> : vector<16x128xf32>
    %250 = tpu.matmul %247, %249, %cst_71 {dimension_numbers = #tpu.dot_dimension_numbers<[1], [0], [0], [1], [0, 0, 1, 1], [], []>} : vector<16x128xbf16>, vector<128x128xbf16>, vector<16x128xf32> -> vector<16x128xf32>
    %c0_72 = arith.constant 0 : index
    %c0_73 = arith.constant 0 : index
    %c0_74 = arith.constant 0 : index
    %251 = vector.load %arg10[%c0_72, %c0_73, %c0_74] : memref<2x1x128xf32, #tpu.memory_space<vmem>>, vector<1x1x128xf32>
    %252 = vector.shape_cast %251 : vector<1x1x128xf32> to vector<1x128xf32>
    %253 = vector.broadcast %252 : vector<1x128xf32> to vector<16x128xf32>
    %254 = arith.addf %250, %253 : vector<16x128xf32>
    %255 = arith.addf %99, %254 : vector<16x128xf32>
    %c0_75 = arith.constant 0 : index
    %c0_76 = arith.constant 0 : index
    %c0_77 = arith.constant 0 : index
    %256 = vector.load %arg11[%c0_75, %c0_76, %c0_77] : memref<2x1x128xf32, #tpu.memory_space<vmem>>, vector<1x1x128xf32>
    %257 = vector.shape_cast %256 : vector<1x1x128xf32> to vector<1x128xf32>
    %c0_78 = arith.constant 0 : index
    %c0_79 = arith.constant 0 : index
    %c0_80 = arith.constant 0 : index
    %258 = vector.load %arg12[%c0_78, %c0_79, %c0_80] : memref<2x1x128xf32, #tpu.memory_space<vmem>>, vector<1x1x128xf32>
    %259 = vector.shape_cast %258 : vector<1x1x128xf32> to vector<1x128xf32>
    %cst_81 = arith.constant dense<0.000000e+00> : vector<16xf32>
    %260 = vector.multi_reduction <add>, %255, %cst_81 [1] : vector<16x128xf32> to vector<16xf32>
    %261 = vector.shape_cast %260 : vector<16xf32> to vector<16x1xf32>
    %cst_82 = arith.constant 1.280000e+02 : f32
    %262 = vector.broadcast %cst_82 : f32 to vector<16x1xf32>
    %263 = arith.divf %261, %262 : vector<16x1xf32>
    %264 = vector.broadcast %263 : vector<16x1xf32> to vector<16x128xf32>
    %265 = arith.subf %255, %264 : vector<16x128xf32>
    %266 = arith.mulf %265, %265 : vector<16x128xf32>
    %cst_83 = arith.constant dense<0.000000e+00> : vector<16xf32>
    %267 = vector.multi_reduction <add>, %266, %cst_83 [1] : vector<16x128xf32> to vector<16xf32>
    %268 = vector.shape_cast %267 : vector<16xf32> to vector<16x1xf32>
    %cst_84 = arith.constant 1.280000e+02 : f32
    %269 = vector.broadcast %cst_84 : f32 to vector<16x1xf32>
    %270 = arith.divf %268, %269 : vector<16x1xf32>
    %271 = vector.broadcast %263 : vector<16x1xf32> to vector<16x128xf32>
    %272 = arith.subf %255, %271 : vector<16x128xf32>
    %cst_85 = arith.constant 9.99999974E-6 : f32
    %273 = vector.broadcast %cst_85 : f32 to vector<16x1xf32>
    %274 = arith.addf %270, %273 : vector<16x1xf32>
    %275 = math.rsqrt %274 : vector<16x1xf32>
    %276 = vector.broadcast %275 : vector<16x1xf32> to vector<16x128xf32>
    %277 = arith.mulf %272, %276 : vector<16x128xf32>
    %278 = vector.broadcast %257 : vector<1x128xf32> to vector<16x128xf32>
    %279 = arith.mulf %277, %278 : vector<16x128xf32>
    %280 = vector.broadcast %259 : vector<1x128xf32> to vector<16x128xf32>
    %281 = arith.addf %279, %280 : vector<16x128xf32>
    %282 = arith.truncf %281 : vector<16x128xf32> to vector<16x128xbf16>
    %c0_86 = arith.constant 0 : index
    %c0_87 = arith.constant 0 : index
    %c0_88 = arith.constant 0 : index
    %283 = vector.load %arg13[%c0_86, %c0_87, %c0_88] : memref<2x128x128xbf16, #tpu.memory_space<vmem>>, vector<1x128x128xbf16>
    %284 = vector.shape_cast %283 : vector<1x128x128xbf16> to vector<128x128xbf16>
    %cst_89 = arith.constant dense<0.000000e+00> : vector<16x128xf32>
    %285 = tpu.matmul %282, %284, %cst_89 {dimension_numbers = #tpu.dot_dimension_numbers<[1], [0], [0], [1], [0, 0, 1, 1], [], []>} : vector<16x128xbf16>, vector<128x128xbf16>, vector<16x128xf32> -> vector<16x128xf32>
    %c0_90 = arith.constant 0 : index
    %c0_91 = arith.constant 0 : index
    %c0_92 = arith.constant 0 : index
    %286 = vector.load %arg14[%c0_90, %c0_91, %c0_92] : memref<2x1x128xf32, #tpu.memory_space<vmem>>, vector<1x1x128xf32>
    %287 = vector.shape_cast %286 : vector<1x1x128xf32> to vector<1x128xf32>
    %288 = vector.broadcast %287 : vector<1x128xf32> to vector<16x128xf32>
    %289 = arith.addf %285, %288 : vector<16x128xf32>
    %c0_93 = arith.constant 0 : index
    %c0_94 = arith.constant 0 : index
    %c0_95 = arith.constant 0 : index
    %290 = vector.load %arg15[%c0_93, %c0_94, %c0_95] : memref<2x128x256xbf16, #tpu.memory_space<vmem>>, vector<1x128x256xbf16>
    %291 = vector.shape_cast %290 : vector<1x128x256xbf16> to vector<128x256xbf16>
    %cst_96 = arith.constant dense<0.000000e+00> : vector<16x256xf32>
    %292 = tpu.matmul %74, %291, %cst_96 {dimension_numbers = #tpu.dot_dimension_numbers<[1], [0], [0], [1], [0, 0, 1, 1], [], []>} : vector<16x128xbf16>, vector<128x256xbf16>, vector<16x256xf32> -> vector<16x256xf32>
    %c0_97 = arith.constant 0 : index
    %c0_98 = arith.constant 0 : index
    %c0_99 = arith.constant 0 : index
    %293 = vector.load %arg16[%c0_97, %c0_98, %c0_99] : memref<2x1x256xf32, #tpu.memory_space<vmem>>, vector<1x1x256xf32>
    %294 = vector.shape_cast %293 : vector<1x1x256xf32> to vector<1x256xf32>
    %295 = vector.broadcast %294 : vector<1x256xf32> to vector<16x256xf32>
    %296 = arith.addf %292, %295 : vector<16x256xf32>
    %297 = vector.extract_strided_slice %296 {offsets = [0, 0], sizes = [16, 128], strides = [1, 1]} : vector<16x256xf32> to vector<16x128xf32>
    %298 = vector.extract_strided_slice %296 {offsets = [0, 128], sizes = [16, 128], strides = [1, 1]} : vector<16x256xf32> to vector<16x128xf32>
    %299 = vector.broadcast %7 : vector<1x128xf32> to vector<16x128xf32>
    %300 = arith.mulf %297, %299 : vector<16x128xf32>
    %301 = vector.broadcast %14 : vector<1x128xf32> to vector<16x128xf32>
    %302 = arith.mulf %297, %301 : vector<16x128xf32>
    %303 = vector.broadcast %21 : vector<1x128xf32> to vector<16x128xf32>
    %304 = arith.mulf %297, %303 : vector<16x128xf32>
    %305 = vector.broadcast %28 : vector<1x128xf32> to vector<16x128xf32>
    %306 = arith.mulf %297, %305 : vector<16x128xf32>
    %307 = tpu.concatenate %300, %302, %304, %306 in 0 : vector<16x128xf32>, vector<16x128xf32>, vector<16x128xf32>, vector<16x128xf32> -> vector<64x128xf32>
    %308 = vector.broadcast %7 : vector<1x128xf32> to vector<16x128xf32>
    %309 = arith.mulf %298, %308 : vector<16x128xf32>
    %310 = vector.broadcast %14 : vector<1x128xf32> to vector<16x128xf32>
    %311 = arith.mulf %298, %310 : vector<16x128xf32>
    %312 = vector.broadcast %21 : vector<1x128xf32> to vector<16x128xf32>
    %313 = arith.mulf %298, %312 : vector<16x128xf32>
    %314 = vector.broadcast %28 : vector<1x128xf32> to vector<16x128xf32>
    %315 = arith.mulf %298, %314 : vector<16x128xf32>
    %316 = tpu.concatenate %309, %311, %313, %315 in 0 : vector<16x128xf32>, vector<16x128xf32>, vector<16x128xf32>, vector<16x128xf32> -> vector<64x128xf32>
    %cst_100 = arith.constant dense<0.000000e+00> : vector<16x64xf32>
    %317 = tpu.matmul %289, %307, %cst_100 {dimension_numbers = #tpu.dot_dimension_numbers<[1], [1], [0], [0], [0, 0, 1, 0], [], []>} : vector<16x128xf32>, vector<64x128xf32>, vector<16x64xf32> -> vector<16x64xf32>
    %cst_101 = arith.constant 0.176776692 : f32
    %318 = vector.broadcast %cst_101 : f32 to vector<16x64xf32>
    %319 = arith.mulf %317, %318 : vector<16x64xf32>
    %320 = arith.addf %319, %72 : vector<16x64xf32>
    %cst_102 = arith.constant 0.000000e+00 : f32
    %321 = vector.broadcast %cst_102 : f32 to vector<16x64xf32>
    %cst_103 = arith.constant -1.000000e+30 : f32
    %322 = vector.shape_cast %55 : vector<1x64xi1> to vector<1x64xi1>
    %323 = vector.broadcast %322 : vector<1x64xi1> to vector<16x64xi1>
    %324 = vector.broadcast %cst_103 : f32 to vector<16x64xf32>
    %325 = arith.select %323, %320, %324 : vector<16x64xi1>, vector<16x64xf32>
    %cst_104 = arith.constant dense<0xFF800000> : vector<16xf32>
    %326 = vector.multi_reduction <maximumf>, %325, %cst_104 [1] : vector<16x64xf32> to vector<16xf32>
    %327 = vector.shape_cast %326 : vector<16xf32> to vector<16x1xf32>
    %cst_105 = arith.constant 0.000000e+00 : f32
    %328 = vector.shape_cast %55 : vector<1x64xi1> to vector<1x64xi1>
    %329 = vector.broadcast %328 : vector<1x64xi1> to vector<16x64xi1>
    %330 = vector.shape_cast %327 : vector<16x1xf32> to vector<16x1xf32>
    %331 = vector.broadcast %330 : vector<16x1xf32> to vector<16x64xf32>
    %332 = vector.broadcast %cst_105 : f32 to vector<16x64xf32>
    %333 = arith.select %329, %331, %332 : vector<16x64xi1>, vector<16x64xf32>
    %334 = arith.addf %321, %333 : vector<16x64xf32>
    %cst_106 = arith.constant -1.000000e+30 : f32
    %335 = vector.shape_cast %60 : vector<1x64xi1> to vector<1x64xi1>
    %336 = vector.broadcast %335 : vector<1x64xi1> to vector<16x64xi1>
    %337 = vector.broadcast %cst_106 : f32 to vector<16x64xf32>
    %338 = arith.select %336, %320, %337 : vector<16x64xi1>, vector<16x64xf32>
    %cst_107 = arith.constant dense<0xFF800000> : vector<16xf32>
    %339 = vector.multi_reduction <maximumf>, %338, %cst_107 [1] : vector<16x64xf32> to vector<16xf32>
    %340 = vector.shape_cast %339 : vector<16xf32> to vector<16x1xf32>
    %cst_108 = arith.constant 0.000000e+00 : f32
    %341 = vector.shape_cast %60 : vector<1x64xi1> to vector<1x64xi1>
    %342 = vector.broadcast %341 : vector<1x64xi1> to vector<16x64xi1>
    %343 = vector.shape_cast %340 : vector<16x1xf32> to vector<16x1xf32>
    %344 = vector.broadcast %343 : vector<16x1xf32> to vector<16x64xf32>
    %345 = vector.broadcast %cst_108 : f32 to vector<16x64xf32>
    %346 = arith.select %342, %344, %345 : vector<16x64xi1>, vector<16x64xf32>
    %347 = arith.addf %334, %346 : vector<16x64xf32>
    %cst_109 = arith.constant -1.000000e+30 : f32
    %348 = vector.shape_cast %65 : vector<1x64xi1> to vector<1x64xi1>
    %349 = vector.broadcast %348 : vector<1x64xi1> to vector<16x64xi1>
    %350 = vector.broadcast %cst_109 : f32 to vector<16x64xf32>
    %351 = arith.select %349, %320, %350 : vector<16x64xi1>, vector<16x64xf32>
    %cst_110 = arith.constant dense<0xFF800000> : vector<16xf32>
    %352 = vector.multi_reduction <maximumf>, %351, %cst_110 [1] : vector<16x64xf32> to vector<16xf32>
    %353 = vector.shape_cast %352 : vector<16xf32> to vector<16x1xf32>
    %cst_111 = arith.constant 0.000000e+00 : f32
    %354 = vector.shape_cast %65 : vector<1x64xi1> to vector<1x64xi1>
    %355 = vector.broadcast %354 : vector<1x64xi1> to vector<16x64xi1>
    %356 = vector.shape_cast %353 : vector<16x1xf32> to vector<16x1xf32>
    %357 = vector.broadcast %356 : vector<16x1xf32> to vector<16x64xf32>
    %358 = vector.broadcast %cst_111 : f32 to vector<16x64xf32>
    %359 = arith.select %355, %357, %358 : vector<16x64xi1>, vector<16x64xf32>
    %360 = arith.addf %347, %359 : vector<16x64xf32>
    %cst_112 = arith.constant -1.000000e+30 : f32
    %361 = vector.shape_cast %70 : vector<1x64xi1> to vector<1x64xi1>
    %362 = vector.broadcast %361 : vector<1x64xi1> to vector<16x64xi1>
    %363 = vector.broadcast %cst_112 : f32 to vector<16x64xf32>
    %364 = arith.select %362, %320, %363 : vector<16x64xi1>, vector<16x64xf32>
    %cst_113 = arith.constant dense<0xFF800000> : vector<16xf32>
    %365 = vector.multi_reduction <maximumf>, %364, %cst_113 [1] : vector<16x64xf32> to vector<16xf32>
    %366 = vector.shape_cast %365 : vector<16xf32> to vector<16x1xf32>
    %cst_114 = arith.constant 0.000000e+00 : f32
    %367 = vector.shape_cast %70 : vector<1x64xi1> to vector<1x64xi1>
    %368 = vector.broadcast %367 : vector<1x64xi1> to vector<16x64xi1>
    %369 = vector.shape_cast %366 : vector<16x1xf32> to vector<16x1xf32>
    %370 = vector.broadcast %369 : vector<16x1xf32> to vector<16x64xf32>
    %371 = vector.broadcast %cst_114 : f32 to vector<16x64xf32>
    %372 = arith.select %368, %370, %371 : vector<16x64xi1>, vector<16x64xf32>
    %373 = arith.addf %360, %372 : vector<16x64xf32>
    %374 = arith.subf %320, %373 : vector<16x64xf32>
    %375 = math.exp %374 : vector<16x64xf32>
    %cst_115 = arith.constant 0.000000e+00 : f32
    %376 = vector.broadcast %cst_115 : f32 to vector<16x64xf32>
    %cst_116 = arith.constant 0.000000e+00 : f32
    %377 = vector.shape_cast %55 : vector<1x64xi1> to vector<1x64xi1>
    %378 = vector.broadcast %377 : vector<1x64xi1> to vector<16x64xi1>
    %379 = vector.broadcast %cst_116 : f32 to vector<16x64xf32>
    %380 = arith.select %378, %375, %379 : vector<16x64xi1>, vector<16x64xf32>
    %cst_117 = arith.constant dense<0.000000e+00> : vector<16xf32>
    %381 = vector.multi_reduction <add>, %380, %cst_117 [1] : vector<16x64xf32> to vector<16xf32>
    %382 = vector.shape_cast %381 : vector<16xf32> to vector<16x1xf32>
    %383 = tpu.reciprocal %382 {approx = true} : vector<16x1xf32> -> vector<16x1xf32>
    %cst_118 = arith.constant 0.000000e+00 : f32
    %384 = vector.shape_cast %55 : vector<1x64xi1> to vector<1x64xi1>
    %385 = vector.broadcast %384 : vector<1x64xi1> to vector<16x64xi1>
    %386 = vector.shape_cast %383 : vector<16x1xf32> to vector<16x1xf32>
    %387 = vector.broadcast %386 : vector<16x1xf32> to vector<16x64xf32>
    %388 = vector.broadcast %cst_118 : f32 to vector<16x64xf32>
    %389 = arith.select %385, %387, %388 : vector<16x64xi1>, vector<16x64xf32>
    %390 = arith.addf %376, %389 : vector<16x64xf32>
    %cst_119 = arith.constant 0.000000e+00 : f32
    %391 = vector.shape_cast %60 : vector<1x64xi1> to vector<1x64xi1>
    %392 = vector.broadcast %391 : vector<1x64xi1> to vector<16x64xi1>
    %393 = vector.broadcast %cst_119 : f32 to vector<16x64xf32>
    %394 = arith.select %392, %375, %393 : vector<16x64xi1>, vector<16x64xf32>
    %cst_120 = arith.constant dense<0.000000e+00> : vector<16xf32>
    %395 = vector.multi_reduction <add>, %394, %cst_120 [1] : vector<16x64xf32> to vector<16xf32>
    %396 = vector.shape_cast %395 : vector<16xf32> to vector<16x1xf32>
    %397 = tpu.reciprocal %396 {approx = true} : vector<16x1xf32> -> vector<16x1xf32>
    %cst_121 = arith.constant 0.000000e+00 : f32
    %398 = vector.shape_cast %60 : vector<1x64xi1> to vector<1x64xi1>
    %399 = vector.broadcast %398 : vector<1x64xi1> to vector<16x64xi1>
    %400 = vector.shape_cast %397 : vector<16x1xf32> to vector<16x1xf32>
    %401 = vector.broadcast %400 : vector<16x1xf32> to vector<16x64xf32>
    %402 = vector.broadcast %cst_121 : f32 to vector<16x64xf32>
    %403 = arith.select %399, %401, %402 : vector<16x64xi1>, vector<16x64xf32>
    %404 = arith.addf %390, %403 : vector<16x64xf32>
    %cst_122 = arith.constant 0.000000e+00 : f32
    %405 = vector.shape_cast %65 : vector<1x64xi1> to vector<1x64xi1>
    %406 = vector.broadcast %405 : vector<1x64xi1> to vector<16x64xi1>
    %407 = vector.broadcast %cst_122 : f32 to vector<16x64xf32>
    %408 = arith.select %406, %375, %407 : vector<16x64xi1>, vector<16x64xf32>
    %cst_123 = arith.constant dense<0.000000e+00> : vector<16xf32>
    %409 = vector.multi_reduction <add>, %408, %cst_123 [1] : vector<16x64xf32> to vector<16xf32>
    %410 = vector.shape_cast %409 : vector<16xf32> to vector<16x1xf32>
    %411 = tpu.reciprocal %410 {approx = true} : vector<16x1xf32> -> vector<16x1xf32>
    %cst_124 = arith.constant 0.000000e+00 : f32
    %412 = vector.shape_cast %65 : vector<1x64xi1> to vector<1x64xi1>
    %413 = vector.broadcast %412 : vector<1x64xi1> to vector<16x64xi1>
    %414 = vector.shape_cast %411 : vector<16x1xf32> to vector<16x1xf32>
    %415 = vector.broadcast %414 : vector<16x1xf32> to vector<16x64xf32>
    %416 = vector.broadcast %cst_124 : f32 to vector<16x64xf32>
    %417 = arith.select %413, %415, %416 : vector<16x64xi1>, vector<16x64xf32>
    %418 = arith.addf %404, %417 : vector<16x64xf32>
    %cst_125 = arith.constant 0.000000e+00 : f32
    %419 = vector.shape_cast %70 : vector<1x64xi1> to vector<1x64xi1>
    %420 = vector.broadcast %419 : vector<1x64xi1> to vector<16x64xi1>
    %421 = vector.broadcast %cst_125 : f32 to vector<16x64xf32>
    %422 = arith.select %420, %375, %421 : vector<16x64xi1>, vector<16x64xf32>
    %cst_126 = arith.constant dense<0.000000e+00> : vector<16xf32>
    %423 = vector.multi_reduction <add>, %422, %cst_126 [1] : vector<16x64xf32> to vector<16xf32>
    %424 = vector.shape_cast %423 : vector<16xf32> to vector<16x1xf32>
    %425 = tpu.reciprocal %424 {approx = true} : vector<16x1xf32> -> vector<16x1xf32>
    %cst_127 = arith.constant 0.000000e+00 : f32
    %426 = vector.shape_cast %70 : vector<1x64xi1> to vector<1x64xi1>
    %427 = vector.broadcast %426 : vector<1x64xi1> to vector<16x64xi1>
    %428 = vector.shape_cast %425 : vector<16x1xf32> to vector<16x1xf32>
    %429 = vector.broadcast %428 : vector<16x1xf32> to vector<16x64xf32>
    %430 = vector.broadcast %cst_127 : f32 to vector<16x64xf32>
    %431 = arith.select %427, %429, %430 : vector<16x64xi1>, vector<16x64xf32>
    %432 = arith.addf %418, %431 : vector<16x64xf32>
    %433 = arith.mulf %375, %432 : vector<16x64xf32>
    %cst_128 = arith.constant dense<0.000000e+00> : vector<16x128xf32>
    %434 = tpu.matmul %433, %316, %cst_128 {dimension_numbers = #tpu.dot_dimension_numbers<[1], [0], [0], [1], [0, 0, 1, 1], [], []>} : vector<16x64xf32>, vector<64x128xf32>, vector<16x128xf32> -> vector<16x128xf32>
    %435 = arith.truncf %434 : vector<16x128xf32> to vector<16x128xbf16>
    %c0_129 = arith.constant 0 : index
    %c0_130 = arith.constant 0 : index
    %c0_131 = arith.constant 0 : index
    %436 = vector.load %arg17[%c0_129, %c0_130, %c0_131] : memref<2x128x128xbf16, #tpu.memory_space<vmem>>, vector<1x128x128xbf16>
    %437 = vector.shape_cast %436 : vector<1x128x128xbf16> to vector<128x128xbf16>
    %cst_132 = arith.constant dense<0.000000e+00> : vector<16x128xf32>
    %438 = tpu.matmul %435, %437, %cst_132 {dimension_numbers = #tpu.dot_dimension_numbers<[1], [0], [0], [1], [0, 0, 1, 1], [], []>} : vector<16x128xbf16>, vector<128x128xbf16>, vector<16x128xf32> -> vector<16x128xf32>
    %c0_133 = arith.constant 0 : index
    %c0_134 = arith.constant 0 : index
    %c0_135 = arith.constant 0 : index
    %439 = vector.load %arg18[%c0_133, %c0_134, %c0_135] : memref<2x1x128xf32, #tpu.memory_space<vmem>>, vector<1x1x128xf32>
    %440 = vector.shape_cast %439 : vector<1x1x128xf32> to vector<1x128xf32>
    %441 = vector.broadcast %440 : vector<1x128xf32> to vector<16x128xf32>
    %442 = arith.addf %438, %441 : vector<16x128xf32>
    %443 = arith.addf %281, %442 : vector<16x128xf32>
    %c0_136 = arith.constant 0 : index
    %c0_137 = arith.constant 0 : index
    %c0_138 = arith.constant 0 : index
    %444 = vector.load %arg19[%c0_136, %c0_137, %c0_138] : memref<2x1x128xf32, #tpu.memory_space<vmem>>, vector<1x1x128xf32>
    %445 = vector.shape_cast %444 : vector<1x1x128xf32> to vector<1x128xf32>
    %c0_139 = arith.constant 0 : index
    %c0_140 = arith.constant 0 : index
    %c0_141 = arith.constant 0 : index
    %446 = vector.load %arg20[%c0_139, %c0_140, %c0_141] : memref<2x1x128xf32, #tpu.memory_space<vmem>>, vector<1x1x128xf32>
    %447 = vector.shape_cast %446 : vector<1x1x128xf32> to vector<1x128xf32>
    %cst_142 = arith.constant dense<0.000000e+00> : vector<16xf32>
    %448 = vector.multi_reduction <add>, %443, %cst_142 [1] : vector<16x128xf32> to vector<16xf32>
    %449 = vector.shape_cast %448 : vector<16xf32> to vector<16x1xf32>
    %cst_143 = arith.constant 1.280000e+02 : f32
    %450 = vector.broadcast %cst_143 : f32 to vector<16x1xf32>
    %451 = arith.divf %449, %450 : vector<16x1xf32>
    %452 = vector.broadcast %451 : vector<16x1xf32> to vector<16x128xf32>
    %453 = arith.subf %443, %452 : vector<16x128xf32>
    %454 = arith.mulf %453, %453 : vector<16x128xf32>
    %cst_144 = arith.constant dense<0.000000e+00> : vector<16xf32>
    %455 = vector.multi_reduction <add>, %454, %cst_144 [1] : vector<16x128xf32> to vector<16xf32>
    %456 = vector.shape_cast %455 : vector<16xf32> to vector<16x1xf32>
    %cst_145 = arith.constant 1.280000e+02 : f32
    %457 = vector.broadcast %cst_145 : f32 to vector<16x1xf32>
    %458 = arith.divf %456, %457 : vector<16x1xf32>
    %459 = vector.broadcast %451 : vector<16x1xf32> to vector<16x128xf32>
    %460 = arith.subf %443, %459 : vector<16x128xf32>
    %cst_146 = arith.constant 9.99999974E-6 : f32
    %461 = vector.broadcast %cst_146 : f32 to vector<16x1xf32>
    %462 = arith.addf %458, %461 : vector<16x1xf32>
    %463 = math.rsqrt %462 : vector<16x1xf32>
    %464 = vector.broadcast %463 : vector<16x1xf32> to vector<16x128xf32>
    %465 = arith.mulf %460, %464 : vector<16x128xf32>
    %466 = vector.broadcast %445 : vector<1x128xf32> to vector<16x128xf32>
    %467 = arith.mulf %465, %466 : vector<16x128xf32>
    %468 = vector.broadcast %447 : vector<1x128xf32> to vector<16x128xf32>
    %469 = arith.addf %467, %468 : vector<16x128xf32>
    %470 = arith.truncf %469 : vector<16x128xf32> to vector<16x128xbf16>
    %c0_147 = arith.constant 0 : index
    %c0_148 = arith.constant 0 : index
    %c0_149 = arith.constant 0 : index
    %471 = vector.load %arg21[%c0_147, %c0_148, %c0_149] : memref<2x128x256xbf16, #tpu.memory_space<vmem>>, vector<1x128x256xbf16>
    %472 = vector.shape_cast %471 : vector<1x128x256xbf16> to vector<128x256xbf16>
    %cst_150 = arith.constant dense<0.000000e+00> : vector<16x256xf32>
    %473 = tpu.matmul %470, %472, %cst_150 {dimension_numbers = #tpu.dot_dimension_numbers<[1], [0], [0], [1], [0, 0, 1, 1], [], []>} : vector<16x128xbf16>, vector<128x256xbf16>, vector<16x256xf32> -> vector<16x256xf32>
    %c0_151 = arith.constant 0 : index
    %c0_152 = arith.constant 0 : index
    %c0_153 = arith.constant 0 : index
    %474 = vector.load %arg22[%c0_151, %c0_152, %c0_153] : memref<2x1x256xf32, #tpu.memory_space<vmem>>, vector<1x1x256xf32>
    %475 = vector.shape_cast %474 : vector<1x1x256xf32> to vector<1x256xf32>
    %476 = vector.broadcast %475 : vector<1x256xf32> to vector<16x256xf32>
    %477 = arith.addf %473, %476 : vector<16x256xf32>
    %cst_154 = arith.constant 5.000000e-01 : f32
    %478 = vector.broadcast %cst_154 : f32 to vector<16x256xf32>
    %479 = arith.mulf %478, %477 : vector<16x256xf32>
    %cst_155 = arith.constant 4.471500e-02 : f32
    %480 = vector.broadcast %cst_155 : f32 to vector<16x256xf32>
    %481 = arith.mulf %480, %477 : vector<16x256xf32>
    %482 = arith.mulf %481, %477 : vector<16x256xf32>
    %483 = arith.mulf %482, %477 : vector<16x256xf32>
    %484 = arith.addf %477, %483 : vector<16x256xf32>
    %cst_156 = arith.constant 0.797884583 : f32
    %485 = vector.broadcast %cst_156 : f32 to vector<16x256xf32>
    %486 = arith.mulf %485, %484 : vector<16x256xf32>
    %487 = math.tanh %486 : vector<16x256xf32>
    %cst_157 = arith.constant 1.000000e+00 : f32
    %488 = vector.broadcast %cst_157 : f32 to vector<16x256xf32>
    %489 = arith.addf %488, %487 : vector<16x256xf32>
    %490 = arith.mulf %479, %489 : vector<16x256xf32>
    %491 = arith.truncf %490 : vector<16x256xf32> to vector<16x256xbf16>
    %c0_158 = arith.constant 0 : index
    %c0_159 = arith.constant 0 : index
    %c0_160 = arith.constant 0 : index
    %492 = vector.load %arg23[%c0_158, %c0_159, %c0_160] : memref<2x256x128xbf16, #tpu.memory_space<vmem>>, vector<1x256x128xbf16>
    %493 = vector.shape_cast %492 : vector<1x256x128xbf16> to vector<256x128xbf16>
    %cst_161 = arith.constant dense<0.000000e+00> : vector<16x128xf32>
    %494 = tpu.matmul %491, %493, %cst_161 {dimension_numbers = #tpu.dot_dimension_numbers<[1], [0], [0], [1], [0, 0, 1, 1], [], []>} : vector<16x256xbf16>, vector<256x128xbf16>, vector<16x128xf32> -> vector<16x128xf32>
    %c0_162 = arith.constant 0 : index
    %c0_163 = arith.constant 0 : index
    %c0_164 = arith.constant 0 : index
    %495 = vector.load %arg24[%c0_162, %c0_163, %c0_164] : memref<2x1x128xf32, #tpu.memory_space<vmem>>, vector<1x1x128xf32>
    %496 = vector.shape_cast %495 : vector<1x1x128xf32> to vector<1x128xf32>
    %497 = vector.broadcast %496 : vector<1x128xf32> to vector<16x128xf32>
    %498 = arith.addf %494, %497 : vector<16x128xf32>
    %499 = arith.addf %469, %498 : vector<16x128xf32>
    %c0_165 = arith.constant 0 : index
    %c0_166 = arith.constant 0 : index
    %c0_167 = arith.constant 0 : index
    %500 = vector.load %arg25[%c0_165, %c0_166, %c0_167] : memref<2x1x128xf32, #tpu.memory_space<vmem>>, vector<1x1x128xf32>
    %501 = vector.shape_cast %500 : vector<1x1x128xf32> to vector<1x128xf32>
    %c0_168 = arith.constant 0 : index
    %c0_169 = arith.constant 0 : index
    %c0_170 = arith.constant 0 : index
    %502 = vector.load %arg26[%c0_168, %c0_169, %c0_170] : memref<2x1x128xf32, #tpu.memory_space<vmem>>, vector<1x1x128xf32>
    %503 = vector.shape_cast %502 : vector<1x1x128xf32> to vector<1x128xf32>
    %cst_171 = arith.constant dense<0.000000e+00> : vector<16xf32>
    %504 = vector.multi_reduction <add>, %499, %cst_171 [1] : vector<16x128xf32> to vector<16xf32>
    %505 = vector.shape_cast %504 : vector<16xf32> to vector<16x1xf32>
    %cst_172 = arith.constant 1.280000e+02 : f32
    %506 = vector.broadcast %cst_172 : f32 to vector<16x1xf32>
    %507 = arith.divf %505, %506 : vector<16x1xf32>
    %508 = vector.broadcast %507 : vector<16x1xf32> to vector<16x128xf32>
    %509 = arith.subf %499, %508 : vector<16x128xf32>
    %510 = arith.mulf %509, %509 : vector<16x128xf32>
    %cst_173 = arith.constant dense<0.000000e+00> : vector<16xf32>
    %511 = vector.multi_reduction <add>, %510, %cst_173 [1] : vector<16x128xf32> to vector<16xf32>
    %512 = vector.shape_cast %511 : vector<16xf32> to vector<16x1xf32>
    %cst_174 = arith.constant 1.280000e+02 : f32
    %513 = vector.broadcast %cst_174 : f32 to vector<16x1xf32>
    %514 = arith.divf %512, %513 : vector<16x1xf32>
    %515 = vector.broadcast %507 : vector<16x1xf32> to vector<16x128xf32>
    %516 = arith.subf %499, %515 : vector<16x128xf32>
    %cst_175 = arith.constant 9.99999974E-6 : f32
    %517 = vector.broadcast %cst_175 : f32 to vector<16x1xf32>
    %518 = arith.addf %514, %517 : vector<16x1xf32>
    %519 = math.rsqrt %518 : vector<16x1xf32>
    %520 = vector.broadcast %519 : vector<16x1xf32> to vector<16x128xf32>
    %521 = arith.mulf %516, %520 : vector<16x128xf32>
    %522 = vector.broadcast %501 : vector<1x128xf32> to vector<16x128xf32>
    %523 = arith.mulf %521, %522 : vector<16x128xf32>
    %524 = vector.broadcast %503 : vector<1x128xf32> to vector<16x128xf32>
    %525 = arith.addf %523, %524 : vector<16x128xf32>
    %526 = arith.truncf %525 : vector<16x128xf32> to vector<16x128xbf16>
    %c1 = arith.constant 1 : index
    %c0_176 = arith.constant 0 : index
    %c0_177 = arith.constant 0 : index
    %527 = vector.load %arg7[%c1, %c0_176, %c0_177] : memref<2x128x384xbf16, #tpu.memory_space<vmem>>, vector<1x128x384xbf16>
    %528 = vector.shape_cast %527 : vector<1x128x384xbf16> to vector<128x384xbf16>
    %cst_178 = arith.constant dense<0.000000e+00> : vector<16x384xf32>
    %529 = tpu.matmul %526, %528, %cst_178 {dimension_numbers = #tpu.dot_dimension_numbers<[1], [0], [0], [1], [0, 0, 1, 1], [], []>} : vector<16x128xbf16>, vector<128x384xbf16>, vector<16x384xf32> -> vector<16x384xf32>
    %c1_179 = arith.constant 1 : index
    %c0_180 = arith.constant 0 : index
    %c0_181 = arith.constant 0 : index
    %530 = vector.load %arg8[%c1_179, %c0_180, %c0_181] : memref<2x1x384xf32, #tpu.memory_space<vmem>>, vector<1x1x384xf32>
    %531 = vector.shape_cast %530 : vector<1x1x384xf32> to vector<1x384xf32>
    %532 = vector.broadcast %531 : vector<1x384xf32> to vector<16x384xf32>
    %533 = arith.addf %529, %532 : vector<16x384xf32>
    %534 = vector.extract_strided_slice %533 {offsets = [0, 0], sizes = [16, 128], strides = [1, 1]} : vector<16x384xf32> to vector<16x128xf32>
    %535 = vector.extract_strided_slice %533 {offsets = [0, 128], sizes = [16, 128], strides = [1, 1]} : vector<16x384xf32> to vector<16x128xf32>
    %536 = vector.extract_strided_slice %533 {offsets = [0, 256], sizes = [16, 128], strides = [1, 1]} : vector<16x384xf32> to vector<16x128xf32>
    %537 = vector.broadcast %7 : vector<1x128xf32> to vector<16x128xf32>
    %538 = arith.mulf %535, %537 : vector<16x128xf32>
    %539 = vector.broadcast %14 : vector<1x128xf32> to vector<16x128xf32>
    %540 = arith.mulf %535, %539 : vector<16x128xf32>
    %541 = vector.broadcast %21 : vector<1x128xf32> to vector<16x128xf32>
    %542 = arith.mulf %535, %541 : vector<16x128xf32>
    %543 = vector.broadcast %28 : vector<1x128xf32> to vector<16x128xf32>
    %544 = arith.mulf %535, %543 : vector<16x128xf32>
    %545 = tpu.concatenate %538, %540, %542, %544 in 0 : vector<16x128xf32>, vector<16x128xf32>, vector<16x128xf32>, vector<16x128xf32> -> vector<64x128xf32>
    %546 = vector.broadcast %7 : vector<1x128xf32> to vector<16x128xf32>
    %547 = arith.mulf %536, %546 : vector<16x128xf32>
    %548 = vector.broadcast %14 : vector<1x128xf32> to vector<16x128xf32>
    %549 = arith.mulf %536, %548 : vector<16x128xf32>
    %550 = vector.broadcast %21 : vector<1x128xf32> to vector<16x128xf32>
    %551 = arith.mulf %536, %550 : vector<16x128xf32>
    %552 = vector.broadcast %28 : vector<1x128xf32> to vector<16x128xf32>
    %553 = arith.mulf %536, %552 : vector<16x128xf32>
    %554 = tpu.concatenate %547, %549, %551, %553 in 0 : vector<16x128xf32>, vector<16x128xf32>, vector<16x128xf32>, vector<16x128xf32> -> vector<64x128xf32>
    %cst_182 = arith.constant dense<0.000000e+00> : vector<16x64xf32>
    %555 = tpu.matmul %534, %545, %cst_182 {dimension_numbers = #tpu.dot_dimension_numbers<[1], [1], [0], [0], [0, 0, 1, 0], [], []>} : vector<16x128xf32>, vector<64x128xf32>, vector<16x64xf32> -> vector<16x64xf32>
    %cst_183 = arith.constant 0.176776692 : f32
    %556 = vector.broadcast %cst_183 : f32 to vector<16x64xf32>
    %557 = arith.mulf %555, %556 : vector<16x64xf32>
    %558 = arith.addf %557, %71 : vector<16x64xf32>
    %cst_184 = arith.constant 0.000000e+00 : f32
    %559 = vector.broadcast %cst_184 : f32 to vector<16x64xf32>
    %cst_185 = arith.constant -1.000000e+30 : f32
    %560 = vector.shape_cast %34 : vector<1x64xi1> to vector<1x64xi1>
    %561 = vector.broadcast %560 : vector<1x64xi1> to vector<16x64xi1>
    %562 = vector.broadcast %cst_185 : f32 to vector<16x64xf32>
    %563 = arith.select %561, %558, %562 : vector<16x64xi1>, vector<16x64xf32>
    %cst_186 = arith.constant dense<0xFF800000> : vector<16xf32>
    %564 = vector.multi_reduction <maximumf>, %563, %cst_186 [1] : vector<16x64xf32> to vector<16xf32>
    %565 = vector.shape_cast %564 : vector<16xf32> to vector<16x1xf32>
    %cst_187 = arith.constant 0.000000e+00 : f32
    %566 = vector.shape_cast %34 : vector<1x64xi1> to vector<1x64xi1>
    %567 = vector.broadcast %566 : vector<1x64xi1> to vector<16x64xi1>
    %568 = vector.shape_cast %565 : vector<16x1xf32> to vector<16x1xf32>
    %569 = vector.broadcast %568 : vector<16x1xf32> to vector<16x64xf32>
    %570 = vector.broadcast %cst_187 : f32 to vector<16x64xf32>
    %571 = arith.select %567, %569, %570 : vector<16x64xi1>, vector<16x64xf32>
    %572 = arith.addf %559, %571 : vector<16x64xf32>
    %cst_188 = arith.constant -1.000000e+30 : f32
    %573 = vector.shape_cast %39 : vector<1x64xi1> to vector<1x64xi1>
    %574 = vector.broadcast %573 : vector<1x64xi1> to vector<16x64xi1>
    %575 = vector.broadcast %cst_188 : f32 to vector<16x64xf32>
    %576 = arith.select %574, %558, %575 : vector<16x64xi1>, vector<16x64xf32>
    %cst_189 = arith.constant dense<0xFF800000> : vector<16xf32>
    %577 = vector.multi_reduction <maximumf>, %576, %cst_189 [1] : vector<16x64xf32> to vector<16xf32>
    %578 = vector.shape_cast %577 : vector<16xf32> to vector<16x1xf32>
    %cst_190 = arith.constant 0.000000e+00 : f32
    %579 = vector.shape_cast %39 : vector<1x64xi1> to vector<1x64xi1>
    %580 = vector.broadcast %579 : vector<1x64xi1> to vector<16x64xi1>
    %581 = vector.shape_cast %578 : vector<16x1xf32> to vector<16x1xf32>
    %582 = vector.broadcast %581 : vector<16x1xf32> to vector<16x64xf32>
    %583 = vector.broadcast %cst_190 : f32 to vector<16x64xf32>
    %584 = arith.select %580, %582, %583 : vector<16x64xi1>, vector<16x64xf32>
    %585 = arith.addf %572, %584 : vector<16x64xf32>
    %cst_191 = arith.constant -1.000000e+30 : f32
    %586 = vector.shape_cast %44 : vector<1x64xi1> to vector<1x64xi1>
    %587 = vector.broadcast %586 : vector<1x64xi1> to vector<16x64xi1>
    %588 = vector.broadcast %cst_191 : f32 to vector<16x64xf32>
    %589 = arith.select %587, %558, %588 : vector<16x64xi1>, vector<16x64xf32>
    %cst_192 = arith.constant dense<0xFF800000> : vector<16xf32>
    %590 = vector.multi_reduction <maximumf>, %589, %cst_192 [1] : vector<16x64xf32> to vector<16xf32>
    %591 = vector.shape_cast %590 : vector<16xf32> to vector<16x1xf32>
    %cst_193 = arith.constant 0.000000e+00 : f32
    %592 = vector.shape_cast %44 : vector<1x64xi1> to vector<1x64xi1>
    %593 = vector.broadcast %592 : vector<1x64xi1> to vector<16x64xi1>
    %594 = vector.shape_cast %591 : vector<16x1xf32> to vector<16x1xf32>
    %595 = vector.broadcast %594 : vector<16x1xf32> to vector<16x64xf32>
    %596 = vector.broadcast %cst_193 : f32 to vector<16x64xf32>
    %597 = arith.select %593, %595, %596 : vector<16x64xi1>, vector<16x64xf32>
    %598 = arith.addf %585, %597 : vector<16x64xf32>
    %cst_194 = arith.constant -1.000000e+30 : f32
    %599 = vector.shape_cast %49 : vector<1x64xi1> to vector<1x64xi1>
    %600 = vector.broadcast %599 : vector<1x64xi1> to vector<16x64xi1>
    %601 = vector.broadcast %cst_194 : f32 to vector<16x64xf32>
    %602 = arith.select %600, %558, %601 : vector<16x64xi1>, vector<16x64xf32>
    %cst_195 = arith.constant dense<0xFF800000> : vector<16xf32>
    %603 = vector.multi_reduction <maximumf>, %602, %cst_195 [1] : vector<16x64xf32> to vector<16xf32>
    %604 = vector.shape_cast %603 : vector<16xf32> to vector<16x1xf32>
    %cst_196 = arith.constant 0.000000e+00 : f32
    %605 = vector.shape_cast %49 : vector<1x64xi1> to vector<1x64xi1>
    %606 = vector.broadcast %605 : vector<1x64xi1> to vector<16x64xi1>
    %607 = vector.shape_cast %604 : vector<16x1xf32> to vector<16x1xf32>
    %608 = vector.broadcast %607 : vector<16x1xf32> to vector<16x64xf32>
    %609 = vector.broadcast %cst_196 : f32 to vector<16x64xf32>
    %610 = arith.select %606, %608, %609 : vector<16x64xi1>, vector<16x64xf32>
    %611 = arith.addf %598, %610 : vector<16x64xf32>
    %612 = arith.subf %558, %611 : vector<16x64xf32>
    %613 = math.exp %612 : vector<16x64xf32>
    %cst_197 = arith.constant 0.000000e+00 : f32
    %614 = vector.broadcast %cst_197 : f32 to vector<16x64xf32>
    %cst_198 = arith.constant 0.000000e+00 : f32
    %615 = vector.shape_cast %34 : vector<1x64xi1> to vector<1x64xi1>
    %616 = vector.broadcast %615 : vector<1x64xi1> to vector<16x64xi1>
    %617 = vector.broadcast %cst_198 : f32 to vector<16x64xf32>
    %618 = arith.select %616, %613, %617 : vector<16x64xi1>, vector<16x64xf32>
    %cst_199 = arith.constant dense<0.000000e+00> : vector<16xf32>
    %619 = vector.multi_reduction <add>, %618, %cst_199 [1] : vector<16x64xf32> to vector<16xf32>
    %620 = vector.shape_cast %619 : vector<16xf32> to vector<16x1xf32>
    %621 = tpu.reciprocal %620 {approx = true} : vector<16x1xf32> -> vector<16x1xf32>
    %cst_200 = arith.constant 0.000000e+00 : f32
    %622 = vector.shape_cast %34 : vector<1x64xi1> to vector<1x64xi1>
    %623 = vector.broadcast %622 : vector<1x64xi1> to vector<16x64xi1>
    %624 = vector.shape_cast %621 : vector<16x1xf32> to vector<16x1xf32>
    %625 = vector.broadcast %624 : vector<16x1xf32> to vector<16x64xf32>
    %626 = vector.broadcast %cst_200 : f32 to vector<16x64xf32>
    %627 = arith.select %623, %625, %626 : vector<16x64xi1>, vector<16x64xf32>
    %628 = arith.addf %614, %627 : vector<16x64xf32>
    %cst_201 = arith.constant 0.000000e+00 : f32
    %629 = vector.shape_cast %39 : vector<1x64xi1> to vector<1x64xi1>
    %630 = vector.broadcast %629 : vector<1x64xi1> to vector<16x64xi1>
    %631 = vector.broadcast %cst_201 : f32 to vector<16x64xf32>
    %632 = arith.select %630, %613, %631 : vector<16x64xi1>, vector<16x64xf32>
    %cst_202 = arith.constant dense<0.000000e+00> : vector<16xf32>
    %633 = vector.multi_reduction <add>, %632, %cst_202 [1] : vector<16x64xf32> to vector<16xf32>
    %634 = vector.shape_cast %633 : vector<16xf32> to vector<16x1xf32>
    %635 = tpu.reciprocal %634 {approx = true} : vector<16x1xf32> -> vector<16x1xf32>
    %cst_203 = arith.constant 0.000000e+00 : f32
    %636 = vector.shape_cast %39 : vector<1x64xi1> to vector<1x64xi1>
    %637 = vector.broadcast %636 : vector<1x64xi1> to vector<16x64xi1>
    %638 = vector.shape_cast %635 : vector<16x1xf32> to vector<16x1xf32>
    %639 = vector.broadcast %638 : vector<16x1xf32> to vector<16x64xf32>
    %640 = vector.broadcast %cst_203 : f32 to vector<16x64xf32>
    %641 = arith.select %637, %639, %640 : vector<16x64xi1>, vector<16x64xf32>
    %642 = arith.addf %628, %641 : vector<16x64xf32>
    %cst_204 = arith.constant 0.000000e+00 : f32
    %643 = vector.shape_cast %44 : vector<1x64xi1> to vector<1x64xi1>
    %644 = vector.broadcast %643 : vector<1x64xi1> to vector<16x64xi1>
    %645 = vector.broadcast %cst_204 : f32 to vector<16x64xf32>
    %646 = arith.select %644, %613, %645 : vector<16x64xi1>, vector<16x64xf32>
    %cst_205 = arith.constant dense<0.000000e+00> : vector<16xf32>
    %647 = vector.multi_reduction <add>, %646, %cst_205 [1] : vector<16x64xf32> to vector<16xf32>
    %648 = vector.shape_cast %647 : vector<16xf32> to vector<16x1xf32>
    %649 = tpu.reciprocal %648 {approx = true} : vector<16x1xf32> -> vector<16x1xf32>
    %cst_206 = arith.constant 0.000000e+00 : f32
    %650 = vector.shape_cast %44 : vector<1x64xi1> to vector<1x64xi1>
    %651 = vector.broadcast %650 : vector<1x64xi1> to vector<16x64xi1>
    %652 = vector.shape_cast %649 : vector<16x1xf32> to vector<16x1xf32>
    %653 = vector.broadcast %652 : vector<16x1xf32> to vector<16x64xf32>
    %654 = vector.broadcast %cst_206 : f32 to vector<16x64xf32>
    %655 = arith.select %651, %653, %654 : vector<16x64xi1>, vector<16x64xf32>
    %656 = arith.addf %642, %655 : vector<16x64xf32>
    %cst_207 = arith.constant 0.000000e+00 : f32
    %657 = vector.shape_cast %49 : vector<1x64xi1> to vector<1x64xi1>
    %658 = vector.broadcast %657 : vector<1x64xi1> to vector<16x64xi1>
    %659 = vector.broadcast %cst_207 : f32 to vector<16x64xf32>
    %660 = arith.select %658, %613, %659 : vector<16x64xi1>, vector<16x64xf32>
    %cst_208 = arith.constant dense<0.000000e+00> : vector<16xf32>
    %661 = vector.multi_reduction <add>, %660, %cst_208 [1] : vector<16x64xf32> to vector<16xf32>
    %662 = vector.shape_cast %661 : vector<16xf32> to vector<16x1xf32>
    %663 = tpu.reciprocal %662 {approx = true} : vector<16x1xf32> -> vector<16x1xf32>
    %cst_209 = arith.constant 0.000000e+00 : f32
    %664 = vector.shape_cast %49 : vector<1x64xi1> to vector<1x64xi1>
    %665 = vector.broadcast %664 : vector<1x64xi1> to vector<16x64xi1>
    %666 = vector.shape_cast %663 : vector<16x1xf32> to vector<16x1xf32>
    %667 = vector.broadcast %666 : vector<16x1xf32> to vector<16x64xf32>
    %668 = vector.broadcast %cst_209 : f32 to vector<16x64xf32>
    %669 = arith.select %665, %667, %668 : vector<16x64xi1>, vector<16x64xf32>
    %670 = arith.addf %656, %669 : vector<16x64xf32>
    %671 = arith.mulf %613, %670 : vector<16x64xf32>
    %cst_210 = arith.constant dense<0.000000e+00> : vector<16x128xf32>
    %672 = tpu.matmul %671, %554, %cst_210 {dimension_numbers = #tpu.dot_dimension_numbers<[1], [0], [0], [1], [0, 0, 1, 1], [], []>} : vector<16x64xf32>, vector<64x128xf32>, vector<16x128xf32> -> vector<16x128xf32>
    %673 = arith.truncf %672 : vector<16x128xf32> to vector<16x128xbf16>
    %c1_211 = arith.constant 1 : index
    %c0_212 = arith.constant 0 : index
    %c0_213 = arith.constant 0 : index
    %674 = vector.load %arg9[%c1_211, %c0_212, %c0_213] : memref<2x128x128xbf16, #tpu.memory_space<vmem>>, vector<1x128x128xbf16>
    %675 = vector.shape_cast %674 : vector<1x128x128xbf16> to vector<128x128xbf16>
    %cst_214 = arith.constant dense<0.000000e+00> : vector<16x128xf32>
    %676 = tpu.matmul %673, %675, %cst_214 {dimension_numbers = #tpu.dot_dimension_numbers<[1], [0], [0], [1], [0, 0, 1, 1], [], []>} : vector<16x128xbf16>, vector<128x128xbf16>, vector<16x128xf32> -> vector<16x128xf32>
    %c1_215 = arith.constant 1 : index
    %c0_216 = arith.constant 0 : index
    %c0_217 = arith.constant 0 : index
    %677 = vector.load %arg10[%c1_215, %c0_216, %c0_217] : memref<2x1x128xf32, #tpu.memory_space<vmem>>, vector<1x1x128xf32>
    %678 = vector.shape_cast %677 : vector<1x1x128xf32> to vector<1x128xf32>
    %679 = vector.broadcast %678 : vector<1x128xf32> to vector<16x128xf32>
    %680 = arith.addf %676, %679 : vector<16x128xf32>
    %681 = arith.addf %525, %680 : vector<16x128xf32>
    %c1_218 = arith.constant 1 : index
    %c0_219 = arith.constant 0 : index
    %c0_220 = arith.constant 0 : index
    %682 = vector.load %arg11[%c1_218, %c0_219, %c0_220] : memref<2x1x128xf32, #tpu.memory_space<vmem>>, vector<1x1x128xf32>
    %683 = vector.shape_cast %682 : vector<1x1x128xf32> to vector<1x128xf32>
    %c1_221 = arith.constant 1 : index
    %c0_222 = arith.constant 0 : index
    %c0_223 = arith.constant 0 : index
    %684 = vector.load %arg12[%c1_221, %c0_222, %c0_223] : memref<2x1x128xf32, #tpu.memory_space<vmem>>, vector<1x1x128xf32>
    %685 = vector.shape_cast %684 : vector<1x1x128xf32> to vector<1x128xf32>
    %cst_224 = arith.constant dense<0.000000e+00> : vector<16xf32>
    %686 = vector.multi_reduction <add>, %681, %cst_224 [1] : vector<16x128xf32> to vector<16xf32>
    %687 = vector.shape_cast %686 : vector<16xf32> to vector<16x1xf32>
    %cst_225 = arith.constant 1.280000e+02 : f32
    %688 = vector.broadcast %cst_225 : f32 to vector<16x1xf32>
    %689 = arith.divf %687, %688 : vector<16x1xf32>
    %690 = vector.broadcast %689 : vector<16x1xf32> to vector<16x128xf32>
    %691 = arith.subf %681, %690 : vector<16x128xf32>
    %692 = arith.mulf %691, %691 : vector<16x128xf32>
    %cst_226 = arith.constant dense<0.000000e+00> : vector<16xf32>
    %693 = vector.multi_reduction <add>, %692, %cst_226 [1] : vector<16x128xf32> to vector<16xf32>
    %694 = vector.shape_cast %693 : vector<16xf32> to vector<16x1xf32>
    %cst_227 = arith.constant 1.280000e+02 : f32
    %695 = vector.broadcast %cst_227 : f32 to vector<16x1xf32>
    %696 = arith.divf %694, %695 : vector<16x1xf32>
    %697 = vector.broadcast %689 : vector<16x1xf32> to vector<16x128xf32>
    %698 = arith.subf %681, %697 : vector<16x128xf32>
    %cst_228 = arith.constant 9.99999974E-6 : f32
    %699 = vector.broadcast %cst_228 : f32 to vector<16x1xf32>
    %700 = arith.addf %696, %699 : vector<16x1xf32>
    %701 = math.rsqrt %700 : vector<16x1xf32>
    %702 = vector.broadcast %701 : vector<16x1xf32> to vector<16x128xf32>
    %703 = arith.mulf %698, %702 : vector<16x128xf32>
    %704 = vector.broadcast %683 : vector<1x128xf32> to vector<16x128xf32>
    %705 = arith.mulf %703, %704 : vector<16x128xf32>
    %706 = vector.broadcast %685 : vector<1x128xf32> to vector<16x128xf32>
    %707 = arith.addf %705, %706 : vector<16x128xf32>
    %708 = arith.truncf %707 : vector<16x128xf32> to vector<16x128xbf16>
    %c1_229 = arith.constant 1 : index
    %c0_230 = arith.constant 0 : index
    %c0_231 = arith.constant 0 : index
    %709 = vector.load %arg13[%c1_229, %c0_230, %c0_231] : memref<2x128x128xbf16, #tpu.memory_space<vmem>>, vector<1x128x128xbf16>
    %710 = vector.shape_cast %709 : vector<1x128x128xbf16> to vector<128x128xbf16>
    %cst_232 = arith.constant dense<0.000000e+00> : vector<16x128xf32>
    %711 = tpu.matmul %708, %710, %cst_232 {dimension_numbers = #tpu.dot_dimension_numbers<[1], [0], [0], [1], [0, 0, 1, 1], [], []>} : vector<16x128xbf16>, vector<128x128xbf16>, vector<16x128xf32> -> vector<16x128xf32>
    %c1_233 = arith.constant 1 : index
    %c0_234 = arith.constant 0 : index
    %c0_235 = arith.constant 0 : index
    %712 = vector.load %arg14[%c1_233, %c0_234, %c0_235] : memref<2x1x128xf32, #tpu.memory_space<vmem>>, vector<1x1x128xf32>
    %713 = vector.shape_cast %712 : vector<1x1x128xf32> to vector<1x128xf32>
    %714 = vector.broadcast %713 : vector<1x128xf32> to vector<16x128xf32>
    %715 = arith.addf %711, %714 : vector<16x128xf32>
    %c1_236 = arith.constant 1 : index
    %c0_237 = arith.constant 0 : index
    %c0_238 = arith.constant 0 : index
    %716 = vector.load %arg15[%c1_236, %c0_237, %c0_238] : memref<2x128x256xbf16, #tpu.memory_space<vmem>>, vector<1x128x256xbf16>
    %717 = vector.shape_cast %716 : vector<1x128x256xbf16> to vector<128x256xbf16>
    %cst_239 = arith.constant dense<0.000000e+00> : vector<16x256xf32>
    %718 = tpu.matmul %74, %717, %cst_239 {dimension_numbers = #tpu.dot_dimension_numbers<[1], [0], [0], [1], [0, 0, 1, 1], [], []>} : vector<16x128xbf16>, vector<128x256xbf16>, vector<16x256xf32> -> vector<16x256xf32>
    %c1_240 = arith.constant 1 : index
    %c0_241 = arith.constant 0 : index
    %c0_242 = arith.constant 0 : index
    %719 = vector.load %arg16[%c1_240, %c0_241, %c0_242] : memref<2x1x256xf32, #tpu.memory_space<vmem>>, vector<1x1x256xf32>
    %720 = vector.shape_cast %719 : vector<1x1x256xf32> to vector<1x256xf32>
    %721 = vector.broadcast %720 : vector<1x256xf32> to vector<16x256xf32>
    %722 = arith.addf %718, %721 : vector<16x256xf32>
    %723 = vector.extract_strided_slice %722 {offsets = [0, 0], sizes = [16, 128], strides = [1, 1]} : vector<16x256xf32> to vector<16x128xf32>
    %724 = vector.extract_strided_slice %722 {offsets = [0, 128], sizes = [16, 128], strides = [1, 1]} : vector<16x256xf32> to vector<16x128xf32>
    %725 = vector.broadcast %7 : vector<1x128xf32> to vector<16x128xf32>
    %726 = arith.mulf %723, %725 : vector<16x128xf32>
    %727 = vector.broadcast %14 : vector<1x128xf32> to vector<16x128xf32>
    %728 = arith.mulf %723, %727 : vector<16x128xf32>
    %729 = vector.broadcast %21 : vector<1x128xf32> to vector<16x128xf32>
    %730 = arith.mulf %723, %729 : vector<16x128xf32>
    %731 = vector.broadcast %28 : vector<1x128xf32> to vector<16x128xf32>
    %732 = arith.mulf %723, %731 : vector<16x128xf32>
    %733 = tpu.concatenate %726, %728, %730, %732 in 0 : vector<16x128xf32>, vector<16x128xf32>, vector<16x128xf32>, vector<16x128xf32> -> vector<64x128xf32>
    %734 = vector.broadcast %7 : vector<1x128xf32> to vector<16x128xf32>
    %735 = arith.mulf %724, %734 : vector<16x128xf32>
    %736 = vector.broadcast %14 : vector<1x128xf32> to vector<16x128xf32>
    %737 = arith.mulf %724, %736 : vector<16x128xf32>
    %738 = vector.broadcast %21 : vector<1x128xf32> to vector<16x128xf32>
    %739 = arith.mulf %724, %738 : vector<16x128xf32>
    %740 = vector.broadcast %28 : vector<1x128xf32> to vector<16x128xf32>
    %741 = arith.mulf %724, %740 : vector<16x128xf32>
    %742 = tpu.concatenate %735, %737, %739, %741 in 0 : vector<16x128xf32>, vector<16x128xf32>, vector<16x128xf32>, vector<16x128xf32> -> vector<64x128xf32>
    %cst_243 = arith.constant dense<0.000000e+00> : vector<16x64xf32>
    %743 = tpu.matmul %715, %733, %cst_243 {dimension_numbers = #tpu.dot_dimension_numbers<[1], [1], [0], [0], [0, 0, 1, 0], [], []>} : vector<16x128xf32>, vector<64x128xf32>, vector<16x64xf32> -> vector<16x64xf32>
    %cst_244 = arith.constant 0.176776692 : f32
    %744 = vector.broadcast %cst_244 : f32 to vector<16x64xf32>
    %745 = arith.mulf %743, %744 : vector<16x64xf32>
    %746 = arith.addf %745, %72 : vector<16x64xf32>
    %cst_245 = arith.constant 0.000000e+00 : f32
    %747 = vector.broadcast %cst_245 : f32 to vector<16x64xf32>
    %cst_246 = arith.constant -1.000000e+30 : f32
    %748 = vector.shape_cast %55 : vector<1x64xi1> to vector<1x64xi1>
    %749 = vector.broadcast %748 : vector<1x64xi1> to vector<16x64xi1>
    %750 = vector.broadcast %cst_246 : f32 to vector<16x64xf32>
    %751 = arith.select %749, %746, %750 : vector<16x64xi1>, vector<16x64xf32>
    %cst_247 = arith.constant dense<0xFF800000> : vector<16xf32>
    %752 = vector.multi_reduction <maximumf>, %751, %cst_247 [1] : vector<16x64xf32> to vector<16xf32>
    %753 = vector.shape_cast %752 : vector<16xf32> to vector<16x1xf32>
    %cst_248 = arith.constant 0.000000e+00 : f32
    %754 = vector.shape_cast %55 : vector<1x64xi1> to vector<1x64xi1>
    %755 = vector.broadcast %754 : vector<1x64xi1> to vector<16x64xi1>
    %756 = vector.shape_cast %753 : vector<16x1xf32> to vector<16x1xf32>
    %757 = vector.broadcast %756 : vector<16x1xf32> to vector<16x64xf32>
    %758 = vector.broadcast %cst_248 : f32 to vector<16x64xf32>
    %759 = arith.select %755, %757, %758 : vector<16x64xi1>, vector<16x64xf32>
    %760 = arith.addf %747, %759 : vector<16x64xf32>
    %cst_249 = arith.constant -1.000000e+30 : f32
    %761 = vector.shape_cast %60 : vector<1x64xi1> to vector<1x64xi1>
    %762 = vector.broadcast %761 : vector<1x64xi1> to vector<16x64xi1>
    %763 = vector.broadcast %cst_249 : f32 to vector<16x64xf32>
    %764 = arith.select %762, %746, %763 : vector<16x64xi1>, vector<16x64xf32>
    %cst_250 = arith.constant dense<0xFF800000> : vector<16xf32>
    %765 = vector.multi_reduction <maximumf>, %764, %cst_250 [1] : vector<16x64xf32> to vector<16xf32>
    %766 = vector.shape_cast %765 : vector<16xf32> to vector<16x1xf32>
    %cst_251 = arith.constant 0.000000e+00 : f32
    %767 = vector.shape_cast %60 : vector<1x64xi1> to vector<1x64xi1>
    %768 = vector.broadcast %767 : vector<1x64xi1> to vector<16x64xi1>
    %769 = vector.shape_cast %766 : vector<16x1xf32> to vector<16x1xf32>
    %770 = vector.broadcast %769 : vector<16x1xf32> to vector<16x64xf32>
    %771 = vector.broadcast %cst_251 : f32 to vector<16x64xf32>
    %772 = arith.select %768, %770, %771 : vector<16x64xi1>, vector<16x64xf32>
    %773 = arith.addf %760, %772 : vector<16x64xf32>
    %cst_252 = arith.constant -1.000000e+30 : f32
    %774 = vector.shape_cast %65 : vector<1x64xi1> to vector<1x64xi1>
    %775 = vector.broadcast %774 : vector<1x64xi1> to vector<16x64xi1>
    %776 = vector.broadcast %cst_252 : f32 to vector<16x64xf32>
    %777 = arith.select %775, %746, %776 : vector<16x64xi1>, vector<16x64xf32>
    %cst_253 = arith.constant dense<0xFF800000> : vector<16xf32>
    %778 = vector.multi_reduction <maximumf>, %777, %cst_253 [1] : vector<16x64xf32> to vector<16xf32>
    %779 = vector.shape_cast %778 : vector<16xf32> to vector<16x1xf32>
    %cst_254 = arith.constant 0.000000e+00 : f32
    %780 = vector.shape_cast %65 : vector<1x64xi1> to vector<1x64xi1>
    %781 = vector.broadcast %780 : vector<1x64xi1> to vector<16x64xi1>
    %782 = vector.shape_cast %779 : vector<16x1xf32> to vector<16x1xf32>
    %783 = vector.broadcast %782 : vector<16x1xf32> to vector<16x64xf32>
    %784 = vector.broadcast %cst_254 : f32 to vector<16x64xf32>
    %785 = arith.select %781, %783, %784 : vector<16x64xi1>, vector<16x64xf32>
    %786 = arith.addf %773, %785 : vector<16x64xf32>
    %cst_255 = arith.constant -1.000000e+30 : f32
    %787 = vector.shape_cast %70 : vector<1x64xi1> to vector<1x64xi1>
    %788 = vector.broadcast %787 : vector<1x64xi1> to vector<16x64xi1>
    %789 = vector.broadcast %cst_255 : f32 to vector<16x64xf32>
    %790 = arith.select %788, %746, %789 : vector<16x64xi1>, vector<16x64xf32>
    %cst_256 = arith.constant dense<0xFF800000> : vector<16xf32>
    %791 = vector.multi_reduction <maximumf>, %790, %cst_256 [1] : vector<16x64xf32> to vector<16xf32>
    %792 = vector.shape_cast %791 : vector<16xf32> to vector<16x1xf32>
    %cst_257 = arith.constant 0.000000e+00 : f32
    %793 = vector.shape_cast %70 : vector<1x64xi1> to vector<1x64xi1>
    %794 = vector.broadcast %793 : vector<1x64xi1> to vector<16x64xi1>
    %795 = vector.shape_cast %792 : vector<16x1xf32> to vector<16x1xf32>
    %796 = vector.broadcast %795 : vector<16x1xf32> to vector<16x64xf32>
    %797 = vector.broadcast %cst_257 : f32 to vector<16x64xf32>
    %798 = arith.select %794, %796, %797 : vector<16x64xi1>, vector<16x64xf32>
    %799 = arith.addf %786, %798 : vector<16x64xf32>
    %800 = arith.subf %746, %799 : vector<16x64xf32>
    %801 = math.exp %800 : vector<16x64xf32>
    %cst_258 = arith.constant 0.000000e+00 : f32
    %802 = vector.broadcast %cst_258 : f32 to vector<16x64xf32>
    %cst_259 = arith.constant 0.000000e+00 : f32
    %803 = vector.shape_cast %55 : vector<1x64xi1> to vector<1x64xi1>
    %804 = vector.broadcast %803 : vector<1x64xi1> to vector<16x64xi1>
    %805 = vector.broadcast %cst_259 : f32 to vector<16x64xf32>
    %806 = arith.select %804, %801, %805 : vector<16x64xi1>, vector<16x64xf32>
    %cst_260 = arith.constant dense<0.000000e+00> : vector<16xf32>
    %807 = vector.multi_reduction <add>, %806, %cst_260 [1] : vector<16x64xf32> to vector<16xf32>
    %808 = vector.shape_cast %807 : vector<16xf32> to vector<16x1xf32>
    %809 = tpu.reciprocal %808 {approx = true} : vector<16x1xf32> -> vector<16x1xf32>
    %cst_261 = arith.constant 0.000000e+00 : f32
    %810 = vector.shape_cast %55 : vector<1x64xi1> to vector<1x64xi1>
    %811 = vector.broadcast %810 : vector<1x64xi1> to vector<16x64xi1>
    %812 = vector.shape_cast %809 : vector<16x1xf32> to vector<16x1xf32>
    %813 = vector.broadcast %812 : vector<16x1xf32> to vector<16x64xf32>
    %814 = vector.broadcast %cst_261 : f32 to vector<16x64xf32>
    %815 = arith.select %811, %813, %814 : vector<16x64xi1>, vector<16x64xf32>
    %816 = arith.addf %802, %815 : vector<16x64xf32>
    %cst_262 = arith.constant 0.000000e+00 : f32
    %817 = vector.shape_cast %60 : vector<1x64xi1> to vector<1x64xi1>
    %818 = vector.broadcast %817 : vector<1x64xi1> to vector<16x64xi1>
    %819 = vector.broadcast %cst_262 : f32 to vector<16x64xf32>
    %820 = arith.select %818, %801, %819 : vector<16x64xi1>, vector<16x64xf32>
    %cst_263 = arith.constant dense<0.000000e+00> : vector<16xf32>
    %821 = vector.multi_reduction <add>, %820, %cst_263 [1] : vector<16x64xf32> to vector<16xf32>
    %822 = vector.shape_cast %821 : vector<16xf32> to vector<16x1xf32>
    %823 = tpu.reciprocal %822 {approx = true} : vector<16x1xf32> -> vector<16x1xf32>
    %cst_264 = arith.constant 0.000000e+00 : f32
    %824 = vector.shape_cast %60 : vector<1x64xi1> to vector<1x64xi1>
    %825 = vector.broadcast %824 : vector<1x64xi1> to vector<16x64xi1>
    %826 = vector.shape_cast %823 : vector<16x1xf32> to vector<16x1xf32>
    %827 = vector.broadcast %826 : vector<16x1xf32> to vector<16x64xf32>
    %828 = vector.broadcast %cst_264 : f32 to vector<16x64xf32>
    %829 = arith.select %825, %827, %828 : vector<16x64xi1>, vector<16x64xf32>
    %830 = arith.addf %816, %829 : vector<16x64xf32>
    %cst_265 = arith.constant 0.000000e+00 : f32
    %831 = vector.shape_cast %65 : vector<1x64xi1> to vector<1x64xi1>
    %832 = vector.broadcast %831 : vector<1x64xi1> to vector<16x64xi1>
    %833 = vector.broadcast %cst_265 : f32 to vector<16x64xf32>
    %834 = arith.select %832, %801, %833 : vector<16x64xi1>, vector<16x64xf32>
    %cst_266 = arith.constant dense<0.000000e+00> : vector<16xf32>
    %835 = vector.multi_reduction <add>, %834, %cst_266 [1] : vector<16x64xf32> to vector<16xf32>
    %836 = vector.shape_cast %835 : vector<16xf32> to vector<16x1xf32>
    %837 = tpu.reciprocal %836 {approx = true} : vector<16x1xf32> -> vector<16x1xf32>
    %cst_267 = arith.constant 0.000000e+00 : f32
    %838 = vector.shape_cast %65 : vector<1x64xi1> to vector<1x64xi1>
    %839 = vector.broadcast %838 : vector<1x64xi1> to vector<16x64xi1>
    %840 = vector.shape_cast %837 : vector<16x1xf32> to vector<16x1xf32>
    %841 = vector.broadcast %840 : vector<16x1xf32> to vector<16x64xf32>
    %842 = vector.broadcast %cst_267 : f32 to vector<16x64xf32>
    %843 = arith.select %839, %841, %842 : vector<16x64xi1>, vector<16x64xf32>
    %844 = arith.addf %830, %843 : vector<16x64xf32>
    %cst_268 = arith.constant 0.000000e+00 : f32
    %845 = vector.shape_cast %70 : vector<1x64xi1> to vector<1x64xi1>
    %846 = vector.broadcast %845 : vector<1x64xi1> to vector<16x64xi1>
    %847 = vector.broadcast %cst_268 : f32 to vector<16x64xf32>
    %848 = arith.select %846, %801, %847 : vector<16x64xi1>, vector<16x64xf32>
    %cst_269 = arith.constant dense<0.000000e+00> : vector<16xf32>
    %849 = vector.multi_reduction <add>, %848, %cst_269 [1] : vector<16x64xf32> to vector<16xf32>
    %850 = vector.shape_cast %849 : vector<16xf32> to vector<16x1xf32>
    %851 = tpu.reciprocal %850 {approx = true} : vector<16x1xf32> -> vector<16x1xf32>
    %cst_270 = arith.constant 0.000000e+00 : f32
    %852 = vector.shape_cast %70 : vector<1x64xi1> to vector<1x64xi1>
    %853 = vector.broadcast %852 : vector<1x64xi1> to vector<16x64xi1>
    %854 = vector.shape_cast %851 : vector<16x1xf32> to vector<16x1xf32>
    %855 = vector.broadcast %854 : vector<16x1xf32> to vector<16x64xf32>
    %856 = vector.broadcast %cst_270 : f32 to vector<16x64xf32>
    %857 = arith.select %853, %855, %856 : vector<16x64xi1>, vector<16x64xf32>
    %858 = arith.addf %844, %857 : vector<16x64xf32>
    %859 = arith.mulf %801, %858 : vector<16x64xf32>
    %cst_271 = arith.constant dense<0.000000e+00> : vector<16x128xf32>
    %860 = tpu.matmul %859, %742, %cst_271 {dimension_numbers = #tpu.dot_dimension_numbers<[1], [0], [0], [1], [0, 0, 1, 1], [], []>} : vector<16x64xf32>, vector<64x128xf32>, vector<16x128xf32> -> vector<16x128xf32>
    %861 = arith.truncf %860 : vector<16x128xf32> to vector<16x128xbf16>
    %c1_272 = arith.constant 1 : index
    %c0_273 = arith.constant 0 : index
    %c0_274 = arith.constant 0 : index
    %862 = vector.load %arg17[%c1_272, %c0_273, %c0_274] : memref<2x128x128xbf16, #tpu.memory_space<vmem>>, vector<1x128x128xbf16>
    %863 = vector.shape_cast %862 : vector<1x128x128xbf16> to vector<128x128xbf16>
    %cst_275 = arith.constant dense<0.000000e+00> : vector<16x128xf32>
    %864 = tpu.matmul %861, %863, %cst_275 {dimension_numbers = #tpu.dot_dimension_numbers<[1], [0], [0], [1], [0, 0, 1, 1], [], []>} : vector<16x128xbf16>, vector<128x128xbf16>, vector<16x128xf32> -> vector<16x128xf32>
    %c1_276 = arith.constant 1 : index
    %c0_277 = arith.constant 0 : index
    %c0_278 = arith.constant 0 : index
    %865 = vector.load %arg18[%c1_276, %c0_277, %c0_278] : memref<2x1x128xf32, #tpu.memory_space<vmem>>, vector<1x1x128xf32>
    %866 = vector.shape_cast %865 : vector<1x1x128xf32> to vector<1x128xf32>
    %867 = vector.broadcast %866 : vector<1x128xf32> to vector<16x128xf32>
    %868 = arith.addf %864, %867 : vector<16x128xf32>
    %869 = arith.addf %707, %868 : vector<16x128xf32>
    %c1_279 = arith.constant 1 : index
    %c0_280 = arith.constant 0 : index
    %c0_281 = arith.constant 0 : index
    %870 = vector.load %arg19[%c1_279, %c0_280, %c0_281] : memref<2x1x128xf32, #tpu.memory_space<vmem>>, vector<1x1x128xf32>
    %871 = vector.shape_cast %870 : vector<1x1x128xf32> to vector<1x128xf32>
    %c1_282 = arith.constant 1 : index
    %c0_283 = arith.constant 0 : index
    %c0_284 = arith.constant 0 : index
    %872 = vector.load %arg20[%c1_282, %c0_283, %c0_284] : memref<2x1x128xf32, #tpu.memory_space<vmem>>, vector<1x1x128xf32>
    %873 = vector.shape_cast %872 : vector<1x1x128xf32> to vector<1x128xf32>
    %cst_285 = arith.constant dense<0.000000e+00> : vector<16xf32>
    %874 = vector.multi_reduction <add>, %869, %cst_285 [1] : vector<16x128xf32> to vector<16xf32>
    %875 = vector.shape_cast %874 : vector<16xf32> to vector<16x1xf32>
    %cst_286 = arith.constant 1.280000e+02 : f32
    %876 = vector.broadcast %cst_286 : f32 to vector<16x1xf32>
    %877 = arith.divf %875, %876 : vector<16x1xf32>
    %878 = vector.broadcast %877 : vector<16x1xf32> to vector<16x128xf32>
    %879 = arith.subf %869, %878 : vector<16x128xf32>
    %880 = arith.mulf %879, %879 : vector<16x128xf32>
    %cst_287 = arith.constant dense<0.000000e+00> : vector<16xf32>
    %881 = vector.multi_reduction <add>, %880, %cst_287 [1] : vector<16x128xf32> to vector<16xf32>
    %882 = vector.shape_cast %881 : vector<16xf32> to vector<16x1xf32>
    %cst_288 = arith.constant 1.280000e+02 : f32
    %883 = vector.broadcast %cst_288 : f32 to vector<16x1xf32>
    %884 = arith.divf %882, %883 : vector<16x1xf32>
    %885 = vector.broadcast %877 : vector<16x1xf32> to vector<16x128xf32>
    %886 = arith.subf %869, %885 : vector<16x128xf32>
    %cst_289 = arith.constant 9.99999974E-6 : f32
    %887 = vector.broadcast %cst_289 : f32 to vector<16x1xf32>
    %888 = arith.addf %884, %887 : vector<16x1xf32>
    %889 = math.rsqrt %888 : vector<16x1xf32>
    %890 = vector.broadcast %889 : vector<16x1xf32> to vector<16x128xf32>
    %891 = arith.mulf %886, %890 : vector<16x128xf32>
    %892 = vector.broadcast %871 : vector<1x128xf32> to vector<16x128xf32>
    %893 = arith.mulf %891, %892 : vector<16x128xf32>
    %894 = vector.broadcast %873 : vector<1x128xf32> to vector<16x128xf32>
    %895 = arith.addf %893, %894 : vector<16x128xf32>
    %896 = arith.truncf %895 : vector<16x128xf32> to vector<16x128xbf16>
    %c1_290 = arith.constant 1 : index
    %c0_291 = arith.constant 0 : index
    %c0_292 = arith.constant 0 : index
    %897 = vector.load %arg21[%c1_290, %c0_291, %c0_292] : memref<2x128x256xbf16, #tpu.memory_space<vmem>>, vector<1x128x256xbf16>
    %898 = vector.shape_cast %897 : vector<1x128x256xbf16> to vector<128x256xbf16>
    %cst_293 = arith.constant dense<0.000000e+00> : vector<16x256xf32>
    %899 = tpu.matmul %896, %898, %cst_293 {dimension_numbers = #tpu.dot_dimension_numbers<[1], [0], [0], [1], [0, 0, 1, 1], [], []>} : vector<16x128xbf16>, vector<128x256xbf16>, vector<16x256xf32> -> vector<16x256xf32>
    %c1_294 = arith.constant 1 : index
    %c0_295 = arith.constant 0 : index
    %c0_296 = arith.constant 0 : index
    %900 = vector.load %arg22[%c1_294, %c0_295, %c0_296] : memref<2x1x256xf32, #tpu.memory_space<vmem>>, vector<1x1x256xf32>
    %901 = vector.shape_cast %900 : vector<1x1x256xf32> to vector<1x256xf32>
    %902 = vector.broadcast %901 : vector<1x256xf32> to vector<16x256xf32>
    %903 = arith.addf %899, %902 : vector<16x256xf32>
    %cst_297 = arith.constant 5.000000e-01 : f32
    %904 = vector.broadcast %cst_297 : f32 to vector<16x256xf32>
    %905 = arith.mulf %904, %903 : vector<16x256xf32>
    %cst_298 = arith.constant 4.471500e-02 : f32
    %906 = vector.broadcast %cst_298 : f32 to vector<16x256xf32>
    %907 = arith.mulf %906, %903 : vector<16x256xf32>
    %908 = arith.mulf %907, %903 : vector<16x256xf32>
    %909 = arith.mulf %908, %903 : vector<16x256xf32>
    %910 = arith.addf %903, %909 : vector<16x256xf32>
    %cst_299 = arith.constant 0.797884583 : f32
    %911 = vector.broadcast %cst_299 : f32 to vector<16x256xf32>
    %912 = arith.mulf %911, %910 : vector<16x256xf32>
    %913 = math.tanh %912 : vector<16x256xf32>
    %cst_300 = arith.constant 1.000000e+00 : f32
    %914 = vector.broadcast %cst_300 : f32 to vector<16x256xf32>
    %915 = arith.addf %914, %913 : vector<16x256xf32>
    %916 = arith.mulf %905, %915 : vector<16x256xf32>
    %917 = arith.truncf %916 : vector<16x256xf32> to vector<16x256xbf16>
    %c1_301 = arith.constant 1 : index
    %c0_302 = arith.constant 0 : index
    %c0_303 = arith.constant 0 : index
    %918 = vector.load %arg23[%c1_301, %c0_302, %c0_303] : memref<2x256x128xbf16, #tpu.memory_space<vmem>>, vector<1x256x128xbf16>
    %919 = vector.shape_cast %918 : vector<1x256x128xbf16> to vector<256x128xbf16>
    %cst_304 = arith.constant dense<0.000000e+00> : vector<16x128xf32>
    %920 = tpu.matmul %917, %919, %cst_304 {dimension_numbers = #tpu.dot_dimension_numbers<[1], [0], [0], [1], [0, 0, 1, 1], [], []>} : vector<16x256xbf16>, vector<256x128xbf16>, vector<16x128xf32> -> vector<16x128xf32>
    %c1_305 = arith.constant 1 : index
    %c0_306 = arith.constant 0 : index
    %c0_307 = arith.constant 0 : index
    %921 = vector.load %arg24[%c1_305, %c0_306, %c0_307] : memref<2x1x128xf32, #tpu.memory_space<vmem>>, vector<1x1x128xf32>
    %922 = vector.shape_cast %921 : vector<1x1x128xf32> to vector<1x128xf32>
    %923 = vector.broadcast %922 : vector<1x128xf32> to vector<16x128xf32>
    %924 = arith.addf %920, %923 : vector<16x128xf32>
    %925 = arith.addf %895, %924 : vector<16x128xf32>
    %c1_308 = arith.constant 1 : index
    %c0_309 = arith.constant 0 : index
    %c0_310 = arith.constant 0 : index
    %926 = vector.load %arg25[%c1_308, %c0_309, %c0_310] : memref<2x1x128xf32, #tpu.memory_space<vmem>>, vector<1x1x128xf32>
    %927 = vector.shape_cast %926 : vector<1x1x128xf32> to vector<1x128xf32>
    %c1_311 = arith.constant 1 : index
    %c0_312 = arith.constant 0 : index
    %c0_313 = arith.constant 0 : index
    %928 = vector.load %arg26[%c1_311, %c0_312, %c0_313] : memref<2x1x128xf32, #tpu.memory_space<vmem>>, vector<1x1x128xf32>
    %929 = vector.shape_cast %928 : vector<1x1x128xf32> to vector<1x128xf32>
    %cst_314 = arith.constant dense<0.000000e+00> : vector<16xf32>
    %930 = vector.multi_reduction <add>, %925, %cst_314 [1] : vector<16x128xf32> to vector<16xf32>
    %931 = vector.shape_cast %930 : vector<16xf32> to vector<16x1xf32>
    %cst_315 = arith.constant 1.280000e+02 : f32
    %932 = vector.broadcast %cst_315 : f32 to vector<16x1xf32>
    %933 = arith.divf %931, %932 : vector<16x1xf32>
    %934 = vector.broadcast %933 : vector<16x1xf32> to vector<16x128xf32>
    %935 = arith.subf %925, %934 : vector<16x128xf32>
    %936 = arith.mulf %935, %935 : vector<16x128xf32>
    %cst_316 = arith.constant dense<0.000000e+00> : vector<16xf32>
    %937 = vector.multi_reduction <add>, %936, %cst_316 [1] : vector<16x128xf32> to vector<16xf32>
    %938 = vector.shape_cast %937 : vector<16xf32> to vector<16x1xf32>
    %cst_317 = arith.constant 1.280000e+02 : f32
    %939 = vector.broadcast %cst_317 : f32 to vector<16x1xf32>
    %940 = arith.divf %938, %939 : vector<16x1xf32>
    %941 = vector.broadcast %933 : vector<16x1xf32> to vector<16x128xf32>
    %942 = arith.subf %925, %941 : vector<16x128xf32>
    %cst_318 = arith.constant 9.99999974E-6 : f32
    %943 = vector.broadcast %cst_318 : f32 to vector<16x1xf32>
    %944 = arith.addf %940, %943 : vector<16x1xf32>
    %945 = math.rsqrt %944 : vector<16x1xf32>
    %946 = vector.broadcast %945 : vector<16x1xf32> to vector<16x128xf32>
    %947 = arith.mulf %942, %946 : vector<16x128xf32>
    %948 = vector.broadcast %927 : vector<1x128xf32> to vector<16x128xf32>
    %949 = arith.mulf %947, %948 : vector<16x128xf32>
    %950 = vector.broadcast %929 : vector<1x128xf32> to vector<16x128xf32>
    %951 = arith.addf %949, %950 : vector<16x128xf32>
    %c0_319 = arith.constant 0 : index
    %c0_320 = arith.constant 0 : index
    %952 = vector.load %arg29[%c0_319, %c0_320] : memref<16x128xf32, #tpu.memory_space<vmem>>, vector<16x128xf32>
    tpu.vector_store %arg29[%c0_319, %c0_320], %951 {strides = array<i32>} : memref<16x128xf32, #tpu.memory_space<vmem>>, vector<16x128xf32>,
    %953 = arith.truncf %951 : vector<16x128xf32> to vector<16x128xbf16>
    %c0_321 = arith.constant 0 : index
    %c0_322 = arith.constant 0 : index
    %954 = vector.load %arg27[%c0_321, %c0_322] : memref<128x128xbf16, #tpu.memory_space<vmem>>, vector<128x128xbf16>
    %cst_323 = arith.constant dense<0.000000e+00> : vector<16x128xf32>
    %955 = tpu.matmul %953, %954, %cst_323 {dimension_numbers = #tpu.dot_dimension_numbers<[1], [0], [0], [1], [0, 0, 1, 1], [], []>} : vector<16x128xbf16>, vector<128x128xbf16>, vector<16x128xf32> -> vector<16x128xf32>
    %c0_324 = arith.constant 0 : index
    %c0_325 = arith.constant 0 : index
    %956 = vector.load %arg28[%c0_324, %c0_325] : memref<1x128xf32, #tpu.memory_space<vmem>>, vector<1x128xf32>
    %957 = vector.broadcast %956 : vector<1x128xf32> to vector<16x128xf32>
    %958 = arith.addf %955, %957 : vector<16x128xf32>
    %c0_326 = arith.constant 0 : index
    %c0_327 = arith.constant 0 : index
    %959 = vector.load %arg30[%c0_326, %c0_327] : memref<16x128xf32, #tpu.memory_space<vmem>>, vector<16x128xf32>
    tpu.vector_store %arg30[%c0_326, %c0_327], %958 {strides = array<i32>} : memref<16x128xf32, #tpu.memory_space<vmem>>, vector<16x128xf32>,
    %cst_328 = arith.constant dense<0xFF800000> : vector<16xf32>
    %960 = vector.multi_reduction <maximumf>, %958, %cst_328 [1] : vector<16x128xf32> to vector<16xf32>
    %961 = vector.shape_cast %960 : vector<16xf32> to vector<16x1xf32>
    %962 = tpu.iota {dimensions = array<i32: 1>} : vector<16x128xi32>
    %963 = vector.broadcast %961 : vector<16x1xf32> to vector<16x128xf32>
    %964 = arith.cmpf oge, %958, %963 : vector<16x128xf32>
    %c128_i32_329 = arith.constant 128 : i32
    %965 = vector.broadcast %c128_i32_329 : i32 to vector<16x128xi32>
    %966 = arith.select %964, %962, %965 : vector<16x128xi1>, vector<16x128xi32>
    %cst_330 = arith.constant dense<2147483647> : vector<16xi32>
    %967 = vector.multi_reduction <minsi>, %966, %cst_330 [1] : vector<16x128xi32> to vector<16xi32>
    %968 = vector.shape_cast %967 : vector<16xi32> to vector<16x1xi32>
    %c0_331 = arith.constant 0 : index
    %c0_332 = arith.constant 0 : index
    %969 = vector.load %arg2[%c0_331, %c0_332] : memref<16x1xi32, #tpu.memory_space<vmem>>, vector<16x1xi32>
    %970 = vector.broadcast %961 : vector<16x1xf32> to vector<16x128xf32>
    %971 = arith.subf %958, %970 : vector<16x128xf32>
    %972 = math.exp %971 : vector<16x128xf32>
    %cst_333 = arith.constant dense<0.000000e+00> : vector<16xf32>
    %973 = vector.multi_reduction <add>, %972, %cst_333 [1] : vector<16x128xf32> to vector<16xf32>
    %974 = vector.shape_cast %973 : vector<16xf32> to vector<16x1xf32>
    %975 = math.log %974 : vector<16x1xf32>
    %976 = arith.addf %975, %961 : vector<16x1xf32>
    %977 = vector.broadcast %969 : vector<16x1xi32> to vector<16x128xi32>
    %978 = arith.cmpi eq, %962, %977 : vector<16x128xi32>
    %979 = arith.extui %978 : vector<16x128xi1> to vector<16x128xi32>
    %980 = arith.sitofp %979 : vector<16x128xi32> to vector<16x128xf32>
    %981 = arith.mulf %980, %958 : vector<16x128xf32>
    %cst_334 = arith.constant dense<0.000000e+00> : vector<16xf32>
    %982 = vector.multi_reduction <add>, %981, %cst_334 [1] : vector<16x128xf32> to vector<16xf32>
    %983 = vector.shape_cast %982 : vector<16xf32> to vector<16x1xf32>
    %984 = arith.subf %976, %983 : vector<16x1xf32>
    %c1_i32 = arith.constant 1 : i32
    %985 = vector.broadcast %c1_i32 : i32 to vector<16x1xi32>
    %986 = arith.cmpi ne, %969, %985 : vector<16x1xi32>
    %987 = arith.extui %986 : vector<16x1xi1> to vector<16x1xi32>
    %988 = arith.sitofp %987 : vector<16x1xi32> to vector<16x1xf32>
    %989 = arith.mulf %984, %988 : vector<16x1xf32>
    %990 = vector.shape_cast %989 : vector<16x1xf32> to vector<1x16x1xf32>
    %cst_335 = arith.constant dense<0.000000e+00> : vector<1xf32>
    %991 = vector.multi_reduction <add>, %990, %cst_335 [1, 2] : vector<1x16x1xf32> to vector<1xf32>
    %992 = vector.shape_cast %991 : vector<1xf32> to vector<1x1x1xf32>
    %993 = vector.extract %992[0, 0, 0] : f32 from vector<1x1x1xf32>
    %994 = vector.shape_cast %988 : vector<16x1xf32> to vector<1x16x1xf32>
    %cst_336 = arith.constant dense<0.000000e+00> : vector<1xf32>
    %995 = vector.multi_reduction <add>, %994, %cst_336 [1, 2] : vector<1x16x1xf32> to vector<1xf32>
    %996 = vector.shape_cast %995 : vector<1xf32> to vector<1x1x1xf32>
    %997 = vector.extract %996[0, 0, 0] : f32 from vector<1x1x1xf32>
    %998 = arith.cmpi eq, %968, %969 : vector<16x1xi32>
    %c3_i32 = arith.constant 3 : i32
    %999 = vector.broadcast %c3_i32 : i32 to vector<16x1xi32>
    %1000 = arith.cmpi ne, %968, %999 : vector<16x1xi32>
    %1001 = arith.andi %998, %1000 : vector<16x1xi1>
    %1002 = arith.extui %1001 : vector<16x1xi1> to vector<16x1xi32>
    %1003 = arith.sitofp %1002 : vector<16x1xi32> to vector<16x1xf32>
    %1004 = arith.mulf %1003, %988 : vector<16x1xf32>
    %1005 = vector.shape_cast %1004 : vector<16x1xf32> to vector<1x16x1xf32>
    %cst_337 = arith.constant dense<0.000000e+00> : vector<1xf32>
    %1006 = vector.multi_reduction <add>, %1005, %cst_337 [1, 2] : vector<1x16x1xf32> to vector<1xf32>
    %1007 = vector.shape_cast %1006 : vector<1xf32> to vector<1x1x1xf32>
    %1008 = vector.extract %1007[0, 0, 0] : f32 from vector<1x1x1xf32>
    %1009 = vector.shape_cast %988 : vector<16x1xf32> to vector<1x16x1xf32>
    %cst_338 = arith.constant dense<0.000000e+00> : vector<1xf32>
    %1010 = vector.multi_reduction <add>, %1009, %cst_338 [1, 2] : vector<1x16x1xf32> to vector<1xf32>
    %1011 = vector.shape_cast %1010 : vector<1xf32> to vector<1x1x1xf32>
    %1012 = vector.extract %1011[0, 0, 0] : f32 from vector<1x1x1xf32>
    %cst_339 = arith.constant 1.000000e+00 : f32
    %1013 = vector.broadcast %cst_339 : f32 to vector<16x1xf32>
    %1014 = arith.select %986, %1003, %1013 : vector<16x1xi1>, vector<16x1xf32>
    %1015 = vector.extract_strided_slice %1014 {offsets = [0, 0], sizes = [8, 1], strides = [1, 1]} : vector<16x1xf32> to vector<8x1xf32>
    %1016 = vector.shape_cast %1015 : vector<8x1xf32> to vector<1x8x1xf32>
    %cst_340 = arith.constant dense<0x7F800000> : vector<1xf32>
    %1017 = vector.multi_reduction <minimumf>, %1016, %cst_340 [1, 2] : vector<1x8x1xf32> to vector<1xf32>
    %1018 = vector.shape_cast %1017 : vector<1xf32> to vector<1x1x1xf32>
    %1019 = vector.extract %1018[0, 0, 0] : f32 from vector<1x1x1xf32>
    %cst_341 = arith.constant 0.000000e+00 : f32
    %1020 = arith.addf %cst_341, %1019 : f32
    %1021 = vector.extract_strided_slice %1014 {offsets = [8, 0], sizes = [8, 1], strides = [1, 1]} : vector<16x1xf32> to vector<8x1xf32>
    %1022 = vector.shape_cast %1021 : vector<8x1xf32> to vector<1x8x1xf32>
    %cst_342 = arith.constant dense<0x7F800000> : vector<1xf32>
    %1023 = vector.multi_reduction <minimumf>, %1022, %cst_342 [1, 2] : vector<1x8x1xf32> to vector<1xf32>
    %1024 = vector.shape_cast %1023 : vector<1xf32> to vector<1x1x1xf32>
    %1025 = vector.extract %1024[0, 0, 0] : f32 from vector<1x1x1xf32>
    %1026 = arith.addf %1020, %1025 : f32
    %1027 = tpu.iota {dimensions = array<i32: 1>} : vector<1x128xi32>
    %c0_i32_343 = arith.constant 0 : i32
    %1028 = vector.broadcast %c0_i32_343 : i32 to vector<1x128xi32>
    %1029 = arith.cmpi eq, %1027, %1028 : vector<1x128xi32>
    %cst_344 = arith.constant 0.000000e+00 : f32
    %1030 = vector.broadcast %993 : f32 to vector<1x128xf32>
    %1031 = vector.broadcast %cst_344 : f32 to vector<1x128xf32>
    %1032 = arith.select %1029, %1030, %1031 : vector<1x128xi1>, vector<1x128xf32>
    %c1_i32_345 = arith.constant 1 : i32
    %1033 = vector.broadcast %c1_i32_345 : i32 to vector<1x128xi32>
    %1034 = arith.cmpi eq, %1027, %1033 : vector<1x128xi32>
    %cst_346 = arith.constant 0.000000e+00 : f32
    %1035 = vector.broadcast %997 : f32 to vector<1x128xf32>
    %1036 = vector.broadcast %cst_346 : f32 to vector<1x128xf32>
    %1037 = arith.select %1034, %1035, %1036 : vector<1x128xi1>, vector<1x128xf32>
    %1038 = arith.addf %1032, %1037 : vector<1x128xf32>
    %c2_i32 = arith.constant 2 : i32
    %1039 = vector.broadcast %c2_i32 : i32 to vector<1x128xi32>
    %1040 = arith.cmpi eq, %1027, %1039 : vector<1x128xi32>
    %cst_347 = arith.constant 0.000000e+00 : f32
    %1041 = vector.broadcast %1008 : f32 to vector<1x128xf32>
    %1042 = vector.broadcast %cst_347 : f32 to vector<1x128xf32>
    %1043 = arith.select %1040, %1041, %1042 : vector<1x128xi1>, vector<1x128xf32>
    %1044 = arith.addf %1038, %1043 : vector<1x128xf32>
    %c3_i32_348 = arith.constant 3 : i32
    %1045 = vector.broadcast %c3_i32_348 : i32 to vector<1x128xi32>
    %1046 = arith.cmpi eq, %1027, %1045 : vector<1x128xi32>
    %cst_349 = arith.constant 0.000000e+00 : f32
    %1047 = vector.broadcast %1012 : f32 to vector<1x128xf32>
    %1048 = vector.broadcast %cst_349 : f32 to vector<1x128xf32>
    %1049 = arith.select %1046, %1047, %1048 : vector<1x128xi1>, vector<1x128xf32>
    %1050 = arith.addf %1044, %1049 : vector<1x128xf32>
    %c4_i32 = arith.constant 4 : i32
    %1051 = vector.broadcast %c4_i32 : i32 to vector<1x128xi32>
    %1052 = arith.cmpi eq, %1027, %1051 : vector<1x128xi32>
    %cst_350 = arith.constant 0.000000e+00 : f32
    %1053 = vector.broadcast %1026 : f32 to vector<1x128xf32>
    %1054 = vector.broadcast %cst_350 : f32 to vector<1x128xf32>
    %1055 = arith.select %1052, %1053, %1054 : vector<1x128xi1>, vector<1x128xf32>
    %1056 = arith.addf %1050, %1055 : vector<1x128xf32>
    %c5_i32 = arith.constant 5 : i32
    %1057 = vector.broadcast %c5_i32 : i32 to vector<1x128xi32>
    %1058 = arith.cmpi eq, %1027, %1057 : vector<1x128xi32>
    %cst_351 = arith.constant 2.000000e+00 : f32
    %cst_352 = arith.constant 0.000000e+00 : f32
    %1059 = vector.broadcast %cst_351 : f32 to vector<1x128xf32>
    %1060 = vector.broadcast %cst_352 : f32 to vector<1x128xf32>
    %1061 = arith.select %1058, %1059, %1060 : vector<1x128xi1>, vector<1x128xf32>
    %1062 = arith.addf %1056, %1061 : vector<1x128xf32>
    %c0_353 = arith.constant 0 : index
    %c0_354 = arith.constant 0 : index
    %1063 = vector.load %arg31[%c0_353, %c0_354] : memref<1x128xf32, #tpu.memory_space<vmem>>, vector<1x128xf32>
    tpu.vector_store %arg31[%c0_353, %c0_354], %1062 {strides = array<i32>} : memref<1x128xf32, #tpu.memory_space<vmem>>, vector<1x128xf32>,
    return
  }
}

</mosaic_0001>

<llo_original>
// kernel: tile.25
$region0: #{tile.25}
  %s0 = inlined_call_operand.vmem [shape: f32[16,4,16], index: 0, kind: input, shape index: {}]
  %s1 = inlined_call_operand.vmem [shape: f32[16,64], index: 1, kind: output, shape index: {}]
  $region1: #{tile.25} parent=0
    #allocation0 [shape = 'u8[65536]{0}', space=vmem, size = 0x10000, scoped, tag = 'scoped mem for input reshape']
    %s3 = ssub.s32 16, 1
    %s4 = scalar_lea.vmem %s0, 60
    %v5 = vld [vmem:[%s4] sm:%s3]
    %s6 = scalar_lea.vmem [#allocation0], 120
    %7 = vst [vmem:[%s6] sm:%s3] %v5
    %s8 = scalar_lea.vmem %s0, 56
    %v9 = vld [vmem:[%s8] sm:%s3]
    %s10 = scalar_lea.vmem [#allocation0], 112
    %11 = vst [vmem:[%s10] sm:%s3] %v9
    %s12 = scalar_lea.vmem %s0, 52
    %v13 = vld [vmem:[%s12] sm:%s3]
    %s14 = scalar_lea.vmem [#allocation0], 104
    %15 = vst [vmem:[%s14] sm:%s3] %v13
    %s16 = scalar_lea.vmem %s0, 48
    %v17 = vld [vmem:[%s16] sm:%s3]
    %s18 = scalar_lea.vmem [#allocation0], 96
    %19 = vst [vmem:[%s18] sm:%s3] %v17
    %s20 = scalar_lea.vmem %s0, 44
    %v21 = vld [vmem:[%s20] sm:%s3]
    %s22 = scalar_lea.vmem [#allocation0], 88
    %23 = vst [vmem:[%s22] sm:%s3] %v21
    %s24 = scalar_lea.vmem %s0, 40
    %v25 = vld [vmem:[%s24] sm:%s3]
    %s26 = scalar_lea.vmem [#allocation0], 80
    %27 = vst [vmem:[%s26] sm:%s3] %v25
    %s28 = scalar_lea.vmem %s0, 36
    %v29 = vld [vmem:[%s28] sm:%s3]
    %s30 = scalar_lea.vmem [#allocation0], 72
    %31 = vst [vmem:[%s30] sm:%s3] %v29
    %s32 = scalar_lea.vmem %s0, 32
    %v33 = vld [vmem:[%s32] sm:%s3]
    %s34 = scalar_lea.vmem [#allocation0], 64
    %35 = vst [vmem:[%s34] sm:%s3] %v33
    %s36 = scalar_lea.vmem %s0, 28
    %v37 = vld [vmem:[%s36] sm:%s3]
    %s38 = scalar_lea.vmem [#allocation0], 56
    %39 = vst [vmem:[%s38] sm:%s3] %v37
    %s40 = scalar_lea.vmem %s0, 24
    %v41 = vld [vmem:[%s40] sm:%s3]
    %s42 = scalar_lea.vmem [#allocation0], 48
    %43 = vst [vmem:[%s42] sm:%s3] %v41
    %s44 = scalar_lea.vmem %s0, 20
    %v45 = vld [vmem:[%s44] sm:%s3]
    %s46 = scalar_lea.vmem [#allocation0], 40
    %47 = vst [vmem:[%s46] sm:%s3] %v45
    %s48 = scalar_lea.vmem %s0, 16
    %v49 = vld [vmem:[%s48] sm:%s3]
    %s50 = scalar_lea.vmem [#allocation0], 32
    %51 = vst [vmem:[%s50] sm:%s3] %v49
    %s52 = scalar_lea.vmem %s0, 12
    %v53 = vld [vmem:[%s52] sm:%s3]
    %s54 = scalar_lea.vmem [#allocation0], 24
    %55 = vst [vmem:[%s54] sm:%s3] %v53
    %s56 = scalar_lea.vmem %s0, 8
    %v57 = vld [vmem:[%s56] sm:%s3]
    %s58 = scalar_lea.vmem [#allocation0], 16
    %59 = vst [vmem:[%s58] sm:%s3] %v57
    %s60 = scalar_lea.vmem %s0, 4
    %v61 = vld [vmem:[%s60] sm:%s3]
    %s62 = scalar_lea.vmem [#allocation0], 8
    %63 = vst [vmem:[%s62] sm:%s3] %v61
    %v64 = vld [vmem:[%s0] sm:%s3]
    %65 = vst [vmem:[#allocation0] sm:%s3] %v64
    %v66 = vld [vmem:[#allocation0] ss:$8 sm:$0xf]
    %v67 = vld [vmem:[#allocation0] ss:$8 sm:$0xf0]
    %vm68 = vcmask 1047556
    %v69 = vsel %vm68, %v67, %v66
    %vm70 = vcmask 130048
    %71 = vst.msk [vmem:[%s1] sm:$0xff] %vm70, %v69
    %s72 = scalar_lea.vmem [#allocation0], 64
    %v73 = vld [vmem:[%s72] ss:$8 sm:$0xf]
    %s74 = scalar_lea.vmem [#allocation0], 64
    %v75 = vld [vmem:[%s74] ss:$8 sm:$0xf0]
    %vm76 = vcmask 1047556
    %v77 = vsel %vm76, %v75, %v73
    %vm78 = vcmask 130048
    %s79 = scalar_lea.vmem %s1, 8
    %80 = vst.msk [vmem:[%s79] sm:$0xff] %vm78, %v77
    %s81 = scalar_lea.vmem [#allocation0], 3
    %v82 = vld [vmem:[%s81] ss:$8 sm:$0xf]
    %s83 = scalar_lea.vmem [#allocation0], 3
    %v84 = vld [vmem:[%s83] ss:$8 sm:$0xf0]
    %vm85 = vcmask 1047556
    %v86 = vsel %vm85, %v84, %v82
    %87 = vrot.lane.b32.xlu0 %v86, 48
    %v88 = vpop.permute.xlu0 %87
    %vm89 = vcmask 523648
    %90 = vst.msk [vmem:[%s1] sm:$0xff] %vm89, %v88
    %s91 = scalar_lea.vmem [#allocation0], 67
    %v92 = vld [vmem:[%s91] ss:$8 sm:$0xf]
    %s93 = scalar_lea.vmem [#allocation0], 67
    %v94 = vld [vmem:[%s93] ss:$8 sm:$0xf0]
    %vm95 = vcmask 1047556
    %v96 = vsel %vm95, %v94, %v92
    %97 = vrot.lane.b32.xlu0 %v96, 48
    %v98 = vpop.permute.xlu0 %97
    %vm99 = vcmask 523648
    %s100 = scalar_lea.vmem %s1, 8
    %101 = vst.msk [vmem:[%s100] sm:$0xff] %vm99, %v98
    %s102 = scalar_lea.vmem [#allocation0], 2
    %v103 = vld [vmem:[%s102] ss:$8 sm:$0xf]
    %s104 = scalar_lea.vmem [#allocation0], 2
    %v105 = vld [vmem:[%s104] ss:$8 sm:$0xf0]
    %vm106 = vcmask 1047556
    %v107 = vsel %vm106, %v105, %v103
    %108 = vrot.lane.b32.xlu0 %v107, 32
    %v109 = vpop.permute.xlu0 %108
    %vm110 = vcmask 392448
    %111 = vst.msk [vmem:[%s1] sm:$0xff] %vm110, %v109
    %s112 = scalar_lea.vmem [#allocation0], 66
    %v113 = vld [vmem:[%s112] ss:$8 sm:$0xf]
    %s114 = scalar_lea.vmem [#allocation0], 66
    %v115 = vld [vmem:[%s114] ss:$8 sm:$0xf0]
    %vm116 = vcmask 1047556
    %v117 = vsel %vm116, %v115, %v113
    %118 = vrot.lane.b32.xlu0 %v117, 32
    %v119 = vpop.permute.xlu0 %118
    %vm120 = vcmask 392448
    %s121 = scalar_lea.vmem %s1, 8
    %122 = vst.msk [vmem:[%s121] sm:$0xff] %vm120, %v119
    %s123 = scalar_lea.vmem [#allocation0], 1
    %v124 = vld [vmem:[%s123] ss:$8 sm:$0xf]
    %s125 = scalar_lea.vmem [#allocation0], 1
    %v126 = vld [vmem:[%s125] ss:$8 sm:$0xf0]
    %vm127 = vcmask 1047556
    %v128 = vsel %vm127, %v126, %v124
    %129 = vrot.lane.b32.xlu0 %v128, 16
    %v130 = vpop.permute.xlu0 %129
    %vm131 = vcmask 261248
    %132 = vst.msk [vmem:[%s1] sm:$0xff] %vm131, %v130
    %s133 = scalar_lea.vmem [#allocation0], 65
    %v134 = vld [vmem:[%s133] ss:$8 sm:$0xf]
    %s135 = scalar_lea.vmem [#allocation0], 65
    %v136 = vld [vmem:[%s135] ss:$8 sm:$0xf0]
    %vm137 = vcmask 1047556
    %v138 = vsel %vm137, %v136, %v134
    %139 = vrot.lane.b32.xlu0 %v138, 16
    %v140 = vpop.permute.xlu0 %139
    %vm141 = vcmask 261248
    %s142 = scalar_lea.vmem %s1, 8
    %143 = vst.msk [vmem:[%s142] sm:$0xff] %vm141, %v140

// kernel: bart_generator_train_forward.2
$region0: #{bart_generator_train_forward.2}
  #allocation0 [shape = 'u32[]', space=smem, size = 0x4, offset = 0x4, fixed_abs, tag = 'smem constant byte address 0x4 - core index']
  #allocation1 [shape = 'u32[72,128]{1,0:T(1,128)}', space=vmem, size = 0x9000, scoped, tag = 'internal scratch']
  %s0 = inlined_call_operand.vmem [shape: f32[16,128], index: 0, kind: input, shape index: {}]
  %s1 = inlined_call_operand.vmem [shape: f32[16,64], index: 1, kind: input, shape index: {}]
  %s2 = inlined_call_operand.vmem [shape: f32[1,128], index: 2, kind: input, shape index: {}]
  %s3 = inlined_call_operand.vmem [shape: f32[1,128], index: 3, kind: input, shape index: {}]
  %s4 = inlined_call_operand.hbm [shape: bf16[2,128,384], index: 4, kind: input, shape index: {}]
  %s5 = inlined_call_operand.vmem [shape: f32[2,1,384], index: 5, kind: input, shape index: {}]
  %s6 = inlined_call_operand.vmem [shape: bf16[2,128,128], index: 6, kind: input, shape index: {}]
  %s7 = inlined_call_operand.vmem [shape: f32[2,1,128], index: 7, kind: input, shape index: {}]
  %s8 = inlined_call_operand.vmem [shape: f32[2,1,128], index: 8, kind: input, shape index: {}]
  %s9 = inlined_call_operand.vmem [shape: f32[2,1,128], index: 9, kind: input, shape index: {}]
  %s10 = inlined_call_operand.hbm [shape: bf16[2,128,256], index: 10, kind: input, shape index: {}]
  %s11 = inlined_call_operand.vmem [shape: f32[2,1,256], index: 11, kind: input, shape index: {}]
  %s12 = inlined_call_operand.hbm [shape: bf16[2,256,128], index: 12, kind: input, shape index: {}]
  %s13 = inlined_call_operand.vmem [shape: f32[2,1,128], index: 13, kind: input, shape index: {}]
  %s14 = inlined_call_operand.vmem [shape: f32[2,1,128], index: 14, kind: input, shape index: {}]
  %s15 = inlined_call_operand.vmem [shape: f32[2,1,128], index: 15, kind: input, shape index: {}]
  %s16 = inlined_call_operand.vmem [shape: f32[16,128], index: 16, kind: output, shape index: {}]
  %s17 = sld [smem:[#allocation0]]
  $region86: #{bart_generator_train_forward.2} parent=0
    _
  %s19 = ssub.s32 1, %s17
  %s20 = scalar_select 0, %s19, %s17
  $region1: #{bart_generator_train_forward.2} parent=0
    #allocation2 [shape = 'u8[196608]{0}', space=vmem, size = 0x30000, scoped, tag = 'input window, operand 4, single buffered']
    #allocation3 [shape = 's32[1]{0}', space=sflag, size = 0x4, scoped, tag = 'scoped memory for bart_generator_train_forward.2']
    #allocation4 [shape = 'u8[131072]{0}', space=vmem, size = 0x20000, scoped, tag = 'input window, operand 10, single buffered']
    #allocation5 [shape = 's32[1]{0}', space=sflag, size = 0x4, scoped, tag = 'scoped memory for bart_generator_train_forward.2']
    #allocation6 [shape = 'u8[131072]{0}', space=vmem, size = 0x20000, scoped, tag = 'input window, operand 12, single buffered']
    %21 = vsyncpa [#allocation3], 0
    %22 = vsyncpa [#allocation5], 0
    // Predicated region
    $region2: #{bart_generator_train_forward.2} parent=1 // pred_check
      _
    $region3: #{bart_generator_train_forward.2} parent=1 // pred_check_branch
      %24 = sbr.rel (0) target = $region5
    $region4: #{bart_generator_train_forward.2} parent=1 // pred_region
      _
    $region5: #{bart_generator_train_forward.2} parent=1 // pred_fallthru
      _
    // Predicated region
    $region6: #{bart_generator_train_forward.2} parent=1 // pred_check
      _
    $region7: #{bart_generator_train_forward.2} parent=1 // pred_check_branch
      %26 = sbr.rel (0) target = $region9
    $region8: #{bart_generator_train_forward.2} parent=1 // pred_region
      _
    $region9: #{bart_generator_train_forward.2} parent=1 // pred_fallthru
      _
    // Predicated region
    $region10: #{bart_generator_train_forward.2} parent=1 // pred_check
      _
    $region11: #{bart_generator_train_forward.2} parent=1 // pred_check_branch
      %28 = sbr.rel (0) target = $region13
    $region12: #{bart_generator_train_forward.2} parent=1 // pred_region
      _
    $region13: #{bart_generator_train_forward.2} parent=1 // pred_fallthru
      _
    // Predicated region
    $region14: #{bart_generator_train_forward.2} parent=1 // pred_check
      _
    $region15: #{bart_generator_train_forward.2} parent=1 // pred_check_branch
      %30 = sbr.rel (0) target = $region17
    $region16: #{bart_generator_train_forward.2} parent=1 // pred_region
      _
    $region17: #{bart_generator_train_forward.2} parent=1 // pred_fallthru
      _
    // Predicated region
    $region18: #{bart_generator_train_forward.2} parent=1 // pred_check
      _
    $region19: #{bart_generator_train_forward.2} parent=1 // pred_check_branch
      %32 = sbr.rel (0) target = $region21
    $region20: #{bart_generator_train_forward.2} parent=1 // pred_region
      %34 = vsyncadd [#allocation3], 0
      %s35 = sshll.u32 %s4, 4
      %s36 = int_to_ptr.hbm [resolvable:$true] %s35
      %s37 = sshll.u32 [#allocation2], 4
      %s38 = int_to_ptr.vmem [resolvable:$true] %s37
      %43 = dma.hbm_to_vmem [thread:$0]  %s36, 6144, %s38, [#allocation3], 192, 192, 12
    $region21: #{bart_generator_train_forward.2} parent=1 // pred_fallthru
      _
    // Predicated region
    $region22: #{bart_generator_train_forward.2} parent=1 // pred_check
      _
    $region23: #{bart_generator_train_forward.2} parent=1 // pred_check_branch
      %45 = sbr.rel (0) target = $region25
    $region24: #{bart_generator_train_forward.2} parent=1 // pred_region
      _
    $region25: #{bart_generator_train_forward.2} parent=1 // pred_fallthru
      _
    // Predicated region
    $region26: #{bart_generator_train_forward.2} parent=1 // pred_check
      _
    $region27: #{bart_generator_train_forward.2} parent=1 // pred_check_branch
      %47 = sbr.rel (0) target = $region29
    $region28: #{bart_generator_train_forward.2} parent=1 // pred_region
      _
    $region29: #{bart_generator_train_forward.2} parent=1 // pred_fallthru
      _
    // Predicated region
    $region30: #{bart_generator_train_forward.2} parent=1 // pred_check
      _
    $region31: #{bart_generator_train_forward.2} parent=1 // pred_check_branch
      %49 = sbr.rel (0) target = $region33
    $region32: #{bart_generator_train_forward.2} parent=1 // pred_region
      _
    $region33: #{bart_generator_train_forward.2} parent=1 // pred_fallthru
      _
    // Predicated region
    $region34: #{bart_generator_train_forward.2} parent=1 // pred_check
      _
    $region35: #{bart_generator_train_forward.2} parent=1 // pred_check_branch
      %51 = sbr.rel (0) target = $region37
    $region36: #{bart_generator_train_forward.2} parent=1 // pred_region
      _
    $region37: #{bart_generator_train_forward.2} parent=1 // pred_fallthru
      _
    // Predicated region
    $region38: #{bart_generator_train_forward.2} parent=1 // pred_check
      _
    $region39: #{bart_generator_train_forward.2} parent=1 // pred_check_branch
      %53 = sbr.rel (0) target = $region41
    $region40: #{bart_generator_train_forward.2} parent=1 // pred_region
      _
    $region41: #{bart_generator_train_forward.2} parent=1 // pred_fallthru
      _
    // Predicated region
    $region42: #{bart_generator_train_forward.2} parent=1 // pred_check
      _
    $region43: #{bart_generator_train_forward.2} parent=1 // pred_check_branch
      %55 = sbr.rel (0) target = $region45
    $region44: #{bart_generator_train_forward.2} parent=1 // pred_region
      %57 = vsyncadd [#allocation5], 0
      %s58 = sshll.u32 %s10, 4
      %s59 = int_to_ptr.hbm [resolvable:$true] %s58
      %s60 = sshll.u32 [#allocation4], 4
      %s61 = int_to_ptr.vmem [resolvable:$true] %s60
      %66 = dma.hbm_to_vmem [thread:$0]  %s59, 4096, %s61, [#allocation5], 128, 128, 8
    $region45: #{bart_generator_train_forward.2} parent=1 // pred_fallthru
      _
    // Predicated region
    $region46: #{bart_generator_train_forward.2} parent=1 // pred_check
      _
    $region47: #{bart_generator_train_forward.2} parent=1 // pred_check_branch
      %68 = sbr.rel (0) target = $region49
    $region48: #{bart_generator_train_forward.2} parent=1 // pred_region
      _
    $region49: #{bart_generator_train_forward.2} parent=1 // pred_fallthru
      _
    // Predicated region
    $region50: #{bart_generator_train_forward.2} parent=1 // pred_check
      _
    $region51: #{bart_generator_train_forward.2} parent=1 // pred_check_branch
      %70 = sbr.rel (0) target = $region53
    $region52: #{bart_generator_train_forward.2} parent=1 // pred_region
      %72 = vsyncadd [#allocation5], 0
      %s73 = sshll.u32 %s12, 4
      %s74 = int_to_ptr.hbm [resolvable:$true] %s73
      %s75 = sshll.u32 [#allocation6], 4
      %s76 = int_to_ptr.vmem [resolvable:$true] %s75
      %81 = dma.hbm_to_vmem [thread:$0]  %s74, 4096, %s76, [#allocation5], 64, 64, 4
    $region53: #{bart_generator_train_forward.2} parent=1 // pred_fallthru
      _
    // Predicated region
    $region54: #{bart_generator_train_forward.2} parent=1 // pred_check
      _
    $region55: #{bart_generator_train_forward.2} parent=1 // pred_check_branch
      %83 = sbr.rel (0) target = $region57
    $region56: #{bart_generator_train_forward.2} parent=1 // pred_region
      _
    $region57: #{bart_generator_train_forward.2} parent=1 // pred_fallthru
      _
    // Predicated region
    $region58: #{bart_generator_train_forward.2} parent=1 // pred_check
      _
    $region59: #{bart_generator_train_forward.2} parent=1 // pred_check_branch
      %85 = sbr.rel (0) target = $region61
    $region60: #{bart_generator_train_forward.2} parent=1 // pred_region
      _
    $region61: #{bart_generator_train_forward.2} parent=1 // pred_fallthru
      _
    // Predicated region
    $region62: #{bart_generator_train_forward.2} parent=1 // pred_check
      _
    $region63: #{bart_generator_train_forward.2} parent=1 // pred_check_branch
      %87 = sbr.rel (0) target = $region65
    $region64: #{bart_generator_train_forward.2} parent=1 // pred_region
      _
    $region65: #{bart_generator_train_forward.2} parent=1 // pred_fallthru
      _
    // Predicated region
    $region66: #{bart_generator_train_forward.2} parent=1 // pred_check
      _
    $region67: #{bart_generator_train_forward.2} parent=1 // pred_check_branch
      %89 = sbr.rel (0) target = $region69
    $region68: #{bart_generator_train_forward.2} parent=1 // pred_region
      %91 = dma.done [#allocation3], 6144
    $region69: #{bart_generator_train_forward.2} parent=1 // pred_fallthru
      _
    // Predicated region
    $region70: #{bart_generator_train_forward.2} parent=1 // pred_check
      _
    $region71: #{bart_generator_train_forward.2} parent=1 // pred_check_branch
      %93 = sbr.rel (0) target = $region73
    $region72: #{bart_generator_train_forward.2} parent=1 // pred_region
      %95 = dma.done [#allocation5], 4096
    $region73: #{bart_generator_train_forward.2} parent=1 // pred_fallthru
      _
    // Predicated region
    $region74: #{bart_generator_train_forward.2} parent=1 // pred_check
      _
    $region75: #{bart_generator_train_forward.2} parent=1 // pred_check_branch
      %97 = sbr.rel (0) target = $region77
    $region76: #{bart_generator_train_forward.2} parent=1 // pred_region
      %99 = dma.done [#allocation5], 4096
    $region77: #{bart_generator_train_forward.2} parent=1 // pred_fallthru
      _
    %v100 = vlaneseq
    %v101 = vand.u32 %v100, 127
    %vm102 = vcmp.ge.s32.totalorder %v101, 0
    %vm103 = vcmp.lt.s32.totalorder %v101, 32
    %vm104 = vmand %vm102, %vm103
    %v105 = vsel %vm104, 1, 0
    %v106 = vcvt.s32.f32 %v105
    %vm107 = vcmp.ge.s32.totalorder %v101, 32
    %vm108 = vcmp.lt.s32.totalorder %v101, 64
    %vm109 = vmand %vm107, %vm108
    %v110 = vsel %vm109, 1, 0
    %v111 = vcvt.s32.f32 %v110
    %vm112 = vcmp.ge.s32.totalorder %v101, 64
    %vm113 = vcmp.lt.s32.totalorder %v101, 96
    %vm114 = vmand %vm112, %vm113
    %v115 = vsel %vm114, 1, 0
    %v116 = vcvt.s32.f32 %v115
    %vm117 = vcmp.ge.s32.totalorder %v101, 96
    %vm118 = vcmp.lt.s32.totalorder %v101, 128
    %vm119 = vmand %vm117, %vm118
    %v120 = vsel %vm119, 1, 0
    %v121 = vcvt.s32.f32 %v120
    %vm122 = vcmp.lt.s32.totalorder %v101, 16
    %vm123 = vmand %vm102, %vm122
    %vm124 = vcmp.ge.s32.totalorder %v101, 16
    %vm125 = vmand %vm124, %vm103
    %vm126 = vcmp.lt.s32.totalorder %v101, 48
    %vm127 = vmand %vm107, %vm126
    %vm128 = vcmp.ge.s32.totalorder %v101, 48
    %vm129 = vmand %vm128, %vm108
    %v130 = vld [vmem:[%s1] sm:$0xff]
    %v131 = vld [vmem:[%s1 + $0x8] sm:$0xff]
    %v132 = vld [vmem:[%s0] sm:$0xff]
    %v133 = vld [vmem:[%s0 + $0x8] sm:$0xff]
    %v134 = vld [vmem:[%s2] sm:$0x1]
    %v135 = vld [vmem:[%s3] sm:$0x1]
    %136 = vadd.xlane.f32.xlu0 %v132
    %v137 = vpop.xlane.xlu0 %136
    %138 = vadd.xlane.f32.xlu0 %v133
    %v139 = vpop.xlane.xlu0 %138
    %v140 = vrcp.pop 128.0
    %v141 = vmul.f32 128.0, %v140
    %v142 = vsub.f32 1.0, %v141
    %v143 = vmul.f32 %v140, %v142
    %v144 = vadd.f32 %v140, %v143
    %vm145 = vweird.f32 %v140
    %v146 = vsel %vm145, %v140, %v144
    %v147 = vmul.f32 %v137, %v146
    %v148 = vmul.f32 %v139, %v146
    %v149 = vsub.f32 %v132, %v147
    %v150 = vsub.f32 %v133, %v148
    %v151 = vmul.f32 %v149, %v149
    %v152 = vmul.f32 %v150, %v150
    %153 = vadd.xlane.f32.xlu0 %v151
    %v154 = vpop.xlane.xlu0 %153
    %155 = vadd.xlane.f32.xlu0 %v152
    %v156 = vpop.xlane.xlu0 %155
    %v157 = vmul.f32 %v154, %v146
    %v158 = vmul.f32 %v156, %v146
    %v159 = vadd.f32 %v157, 1e-05
    %v160 = vadd.f32 %v158, 1e-05
    %v161 = vrsqrt.pop %v159
    %v162 = vmul.f32 %v161, %v159
    %v163 = vmul.f32 %v162, %v161
    %v164 = vmul.f32 0.5, %v163
    %v165 = vsub.f32 1.5, %v164
    %v166 = vmul.f32 %v161, %v165
    %vm167 = vweird.f32 %v159
    %vm168 = vweird.f32 %v161
    %vm169 = vmor %vm167, %vm168
    %v170 = vsel %vm169, %v161, %v166
    %v171 = vrsqrt.pop %v160
    %v172 = vmul.f32 %v171, %v160
    %v173 = vmul.f32 %v172, %v171
    %v174 = vmul.f32 0.5, %v173
    %v175 = vsub.f32 1.5, %v174
    %v176 = vmul.f32 %v171, %v175
    %vm177 = vweird.f32 %v160
    %vm178 = vweird.f32 %v171
    %vm179 = vmor %vm177, %vm178
    %v180 = vsel %vm179, %v171, %v176
    %v181 = vmul.f32 %v149, %v170
    %v182 = vmul.f32 %v150, %v180
    %v184 = vperm.slane %v134, 0
    %v186 = vmul.f32 %v181, %v184
    %v187 = vmul.f32 %v182, %v184
    %v189 = vperm.slane %v135, 0
    %v191 = vadd.f32 %v186, %v189
    %v192 = vadd.f32 %v187, %v189
    %v193 = vpack.c.bf16 %v192, %v191
    %v194 = vld [vmem:[#allocation2] sm:$0xff]
    %v195 = vld [vmem:[#allocation2 + $0x8] sm:$0xf]
    %v196 = vld [vmem:[#allocation2 + $0xc] sm:$0xff]
    %v197 = vld [vmem:[#allocation2 + $0x14] sm:$0xf]
    %v198 = vld [vmem:[#allocation2 + $0x18] sm:$0xff]
    %v199 = vld [vmem:[#allocation2 + $0x20] sm:$0xf]
    %v200 = vld [vmem:[#allocation2 + $0x24] sm:$0xff]
    %v201 = vld [vmem:[#allocation2 + $0x2c] sm:$0xf]
    %v202 = vld [vmem:[#allocation2 + $0x30] sm:$0xff]
    %v203 = vld [vmem:[#allocation2 + $0x38] sm:$0xf]
    %v204 = vld [vmem:[#allocation2 + $0x3c] sm:$0xff]
    %v205 = vld [vmem:[#allocation2 + $0x44] sm:$0xf]
    %v206 = vld [vmem:[#allocation2 + $0x48] sm:$0xff]
    %v207 = vld [vmem:[#allocation2 + $0x50] sm:$0xf]
    %v208 = vld [vmem:[#allocation2 + $0x54] sm:$0xff]
    %v209 = vld [vmem:[#allocation2 + $0x5c] sm:$0xf]
    %v210 = vld [vmem:[#allocation2 + $0x60] sm:$0xff]
    %v211 = vld [vmem:[#allocation2 + $0x68] sm:$0xf]
    %v212 = vld [vmem:[#allocation2 + $0x6c] sm:$0xff]
    %v213 = vld [vmem:[#allocation2 + $0x74] sm:$0xf]
    %v214 = vld [vmem:[#allocation2 + $0x78] sm:$0xff]
    %v215 = vld [vmem:[#allocation2 + $0x80] sm:$0xf]
    %v216 = vld [vmem:[#allocation2 + $0x84] sm:$0xff]
    %v217 = vld [vmem:[#allocation2 + $0x8c] sm:$0xf]
    %v218 = vld [vmem:[#allocation2 + $0x90] sm:$0xff]
    %v219 = vld [vmem:[#allocation2 + $0x98] sm:$0xf]
    %v220 = vld [vmem:[#allocation2 + $0x9c] sm:$0xff]
    %v221 = vld [vmem:[#allocation2 + $0xa4] sm:$0xf]
    %v222 = vld [vmem:[#allocation2 + $0xa8] sm:$0xff]
    %v223 = vld [vmem:[#allocation2 + $0xb0] sm:$0xf]
    %v224 = vld [vmem:[#allocation2 + $0xb4] sm:$0xff]
    %v225 = vld [vmem:[#allocation2 + $0xbc] sm:$0xf]
    %v226 = vld [vmem:[%s5] sm:$0x7]
    %v228 = vperm.slane %v226, 0
    %v229 = vperm.slane %v226, 1
    %v230 = vperm.slane %v226, 2
    %v266 = vunpack.c.l.b16 %v194
    %v267 = vunpack.c.h.b16 %v194
    %v268 = vunpack.c.l.b16 %v195
    %v269 = vunpack.c.l.b16 %v196
    %v270 = vunpack.c.h.b16 %v196
    %v271 = vunpack.c.l.b16 %v197
    %v272 = vunpack.c.l.b16 %v198
    %v273 = vunpack.c.h.b16 %v198
    %v274 = vunpack.c.l.b16 %v199
    %v275 = vunpack.c.l.b16 %v200
    %v276 = vunpack.c.h.b16 %v200
    %v277 = vunpack.c.l.b16 %v201
    %v278 = vunpack.c.l.b16 %v202
    %v279 = vunpack.c.h.b16 %v202
    %v280 = vunpack.c.l.b16 %v203
    %v281 = vunpack.c.l.b16 %v204
    %v282 = vunpack.c.h.b16 %v204
    %v283 = vunpack.c.l.b16 %v205
    %v284 = vunpack.c.l.b16 %v206
    %v285 = vunpack.c.h.b16 %v206
    %v286 = vunpack.c.l.b16 %v207
    %v287 = vunpack.c.l.b16 %v208
    %v288 = vunpack.c.h.b16 %v208
    %v289 = vunpack.c.l.b16 %v209
    %v290 = vunpack.c.l.b16 %v210
    %v291 = vunpack.c.h.b16 %v210
    %v292 = vunpack.c.l.b16 %v211
    %v293 = vunpack.c.l.b16 %v212
    %v294 = vunpack.c.h.b16 %v212
    %v295 = vunpack.c.l.b16 %v213
    %v296 = vunpack.c.l.b16 %v214
    %v297 = vunpack.c.h.b16 %v214
    %v298 = vunpack.c.l.b16 %v215
    %v299 = vunpack.c.l.b16 %v216
    %v300 = vunpack.c.h.b16 %v216
    %v301 = vunpack.c.l.b16 %v217
    %v302 = vunpack.c.l.b16 %v218
    %v303 = vunpack.c.h.b16 %v218
    %v304 = vunpack.c.l.b16 %v219
    %v305 = vunpack.c.l.b16 %v220
    %v306 = vunpack.c.h.b16 %v220
    %v307 = vunpack.c.l.b16 %v221
    %v308 = vunpack.c.l.b16 %v222
    %v309 = vunpack.c.h.b16 %v222
    %v310 = vunpack.c.l.b16 %v223
    %v311 = vunpack.c.l.b16 %v224
    %v312 = vunpack.c.h.b16 %v224
    %v313 = vunpack.c.l.b16 %v225
    %v314 = vpack.c.b16 %v269, %v266
    %v315 = vpack.c.b16 %v270, %v267
    %v316 = vpack.c.b16 %v271, %v268
    %v317 = vpack.c.b16 %v275, %v272
    %v318 = vpack.c.b16 %v276, %v273
    %v319 = vpack.c.b16 %v277, %v274
    %v320 = vpack.c.b16 %v281, %v278
    %v321 = vpack.c.b16 %v282, %v279
    %v322 = vpack.c.b16 %v283, %v280
    %v323 = vpack.c.b16 %v287, %v284
    %v324 = vpack.c.b16 %v288, %v285
    %v325 = vpack.c.b16 %v289, %v286
    %v326 = vpack.c.b16 %v293, %v290
    %v327 = vpack.c.b16 %v294, %v291
    %v328 = vpack.c.b16 %v295, %v292
    %v329 = vpack.c.b16 %v299, %v296
    %v330 = vpack.c.b16 %v300, %v297
    %v331 = vpack.c.b16 %v301, %v298
    %v332 = vpack.c.b16 %v305, %v302
    %v333 = vpack.c.b16 %v306, %v303
    %v334 = vpack.c.b16 %v307, %v304
    %v335 = vpack.c.b16 %v311, %v308
    %v336 = vpack.c.b16 %v312, %v309
    %v337 = vpack.c.b16 %v313, %v310
    %362 = vmatpush.bf16.msra.mxu0 %v335
    %363 = vmatpush.bf16.msra.mxu0 %v332
    %364 = vmatpush.bf16.msra.mxu0 %v329
    %365 = vmatpush.bf16.msra.mxu0 %v326
    %366 = vmatpush.bf16.msra.mxu0 %v323
    %367 = vmatpush.bf16.msra.mxu0 %v320
    %368 = vmatpush.bf16.msra.mxu0 %v317
    %369 = vmatpush.bf16.msra.mxu0 %v314
    %370 = vmatmul.bf16.gmra.mxu0 %v193
    %v371 = vpop.f32.mrf.mxu0
    %v372 = vadd.f32 %v228, %v371
    %v373 = vpop.f32.mrf.mxu0
    %v374 = vadd.f32 %v228, %v373
    %375 = vdwg.mxu0
    %376 = vmatpush.bf16.msra.mxu0 %v336
    %377 = vmatpush.bf16.msra.mxu0 %v333
    %378 = vmatpush.bf16.msra.mxu0 %v330
    %379 = vmatpush.bf16.msra.mxu0 %v327
    %380 = vmatpush.bf16.msra.mxu0 %v324
    %381 = vmatpush.bf16.msra.mxu0 %v321
    %382 = vmatpush.bf16.msra.mxu0 %v318
    %383 = vmatpush.bf16.msra.mxu0 %v315
    %384 = vmatmul.bf16.gmra.mxu0 %v193
    %v385 = vpop.f32.mrf.mxu0
    %v386 = vadd.f32 %v229, %v385
    %v387 = vpop.f32.mrf.mxu0
    %v388 = vadd.f32 %v229, %v387
    %389 = vdwg.mxu0
    %390 = vmatpush.bf16.msra.mxu0 %v337
    %391 = vmatpush.bf16.msra.mxu0 %v334
    %392 = vmatpush.bf16.msra.mxu0 %v331
    %393 = vmatpush.bf16.msra.mxu0 %v328
    %394 = vmatpush.bf16.msra.mxu0 %v325
    %395 = vmatpush.bf16.msra.mxu0 %v322
    %396 = vmatpush.bf16.msra.mxu0 %v319
    %397 = vmatpush.bf16.msra.mxu0 %v316
    %398 = vmatmul.bf16.gmra.mxu0 %v193
    %v399 = vpop.f32.mrf.mxu0
    %v400 = vadd.f32 %v230, %v399
    %v401 = vpop.f32.mrf.mxu0
    %v402 = vadd.f32 %v230, %v401
    %403 = vdwg.mxu0
    %v404 = vmul.f32 %v386, %v106
    %v405 = vmul.f32 %v388, %v106
    %v406 = vmul.f32 %v386, %v111
    %v407 = vmul.f32 %v388, %v111
    %v408 = vmul.f32 %v386, %v116
    %v409 = vmul.f32 %v388, %v116
    %v410 = vmul.f32 %v386, %v121
    %v411 = vmul.f32 %v388, %v121
    %v412 = vmul.f32 %v400, %v106
    %v413 = vmul.f32 %v402, %v106
    %v414 = vmul.f32 %v400, %v111
    %v415 = vmul.f32 %v402, %v111
    %v416 = vmul.f32 %v400, %v116
    %v417 = vmul.f32 %v402, %v116
    %v418 = vmul.f32 %v400, %v121
    %v419 = vmul.f32 %v402, %v121
    %420 = vmatpush.xpose.msra.mxu0 0.0
    %421 = vmatpush.xpose.msra.mxu0 0.0
    %422 = vmatpush.xpose.msra.mxu0 0.0
    %423 = vmatpush.xpose.msra.mxu0 0.0
    %424 = vmatpush.xpose.msra.mxu0 0.0
    %425 = vmatpush.xpose.msra.mxu0 0.0
    %426 = vmatpush.xpose.msra.mxu0 0.0
    %427 = vmatpush.xpose.msra.mxu0 0.0
    %428 = vmatpush.xpose.msra.mxu0 %v411
    %429 = vmatpush.xpose.msra.mxu0 %v410
    %430 = vmatpush.xpose.msra.mxu0 %v409
    %431 = vmatpush.xpose.msra.mxu0 %v408
    %432 = vmatpush.xpose.msra.mxu0 %v407
    %433 = vmatpush.xpose.msra.mxu0 %v406
    %434 = vmatpush.xpose.msra.mxu0 %v405
    %435 = vmatpush.xpose.msra.mxu0 %v404
    %436 = vmatmul.f32.gmra.mxu0 %v372
    %v437 = vpop.f32.mrf.mxu0
    %v438 = vadd.f32 0.0, %v437
    %439 = vmatmul.f32.gmra.mxu0 %v374
    %v440 = vpop.f32.mrf.mxu0
    %v441 = vadd.f32 0.0, %v440
    %442 = vdwg.mxu0
    %v443 = vmul.f32 %v438, 0.17677669
    %v444 = vmul.f32 %v441, 0.17677669
    %v445 = vadd.f32 %v443, %v130
    %v446 = vadd.f32 %v444, %v131
    %v447 = vsel %vm123, 1, 0
    %vm448 = vcmp.eq.s32.totalorder %v447, 1
    %v449 = vsel %vm448, %v445, -1e+30
    %v450 = vsel %vm448, %v446, -1e+30
    %vm451 = vcmask 523264
    %v452 = vsel %vm451, %v449, -inf
    %453 = vmax.xlane.f32.xlu0 %v452
    %v454 = vpop.xlane.xlu0 %453
    %v455 = vsel %vm451, %v450, -inf
    %456 = vmax.xlane.f32.xlu0 %v455
    %v457 = vpop.xlane.xlu0 %456
    %v458 = vsel %vm448, %v454, 0.0
    %v459 = vsel %vm448, %v457, 0.0
    %v460 = vadd.f32 %v458, 0.0
    %v461 = vadd.f32 %v459, 0.0
    %v462 = vsel %vm125, 1, 0
    %vm463 = vcmp.eq.s32.totalorder %v462, 1
    %v464 = vsel %vm463, %v445, -1e+30
    %v465 = vsel %vm463, %v446, -1e+30
    %v466 = vsel %vm451, %v464, -inf
    %467 = vmax.xlane.f32.xlu0 %v466
    %v468 = vpop.xlane.xlu0 %467
    %v469 = vsel %vm451, %v465, -inf
    %470 = vmax.xlane.f32.xlu0 %v469
    %v471 = vpop.xlane.xlu0 %470
    %v472 = vsel %vm463, %v468, 0.0
    %v473 = vsel %vm463, %v471, 0.0
    %v474 = vadd.f32 %v460, %v472
    %v475 = vadd.f32 %v461, %v473
    %v476 = vsel %vm127, 1, 0
    %vm477 = vcmp.eq.s32.totalorder %v476, 1
    %v478 = vsel %vm477, %v445, -1e+30
    %v479 = vsel %vm477, %v446, -1e+30
    %v480 = vsel %vm451, %v478, -inf
    %481 = vmax.xlane.f32.xlu0 %v480
    %v482 = vpop.xlane.xlu0 %481
    %v483 = vsel %vm451, %v479, -inf
    %484 = vmax.xlane.f32.xlu0 %v483
    %v485 = vpop.xlane.xlu0 %484
    %v486 = vsel %vm477, %v482, 0.0
    %v487 = vsel %vm477, %v485, 0.0
    %v488 = vadd.f32 %v474, %v486
    %v489 = vadd.f32 %v475, %v487
    %v490 = vsel %vm129, 1, 0
    %vm491 = vcmp.eq.s32.totalorder %v490, 1
    %v492 = vsel %vm491, %v445, -1e+30
    %v493 = vsel %vm491, %v446, -1e+30
    %v494 = vsel %vm451, %v492, -inf
    %495 = vmax.xlane.f32.xlu0 %v494
    %v496 = vpop.xlane.xlu0 %495
    %v497 = vsel %vm451, %v493, -inf
    %498 = vmax.xlane.f32.xlu0 %v497
    %v499 = vpop.xlane.xlu0 %498
    %v500 = vsel %vm491, %v496, 0.0
    %v501 = vsel %vm491, %v499, 0.0
    %v502 = vadd.f32 %v488, %v500
    %v503 = vadd.f32 %v489, %v501
    %v504 = vsub.f32 %v445, %v502
    %v505 = vsub.f32 %v446, %v503
    %v506 = vmul.f32 %v504, 1.442695
    %v507 = vpow.pop %v506
    %v508 = vmul.f32 %v505, 1.442695
    %v509 = vpow.pop %v508
    %v510 = vsel %vm448, %v507, 0.0
    %v511 = vsel %vm448, %v509, 0.0
    %v512 = vsel %vm451, %v510, 0.0
    %513 = vadd.xlane.f32.xlu0 %v512
    %v514 = vpop.xlane.xlu0 %513
    %v515 = vsel %vm451, %v511, 0.0
    %516 = vadd.xlane.f32.xlu0 %v515
    %v517 = vpop.xlane.xlu0 %516
    %v518 = vrcp.pop %v514
    %v519 = vrcp.pop %v517
    %v520 = vsel %vm448, %v518, 0.0
    %v521 = vsel %vm448, %v519, 0.0
    %v522 = vadd.f32 %v520, 0.0
    %v523 = vadd.f32 %v521, 0.0
    %v524 = vsel %vm463, %v507, 0.0
    %v525 = vsel %vm463, %v509, 0.0
    %v526 = vsel %vm451, %v524, 0.0
    %527 = vadd.xlane.f32.xlu0 %v526
    %v528 = vpop.xlane.xlu0 %527
    %v529 = vsel %vm451, %v525, 0.0
    %530 = vadd.xlane.f32.xlu0 %v529
    %v531 = vpop.xlane.xlu0 %530
    %v532 = vrcp.pop %v528
    %v533 = vrcp.pop %v531
    %v534 = vsel %vm463, %v532, 0.0
    %v535 = vsel %vm463, %v533, 0.0
    %v536 = vadd.f32 %v522, %v534
    %v537 = vadd.f32 %v523, %v535
    %v538 = vsel %vm477, %v507, 0.0
    %v539 = vsel %vm477, %v509, 0.0
    %v540 = vsel %vm451, %v538, 0.0
    %541 = vadd.xlane.f32.xlu0 %v540
    %v542 = vpop.xlane.xlu0 %541
    %v543 = vsel %vm451, %v539, 0.0
    %544 = vadd.xlane.f32.xlu0 %v543
    %v545 = vpop.xlane.xlu0 %544
    %v546 = vrcp.pop %v542
    %v547 = vrcp.pop %v545
    %v548 = vsel %vm477, %v546, 0.0
    %v549 = vsel %vm477, %v547, 0.0
    %v550 = vadd.f32 %v536, %v548
    %v551 = vadd.f32 %v537, %v549
    %v552 = vsel %vm491, %v507, 0.0
    %v553 = vsel %vm491, %v509, 0.0
    %v554 = vsel %vm451, %v552, 0.0
    %555 = vadd.xlane.f32.xlu0 %v554
    %v556 = vpop.xlane.xlu0 %555
    %v557 = vsel %vm451, %v553, 0.0
    %558 = vadd.xlane.f32.xlu0 %v557
    %v559 = vpop.xlane.xlu0 %558
    %v560 = vrcp.pop %v556
    %v561 = vrcp.pop %v559
    %v562 = vsel %vm491, %v560, 0.0
    %v563 = vsel %vm491, %v561, 0.0
    %v564 = vadd.f32 %v550, %v562
    %v565 = vadd.f32 %v551, %v563
    %v566 = vmul.f32 %v507, %v564
    %v567 = vmul.f32 %v509, %v565
    %v569 = vsel %vm451, %v566, 0
    %v572 = vsel %vm451, %v567, 0
    %574 = vmatpush.msra.mxu0 0.0
    %575 = vmatpush.msra.mxu0 0.0
    %576 = vmatpush.msra.mxu0 0.0
    %577 = vmatpush.msra.mxu0 0.0
    %578 = vmatpush.msra.mxu0 0.0
    %579 = vmatpush.msra.mxu0 0.0
    %580 = vmatpush.msra.mxu0 0.0
    %581 = vmatpush.msra.mxu0 0.0
    %582 = vmatpush.msra.mxu0 %v419
    %583 = vmatpush.msra.mxu0 %v418
    %584 = vmatpush.msra.mxu0 %v417
    %585 = vmatpush.msra.mxu0 %v416
    %586 = vmatpush.msra.mxu0 %v415
    %587 = vmatpush.msra.mxu0 %v414
    %588 = vmatpush.msra.mxu0 %v413
    %589 = vmatpush.msra.mxu0 %v412
    %590 = vmatmul.f32.gmra.mxu0 %v569
    %v591 = vpop.f32.mrf.mxu0
    %v592 = vadd.f32 0.0, %v591
    %593 = vmatmul.f32.gmra.mxu0 %v572
    %v594 = vpop.f32.mrf.mxu0
    %v595 = vadd.f32 0.0, %v594
    %596 = vdwg.mxu0
    %v597 = vpack.c.bf16 %v595, %v592
    %v598 = vld [vmem:[%s6] sm:$0xf]
    %v599 = vld [vmem:[%s6 + $0x4] sm:$0xf]
    %v600 = vld [vmem:[%s6 + $0x8] sm:$0xf]
    %v601 = vld [vmem:[%s6 + $0xc] sm:$0xf]
    %v602 = vld [vmem:[%s6 + $0x10] sm:$0xf]
    %v603 = vld [vmem:[%s6 + $0x14] sm:$0xf]
    %v604 = vld [vmem:[%s6 + $0x18] sm:$0xf]
    %v605 = vld [vmem:[%s6 + $0x1c] sm:$0xf]
    %v606 = vld [vmem:[%s6 + $0x20] sm:$0xf]
    %v607 = vld [vmem:[%s6 + $0x24] sm:$0xf]
    %v608 = vld [vmem:[%s6 + $0x28] sm:$0xf]
    %v609 = vld [vmem:[%s6 + $0x2c] sm:$0xf]
    %v610 = vld [vmem:[%s6 + $0x30] sm:$0xf]
    %v611 = vld [vmem:[%s6 + $0x34] sm:$0xf]
    %v612 = vld [vmem:[%s6 + $0x38] sm:$0xf]
    %v613 = vld [vmem:[%s6 + $0x3c] sm:$0xf]
    %v614 = vld [vmem:[%s7] sm:$0x1]
    %v616 = vperm.slane %v614, 0
    %v634 = vunpack.c.l.b16 %v598
    %v635 = vunpack.c.l.b16 %v599
    %v636 = vunpack.c.l.b16 %v600
    %v637 = vunpack.c.l.b16 %v601
    %v638 = vunpack.c.l.b16 %v602
    %v639 = vunpack.c.l.b16 %v603
    %v640 = vunpack.c.l.b16 %v604
    %v641 = vunpack.c.l.b16 %v605
    %v642 = vunpack.c.l.b16 %v606
    %v643 = vunpack.c.l.b16 %v607
    %v644 = vunpack.c.l.b16 %v608
    %v645 = vunpack.c.l.b16 %v609
    %v646 = vunpack.c.l.b16 %v610
    %v647 = vunpack.c.l.b16 %v611
    %v648 = vunpack.c.l.b16 %v612
    %v649 = vunpack.c.l.b16 %v613
    %v650 = vpack.c.b16 %v635, %v634
    %v651 = vpack.c.b16 %v637, %v636
    %v652 = vpack.c.b16 %v639, %v638
    %v653 = vpack.c.b16 %v641, %v640
    %v654 = vpack.c.b16 %v643, %v642
    %v655 = vpack.c.b16 %v645, %v644
    %v656 = vpack.c.b16 %v647, %v646
    %v657 = vpack.c.b16 %v649, %v648
    %666 = vmatpush.bf16.msra.mxu0 %v657
    %667 = vmatpush.bf16.msra.mxu0 %v656
    %668 = vmatpush.bf16.msra.mxu0 %v655
    %669 = vmatpush.bf16.msra.mxu0 %v654
    %670 = vmatpush.bf16.msra.mxu0 %v653
    %671 = vmatpush.bf16.msra.mxu0 %v652
    %672 = vmatpush.bf16.msra.mxu0 %v651
    %673 = vmatpush.bf16.msra.mxu0 %v650
    %674 = vmatmul.bf16.gmra.mxu0 %v597
    %v675 = vpop.f32.mrf.mxu0
    %v676 = vadd.f32 %v616, %v675
    %v677 = vpop.f32.mrf.mxu0
    %v678 = vadd.f32 %v616, %v677
    %679 = vdwg.mxu0
    %v680 = vadd.f32 %v191, %v676
    %v681 = vadd.f32 %v192, %v678
    %v682 = vld [vmem:[%s8] sm:$0x1]
    %v683 = vld [vmem:[%s9] sm:$0x1]
    %684 = vadd.xlane.f32.xlu0 %v680
    %v685 = vpop.xlane.xlu0 %684
    %686 = vadd.xlane.f32.xlu0 %v681
    %v687 = vpop.xlane.xlu0 %686
    %v688 = vmul.f32 %v685, %v146
    %v689 = vmul.f32 %v687, %v146
    %v690 = vsub.f32 %v680, %v688
    %v691 = vsub.f32 %v681, %v689
    %v692 = vmul.f32 %v690, %v690
    %v693 = vmul.f32 %v691, %v691
    %694 = vadd.xlane.f32.xlu0 %v692
    %v695 = vpop.xlane.xlu0 %694
    %696 = vadd.xlane.f32.xlu0 %v693
    %v697 = vpop.xlane.xlu0 %696
    %v698 = vmul.f32 %v695, %v146
    %v699 = vmul.f32 %v697, %v146
    %v700 = vadd.f32 %v698, 1e-05
    %v701 = vadd.f32 %v699, 1e-05
    %v702 = vrsqrt.pop %v700
    %v703 = vmul.f32 %v702, %v700
    %v704 = vmul.f32 %v703, %v702
    %v705 = vmul.f32 0.5, %v704
    %v706 = vsub.f32 1.5, %v705
    %v707 = vmul.f32 %v702, %v706
    %vm708 = vweird.f32 %v700
    %vm709 = vweird.f32 %v702
    %vm710 = vmor %vm708, %vm709
    %v711 = vsel %vm710, %v702, %v707
    %v712 = vrsqrt.pop %v701
    %v713 = vmul.f32 %v712, %v701
    %v714 = vmul.f32 %v713, %v712
    %v715 = vmul.f32 0.5, %v714
    %v716 = vsub.f32 1.5, %v715
    %v717 = vmul.f32 %v712, %v716
    %vm718 = vweird.f32 %v701
    %vm719 = vweird.f32 %v712
    %vm720 = vmor %vm718, %vm719
    %v721 = vsel %vm720, %v712, %v717
    %v722 = vmul.f32 %v690, %v711
    %v723 = vmul.f32 %v691, %v721
    %v725 = vperm.slane %v682, 0
    %v727 = vmul.f32 %v722, %v725
    %v728 = vmul.f32 %v723, %v725
    %v730 = vperm.slane %v683, 0
    %v732 = vadd.f32 %v727, %v730
    %v733 = vadd.f32 %v728, %v730
    %v734 = vpack.c.bf16 %v733, %v732
    %v735 = vld [vmem:[#allocation4] sm:$0xff]
    %v736 = vld [vmem:[#allocation4 + $0x8] sm:$0xff]
    %v737 = vld [vmem:[#allocation4 + $0x10] sm:$0xff]
    %v738 = vld [vmem:[#allocation4 + $0x18] sm:$0xff]
    %v739 = vld [vmem:[#allocation4 + $0x20] sm:$0xff]
    %v740 = vld [vmem:[#allocation4 + $0x28] sm:$0xff]
    %v741 = vld [vmem:[#allocation4 + $0x30] sm:$0xff]
    %v742 = vld [vmem:[#allocation4 + $0x38] sm:$0xff]
    %v743 = vld [vmem:[#allocation4 + $0x40] sm:$0xff]
    %v744 = vld [vmem:[#allocation4 + $0x48] sm:$0xff]
    %v745 = vld [vmem:[#allocation4 + $0x50] sm:$0xff]
    %v746 = vld [vmem:[#allocation4 + $0x58] sm:$0xff]
    %v747 = vld [vmem:[#allocation4 + $0x60] sm:$0xff]
    %v748 = vld [vmem:[#allocation4 + $0x68] sm:$0xff]
    %v749 = vld [vmem:[#allocation4 + $0x70] sm:$0xff]
    %v750 = vld [vmem:[#allocation4 + $0x78] sm:$0xff]
    %v751 = vld [vmem:[%s11] sm:$0x3]
    %v753 = vperm.slane %v751, 0
    %v754 = vperm.slane %v751, 1
    %v773 = vunpack.c.l.b16 %v735
    %v774 = vunpack.c.h.b16 %v735
    %v775 = vunpack.c.l.b16 %v736
    %v776 = vunpack.c.h.b16 %v736
    %v777 = vunpack.c.l.b16 %v737
    %v778 = vunpack.c.h.b16 %v737
    %v779 = vunpack.c.l.b16 %v738
    %v780 = vunpack.c.h.b16 %v738
    %v781 = vunpack.c.l.b16 %v739
    %v782 = vunpack.c.h.b16 %v739
    %v783 = vunpack.c.l.b16 %v740
    %v784 = vunpack.c.h.b16 %v740
    %v785 = vunpack.c.l.b16 %v741
    %v786 = vunpack.c.h.b16 %v741
    %v787 = vunpack.c.l.b16 %v742
    %v788 = vunpack.c.h.b16 %v742
    %v789 = vunpack.c.l.b16 %v743
    %v790 = vunpack.c.h.b16 %v743
    %v791 = vunpack.c.l.b16 %v744
    %v792 = vunpack.c.h.b16 %v744
    %v793 = vunpack.c.l.b16 %v745
    %v794 = vunpack.c.h.b16 %v745
    %v795 = vunpack.c.l.b16 %v746
    %v796 = vunpack.c.h.b16 %v746
    %v797 = vunpack.c.l.b16 %v747
    %v798 = vunpack.c.h.b16 %v747
    %v799 = vunpack.c.l.b16 %v748
    %v800 = vunpack.c.h.b16 %v748
    %v801 = vunpack.c.l.b16 %v749
    %v802 = vunpack.c.h.b16 %v749
    %v803 = vunpack.c.l.b16 %v750
    %v804 = vunpack.c.h.b16 %v750
    %v805 = vpack.c.b16 %v775, %v773
    %v806 = vpack.c.b16 %v776, %v774
    %v807 = vpack.c.b16 %v779, %v777
    %v808 = vpack.c.b16 %v780, %v778
    %v809 = vpack.c.b16 %v783, %v781
    %v810 = vpack.c.b16 %v784, %v782
    %v811 = vpack.c.b16 %v787, %v785
    %v812 = vpack.c.b16 %v788, %v786
    %v813 = vpack.c.b16 %v791, %v789
    %v814 = vpack.c.b16 %v792, %v790
    %v815 = vpack.c.b16 %v795, %v793
    %v816 = vpack.c.b16 %v796, %v794
    %v817 = vpack.c.b16 %v799, %v797
    %v818 = vpack.c.b16 %v800, %v798
    %v819 = vpack.c.b16 %v803, %v801
    %v820 = vpack.c.b16 %v804, %v802
    %837 = vmatpush.bf16.msra.mxu0 %v819
    %838 = vmatpush.bf16.msra.mxu0 %v817
    %839 = vmatpush.bf16.msra.mxu0 %v815
    %840 = vmatpush.bf16.msra.mxu0 %v813
    %841 = vmatpush.bf16.msra.mxu0 %v811
    %842 = vmatpush.bf16.msra.mxu0 %v809
    %843 = vmatpush.bf16.msra.mxu0 %v807
    %844 = vmatpush.bf16.msra.mxu0 %v805
    %845 = vmatmul.bf16.gmra.mxu0 %v734
    %v846 = vpop.f32.mrf.mxu0
    %v847 = vadd.f32 %v753, %v846
    %v848 = vpop.f32.mrf.mxu0
    %v849 = vadd.f32 %v753, %v848
    %850 = vdwg.mxu0
    %851 = vmatpush.bf16.msra.mxu0 %v820
    %852 = vmatpush.bf16.msra.mxu0 %v818
    %853 = vmatpush.bf16.msra.mxu0 %v816
    %854 = vmatpush.bf16.msra.mxu0 %v814
    %855 = vmatpush.bf16.msra.mxu0 %v812
    %856 = vmatpush.bf16.msra.mxu0 %v810
    %857 = vmatpush.bf16.msra.mxu0 %v808
    %858 = vmatpush.bf16.msra.mxu0 %v806
    %859 = vmatmul.bf16.gmra.mxu0 %v734
    %v860 = vpop.f32.mrf.mxu0
    %v861 = vadd.f32 %v754, %v860
    %v862 = vpop.f32.mrf.mxu0
    %v863 = vadd.f32 %v754, %v862
    %864 = vdwg.mxu0
    %v865 = vmul.f32 %v847, 0.5
    %v866 = vmul.f32 %v861, 0.5
    %v867 = vmul.f32 %v849, 0.5
    %v868 = vmul.f32 %v863, 0.5
    %v869 = vmul.f32 %v847, 0.044715
    %v870 = vmul.f32 %v861, 0.044715
    %v871 = vmul.f32 %v849, 0.044715
    %v872 = vmul.f32 %v863, 0.044715
    %v873 = vmul.f32 %v869, %v847
    %v874 = vmul.f32 %v870, %v861
    %v875 = vmul.f32 %v871, %v849
    %v876 = vmul.f32 %v872, %v863
    %v877 = vmul.f32 %v873, %v847
    %v878 = vmul.f32 %v874, %v861
    %v879 = vmul.f32 %v875, %v849
    %v880 = vmul.f32 %v876, %v863
    %v881 = vadd.f32 %v847, %v877
    %v882 = vadd.f32 %v861, %v878
    %v883 = vadd.f32 %v849, %v879
    %v884 = vadd.f32 %v863, %v880
    %v885 = vmul.f32 %v881, 0.7978846
    %v886 = vmul.f32 %v882, 0.7978846
    %v887 = vmul.f32 %v883, 0.7978846
    %v888 = vmul.f32 %v884, 0.7978846
    %v889 = vtanh.pop %v885
    %v890 = vtanh.pop %v886
    %v891 = vtanh.pop %v887
    %v892 = vtanh.pop %v888
    %v893 = vadd.f32 %v889, 1.0
    %v894 = vadd.f32 %v890, 1.0
    %v895 = vadd.f32 %v891, 1.0
    %v896 = vadd.f32 %v892, 1.0
    %v897 = vmul.f32 %v865, %v893
    %v898 = vmul.f32 %v866, %v894
    %v899 = vmul.f32 %v867, %v895
    %v900 = vmul.f32 %v868, %v896
    %v901 = vpack.c.bf16 %v899, %v897
    %v902 = vpack.c.bf16 %v900, %v898
    %v903 = vld [vmem:[#allocation6] sm:$0xf]
    %v904 = vld [vmem:[#allocation6 + $0x4] sm:$0xf]
    %v905 = vld [vmem:[#allocation6 + $0x8] sm:$0xf]
    %v906 = vld [vmem:[#allocation6 + $0xc] sm:$0xf]
    %v907 = vld [vmem:[#allocation6 + $0x10] sm:$0xf]
    %v908 = vld [vmem:[#allocation6 + $0x14] sm:$0xf]
    %v909 = vld [vmem:[#allocation6 + $0x18] sm:$0xf]
    %v910 = vld [vmem:[#allocation6 + $0x1c] sm:$0xf]
    %v911 = vld [vmem:[#allocation6 + $0x20] sm:$0xf]
    %v912 = vld [vmem:[#allocation6 + $0x24] sm:$0xf]
    %v913 = vld [vmem:[#allocation6 + $0x28] sm:$0xf]
    %v914 = vld [vmem:[#allocation6 + $0x2c] sm:$0xf]
    %v915 = vld [vmem:[#allocation6 + $0x30] sm:$0xf]
    %v916 = vld [vmem:[#allocation6 + $0x34] sm:$0xf]
    %v917 = vld [vmem:[#allocation6 + $0x38] sm:$0xf]
    %v918 = vld [vmem:[#allocation6 + $0x3c] sm:$0xf]
    %v919 = vld [vmem:[#allocation6 + $0x40] sm:$0xf]
    %v920 = vld [vmem:[#allocation6 + $0x44] sm:$0xf]
    %v921 = vld [vmem:[#allocation6 + $0x48] sm:$0xf]
    %v922 = vld [vmem:[#allocation6 + $0x4c] sm:$0xf]
    %v923 = vld [vmem:[#allocation6 + $0x50] sm:$0xf]
    %v924 = vld [vmem:[#allocation6 + $0x54] sm:$0xf]
    %v925 = vld [vmem:[#allocation6 + $0x58] sm:$0xf]
    %v926 = vld [vmem:[#allocation6 + $0x5c] sm:$0xf]
    %v927 = vld [vmem:[#allocation6 + $0x60] sm:$0xf]
    %v928 = vld [vmem:[#allocation6 + $0x64] sm:$0xf]
    %v929 = vld [vmem:[#allocation6 + $0x68] sm:$0xf]
    %v930 = vld [vmem:[#allocation6 + $0x6c] sm:$0xf]
    %v931 = vld [vmem:[#allocation6 + $0x70] sm:$0xf]
    %v932 = vld [vmem:[#allocation6 + $0x74] sm:$0xf]
    %v933 = vld [vmem:[#allocation6 + $0x78] sm:$0xf]
    %v934 = vld [vmem:[#allocation6 + $0x7c] sm:$0xf]
    %v935 = vld [vmem:[%s13] sm:$0x1]
    %v937 = vperm.slane %v935, 0
    %v971 = vunpack.c.l.b16 %v903
    %v972 = vunpack.c.l.b16 %v904
    %v973 = vunpack.c.l.b16 %v905
    %v974 = vunpack.c.l.b16 %v906
    %v975 = vunpack.c.l.b16 %v907
    %v976 = vunpack.c.l.b16 %v908
    %v977 = vunpack.c.l.b16 %v909
    %v978 = vunpack.c.l.b16 %v910
    %v979 = vunpack.c.l.b16 %v911
    %v980 = vunpack.c.l.b16 %v912
    %v981 = vunpack.c.l.b16 %v913
    %v982 = vunpack.c.l.b16 %v914
    %v983 = vunpack.c.l.b16 %v915
    %v984 = vunpack.c.l.b16 %v916
    %v985 = vunpack.c.l.b16 %v917
    %v986 = vunpack.c.l.b16 %v918
    %v987 = vunpack.c.l.b16 %v919
    %v988 = vunpack.c.l.b16 %v920
    %v989 = vunpack.c.l.b16 %v921
    %v990 = vunpack.c.l.b16 %v922
    %v991 = vunpack.c.l.b16 %v923
    %v992 = vunpack.c.l.b16 %v924
    %v993 = vunpack.c.l.b16 %v925
    %v994 = vunpack.c.l.b16 %v926
    %v995 = vunpack.c.l.b16 %v927
    %v996 = vunpack.c.l.b16 %v928
    %v997 = vunpack.c.l.b16 %v929
    %v998 = vunpack.c.l.b16 %v930
    %v999 = vunpack.c.l.b16 %v931
    %v1000 = vunpack.c.l.b16 %v932
    %v1001 = vunpack.c.l.b16 %v933
    %v1002 = vunpack.c.l.b16 %v934
    %v1003 = vpack.c.b16 %v972, %v971
    %v1004 = vpack.c.b16 %v974, %v973
    %v1005 = vpack.c.b16 %v976, %v975
    %v1006 = vpack.c.b16 %v978, %v977
    %v1007 = vpack.c.b16 %v980, %v979
    %v1008 = vpack.c.b16 %v982, %v981
    %v1009 = vpack.c.b16 %v984, %v983
    %v1010 = vpack.c.b16 %v986, %v985
    %v1011 = vpack.c.b16 %v988, %v987
    %v1012 = vpack.c.b16 %v990, %v989
    %v1013 = vpack.c.b16 %v992, %v991
    %v1014 = vpack.c.b16 %v994, %v993
    %v1015 = vpack.c.b16 %v996, %v995
    %v1016 = vpack.c.b16 %v998, %v997
    %v1017 = vpack.c.b16 %v1000, %v999
    %v1018 = vpack.c.b16 %v1002, %v1001
    %1035 = vmatpush.bf16.msra.mxu0 %v1010
    %1036 = vmatpush.bf16.msra.mxu0 %v1009
    %1037 = vmatpush.bf16.msra.mxu0 %v1008
    %1038 = vmatpush.bf16.msra.mxu0 %v1007
    %1039 = vmatpush.bf16.msra.mxu0 %v1006
    %1040 = vmatpush.bf16.msra.mxu0 %v1005
    %1041 = vmatpush.bf16.msra.mxu0 %v1004
    %1042 = vmatpush.bf16.msra.mxu0 %v1003
    %1043 = vmatmul.bf16.gmra.mxu0 %v901
    %v1044 = vpop.f32.mrf.mxu0
    %v1045 = vadd.f32 %v937, %v1044
    %v1046 = vpop.f32.mrf.mxu0
    %v1047 = vadd.f32 %v937, %v1046
    %1048 = vdwg.mxu0
    %1049 = vmatpush.bf16.msra.mxu0 %v1018
    %1050 = vmatpush.bf16.msra.mxu0 %v1017
    %1051 = vmatpush.bf16.msra.mxu0 %v1016
    %1052 = vmatpush.bf16.msra.mxu0 %v1015
    %1053 = vmatpush.bf16.msra.mxu0 %v1014
    %1054 = vmatpush.bf16.msra.mxu0 %v1013
    %1055 = vmatpush.bf16.msra.mxu0 %v1012
    %1056 = vmatpush.bf16.msra.mxu0 %v1011
    %1057 = vmatmul.bf16.gmra.mxu0 %v902
    %v1058 = vpop.f32.mrf.mxu0
    %v1059 = vadd.f32 %v1045, %v1058
    %v1060 = vpop.f32.mrf.mxu0
    %v1061 = vadd.f32 %v1047, %v1060
    %1062 = vdwg.mxu0
    %v1063 = vadd.f32 %v732, %v1059
    %v1064 = vadd.f32 %v733, %v1061
    %v1065 = vld [vmem:[%s14] sm:$0x1]
    %v1066 = vld [vmem:[%s15] sm:$0x1]
    %1067 = vadd.xlane.f32.xlu0 %v1063
    %v1068 = vpop.xlane.xlu0 %1067
    %1069 = vadd.xlane.f32.xlu0 %v1064
    %v1070 = vpop.xlane.xlu0 %1069
    %v1071 = vmul.f32 %v1068, %v146
    %v1072 = vmul.f32 %v1070, %v146
    %v1073 = vsub.f32 %v1063, %v1071
    %v1074 = vsub.f32 %v1064, %v1072
    %v1075 = vmul.f32 %v1073, %v1073
    %v1076 = vmul.f32 %v1074, %v1074
    %1077 = vadd.xlane.f32.xlu0 %v1075
    %v1078 = vpop.xlane.xlu0 %1077
    %1079 = vadd.xlane.f32.xlu0 %v1076
    %v1080 = vpop.xlane.xlu0 %1079
    %v1081 = vmul.f32 %v1078, %v146
    %v1082 = vmul.f32 %v1080, %v146
    %v1083 = vadd.f32 %v1081, 1e-05
    %v1084 = vadd.f32 %v1082, 1e-05
    %v1085 = vrsqrt.pop %v1083
    %v1086 = vmul.f32 %v1085, %v1083
    %v1087 = vmul.f32 %v1086, %v1085
    %v1088 = vmul.f32 0.5, %v1087
    %v1089 = vsub.f32 1.5, %v1088
    %v1090 = vmul.f32 %v1085, %v1089
    %vm1091 = vweird.f32 %v1083
    %vm1092 = vweird.f32 %v1085
    %vm1093 = vmor %vm1091, %vm1092
    %v1094 = vsel %vm1093, %v1085, %v1090
    %v1095 = vrsqrt.pop %v1084
    %v1096 = vmul.f32 %v1095, %v1084
    %v1097 = vmul.f32 %v1096, %v1095
    %v1098 = vmul.f32 0.5, %v1097
    %v1099 = vsub.f32 1.5, %v1098
    %v1100 = vmul.f32 %v1095, %v1099
    %vm1101 = vweird.f32 %v1084
    %vm1102 = vweird.f32 %v1095
    %vm1103 = vmor %vm1101, %vm1102
    %v1104 = vsel %vm1103, %v1095, %v1100
    %v1105 = vmul.f32 %v1073, %v1094
    %v1106 = vmul.f32 %v1074, %v1104
    %v1108 = vperm.slane %v1065, 0
    %v1110 = vmul.f32 %v1105, %v1108
    %v1111 = vmul.f32 %v1106, %v1108
    %v1113 = vperm.slane %v1066, 0
    %v1115 = vadd.f32 %v1110, %v1113
    %v1116 = vadd.f32 %v1111, %v1113
    %v1117 = vpack.c.bf16 %v1116, %v1115
    %s1118 = scalar_lea.vmem [#allocation2], 192
    %v1119 = vld [vmem:[%s1118] sm:$0xff]
    %v1120 = vld [vmem:[%s1118 + $0x8] sm:$0xf]
    %v1121 = vld [vmem:[%s1118 + $0xc] sm:$0xff]
    %v1122 = vld [vmem:[%s1118 + $0x14] sm:$0xf]
    %v1123 = vld [vmem:[%s1118 + $0x18] sm:$0xff]
    %v1124 = vld [vmem:[%s1118 + $0x20] sm:$0xf]
    %v1125 = vld [vmem:[%s1118 + $0x24] sm:$0xff]
    %v1126 = vld [vmem:[%s1118 + $0x2c] sm:$0xf]
    %v1127 = vld [vmem:[%s1118 + $0x30] sm:$0xff]
    %v1128 = vld [vmem:[%s1118 + $0x38] sm:$0xf]
    %v1129 = vld [vmem:[%s1118 + $0x3c] sm:$0xff]
    %v1130 = vld [vmem:[%s1118 + $0x44] sm:$0xf]
    %v1131 = vld [vmem:[%s1118 + $0x48] sm:$0xff]
    %v1132 = vld [vmem:[%s1118 + $0x50] sm:$0xf]
    %v1133 = vld [vmem:[%s1118 + $0x54] sm:$0xff]
    %v1134 = vld [vmem:[%s1118 + $0x5c] sm:$0xf]
    %v1135 = vld [vmem:[%s1118 + $0x60] sm:$0xff]
    %v1136 = vld [vmem:[%s1118 + $0x68] sm:$0xf]
    %v1137 = vld [vmem:[%s1118 + $0x6c] sm:$0xff]
    %v1138 = vld [vmem:[%s1118 + $0x74] sm:$0xf]
    %v1139 = vld [vmem:[%s1118 + $0x78] sm:$0xff]
    %v1140 = vld [vmem:[%s1118 + $0x80] sm:$0xf]
    %v1141 = vld [vmem:[%s1118 + $0x84] sm:$0xff]
    %v1142 = vld [vmem:[%s1118 + $0x8c] sm:$0xf]
    %v1143 = vld [vmem:[%s1118 + $0x90] sm:$0xff]
    %v1144 = vld [vmem:[%s1118 + $0x98] sm:$0xf]
    %v1145 = vld [vmem:[%s1118 + $0x9c] sm:$0xff]
    %v1146 = vld [vmem:[%s1118 + $0xa4] sm:$0xf]
    %v1147 = vld [vmem:[%s1118 + $0xa8] sm:$0xff]
    %v1148 = vld [vmem:[%s1118 + $0xb0] sm:$0xf]
    %v1149 = vld [vmem:[%s1118 + $0xb4] sm:$0xff]
    %v1150 = vld [vmem:[%s1118 + $0xbc] sm:$0xf]
    %s1151 = scalar_lea.vmem %s5, 3
    %v1152 = vld [vmem:[%s1151] sm:$0x7]
    %v1154 = vperm.slane %v1152, 0
    %v1155 = vperm.slane %v1152, 1
    %v1156 = vperm.slane %v1152, 2
    %v1192 = vunpack.c.l.b16 %v1119
    %v1193 = vunpack.c.h.b16 %v1119
    %v1194 = vunpack.c.l.b16 %v1120
    %v1195 = vunpack.c.l.b16 %v1121
    %v1196 = vunpack.c.h.b16 %v1121
    %v1197 = vunpack.c.l.b16 %v1122
    %v1198 = vunpack.c.l.b16 %v1123
    %v1199 = vunpack.c.h.b16 %v1123
    %v1200 = vunpack.c.l.b16 %v1124
    %v1201 = vunpack.c.l.b16 %v1125
    %v1202 = vunpack.c.h.b16 %v1125
    %v1203 = vunpack.c.l.b16 %v1126
    %v1204 = vunpack.c.l.b16 %v1127
    %v1205 = vunpack.c.h.b16 %v1127
    %v1206 = vunpack.c.l.b16 %v1128
    %v1207 = vunpack.c.l.b16 %v1129
    %v1208 = vunpack.c.h.b16 %v1129
    %v1209 = vunpack.c.l.b16 %v1130
    %v1210 = vunpack.c.l.b16 %v1131
    %v1211 = vunpack.c.h.b16 %v1131
    %v1212 = vunpack.c.l.b16 %v1132
    %v1213 = vunpack.c.l.b16 %v1133
    %v1214 = vunpack.c.h.b16 %v1133
    %v1215 = vunpack.c.l.b16 %v1134
    %v1216 = vunpack.c.l.b16 %v1135
    %v1217 = vunpack.c.h.b16 %v1135
    %v1218 = vunpack.c.l.b16 %v1136
    %v1219 = vunpack.c.l.b16 %v1137
    %v1220 = vunpack.c.h.b16 %v1137
    %v1221 = vunpack.c.l.b16 %v1138
    %v1222 = vunpack.c.l.b16 %v1139
    %v1223 = vunpack.c.h.b16 %v1139
    %v1224 = vunpack.c.l.b16 %v1140
    %v1225 = vunpack.c.l.b16 %v1141
    %v1226 = vunpack.c.h.b16 %v1141
    %v1227 = vunpack.c.l.b16 %v1142
    %v1228 = vunpack.c.l.b16 %v1143
    %v1229 = vunpack.c.h.b16 %v1143
    %v1230 = vunpack.c.l.b16 %v1144
    %v1231 = vunpack.c.l.b16 %v1145
    %v1232 = vunpack.c.h.b16 %v1145
    %v1233 = vunpack.c.l.b16 %v1146
    %v1234 = vunpack.c.l.b16 %v1147
    %v1235 = vunpack.c.h.b16 %v1147
    %v1236 = vunpack.c.l.b16 %v1148
    %v1237 = vunpack.c.l.b16 %v1149
    %v1238 = vunpack.c.h.b16 %v1149
    %v1239 = vunpack.c.l.b16 %v1150
    %v1240 = vpack.c.b16 %v1195, %v1192
    %v1241 = vpack.c.b16 %v1196, %v1193
    %v1242 = vpack.c.b16 %v1197, %v1194
    %v1243 = vpack.c.b16 %v1201, %v1198
    %v1244 = vpack.c.b16 %v1202, %v1199
    %v1245 = vpack.c.b16 %v1203, %v1200
    %v1246 = vpack.c.b16 %v1207, %v1204
    %v1247 = vpack.c.b16 %v1208, %v1205
    %v1248 = vpack.c.b16 %v1209, %v1206
    %v1249 = vpack.c.b16 %v1213, %v1210
    %v1250 = vpack.c.b16 %v1214, %v1211
    %v1251 = vpack.c.b16 %v1215, %v1212
    %v1252 = vpack.c.b16 %v1219, %v1216
    %v1253 = vpack.c.b16 %v1220, %v1217
    %v1254 = vpack.c.b16 %v1221, %v1218
    %v1255 = vpack.c.b16 %v1225, %v1222
    %v1256 = vpack.c.b16 %v1226, %v1223
    %v1257 = vpack.c.b16 %v1227, %v1224
    %v1258 = vpack.c.b16 %v1231, %v1228
    %v1259 = vpack.c.b16 %v1232, %v1229
    %v1260 = vpack.c.b16 %v1233, %v1230
    %v1261 = vpack.c.b16 %v1237, %v1234
    %v1262 = vpack.c.b16 %v1238, %v1235
    %v1263 = vpack.c.b16 %v1239, %v1236
    %1288 = vmatpush.bf16.msra.mxu0 %v1261
    %1289 = vmatpush.bf16.msra.mxu0 %v1258
    %1290 = vmatpush.bf16.msra.mxu0 %v1255
    %1291 = vmatpush.bf16.msra.mxu0 %v1252
    %1292 = vmatpush.bf16.msra.mxu0 %v1249
    %1293 = vmatpush.bf16.msra.mxu0 %v1246
    %1294 = vmatpush.bf16.msra.mxu0 %v1243
    %1295 = vmatpush.bf16.msra.mxu0 %v1240
    %1296 = vmatmul.bf16.gmra.mxu0 %v1117
    %v1297 = vpop.f32.mrf.mxu0
    %v1298 = vadd.f32 %v1154, %v1297
    %v1299 = vpop.f32.mrf.mxu0
    %v1300 = vadd.f32 %v1154, %v1299
    %1301 = vdwg.mxu0
    %1302 = vmatpush.bf16.msra.mxu0 %v1262
    %1303 = vmatpush.bf16.msra.mxu0 %v1259
    %1304 = vmatpush.bf16.msra.mxu0 %v1256
    %1305 = vmatpush.bf16.msra.mxu0 %v1253
    %1306 = vmatpush.bf16.msra.mxu0 %v1250
    %1307 = vmatpush.bf16.msra.mxu0 %v1247
    %1308 = vmatpush.bf16.msra.mxu0 %v1244
    %1309 = vmatpush.bf16.msra.mxu0 %v1241
    %1310 = vmatmul.bf16.gmra.mxu0 %v1117
    %v1311 = vpop.f32.mrf.mxu0
    %v1312 = vadd.f32 %v1155, %v1311
    %v1313 = vpop.f32.mrf.mxu0
    %v1314 = vadd.f32 %v1155, %v1313
    %1315 = vdwg.mxu0
    %1316 = vmatpush.bf16.msra.mxu0 %v1263
    %1317 = vmatpush.bf16.msra.mxu0 %v1260
    %1318 = vmatpush.bf16.msra.mxu0 %v1257
    %1319 = vmatpush.bf16.msra.mxu0 %v1254
    %1320 = vmatpush.bf16.msra.mxu0 %v1251
    %1321 = vmatpush.bf16.msra.mxu0 %v1248
    %1322 = vmatpush.bf16.msra.mxu0 %v1245
    %1323 = vmatpush.bf16.msra.mxu0 %v1242
    %1324 = vmatmul.bf16.gmra.mxu0 %v1117
    %v1325 = vpop.f32.mrf.mxu0
    %v1326 = vadd.f32 %v1156, %v1325
    %v1327 = vpop.f32.mrf.mxu0
    %v1328 = vadd.f32 %v1156, %v1327
    %1329 = vdwg.mxu0
    %v1330 = vmul.f32 %v1312, %v106
    %v1331 = vmul.f32 %v1314, %v106
    %v1332 = vmul.f32 %v1312, %v111
    %v1333 = vmul.f32 %v1314, %v111
    %v1334 = vmul.f32 %v1312, %v116
    %v1335 = vmul.f32 %v1314, %v116
    %v1336 = vmul.f32 %v1312, %v121
    %v1337 = vmul.f32 %v1314, %v121
    %v1338 = vmul.f32 %v1326, %v106
    %v1339 = vmul.f32 %v1328, %v106
    %v1340 = vmul.f32 %v1326, %v111
    %v1341 = vmul.f32 %v1328, %v111
    %v1342 = vmul.f32 %v1326, %v116
    %v1343 = vmul.f32 %v1328, %v116
    %v1344 = vmul.f32 %v1326, %v121
    %v1345 = vmul.f32 %v1328, %v121
    %1346 = vmatpush.xpose.msra.mxu0 0.0
    %1347 = vmatpush.xpose.msra.mxu0 0.0
    %1348 = vmatpush.xpose.msra.mxu0 0.0
    %1349 = vmatpush.xpose.msra.mxu0 0.0
    %1350 = vmatpush.xpose.msra.mxu0 0.0
    %1351 = vmatpush.xpose.msra.mxu0 0.0
    %1352 = vmatpush.xpose.msra.mxu0 0.0
    %1353 = vmatpush.xpose.msra.mxu0 0.0
    %1354 = vmatpush.xpose.msra.mxu0 %v1337
    %1355 = vmatpush.xpose.msra.mxu0 %v1336
    %1356 = vmatpush.xpose.msra.mxu0 %v1335
    %1357 = vmatpush.xpose.msra.mxu0 %v1334
    %1358 = vmatpush.xpose.msra.mxu0 %v1333
    %1359 = vmatpush.xpose.msra.mxu0 %v1332
    %1360 = vmatpush.xpose.msra.mxu0 %v1331
    %1361 = vmatpush.xpose.msra.mxu0 %v1330
    %1362 = vmatmul.f32.gmra.mxu0 %v1298
    %v1363 = vpop.f32.mrf.mxu0
    %v1364 = vadd.f32 0.0, %v1363
    %1365 = vmatmul.f32.gmra.mxu0 %v1300
    %v1366 = vpop.f32.mrf.mxu0
    %v1367 = vadd.f32 0.0, %v1366
    %1368 = vdwg.mxu0
    %v1369 = vmul.f32 %v1364, 0.17677669
    %v1370 = vmul.f32 %v1367, 0.17677669
    %v1371 = vadd.f32 %v1369, %v130
    %v1372 = vadd.f32 %v1370, %v131
    %v1373 = vsel %vm448, %v1371, -1e+30
    %v1374 = vsel %vm448, %v1372, -1e+30
    %v1375 = vsel %vm451, %v1373, -inf
    %1376 = vmax.xlane.f32.xlu0 %v1375
    %v1377 = vpop.xlane.xlu0 %1376
    %v1378 = vsel %vm451, %v1374, -inf
    %1379 = vmax.xlane.f32.xlu0 %v1378
    %v1380 = vpop.xlane.xlu0 %1379
    %v1381 = vsel %vm448, %v1377, 0.0
    %v1382 = vsel %vm448, %v1380, 0.0
    %v1383 = vadd.f32 %v1381, 0.0
    %v1384 = vadd.f32 %v1382, 0.0
    %v1385 = vsel %vm463, %v1371, -1e+30
    %v1386 = vsel %vm463, %v1372, -1e+30
    %v1387 = vsel %vm451, %v1385, -inf
    %1388 = vmax.xlane.f32.xlu0 %v1387
    %v1389 = vpop.xlane.xlu0 %1388
    %v1390 = vsel %vm451, %v1386, -inf
    %1391 = vmax.xlane.f32.xlu0 %v1390
    %v1392 = vpop.xlane.xlu0 %1391
    %v1393 = vsel %vm463, %v1389, 0.0
    %v1394 = vsel %vm463, %v1392, 0.0
    %v1395 = vadd.f32 %v1383, %v1393
    %v1396 = vadd.f32 %v1384, %v1394
    %v1397 = vsel %vm477, %v1371, -1e+30
    %v1398 = vsel %vm477, %v1372, -1e+30
    %v1399 = vsel %vm451, %v1397, -inf
    %1400 = vmax.xlane.f32.xlu0 %v1399
    %v1401 = vpop.xlane.xlu0 %1400
    %v1402 = vsel %vm451, %v1398, -inf
    %1403 = vmax.xlane.f32.xlu0 %v1402
    %v1404 = vpop.xlane.xlu0 %1403
    %v1405 = vsel %vm477, %v1401, 0.0
    %v1406 = vsel %vm477, %v1404, 0.0
    %v1407 = vadd.f32 %v1395, %v1405
    %v1408 = vadd.f32 %v1396, %v1406
    %v1409 = vsel %vm491, %v1371, -1e+30
    %v1410 = vsel %vm491, %v1372, -1e+30
    %v1411 = vsel %vm451, %v1409, -inf
    %1412 = vmax.xlane.f32.xlu0 %v1411
    %v1413 = vpop.xlane.xlu0 %1412
    %v1414 = vsel %vm451, %v1410, -inf
    %1415 = vmax.xlane.f32.xlu0 %v1414
    %v1416 = vpop.xlane.xlu0 %1415
    %v1417 = vsel %vm491, %v1413, 0.0
    %v1418 = vsel %vm491, %v1416, 0.0
    %v1419 = vadd.f32 %v1407, %v1417
    %v1420 = vadd.f32 %v1408, %v1418
    %v1421 = vsub.f32 %v1371, %v1419
    %v1422 = vsub.f32 %v1372, %v1420
    %v1423 = vmul.f32 %v1421, 1.442695
    %v1424 = vpow.pop %v1423
    %v1425 = vmul.f32 %v1422, 1.442695
    %v1426 = vpow.pop %v1425
    %v1427 = vsel %vm448, %v1424, 0.0
    %v1428 = vsel %vm448, %v1426, 0.0
    %v1429 = vsel %vm451, %v1427, 0.0
    %1430 = vadd.xlane.f32.xlu0 %v1429
    %v1431 = vpop.xlane.xlu0 %1430
    %v1432 = vsel %vm451, %v1428, 0.0
    %1433 = vadd.xlane.f32.xlu0 %v1432
    %v1434 = vpop.xlane.xlu0 %1433
    %v1435 = vrcp.pop %v1431
    %v1436 = vrcp.pop %v1434
    %v1437 = vsel %vm448, %v1435, 0.0
    %v1438 = vsel %vm448, %v1436, 0.0
    %v1439 = vadd.f32 %v1437, 0.0
    %v1440 = vadd.f32 %v1438, 0.0
    %v1441 = vsel %vm463, %v1424, 0.0
    %v1442 = vsel %vm463, %v1426, 0.0
    %v1443 = vsel %vm451, %v1441, 0.0
    %1444 = vadd.xlane.f32.xlu0 %v1443
    %v1445 = vpop.xlane.xlu0 %1444
    %v1446 = vsel %vm451, %v1442, 0.0
    %1447 = vadd.xlane.f32.xlu0 %v1446
    %v1448 = vpop.xlane.xlu0 %1447
    %v1449 = vrcp.pop %v1445
    %v1450 = vrcp.pop %v1448
    %v1451 = vsel %vm463, %v1449, 0.0
    %v1452 = vsel %vm463, %v1450, 0.0
    %v1453 = vadd.f32 %v1439, %v1451
    %v1454 = vadd.f32 %v1440, %v1452
    %v1455 = vsel %vm477, %v1424, 0.0
    %v1456 = vsel %vm477, %v1426, 0.0
    %v1457 = vsel %vm451, %v1455, 0.0
    %1458 = vadd.xlane.f32.xlu0 %v1457
    %v1459 = vpop.xlane.xlu0 %1458
    %v1460 = vsel %vm451, %v1456, 0.0
    %1461 = vadd.xlane.f32.xlu0 %v1460
    %v1462 = vpop.xlane.xlu0 %1461
    %v1463 = vrcp.pop %v1459
    %v1464 = vrcp.pop %v1462
    %v1465 = vsel %vm477, %v1463, 0.0
    %v1466 = vsel %vm477, %v1464, 0.0
    %v1467 = vadd.f32 %v1453, %v1465
    %v1468 = vadd.f32 %v1454, %v1466
    %v1469 = vsel %vm491, %v1424, 0.0
    %v1470 = vsel %vm491, %v1426, 0.0
    %v1471 = vsel %vm451, %v1469, 0.0
    %1472 = vadd.xlane.f32.xlu0 %v1471
    %v1473 = vpop.xlane.xlu0 %1472
    %v1474 = vsel %vm451, %v1470, 0.0
    %1475 = vadd.xlane.f32.xlu0 %v1474
    %v1476 = vpop.xlane.xlu0 %1475
    %v1477 = vrcp.pop %v1473
    %v1478 = vrcp.pop %v1476
    %v1479 = vsel %vm491, %v1477, 0.0
    %v1480 = vsel %vm491, %v1478, 0.0
    %v1481 = vadd.f32 %v1467, %v1479
    %v1482 = vadd.f32 %v1468, %v1480
    %v1483 = vmul.f32 %v1424, %v1481
    %v1484 = vmul.f32 %v1426, %v1482
    %v1486 = vsel %vm451, %v1483, 0
    %v1489 = vsel %vm451, %v1484, 0
    %1491 = vmatpush.msra.mxu0 0.0
    %1492 = vmatpush.msra.mxu0 0.0
    %1493 = vmatpush.msra.mxu0 0.0
    %1494 = vmatpush.msra.mxu0 0.0
    %1495 = vmatpush.msra.mxu0 0.0
    %1496 = vmatpush.msra.mxu0 0.0
    %1497 = vmatpush.msra.mxu0 0.0
    %1498 = vmatpush.msra.mxu0 0.0
    %1499 = vmatpush.msra.mxu0 %v1345
    %1500 = vmatpush.msra.mxu0 %v1344
    %1501 = vmatpush.msra.mxu0 %v1343
    %1502 = vmatpush.msra.mxu0 %v1342
    %1503 = vmatpush.msra.mxu0 %v1341
    %1504 = vmatpush.msra.mxu0 %v1340
    %1505 = vmatpush.msra.mxu0 %v1339
    %1506 = vmatpush.msra.mxu0 %v1338
    %1507 = vmatmul.f32.gmra.mxu0 %v1486
    %v1508 = vpop.f32.mrf.mxu0
    %v1509 = vadd.f32 0.0, %v1508
    %1510 = vmatmul.f32.gmra.mxu0 %v1489
    %v1511 = vpop.f32.mrf.mxu0
    %v1512 = vadd.f32 0.0, %v1511
    %1513 = vdwg.mxu0
    %v1514 = vpack.c.bf16 %v1512, %v1509
    %s1515 = scalar_lea.vmem %s6, 64
    %v1516 = vld [vmem:[%s1515] sm:$0xf]
    %v1517 = vld [vmem:[%s1515 + $0x4] sm:$0xf]
    %v1518 = vld [vmem:[%s1515 + $0x8] sm:$0xf]
    %v1519 = vld [vmem:[%s1515 + $0xc] sm:$0xf]
    %v1520 = vld [vmem:[%s1515 + $0x10] sm:$0xf]
    %v1521 = vld [vmem:[%s1515 + $0x14] sm:$0xf]
    %v1522 = vld [vmem:[%s1515 + $0x18] sm:$0xf]
    %v1523 = vld [vmem:[%s1515 + $0x1c] sm:$0xf]
    %v1524 = vld [vmem:[%s1515 + $0x20] sm:$0xf]
    %v1525 = vld [vmem:[%s1515 + $0x24] sm:$0xf]
    %v1526 = vld [vmem:[%s1515 + $0x28] sm:$0xf]
    %v1527 = vld [vmem:[%s1515 + $0x2c] sm:$0xf]
    %v1528 = vld [vmem:[%s1515 + $0x30] sm:$0xf]
    %v1529 = vld [vmem:[%s1515 + $0x34] sm:$0xf]
    %v1530 = vld [vmem:[%s1515 + $0x38] sm:$0xf]
    %v1531 = vld [vmem:[%s1515 + $0x3c] sm:$0xf]
    %s1532 = scalar_lea.vmem %s7, 1
    %v1533 = vld [vmem:[%s1532] sm:$0x1]
    %v1535 = vperm.slane %v1533, 0
    %v1553 = vunpack.c.l.b16 %v1516
    %v1554 = vunpack.c.l.b16 %v1517
    %v1555 = vunpack.c.l.b16 %v1518
    %v1556 = vunpack.c.l.b16 %v1519
    %v1557 = vunpack.c.l.b16 %v1520
    %v1558 = vunpack.c.l.b16 %v1521
    %v1559 = vunpack.c.l.b16 %v1522
    %v1560 = vunpack.c.l.b16 %v1523
    %v1561 = vunpack.c.l.b16 %v1524
    %v1562 = vunpack.c.l.b16 %v1525
    %v1563 = vunpack.c.l.b16 %v1526
    %v1564 = vunpack.c.l.b16 %v1527
    %v1565 = vunpack.c.l.b16 %v1528
    %v1566 = vunpack.c.l.b16 %v1529
    %v1567 = vunpack.c.l.b16 %v1530
    %v1568 = vunpack.c.l.b16 %v1531
    %v1569 = vpack.c.b16 %v1554, %v1553
    %v1570 = vpack.c.b16 %v1556, %v1555
    %v1571 = vpack.c.b16 %v1558, %v1557
    %v1572 = vpack.c.b16 %v1560, %v1559
    %v1573 = vpack.c.b16 %v1562, %v1561
    %v1574 = vpack.c.b16 %v1564, %v1563
    %v1575 = vpack.c.b16 %v1566, %v1565
    %v1576 = vpack.c.b16 %v1568, %v1567
    %1585 = vmatpush.bf16.msra.mxu0 %v1576
    %1586 = vmatpush.bf16.msra.mxu0 %v1575
    %1587 = vmatpush.bf16.msra.mxu0 %v1574
    %1588 = vmatpush.bf16.msra.mxu0 %v1573
    %1589 = vmatpush.bf16.msra.mxu0 %v1572
    %1590 = vmatpush.bf16.msra.mxu0 %v1571
    %1591 = vmatpush.bf16.msra.mxu0 %v1570
    %1592 = vmatpush.bf16.msra.mxu0 %v1569
    %1593 = vmatmul.bf16.gmra.mxu0 %v1514
    %v1594 = vpop.f32.mrf.mxu0
    %v1595 = vadd.f32 %v1535, %v1594
    %v1596 = vpop.f32.mrf.mxu0
    %v1597 = vadd.f32 %v1535, %v1596
    %1598 = vdwg.mxu0
    %v1599 = vadd.f32 %v1115, %v1595
    %v1600 = vadd.f32 %v1116, %v1597
    %s1601 = scalar_lea.vmem %s8, 1
    %v1602 = vld [vmem:[%s1601] sm:$0x1]
    %s1603 = scalar_lea.vmem %s9, 1
    %v1604 = vld [vmem:[%s1603] sm:$0x1]
    %1605 = vadd.xlane.f32.xlu0 %v1599
    %v1606 = vpop.xlane.xlu0 %1605
    %1607 = vadd.xlane.f32.xlu0 %v1600
    %v1608 = vpop.xlane.xlu0 %1607
    %v1609 = vmul.f32 %v1606, %v146
    %v1610 = vmul.f32 %v1608, %v146
    %v1611 = vsub.f32 %v1599, %v1609
    %v1612 = vsub.f32 %v1600, %v1610
    %v1613 = vmul.f32 %v1611, %v1611
    %v1614 = vmul.f32 %v1612, %v1612
    %1615 = vadd.xlane.f32.xlu0 %v1613
    %v1616 = vpop.xlane.xlu0 %1615
    %1617 = vadd.xlane.f32.xlu0 %v1614
    %v1618 = vpop.xlane.xlu0 %1617
    %v1619 = vmul.f32 %v1616, %v146
    %v1620 = vmul.f32 %v1618, %v146
    %v1621 = vadd.f32 %v1619, 1e-05
    %v1622 = vadd.f32 %v1620, 1e-05
    %v1623 = vrsqrt.pop %v1621
    %v1624 = vmul.f32 %v1623, %v1621
    %v1625 = vmul.f32 %v1624, %v1623
    %v1626 = vmul.f32 0.5, %v1625
    %v1627 = vsub.f32 1.5, %v1626
    %v1628 = vmul.f32 %v1623, %v1627
    %vm1629 = vweird.f32 %v1621
    %vm1630 = vweird.f32 %v1623
    %vm1631 = vmor %vm1629, %vm1630
    %v1632 = vsel %vm1631, %v1623, %v1628
    %v1633 = vrsqrt.pop %v1622
    %v1634 = vmul.f32 %v1633, %v1622
    %v1635 = vmul.f32 %v1634, %v1633
    %v1636 = vmul.f32 0.5, %v1635
    %v1637 = vsub.f32 1.5, %v1636
    %v1638 = vmul.f32 %v1633, %v1637
    %vm1639 = vweird.f32 %v1622
    %vm1640 = vweird.f32 %v1633
    %vm1641 = vmor %vm1639, %vm1640
    %v1642 = vsel %vm1641, %v1633, %v1638
    %v1643 = vmul.f32 %v1611, %v1632
    %v1644 = vmul.f32 %v1612, %v1642
    %v1646 = vperm.slane %v1602, 0
    %v1648 = vmul.f32 %v1643, %v1646
    %v1649 = vmul.f32 %v1644, %v1646
    %v1651 = vperm.slane %v1604, 0
    %v1653 = vadd.f32 %v1648, %v1651
    %v1654 = vadd.f32 %v1649, %v1651
    %v1655 = vpack.c.bf16 %v1654, %v1653
    %s1656 = scalar_lea.vmem [#allocation4], 128
    %v1657 = vld [vmem:[%s1656] sm:$0xff]
    %v1658 = vld [vmem:[%s1656 + $0x8] sm:$0xff]
    %v1659 = vld [vmem:[%s1656 + $0x10] sm:$0xff]
    %v1660 = vld [vmem:[%s1656 + $0x18] sm:$0xff]
    %v1661 = vld [vmem:[%s1656 + $0x20] sm:$0xff]
    %v1662 = vld [vmem:[%s1656 + $0x28] sm:$0xff]
    %v1663 = vld [vmem:[%s1656 + $0x30] sm:$0xff]
    %v1664 = vld [vmem:[%s1656 + $0x38] sm:$0xff]
    %v1665 = vld [vmem:[%s1656 + $0x40] sm:$0xff]
    %v1666 = vld [vmem:[%s1656 + $0x48] sm:$0xff]
    %v1667 = vld [vmem:[%s1656 + $0x50] sm:$0xff]
    %v1668 = vld [vmem:[%s1656 + $0x58] sm:$0xff]
    %v1669 = vld [vmem:[%s1656 + $0x60] sm:$0xff]
    %v1670 = vld [vmem:[%s1656 + $0x68] sm:$0xff]
    %v1671 = vld [vmem:[%s1656 + $0x70] sm:$0xff]
    %v1672 = vld [vmem:[%s1656 + $0x78] sm:$0xff]
    %s1673 = scalar_lea.vmem %s11, 2
    %v1674 = vld [vmem:[%s1673] sm:$0x3]
    %v1676 = vperm.slane %v1674, 0
    %v1677 = vperm.slane %v1674, 1
    %v1696 = vunpack.c.l.b16 %v1657
    %v1697 = vunpack.c.h.b16 %v1657
    %v1698 = vunpack.c.l.b16 %v1658
    %v1699 = vunpack.c.h.b16 %v1658
    %v1700 = vunpack.c.l.b16 %v1659
    %v1701 = vunpack.c.h.b16 %v1659
    %v1702 = vunpack.c.l.b16 %v1660
    %v1703 = vunpack.c.h.b16 %v1660
    %v1704 = vunpack.c.l.b16 %v1661
    %v1705 = vunpack.c.h.b16 %v1661
    %v1706 = vunpack.c.l.b16 %v1662
    %v1707 = vunpack.c.h.b16 %v1662
    %v1708 = vunpack.c.l.b16 %v1663
    %v1709 = vunpack.c.h.b16 %v1663
    %v1710 = vunpack.c.l.b16 %v1664
    %v1711 = vunpack.c.h.b16 %v1664
    %v1712 = vunpack.c.l.b16 %v1665
    %v1713 = vunpack.c.h.b16 %v1665
    %v1714 = vunpack.c.l.b16 %v1666
    %v1715 = vunpack.c.h.b16 %v1666
    %v1716 = vunpack.c.l.b16 %v1667
    %v1717 = vunpack.c.h.b16 %v1667
    %v1718 = vunpack.c.l.b16 %v1668
    %v1719 = vunpack.c.h.b16 %v1668
    %v1720 = vunpack.c.l.b16 %v1669
    %v1721 = vunpack.c.h.b16 %v1669
    %v1722 = vunpack.c.l.b16 %v1670
    %v1723 = vunpack.c.h.b16 %v1670
    %v1724 = vunpack.c.l.b16 %v1671
    %v1725 = vunpack.c.h.b16 %v1671
    %v1726 = vunpack.c.l.b16 %v1672
    %v1727 = vunpack.c.h.b16 %v1672
    %v1728 = vpack.c.b16 %v1698, %v1696
    %v1729 = vpack.c.b16 %v1699, %v1697
    %v1730 = vpack.c.b16 %v1702, %v1700
    %v1731 = vpack.c.b16 %v1703, %v1701
    %v1732 = vpack.c.b16 %v1706, %v1704
    %v1733 = vpack.c.b16 %v1707, %v1705
    %v1734 = vpack.c.b16 %v1710, %v1708
    %v1735 = vpack.c.b16 %v1711, %v1709
    %v1736 = vpack.c.b16 %v1714, %v1712
    %v1737 = vpack.c.b16 %v1715, %v1713
    %v1738 = vpack.c.b16 %v1718, %v1716
    %v1739 = vpack.c.b16 %v1719, %v1717
    %v1740 = vpack.c.b16 %v1722, %v1720
    %v1741 = vpack.c.b16 %v1723, %v1721
    %v1742 = vpack.c.b16 %v1726, %v1724
    %v1743 = vpack.c.b16 %v1727, %v1725
    %1760 = vmatpush.bf16.msra.mxu0 %v1742
    %1761 = vmatpush.bf16.msra.mxu0 %v1740
    %1762 = vmatpush.bf16.msra.mxu0 %v1738
    %1763 = vmatpush.bf16.msra.mxu0 %v1736
    %1764 = vmatpush.bf16.msra.mxu0 %v1734
    %1765 = vmatpush.bf16.msra.mxu0 %v1732
    %1766 = vmatpush.bf16.msra.mxu0 %v1730
    %1767 = vmatpush.bf16.msra.mxu0 %v1728
    %1768 = vmatmul.bf16.gmra.mxu0 %v1655
    %v1769 = vpop.f32.mrf.mxu0
    %v1770 = vadd.f32 %v1676, %v1769
    %v1771 = vpop.f32.mrf.mxu0
    %v1772 = vadd.f32 %v1676, %v1771
    %1773 = vdwg.mxu0
    %1774 = vmatpush.bf16.msra.mxu0 %v1743
    %1775 = vmatpush.bf16.msra.mxu0 %v1741
    %1776 = vmatpush.bf16.msra.mxu0 %v1739
    %1777 = vmatpush.bf16.msra.mxu0 %v1737
    %1778 = vmatpush.bf16.msra.mxu0 %v1735
    %1779 = vmatpush.bf16.msra.mxu0 %v1733
    %1780 = vmatpush.bf16.msra.mxu0 %v1731
    %1781 = vmatpush.bf16.msra.mxu0 %v1729
    %1782 = vmatmul.bf16.gmra.mxu0 %v1655
    %v1783 = vpop.f32.mrf.mxu0
    %v1784 = vadd.f32 %v1677, %v1783
    %v1785 = vpop.f32.mrf.mxu0
    %v1786 = vadd.f32 %v1677, %v1785
    %1787 = vdwg.mxu0
    %v1788 = vmul.f32 %v1770, 0.5
    %v1789 = vmul.f32 %v1784, 0.5
    %v1790 = vmul.f32 %v1772, 0.5
    %v1791 = vmul.f32 %v1786, 0.5
    %v1792 = vmul.f32 %v1770, 0.044715
    %v1793 = vmul.f32 %v1784, 0.044715
    %v1794 = vmul.f32 %v1772, 0.044715
    %v1795 = vmul.f32 %v1786, 0.044715
    %v1796 = vmul.f32 %v1792, %v1770
    %v1797 = vmul.f32 %v1793, %v1784
    %v1798 = vmul.f32 %v1794, %v1772
    %v1799 = vmul.f32 %v1795, %v1786
    %v1800 = vmul.f32 %v1796, %v1770
    %v1801 = vmul.f32 %v1797, %v1784
    %v1802 = vmul.f32 %v1798, %v1772
    %v1803 = vmul.f32 %v1799, %v1786
    %v1804 = vadd.f32 %v1770, %v1800
    %v1805 = vadd.f32 %v1784, %v1801
    %v1806 = vadd.f32 %v1772, %v1802
    %v1807 = vadd.f32 %v1786, %v1803
    %v1808 = vmul.f32 %v1804, 0.7978846
    %v1809 = vmul.f32 %v1805, 0.7978846
    %v1810 = vmul.f32 %v1806, 0.7978846
    %v1811 = vmul.f32 %v1807, 0.7978846
    %v1812 = vtanh.pop %v1808
    %v1813 = vtanh.pop %v1809
    %v1814 = vtanh.pop %v1810
    %v1815 = vtanh.pop %v1811
    %v1816 = vadd.f32 %v1812, 1.0
    %v1817 = vadd.f32 %v1813, 1.0
    %v1818 = vadd.f32 %v1814, 1.0
    %v1819 = vadd.f32 %v1815, 1.0
    %v1820 = vmul.f32 %v1788, %v1816
    %v1821 = vmul.f32 %v1789, %v1817
    %v1822 = vmul.f32 %v1790, %v1818
    %v1823 = vmul.f32 %v1791, %v1819
    %v1824 = vpack.c.bf16 %v1822, %v1820
    %v1825 = vpack.c.bf16 %v1823, %v1821
    %s1826 = scalar_lea.vmem [#allocation6], 128
    %v1827 = vld [vmem:[%s1826] sm:$0xf]
    %v1828 = vld [vmem:[%s1826 + $0x4] sm:$0xf]
    %v1829 = vld [vmem:[%s1826 + $0x8] sm:$0xf]
    %v1830 = vld [vmem:[%s1826 + $0xc] sm:$0xf]
    %v1831 = vld [vmem:[%s1826 + $0x10] sm:$0xf]
    %v1832 = vld [vmem:[%s1826 + $0x14] sm:$0xf]
    %v1833 = vld [vmem:[%s1826 + $0x18] sm:$0xf]
    %v1834 = vld [vmem:[%s1826 + $0x1c] sm:$0xf]
    %v1835 = vld [vmem:[%s1826 + $0x20] sm:$0xf]
    %v1836 = vld [vmem:[%s1826 + $0x24] sm:$0xf]
    %v1837 = vld [vmem:[%s1826 + $0x28] sm:$0xf]
    %v1838 = vld [vmem:[%s1826 + $0x2c] sm:$0xf]
    %v1839 = vld [vmem:[%s1826 + $0x30] sm:$0xf]
    %v1840 = vld [vmem:[%s1826 + $0x34] sm:$0xf]
    %v1841 = vld [vmem:[%s1826 + $0x38] sm:$0xf]
    %v1842 = vld [vmem:[%s1826 + $0x3c] sm:$0xf]
    %v1843 = vld [vmem:[%s1826 + $0x40] sm:$0xf]
    %v1844 = vld [vmem:[%s1826 + $0x44] sm:$0xf]
    %v1845 = vld [vmem:[%s1826 + $0x48] sm:$0xf]
    %v1846 = vld [vmem:[%s1826 + $0x4c] sm:$0xf]
    %v1847 = vld [vmem:[%s1826 + $0x50] sm:$0xf]
    %v1848 = vld [vmem:[%s1826 + $0x54] sm:$0xf]
    %v1849 = vld [vmem:[%s1826 + $0x58] sm:$0xf]
    %v1850 = vld [vmem:[%s1826 + $0x5c] sm:$0xf]
    %v1851 = vld [vmem:[%s1826 + $0x60] sm:$0xf]
    %v1852 = vld [vmem:[%s1826 + $0x64] sm:$0xf]
    %v1853 = vld [vmem:[%s1826 + $0x68] sm:$0xf]
    %v1854 = vld [vmem:[%s1826 + $0x6c] sm:$0xf]
    %v1855 = vld [vmem:[%s1826 + $0x70] sm:$0xf]
    %v1856 = vld [vmem:[%s1826 + $0x74] sm:$0xf]
    %v1857 = vld [vmem:[%s1826 + $0x78] sm:$0xf]
    %v1858 = vld [vmem:[%s1826 + $0x7c] sm:$0xf]
    %s1859 = scalar_lea.vmem %s13, 1
    %v1860 = vld [vmem:[%s1859] sm:$0x1]
    %v1862 = vperm.slane %v1860, 0
    %v1896 = vunpack.c.l.b16 %v1827
    %v1897 = vunpack.c.l.b16 %v1828
    %v1898 = vunpack.c.l.b16 %v1829
    %v1899 = vunpack.c.l.b16 %v1830
    %v1900 = vunpack.c.l.b16 %v1831
    %v1901 = vunpack.c.l.b16 %v1832
    %v1902 = vunpack.c.l.b16 %v1833
    %v1903 = vunpack.c.l.b16 %v1834
    %v1904 = vunpack.c.l.b16 %v1835
    %v1905 = vunpack.c.l.b16 %v1836
    %v1906 = vunpack.c.l.b16 %v1837
    %v1907 = vunpack.c.l.b16 %v1838
    %v1908 = vunpack.c.l.b16 %v1839
    %v1909 = vunpack.c.l.b16 %v1840
    %v1910 = vunpack.c.l.b16 %v1841
    %v1911 = vunpack.c.l.b16 %v1842
    %v1912 = vunpack.c.l.b16 %v1843
    %v1913 = vunpack.c.l.b16 %v1844
    %v1914 = vunpack.c.l.b16 %v1845
    %v1915 = vunpack.c.l.b16 %v1846
    %v1916 = vunpack.c.l.b16 %v1847
    %v1917 = vunpack.c.l.b16 %v1848
    %v1918 = vunpack.c.l.b16 %v1849
    %v1919 = vunpack.c.l.b16 %v1850
    %v1920 = vunpack.c.l.b16 %v1851
    %v1921 = vunpack.c.l.b16 %v1852
    %v1922 = vunpack.c.l.b16 %v1853
    %v1923 = vunpack.c.l.b16 %v1854
    %v1924 = vunpack.c.l.b16 %v1855
    %v1925 = vunpack.c.l.b16 %v1856
    %v1926 = vunpack.c.l.b16 %v1857
    %v1927 = vunpack.c.l.b16 %v1858
    %v1928 = vpack.c.b16 %v1897, %v1896
    %v1929 = vpack.c.b16 %v1899, %v1898
    %v1930 = vpack.c.b16 %v1901, %v1900
    %v1931 = vpack.c.b16 %v1903, %v1902
    %v1932 = vpack.c.b16 %v1905, %v1904
    %v1933 = vpack.c.b16 %v1907, %v1906
    %v1934 = vpack.c.b16 %v1909, %v1908
    %v1935 = vpack.c.b16 %v1911, %v1910
    %v1936 = vpack.c.b16 %v1913, %v1912
    %v1937 = vpack.c.b16 %v1915, %v1914
    %v1938 = vpack.c.b16 %v1917, %v1916
    %v1939 = vpack.c.b16 %v1919, %v1918
    %v1940 = vpack.c.b16 %v1921, %v1920
    %v1941 = vpack.c.b16 %v1923, %v1922
    %v1942 = vpack.c.b16 %v1925, %v1924
    %v1943 = vpack.c.b16 %v1927, %v1926
    %1960 = vmatpush.bf16.msra.mxu0 %v1935
    %1961 = vmatpush.bf16.msra.mxu0 %v1934
    %1962 = vmatpush.bf16.msra.mxu0 %v1933
    %1963 = vmatpush.bf16.msra.mxu0 %v1932
    %1964 = vmatpush.bf16.msra.mxu0 %v1931
    %1965 = vmatpush.bf16.msra.mxu0 %v1930
    %1966 = vmatpush.bf16.msra.mxu0 %v1929
    %1967 = vmatpush.bf16.msra.mxu0 %v1928
    %1968 = vmatmul.bf16.gmra.mxu0 %v1824
    %v1969 = vpop.f32.mrf.mxu0
    %v1970 = vadd.f32 %v1862, %v1969
    %v1971 = vpop.f32.mrf.mxu0
    %v1972 = vadd.f32 %v1862, %v1971
    %1973 = vdwg.mxu0
    %1974 = vmatpush.bf16.msra.mxu0 %v1943
    %1975 = vmatpush.bf16.msra.mxu0 %v1942
    %1976 = vmatpush.bf16.msra.mxu0 %v1941
    %1977 = vmatpush.bf16.msra.mxu0 %v1940
    %1978 = vmatpush.bf16.msra.mxu0 %v1939
    %1979 = vmatpush.bf16.msra.mxu0 %v1938
    %1980 = vmatpush.bf16.msra.mxu0 %v1937
    %1981 = vmatpush.bf16.msra.mxu0 %v1936
    %1982 = vmatmul.bf16.gmra.mxu0 %v1825
    %v1983 = vpop.f32.mrf.mxu0
    %v1984 = vadd.f32 %v1970, %v1983
    %v1985 = vpop.f32.mrf.mxu0
    %v1986 = vadd.f32 %v1972, %v1985
    %1987 = vdwg.mxu0
    %v1988 = vadd.f32 %v1653, %v1984
    %v1989 = vadd.f32 %v1654, %v1986
    %s1990 = scalar_lea.vmem %s14, 1
    %v1991 = vld [vmem:[%s1990] sm:$0x1]
    %s1992 = scalar_lea.vmem %s15, 1
    %v1993 = vld [vmem:[%s1992] sm:$0x1]
    %1994 = vadd.xlane.f32.xlu0 %v1988
    %v1995 = vpop.xlane.xlu0 %1994
    %1996 = vadd.xlane.f32.xlu0 %v1989
    %v1997 = vpop.xlane.xlu0 %1996
    %v1998 = vmul.f32 %v1995, %v146
    %v1999 = vmul.f32 %v1997, %v146
    %v2000 = vsub.f32 %v1988, %v1998
    %v2001 = vsub.f32 %v1989, %v1999
    %v2002 = vmul.f32 %v2000, %v2000
    %v2003 = vmul.f32 %v2001, %v2001
    %2004 = vadd.xlane.f32.xlu0 %v2002
    %v2005 = vpop.xlane.xlu0 %2004
    %2006 = vadd.xlane.f32.xlu0 %v2003
    %v2007 = vpop.xlane.xlu0 %2006
    %v2008 = vmul.f32 %v2005, %v146
    %v2009 = vmul.f32 %v2007, %v146
    %v2010 = vadd.f32 %v2008, 1e-05
    %v2011 = vadd.f32 %v2009, 1e-05
    %v2012 = vrsqrt.pop %v2010
    %v2013 = vmul.f32 %v2012, %v2010
    %v2014 = vmul.f32 %v2013, %v2012
    %v2015 = vmul.f32 0.5, %v2014
    %v2016 = vsub.f32 1.5, %v2015
    %v2017 = vmul.f32 %v2012, %v2016
    %vm2018 = vweird.f32 %v2010
    %vm2019 = vweird.f32 %v2012
    %vm2020 = vmor %vm2018, %vm2019
    %v2021 = vsel %vm2020, %v2012, %v2017
    %v2022 = vrsqrt.pop %v2011
    %v2023 = vmul.f32 %v2022, %v2011
    %v2024 = vmul.f32 %v2023, %v2022
    %v2025 = vmul.f32 0.5, %v2024
    %v2026 = vsub.f32 1.5, %v2025
    %v2027 = vmul.f32 %v2022, %v2026
    %vm2028 = vweird.f32 %v2011
    %vm2029 = vweird.f32 %v2022
    %vm2030 = vmor %vm2028, %vm2029
    %v2031 = vsel %vm2030, %v2022, %v2027
    %v2032 = vmul.f32 %v2000, %v2021
    %v2033 = vmul.f32 %v2001, %v2031
    %v2035 = vperm.slane %v1991, 0
    %v2037 = vmul.f32 %v2032, %v2035
    %v2038 = vmul.f32 %v2033, %v2035
    %v2040 = vperm.slane %v1993, 0
    %v2042 = vadd.f32 %v2037, %v2040
    %v2043 = vadd.f32 %v2038, %v2040
    %2044 = vst [vmem:[%s16] sm:$0xff] %v2042
    %2045 = vst [vmem:[%s16 + $0x8] sm:$0xff] %v2043
    // Predicated region
    $region78: #{bart_generator_train_forward.2} parent=1 // pred_check
      _
    $region79: #{bart_generator_train_forward.2} parent=1 // pred_check_branch
      %2047 = sbr.rel (0) target = $region81
    $region80: #{bart_generator_train_forward.2} parent=1 // pred_region
      _
    $region81: #{bart_generator_train_forward.2} parent=1 // pred_fallthru
      _
    // Predicated region
    $region82: #{bart_generator_train_forward.2} parent=1 // pred_check
      _
    $region83: #{bart_generator_train_forward.2} parent=1 // pred_check_branch
      %2049 = sbr.rel (0) target = $region85
    $region84: #{bart_generator_train_forward.2} parent=1 // pred_region
      _
    $region85: #{bart_generator_train_forward.2} parent=1 // pred_fallthru
      _
    %2050 = vsyncpa [#allocation3], 1
    %2051 = vsyncpa [#allocation5], 1

// kernel: bart_generator_train_forward.3
$region0: #{bart_generator_train_forward.3}
  #allocation0 [shape = 'u32[]', space=smem, size = 0x4, offset = 0x4, fixed_abs, tag = 'smem constant byte address 0x4 - core index']
  #allocation1 [shape = 'u32[72,128]{1,0:T(1,128)}', space=vmem, size = 0x9000, scoped, tag = 'internal scratch']
  %s0 = inlined_call_operand.smem [shape: u32[32], index: -1, kind: input, shape index: {}]
  %s1 = sld [smem:[%s0]]
  %s2 = scalar_lea.smem %s0, 1
  %s3 = sld [smem:[%s2]]
  %s4 = scalar_lea.smem %s0, 2
  %s5 = sld [smem:[%s4]]
  %s6 = scalar_lea.smem %s0, 3
  %s7 = sld [smem:[%s6]]
  %s8 = scalar_lea.smem %s0, 4
  %s9 = sld [smem:[%s8]]
  %s10 = scalar_lea.smem %s0, 5
  %s11 = sld [smem:[%s10]]
  %s12 = scalar_lea.smem %s0, 6
  %s13 = sld [smem:[%s12]]
  %s14 = scalar_lea.smem %s0, 7
  %s15 = sld [smem:[%s14]]
  %s16 = scalar_lea.smem %s0, 8
  %s17 = sld [smem:[%s16]]
  %s18 = scalar_lea.smem %s0, 9
  %s19 = sld [smem:[%s18]]
  %s20 = scalar_lea.smem %s0, 10
  %s21 = sld [smem:[%s20]]
  %s22 = scalar_lea.smem %s0, 11
  %s23 = sld [smem:[%s22]]
  %s24 = scalar_lea.smem %s0, 12
  %s25 = sld [smem:[%s24]]
  %s26 = scalar_lea.smem %s0, 13
  %s27 = sld [smem:[%s26]]
  %s28 = scalar_lea.smem %s0, 14
  %s29 = sld [smem:[%s28]]
  %s30 = scalar_lea.smem %s0, 15
  %s31 = sld [smem:[%s30]]
  %s32 = scalar_lea.smem %s0, 16
  %s33 = sld [smem:[%s32]]
  %s34 = scalar_lea.smem %s0, 17
  %s35 = sld [smem:[%s34]]
  %s36 = scalar_lea.smem %s0, 18
  %s37 = sld [smem:[%s36]]
  %s38 = scalar_lea.smem %s0, 19
  %s39 = sld [smem:[%s38]]
  %s40 = scalar_lea.smem %s0, 20
  %s41 = sld [smem:[%s40]]
  %s42 = scalar_lea.smem %s0, 21
  %s43 = sld [smem:[%s42]]
  %s44 = scalar_lea.smem %s0, 22
  %s45 = sld [smem:[%s44]]
  %s46 = scalar_lea.smem %s0, 23
  %s47 = sld [smem:[%s46]]
  %s48 = scalar_lea.smem %s0, 24
  %s49 = sld [smem:[%s48]]
  %s50 = scalar_lea.smem %s0, 25
  %s51 = sld [smem:[%s50]]
  %s52 = scalar_lea.smem %s0, 26
  %s53 = sld [smem:[%s52]]
  %s54 = scalar_lea.smem %s0, 27
  %s55 = sld [smem:[%s54]]
  %s56 = scalar_lea.smem %s0, 28
  %s57 = sld [smem:[%s56]]
  %s58 = scalar_lea.smem %s0, 29
  %s59 = sld [smem:[%s58]]
  %s60 = scalar_lea.smem %s0, 30
  %s61 = sld [smem:[%s60]]
  %s62 = scalar_lea.smem %s0, 31
  %s63 = sld [smem:[%s62]]
  %64 = xla_tuple %s59, %s61, %s63
  %s65 = sld [smem:[#allocation0]]
  $region166: #{bart_generator_train_forward.3} parent=0
    _
  %s67 = ssub.s32 1, %s65
  %s68 = scalar_select 0, %s67, %s65
  $region1: #{bart_generator_train_forward.3} parent=0
    #allocation2 [shape = 'u8[65536]{0}', space=vmem, size = 0x10000, scoped, tag = 'input window, operand 9, single buffered']
    #allocation3 [shape = 's32[1]{0}', space=sflag, size = 0x4, scoped, tag = 'scoped memory for bart_generator_train_forward.3']
    #allocation4 [shape = 's32[1]{0}', space=sflag, size = 0x4, scoped, tag = 'scoped memory for bart_generator_train_forward.3']
    #allocation5 [shape = 'u8[65536]{0}', space=vmem, size = 0x10000, scoped, tag = 'input window, operand 13, single buffered']
    #allocation6 [shape = 's32[1]{0}', space=sflag, size = 0x4, scoped, tag = 'scoped memory for bart_generator_train_forward.3']
    #allocation7 [shape = 'u8[65536]{0}', space=vmem, size = 0x10000, scoped, tag = 'input window, operand 17, single buffered']
    #allocation8 [shape = 'u8[131072]{0}', space=vmem, size = 0x20000, scoped, tag = 'input window, operand 21, single buffered']
    #allocation9 [shape = 's32[1]{0}', space=sflag, size = 0x4, scoped, tag = 'scoped memory for bart_generator_train_forward.3']
    #allocation10 [shape = 'u8[131072]{0}', space=vmem, size = 0x20000, scoped, tag = 'input window, operand 23, single buffered']
    #allocation11 [shape = 'u8[32768]{0}', space=vmem, size = 0x8000, scoped, tag = 'input window, operand 27, single buffered']
    #allocation12 [shape = 's32[1]{0}', space=sflag, size = 0x4, scoped, tag = 'scoped memory for bart_generator_train_forward.3']
    #allocation13 [shape = 'u8[8192]{0}', space=vmem, size = 0x2000, scoped, tag = 'output window, operand 0, single buffered']
    #allocation14 [shape = 'u8[8192]{0}', space=vmem, size = 0x2000, scoped, tag = 'output window, operand 1, single buffered']
    #allocation15 [shape = 's32[1]{0}', space=sflag, size = 0x4, scoped, tag = 'scoped memory for bart_generator_train_forward.3']
    %69 = vsyncpa [#allocation3], 0
    %70 = vsyncpa [#allocation6], 0
    %71 = vsyncpa [#allocation9], 0
    %72 = vsyncpa [#allocation12], 0
    %73 = vsyncpa [#allocation4], 0
    %74 = vsyncpa [#allocation15], 0
    // Predicated region
    $region2: #{bart_generator_train_forward.3} parent=1 // pred_check
      _
    $region3: #{bart_generator_train_forward.3} parent=1 // pred_check_branch
      %76 = sbr.rel (0) target = $region5
    $region4: #{bart_generator_train_forward.3} parent=1 // pred_region
      _
    $region5: #{bart_generator_train_forward.3} parent=1 // pred_fallthru
      _
    // Predicated region
    $region6: #{bart_generator_train_forward.3} parent=1 // pred_check
      _
    $region7: #{bart_generator_train_forward.3} parent=1 // pred_check_branch
      %78 = sbr.rel (0) target = $region9
    $region8: #{bart_generator_train_forward.3} parent=1 // pred_region
      _
    $region9: #{bart_generator_train_forward.3} parent=1 // pred_fallthru
      _
    // Predicated region
    $region10: #{bart_generator_train_forward.3} parent=1 // pred_check
      _
    $region11: #{bart_generator_train_forward.3} parent=1 // pred_check_branch
      %80 = sbr.rel (0) target = $region13
    $region12: #{bart_generator_train_forward.3} parent=1 // pred_region
      _
    $region13: #{bart_generator_train_forward.3} parent=1 // pred_fallthru
      _
    // Predicated region
    $region14: #{bart_generator_train_forward.3} parent=1 // pred_check
      _
    $region15: #{bart_generator_train_forward.3} parent=1 // pred_check_branch
      %82 = sbr.rel (0) target = $region17
    $region16: #{bart_generator_train_forward.3} parent=1 // pred_region
      _
    $region17: #{bart_generator_train_forward.3} parent=1 // pred_fallthru
      _
    // Predicated region
    $region18: #{bart_generator_train_forward.3} parent=1 // pred_check
      _
    $region19: #{bart_generator_train_forward.3} parent=1 // pred_check_branch
      %84 = sbr.rel (0) target = $region21
    $region20: #{bart_generator_train_forward.3} parent=1 // pred_region
      _
    $region21: #{bart_generator_train_forward.3} parent=1 // pred_fallthru
      _
    // Predicated region
    $region22: #{bart_generator_train_forward.3} parent=1 // pred_check
      _
    $region23: #{bart_generator_train_forward.3} parent=1 // pred_check_branch
      %86 = sbr.rel (0) target = $region25
    $region24: #{bart_generator_train_forward.3} parent=1 // pred_region
      _
    $region25: #{bart_generator_train_forward.3} parent=1 // pred_fallthru
      _
    // Predicated region
    $region26: #{bart_generator_train_forward.3} parent=1 // pred_check
      _
    $region27: #{bart_generator_train_forward.3} parent=1 // pred_check_branch
      %88 = sbr.rel (0) target = $region29
    $region28: #{bart_generator_train_forward.3} parent=1 // pred_region
      _
    $region29: #{bart_generator_train_forward.3} parent=1 // pred_fallthru
      _
    // Predicated region
    $region30: #{bart_generator_train_forward.3} parent=1 // pred_check
      _
    $region31: #{bart_generator_train_forward.3} parent=1 // pred_check_branch
      %90 = sbr.rel (0) target = $region33
    $region32: #{bart_generator_train_forward.3} parent=1 // pred_region
      _
    $region33: #{bart_generator_train_forward.3} parent=1 // pred_fallthru
      _
    // Predicated region
    $region34: #{bart_generator_train_forward.3} parent=1 // pred_check
      _
    $region35: #{bart_generator_train_forward.3} parent=1 // pred_check_branch
      %92 = sbr.rel (0) target = $region37
    $region36: #{bart_generator_train_forward.3} parent=1 // pred_region
      _
    $region37: #{bart_generator_train_forward.3} parent=1 // pred_fallthru
      _
    // Predicated region
    $region38: #{bart_generator_train_forward.3} parent=1 // pred_check
      _
    $region39: #{bart_generator_train_forward.3} parent=1 // pred_check_branch
      %94 = sbr.rel (0) target = $region41
    $region40: #{bart_generator_train_forward.3} parent=1 // pred_region
      %96 = vsyncadd [#allocation3], 0
      %s97 = sshll.u32 %s19, 4
      %s98 = int_to_ptr.hbm [resolvable:$true] %s97
      %s99 = sshll.u32 [#allocation2], 4
      %s100 = int_to_ptr.vmem [resolvable:$true] %s99
      %105 = dma.hbm_to_vmem [thread:$0]  %s98, 2048, %s100, [#allocation3], 64, 64, 4
    $region41: #{bart_generator_train_forward.3} parent=1 // pred_fallthru
      _
    // Predicated region
    $region42: #{bart_generator_train_forward.3} parent=1 // pred_check
      _
    $region43: #{bart_generator_train_forward.3} parent=1 // pred_check_branch
      %107 = sbr.rel (0) target = $region45
    $region44: #{bart_generator_train_forward.3} parent=1 // pred_region
      _
    $region45: #{bart_generator_train_forward.3} parent=1 // pred_fallthru
      _
    // Predicated region
    $region46: #{bart_generator_train_forward.3} parent=1 // pred_check
      _
    $region47: #{bart_generator_train_forward.3} parent=1 // pred_check_branch
      %109 = sbr.rel (0) target = $region49
    $region48: #{bart_generator_train_forward.3} parent=1 // pred_region
      _
    $region49: #{bart_generator_train_forward.3} parent=1 // pred_fallthru
      _
    // Predicated region
    $region50: #{bart_generator_train_forward.3} parent=1 // pred_check
      _
    $region51: #{bart_generator_train_forward.3} parent=1 // pred_check_branch
      %111 = sbr.rel (0) target = $region53
    $region52: #{bart_generator_train_forward.3} parent=1 // pred_region
      _
    $region53: #{bart_generator_train_forward.3} parent=1 // pred_fallthru
      _
    // Predicated region
    $region54: #{bart_generator_train_forward.3} parent=1 // pred_check
      _
    $region55: #{bart_generator_train_forward.3} parent=1 // pred_check_branch
      %113 = sbr.rel (0) target = $region57
    $region56: #{bart_generator_train_forward.3} parent=1 // pred_region
      %115 = vsyncadd [#allocation6], 0
      %s116 = sshll.u32 %s27, 4
      %s117 = int_to_ptr.hbm [resolvable:$true] %s116
      %s118 = sshll.u32 [#allocation5], 4
      %s119 = int_to_ptr.vmem [resolvable:$true] %s118
      %124 = dma.hbm_to_vmem [thread:$0]  %s117, 2048, %s119, [#allocation6], 64, 64, 4
    $region57: #{bart_generator_train_forward.3} parent=1 // pred_fallthru
      _
    // Predicated region
    $region58: #{bart_generator_train_forward.3} parent=1 // pred_check
      _
    $region59: #{bart_generator_train_forward.3} parent=1 // pred_check_branch
      %126 = sbr.rel (0) target = $region61
    $region60: #{bart_generator_train_forward.3} parent=1 // pred_region
      _
    $region61: #{bart_generator_train_forward.3} parent=1 // pred_fallthru
      _
    // Predicated region
    $region62: #{bart_generator_train_forward.3} parent=1 // pred_check
      _
    $region63: #{bart_generator_train_forward.3} parent=1 // pred_check_branch
      %128 = sbr.rel (0) target = $region65
    $region64: #{bart_generator_train_forward.3} parent=1 // pred_region
      _
    $region65: #{bart_generator_train_forward.3} parent=1 // pred_fallthru
      _
    // Predicated region
    $region66: #{bart_generator_train_forward.3} parent=1 // pred_check
      _
    $region67: #{bart_generator_train_forward.3} parent=1 // pred_check_branch
      %130 = sbr.rel (0) target = $region69
    $region68: #{bart_generator_train_forward.3} parent=1 // pred_region
      _
    $region69: #{bart_generator_train_forward.3} parent=1 // pred_fallthru
      _
    // Predicated region
    $region70: #{bart_generator_train_forward.3} parent=1 // pred_check
      _
    $region71: #{bart_generator_train_forward.3} parent=1 // pred_check_branch
      %132 = sbr.rel (0) target = $region73
    $region72: #{bart_generator_train_forward.3} parent=1 // pred_region
      %134 = vsyncadd [#allocation6], 0
      %s135 = sshll.u32 %s35, 4
      %s136 = int_to_ptr.hbm [resolvable:$true] %s135
      %s137 = sshll.u32 [#allocation7], 4
      %s138 = int_to_ptr.vmem [resolvable:$true] %s137
      %143 = dma.hbm_to_vmem [thread:$0]  %s136, 2048, %s138, [#allocation6], 64, 64, 4
    $region73: #{bart_generator_train_forward.3} parent=1 // pred_fallthru
      _
    // Predicated region
    $region74: #{bart_generator_train_forward.3} parent=1 // pred_check
      _
    $region75: #{bart_generator_train_forward.3} parent=1 // pred_check_branch
      %145 = sbr.rel (0) target = $region77
    $region76: #{bart_generator_train_forward.3} parent=1 // pred_region
      _
    $region77: #{bart_generator_train_forward.3} parent=1 // pred_fallthru
      _
    // Predicated region
    $region78: #{bart_generator_train_forward.3} parent=1 // pred_check
      _
    $region79: #{bart_generator_train_forward.3} parent=1 // pred_check_branch
      %147 = sbr.rel (0) target = $region81
    $region80: #{bart_generator_train_forward.3} parent=1 // pred_region
      _
    $region81: #{bart_generator_train_forward.3} parent=1 // pred_fallthru
      _
    // Predicated region
    $region82: #{bart_generator_train_forward.3} parent=1 // pred_check
      _
    $region83: #{bart_generator_train_forward.3} parent=1 // pred_check_branch
      %149 = sbr.rel (0) target = $region85
    $region84: #{bart_generator_train_forward.3} parent=1 // pred_region
      _
    $region85: #{bart_generator_train_forward.3} parent=1 // pred_fallthru
      _
    // Predicated region
    $region86: #{bart_generator_train_forward.3} parent=1 // pred_check
      _
    $region87: #{bart_generator_train_forward.3} parent=1 // pred_check_branch
      %151 = sbr.rel (0) target = $region89
    $region88: #{bart_generator_train_forward.3} parent=1 // pred_region
      %153 = vsyncadd [#allocation9], 0
      %s154 = sshll.u32 %s43, 4
      %s155 = int_to_ptr.hbm [resolvable:$true] %s154
      %s156 = sshll.u32 [#allocation8], 4
      %s157 = int_to_ptr.vmem [resolvable:$true] %s156
      %162 = dma.hbm_to_vmem [thread:$0]  %s155, 4096, %s157, [#allocation9], 128, 128, 8
    $region89: #{bart_generator_train_forward.3} parent=1 // pred_fallthru
      _
    // Predicated region
    $region90: #{bart_generator_train_forward.3} parent=1 // pred_check
      _
    $region91: #{bart_generator_train_forward.3} parent=1 // pred_check_branch
      %164 = sbr.rel (0) target = $region93
    $region92: #{bart_generator_train_forward.3} parent=1 // pred_region
      _
    $region93: #{bart_generator_train_forward.3} parent=1 // pred_fallthru
      _
    // Predicated region
    $region94: #{bart_generator_train_forward.3} parent=1 // pred_check
      _
    $region95: #{bart_generator_train_forward.3} parent=1 // pred_check_branch
      %166 = sbr.rel (0) target = $region97
    $region96: #{bart_generator_train_forward.3} parent=1 // pred_region
      %168 = vsyncadd [#allocation9], 0
      %s169 = sshll.u32 %s47, 4
      %s170 = int_to_ptr.hbm [resolvable:$true] %s169
      %s171 = sshll.u32 [#allocation10], 4
      %s172 = int_to_ptr.vmem [resolvable:$true] %s171
      %177 = dma.hbm_to_vmem [thread:$0]  %s170, 4096, %s172, [#allocation9], 64, 64, 4
    $region97: #{bart_generator_train_forward.3} parent=1 // pred_fallthru
      _
    // Predicated region
    $region98: #{bart_generator_train_forward.3} parent=1 // pred_check
      _
    $region99: #{bart_generator_train_forward.3} parent=1 // pred_check_branch
      %179 = sbr.rel (0) target = $region101
    $region100: #{bart_generator_train_forward.3} parent=1 // pred_region
      _
    $region101: #{bart_generator_train_forward.3} parent=1 // pred_fallthru
      _
    // Predicated region
    $region102: #{bart_generator_train_forward.3} parent=1 // pred_check
      _
    $region103: #{bart_generator_train_forward.3} parent=1 // pred_check_branch
      %181 = sbr.rel (0) target = $region105
    $region104: #{bart_generator_train_forward.3} parent=1 // pred_region
      _
    $region105: #{bart_generator_train_forward.3} parent=1 // pred_fallthru
      _
    // Predicated region
    $region106: #{bart_generator_train_forward.3} parent=1 // pred_check
      _
    $region107: #{bart_generator_train_forward.3} parent=1 // pred_check_branch
      %183 = sbr.rel (0) target = $region109
    $region108: #{bart_generator_train_forward.3} parent=1 // pred_region
      _
    $region109: #{bart_generator_train_forward.3} parent=1 // pred_fallthru
      _
    // Predicated region
    $region110: #{bart_generator_train_forward.3} parent=1 // pred_check
      _
    $region111: #{bart_generator_train_forward.3} parent=1 // pred_check_branch
      %185 = sbr.rel (0) target = $region113
    $region112: #{bart_generator_train_forward.3} parent=1 // pred_region
      %187 = vsyncadd [#allocation12], 0
      %s188 = sshll.u32 %s55, 4
      %s189 = int_to_ptr.hbm [resolvable:$true] %s188
      %s190 = sshll.u32 [#allocation11], 4
      %s191 = int_to_ptr.vmem [resolvable:$true] %s190
      %196 = dma.hbm_to_vmem [thread:$0]  %s189, 1024, %s191, [#allocation12], 64, 64, 4
    $region113: #{bart_generator_train_forward.3} parent=1 // pred_fallthru
      _
    // Predicated region
    $region114: #{bart_generator_train_forward.3} parent=1 // pred_check
      _
    $region115: #{bart_generator_train_forward.3} parent=1 // pred_check_branch
      %198 = sbr.rel (0) target = $region117
    $region116: #{bart_generator_train_forward.3} parent=1 // pred_region
      _
    $region117: #{bart_generator_train_forward.3} parent=1 // pred_fallthru
      _
    // Predicated region
    $region118: #{bart_generator_train_forward.3} parent=1 // pred_check
      _
    $region119: #{bart_generator_train_forward.3} parent=1 // pred_check_branch
      %200 = sbr.rel (0) target = $region121
    $region120: #{bart_generator_train_forward.3} parent=1 // pred_region
      %202 = dma.done [#allocation3], 2048
    $region121: #{bart_generator_train_forward.3} parent=1 // pred_fallthru
      _
    // Predicated region
    $region122: #{bart_generator_train_forward.3} parent=1 // pred_check
      _
    $region123: #{bart_generator_train_forward.3} parent=1 // pred_check_branch
      %204 = sbr.rel (0) target = $region125
    $region124: #{bart_generator_train_forward.3} parent=1 // pred_region
      %206 = dma.done [#allocation6], 2048
    $region125: #{bart_generator_train_forward.3} parent=1 // pred_fallthru
      _
    // Predicated region
    $region126: #{bart_generator_train_forward.3} parent=1 // pred_check
      _
    $region127: #{bart_generator_train_forward.3} parent=1 // pred_check_branch
      %208 = sbr.rel (0) target = $region129
    $region128: #{bart_generator_train_forward.3} parent=1 // pred_region
      %210 = dma.done [#allocation6], 2048
    $region129: #{bart_generator_train_forward.3} parent=1 // pred_fallthru
      _
    // Predicated region
    $region130: #{bart_generator_train_forward.3} parent=1 // pred_check
      _
    $region131: #{bart_generator_train_forward.3} parent=1 // pred_check_branch
      %212 = sbr.rel (0) target = $region133
    $region132: #{bart_generator_train_forward.3} parent=1 // pred_region
      %214 = dma.done [#allocation9], 4096
    $region133: #{bart_generator_train_forward.3} parent=1 // pred_fallthru
      _
    // Predicated region
    $region134: #{bart_generator_train_forward.3} parent=1 // pred_check
      _
    $region135: #{bart_generator_train_forward.3} parent=1 // pred_check_branch
      %216 = sbr.rel (0) target = $region137
    $region136: #{bart_generator_train_forward.3} parent=1 // pred_region
      %218 = dma.done [#allocation9], 4096
    $region137: #{bart_generator_train_forward.3} parent=1 // pred_fallthru
      _
    // Predicated region
    $region138: #{bart_generator_train_forward.3} parent=1 // pred_check
      _
    $region139: #{bart_generator_train_forward.3} parent=1 // pred_check_branch
      %220 = sbr.rel (0) target = $region141
    $region140: #{bart_generator_train_forward.3} parent=1 // pred_region
      %222 = dma.done [#allocation12], 1024
    $region141: #{bart_generator_train_forward.3} parent=1 // pred_fallthru
      _
    %v223 = vlaneseq
    %v224 = vand.u32 %v223, 127
    %vm225 = vcmp.ge.s32.totalorder %v224, 0
    %vm226 = vcmp.lt.s32.totalorder %v224, 32
    %vm227 = vmand %vm225, %vm226
    %v228 = vsel %vm227, 1, 0
    %v229 = vcvt.s32.f32 %v228
    %vm230 = vcmp.ge.s32.totalorder %v224, 32
    %vm231 = vcmp.lt.s32.totalorder %v224, 64
    %vm232 = vmand %vm230, %vm231
    %v233 = vsel %vm232, 1, 0
    %v234 = vcvt.s32.f32 %v233
    %vm235 = vcmp.ge.s32.totalorder %v224, 64
    %vm236 = vcmp.lt.s32.totalorder %v224, 96
    %vm237 = vmand %vm235, %vm236
    %v238 = vsel %vm237, 1, 0
    %v239 = vcvt.s32.f32 %v238
    %vm240 = vcmp.ge.s32.totalorder %v224, 96
    %vm241 = vcmp.lt.s32.totalorder %v224, 128
    %vm242 = vmand %vm240, %vm241
    %v243 = vsel %vm242, 1, 0
    %v244 = vcvt.s32.f32 %v243
    %vm245 = vcmp.lt.s32.totalorder %v224, 16
    %vm246 = vmand %vm225, %vm245
    %vm247 = vcmp.ge.s32.totalorder %v224, 16
    %vm248 = vmand %vm247, %vm226
    %vm249 = vcmp.lt.s32.totalorder %v224, 48
    %vm250 = vmand %vm230, %vm249
    %vm251 = vcmp.ge.s32.totalorder %v224, 48
    %vm252 = vmand %vm251, %vm231
    %v253 = vld [vmem:[%s7] sm:$0xff]
    %v254 = vld [vmem:[%s7 + $0x8] sm:$0xff]
    %v255 = vld [vmem:[%s9] sm:$0xff]
    %v256 = vld [vmem:[%s9 + $0x8] sm:$0xff]
    %v257 = vld [vmem:[%s3] sm:$0xff]
    %v258 = vld [vmem:[%s3 + $0x8] sm:$0xff]
    %v259 = vpack.c.bf16 %v258, %v257
    %v260 = vld [vmem:[%s1] sm:$0xff]
    %v261 = vld [vmem:[%s1 + $0x8] sm:$0xff]
    %v262 = vld [vmem:[%s11] sm:$0x1]
    %v263 = vld [vmem:[%s13] sm:$0x1]
    %264 = vadd.xlane.f32.xlu0 %v260
    %v265 = vpop.xlane.xlu0 %264
    %266 = vadd.xlane.f32.xlu0 %v261
    %v267 = vpop.xlane.xlu0 %266
    %v268 = vrcp.pop 128.0
    %v269 = vmul.f32 128.0, %v268
    %v270 = vsub.f32 1.0, %v269
    %v271 = vmul.f32 %v268, %v270
    %v272 = vadd.f32 %v268, %v271
    %vm273 = vweird.f32 %v268
    %v274 = vsel %vm273, %v268, %v272
    %v275 = vmul.f32 %v265, %v274
    %v276 = vmul.f32 %v267, %v274
    %v277 = vsub.f32 %v260, %v275
    %v278 = vsub.f32 %v261, %v276
    %v279 = vmul.f32 %v277, %v277
    %v280 = vmul.f32 %v278, %v278
    %281 = vadd.xlane.f32.xlu0 %v279
    %v282 = vpop.xlane.xlu0 %281
    %283 = vadd.xlane.f32.xlu0 %v280
    %v284 = vpop.xlane.xlu0 %283
    %v285 = vmul.f32 %v282, %v274
    %v286 = vmul.f32 %v284, %v274
    %v287 = vadd.f32 %v285, 1e-05
    %v288 = vadd.f32 %v286, 1e-05
    %v289 = vrsqrt.pop %v287
    %v290 = vmul.f32 %v289, %v287
    %v291 = vmul.f32 %v290, %v289
    %v292 = vmul.f32 0.5, %v291
    %v293 = vsub.f32 1.5, %v292
    %v294 = vmul.f32 %v289, %v293
    %vm295 = vweird.f32 %v287
    %vm296 = vweird.f32 %v289
    %vm297 = vmor %vm295, %vm296
    %v298 = vsel %vm297, %v289, %v294
    %v299 = vrsqrt.pop %v288
    %v300 = vmul.f32 %v299, %v288
    %v301 = vmul.f32 %v300, %v299
    %v302 = vmul.f32 0.5, %v301
    %v303 = vsub.f32 1.5, %v302
    %v304 = vmul.f32 %v299, %v303
    %vm305 = vweird.f32 %v288
    %vm306 = vweird.f32 %v299
    %vm307 = vmor %vm305, %vm306
    %v308 = vsel %vm307, %v299, %v304
    %v309 = vmul.f32 %v277, %v298
    %v310 = vmul.f32 %v278, %v308
    %v312 = vperm.slane %v262, 0
    %v314 = vmul.f32 %v309, %v312
    %v315 = vmul.f32 %v310, %v312
    %v317 = vperm.slane %v263, 0
    %v319 = vadd.f32 %v314, %v317
    %v320 = vadd.f32 %v315, %v317
    %v321 = vpack.c.bf16 %v320, %v319
    %v322 = vld [vmem:[%s15] sm:$0xff]
    %v323 = vld [vmem:[%s15 + $0x8] sm:$0xf]
    %v324 = vld [vmem:[%s15 + $0xc] sm:$0xff]
    %v325 = vld [vmem:[%s15 + $0x14] sm:$0xf]
    %v326 = vld [vmem:[%s15 + $0x18] sm:$0xff]
    %v327 = vld [vmem:[%s15 + $0x20] sm:$0xf]
    %v328 = vld [vmem:[%s15 + $0x24] sm:$0xff]
    %v329 = vld [vmem:[%s15 + $0x2c] sm:$0xf]
    %v330 = vld [vmem:[%s15 + $0x30] sm:$0xff]
    %v331 = vld [vmem:[%s15 + $0x38] sm:$0xf]
    %v332 = vld [vmem:[%s15 + $0x3c] sm:$0xff]
    %v333 = vld [vmem:[%s15 + $0x44] sm:$0xf]
    %v334 = vld [vmem:[%s15 + $0x48] sm:$0xff]
    %v335 = vld [vmem:[%s15 + $0x50] sm:$0xf]
    %v336 = vld [vmem:[%s15 + $0x54] sm:$0xff]
    %v337 = vld [vmem:[%s15 + $0x5c] sm:$0xf]
    %v338 = vld [vmem:[%s15 + $0x60] sm:$0xff]
    %v339 = vld [vmem:[%s15 + $0x68] sm:$0xf]
    %v340 = vld [vmem:[%s15 + $0x6c] sm:$0xff]
    %v341 = vld [vmem:[%s15 + $0x74] sm:$0xf]
    %v342 = vld [vmem:[%s15 + $0x78] sm:$0xff]
    %v343 = vld [vmem:[%s15 + $0x80] sm:$0xf]
    %v344 = vld [vmem:[%s15 + $0x84] sm:$0xff]
    %v345 = vld [vmem:[%s15 + $0x8c] sm:$0xf]
    %v346 = vld [vmem:[%s15 + $0x90] sm:$0xff]
    %v347 = vld [vmem:[%s15 + $0x98] sm:$0xf]
    %v348 = vld [vmem:[%s15 + $0x9c] sm:$0xff]
    %v349 = vld [vmem:[%s15 + $0xa4] sm:$0xf]
    %v350 = vld [vmem:[%s15 + $0xa8] sm:$0xff]
    %v351 = vld [vmem:[%s15 + $0xb0] sm:$0xf]
    %v352 = vld [vmem:[%s15 + $0xb4] sm:$0xff]
    %v353 = vld [vmem:[%s15 + $0xbc] sm:$0xf]
    %v354 = vld [vmem:[%s17] sm:$0x7]
    %v356 = vperm.slane %v354, 0
    %v357 = vperm.slane %v354, 1
    %v358 = vperm.slane %v354, 2
    %v394 = vunpack.c.l.b16 %v322
    %v395 = vunpack.c.h.b16 %v322
    %v396 = vunpack.c.l.b16 %v323
    %v397 = vunpack.c.l.b16 %v324
    %v398 = vunpack.c.h.b16 %v324
    %v399 = vunpack.c.l.b16 %v325
    %v400 = vunpack.c.l.b16 %v326
    %v401 = vunpack.c.h.b16 %v326
    %v402 = vunpack.c.l.b16 %v327
    %v403 = vunpack.c.l.b16 %v328
    %v404 = vunpack.c.h.b16 %v328
    %v405 = vunpack.c.l.b16 %v329
    %v406 = vunpack.c.l.b16 %v330
    %v407 = vunpack.c.h.b16 %v330
    %v408 = vunpack.c.l.b16 %v331
    %v409 = vunpack.c.l.b16 %v332
    %v410 = vunpack.c.h.b16 %v332
    %v411 = vunpack.c.l.b16 %v333
    %v412 = vunpack.c.l.b16 %v334
    %v413 = vunpack.c.h.b16 %v334
    %v414 = vunpack.c.l.b16 %v335
    %v415 = vunpack.c.l.b16 %v336
    %v416 = vunpack.c.h.b16 %v336
    %v417 = vunpack.c.l.b16 %v337
    %v418 = vunpack.c.l.b16 %v338
    %v419 = vunpack.c.h.b16 %v338
    %v420 = vunpack.c.l.b16 %v339
    %v421 = vunpack.c.l.b16 %v340
    %v422 = vunpack.c.h.b16 %v340
    %v423 = vunpack.c.l.b16 %v341
    %v424 = vunpack.c.l.b16 %v342
    %v425 = vunpack.c.h.b16 %v342
    %v426 = vunpack.c.l.b16 %v343
    %v427 = vunpack.c.l.b16 %v344
    %v428 = vunpack.c.h.b16 %v344
    %v429 = vunpack.c.l.b16 %v345
    %v430 = vunpack.c.l.b16 %v346
    %v431 = vunpack.c.h.b16 %v346
    %v432 = vunpack.c.l.b16 %v347
    %v433 = vunpack.c.l.b16 %v348
    %v434 = vunpack.c.h.b16 %v348
    %v435 = vunpack.c.l.b16 %v349
    %v436 = vunpack.c.l.b16 %v350
    %v437 = vunpack.c.h.b16 %v350
    %v438 = vunpack.c.l.b16 %v351
    %v439 = vunpack.c.l.b16 %v352
    %v440 = vunpack.c.h.b16 %v352
    %v441 = vunpack.c.l.b16 %v353
    %v442 = vpack.c.b16 %v397, %v394
    %v443 = vpack.c.b16 %v398, %v395
    %v444 = vpack.c.b16 %v399, %v396
    %v445 = vpack.c.b16 %v403, %v400
    %v446 = vpack.c.b16 %v404, %v401
    %v447 = vpack.c.b16 %v405, %v402
    %v448 = vpack.c.b16 %v409, %v406
    %v449 = vpack.c.b16 %v410, %v407
    %v450 = vpack.c.b16 %v411, %v408
    %v451 = vpack.c.b16 %v415, %v412
    %v452 = vpack.c.b16 %v416, %v413
    %v453 = vpack.c.b16 %v417, %v414
    %v454 = vpack.c.b16 %v421, %v418
    %v455 = vpack.c.b16 %v422, %v419
    %v456 = vpack.c.b16 %v423, %v420
    %v457 = vpack.c.b16 %v427, %v424
    %v458 = vpack.c.b16 %v428, %v425
    %v459 = vpack.c.b16 %v429, %v426
    %v460 = vpack.c.b16 %v433, %v430
    %v461 = vpack.c.b16 %v434, %v431
    %v462 = vpack.c.b16 %v435, %v432
    %v463 = vpack.c.b16 %v439, %v436
    %v464 = vpack.c.b16 %v440, %v437
    %v465 = vpack.c.b16 %v441, %v438
    %490 = vmatpush.bf16.msra.mxu0 %v463
    %491 = vmatpush.bf16.msra.mxu0 %v460
    %492 = vmatpush.bf16.msra.mxu0 %v457
    %493 = vmatpush.bf16.msra.mxu0 %v454
    %494 = vmatpush.bf16.msra.mxu0 %v451
    %495 = vmatpush.bf16.msra.mxu0 %v448
    %496 = vmatpush.bf16.msra.mxu0 %v445
    %497 = vmatpush.bf16.msra.mxu0 %v442
    %498 = vmatmul.bf16.gmra.mxu0 %v321
    %v499 = vpop.f32.mrf.mxu0
    %v500 = vadd.f32 %v356, %v499
    %v501 = vpop.f32.mrf.mxu0
    %v502 = vadd.f32 %v356, %v501
    %503 = vdwg.mxu0
    %504 = vmatpush.bf16.msra.mxu0 %v464
    %505 = vmatpush.bf16.msra.mxu0 %v461
    %506 = vmatpush.bf16.msra.mxu0 %v458
    %507 = vmatpush.bf16.msra.mxu0 %v455
    %508 = vmatpush.bf16.msra.mxu0 %v452
    %509 = vmatpush.bf16.msra.mxu0 %v449
    %510 = vmatpush.bf16.msra.mxu0 %v446
    %511 = vmatpush.bf16.msra.mxu0 %v443
    %512 = vmatmul.bf16.gmra.mxu0 %v321
    %v513 = vpop.f32.mrf.mxu0
    %v514 = vadd.f32 %v357, %v513
    %v515 = vpop.f32.mrf.mxu0
    %v516 = vadd.f32 %v357, %v515
    %517 = vdwg.mxu0
    %518 = vmatpush.bf16.msra.mxu0 %v465
    %519 = vmatpush.bf16.msra.mxu0 %v462
    %520 = vmatpush.bf16.msra.mxu0 %v459
    %521 = vmatpush.bf16.msra.mxu0 %v456
    %522 = vmatpush.bf16.msra.mxu0 %v453
    %523 = vmatpush.bf16.msra.mxu0 %v450
    %524 = vmatpush.bf16.msra.mxu0 %v447
    %525 = vmatpush.bf16.msra.mxu0 %v444
    %526 = vmatmul.bf16.gmra.mxu0 %v321
    %v527 = vpop.f32.mrf.mxu0
    %v528 = vadd.f32 %v358, %v527
    %v529 = vpop.f32.mrf.mxu0
    %v530 = vadd.f32 %v358, %v529
    %531 = vdwg.mxu0
    %v532 = vmul.f32 %v514, %v229
    %v533 = vmul.f32 %v516, %v229
    %v534 = vmul.f32 %v514, %v234
    %v535 = vmul.f32 %v516, %v234
    %v536 = vmul.f32 %v514, %v239
    %v537 = vmul.f32 %v516, %v239
    %v538 = vmul.f32 %v514, %v244
    %v539 = vmul.f32 %v516, %v244
    %v540 = vmul.f32 %v528, %v229
    %v541 = vmul.f32 %v530, %v229
    %v542 = vmul.f32 %v528, %v234
    %v543 = vmul.f32 %v530, %v234
    %v544 = vmul.f32 %v528, %v239
    %v545 = vmul.f32 %v530, %v239
    %v546 = vmul.f32 %v528, %v244
    %v547 = vmul.f32 %v530, %v244
    %548 = vmatpush.xpose.msra.mxu0 0.0
    %549 = vmatpush.xpose.msra.mxu0 0.0
    %550 = vmatpush.xpose.msra.mxu0 0.0
    %551 = vmatpush.xpose.msra.mxu0 0.0
    %552 = vmatpush.xpose.msra.mxu0 0.0
    %553 = vmatpush.xpose.msra.mxu0 0.0
    %554 = vmatpush.xpose.msra.mxu0 0.0
    %555 = vmatpush.xpose.msra.mxu0 0.0
    %556 = vmatpush.xpose.msra.mxu0 %v539
    %557 = vmatpush.xpose.msra.mxu0 %v538
    %558 = vmatpush.xpose.msra.mxu0 %v537
    %559 = vmatpush.xpose.msra.mxu0 %v536
    %560 = vmatpush.xpose.msra.mxu0 %v535
    %561 = vmatpush.xpose.msra.mxu0 %v534
    %562 = vmatpush.xpose.msra.mxu0 %v533
    %563 = vmatpush.xpose.msra.mxu0 %v532
    %564 = vmatmul.f32.gmra.mxu0 %v500
    %v565 = vpop.f32.mrf.mxu0
    %v566 = vadd.f32 0.0, %v565
    %567 = vmatmul.f32.gmra.mxu0 %v502
    %v568 = vpop.f32.mrf.mxu0
    %v569 = vadd.f32 0.0, %v568
    %570 = vdwg.mxu0
    %v571 = vmul.f32 %v566, 0.17677669
    %v572 = vmul.f32 %v569, 0.17677669
    %v573 = vadd.f32 %v571, %v253
    %v574 = vadd.f32 %v572, %v254
    %v575 = vsel %vm246, 1, 0
    %vm576 = vcmp.eq.s32.totalorder %v575, 1
    %v577 = vsel %vm576, %v573, -1e+30
    %v578 = vsel %vm576, %v574, -1e+30
    %vm579 = vcmask 523264
    %v580 = vsel %vm579, %v577, -inf
    %581 = vmax.xlane.f32.xlu0 %v580
    %v582 = vpop.xlane.xlu0 %581
    %v583 = vsel %vm579, %v578, -inf
    %584 = vmax.xlane.f32.xlu0 %v583
    %v585 = vpop.xlane.xlu0 %584
    %v586 = vsel %vm576, %v582, 0.0
    %v587 = vsel %vm576, %v585, 0.0
    %v588 = vadd.f32 %v586, 0.0
    %v589 = vadd.f32 %v587, 0.0
    %v590 = vsel %vm248, 1, 0
    %vm591 = vcmp.eq.s32.totalorder %v590, 1
    %v592 = vsel %vm591, %v573, -1e+30
    %v593 = vsel %vm591, %v574, -1e+30
    %v594 = vsel %vm579, %v592, -inf
    %595 = vmax.xlane.f32.xlu0 %v594
    %v596 = vpop.xlane.xlu0 %595
    %v597 = vsel %vm579, %v593, -inf
    %598 = vmax.xlane.f32.xlu0 %v597
    %v599 = vpop.xlane.xlu0 %598
    %v600 = vsel %vm591, %v596, 0.0
    %v601 = vsel %vm591, %v599, 0.0
    %v602 = vadd.f32 %v588, %v600
    %v603 = vadd.f32 %v589, %v601
    %v604 = vsel %vm250, 1, 0
    %vm605 = vcmp.eq.s32.totalorder %v604, 1
    %v606 = vsel %vm605, %v573, -1e+30
    %v607 = vsel %vm605, %v574, -1e+30
    %v608 = vsel %vm579, %v606, -inf
    %609 = vmax.xlane.f32.xlu0 %v608
    %v610 = vpop.xlane.xlu0 %609
    %v611 = vsel %vm579, %v607, -inf
    %612 = vmax.xlane.f32.xlu0 %v611
    %v613 = vpop.xlane.xlu0 %612
    %v614 = vsel %vm605, %v610, 0.0
    %v615 = vsel %vm605, %v613, 0.0
    %v616 = vadd.f32 %v602, %v614
    %v617 = vadd.f32 %v603, %v615
    %v618 = vsel %vm252, 1, 0
    %vm619 = vcmp.eq.s32.totalorder %v618, 1
    %v620 = vsel %vm619, %v573, -1e+30
    %v621 = vsel %vm619, %v574, -1e+30
    %v622 = vsel %vm579, %v620, -inf
    %623 = vmax.xlane.f32.xlu0 %v622
    %v624 = vpop.xlane.xlu0 %623
    %v625 = vsel %vm579, %v621, -inf
    %626 = vmax.xlane.f32.xlu0 %v625
    %v627 = vpop.xlane.xlu0 %626
    %v628 = vsel %vm619, %v624, 0.0
    %v629 = vsel %vm619, %v627, 0.0
    %v630 = vadd.f32 %v616, %v628
    %v631 = vadd.f32 %v617, %v629
    %v632 = vsub.f32 %v573, %v630
    %v633 = vsub.f32 %v574, %v631
    %v634 = vmul.f32 %v632, 1.442695
    %v635 = vpow.pop %v634
    %v636 = vmul.f32 %v633, 1.442695
    %v637 = vpow.pop %v636
    %v638 = vsel %vm576, %v635, 0.0
    %v639 = vsel %vm576, %v637, 0.0
    %v640 = vsel %vm579, %v638, 0.0
    %641 = vadd.xlane.f32.xlu0 %v640
    %v642 = vpop.xlane.xlu0 %641
    %v643 = vsel %vm579, %v639, 0.0
    %644 = vadd.xlane.f32.xlu0 %v643
    %v645 = vpop.xlane.xlu0 %644
    %v646 = vrcp.pop %v642
    %v647 = vrcp.pop %v645
    %v648 = vsel %vm576, %v646, 0.0
    %v649 = vsel %vm576, %v647, 0.0
    %v650 = vadd.f32 %v648, 0.0
    %v651 = vadd.f32 %v649, 0.0
    %v652 = vsel %vm591, %v635, 0.0
    %v653 = vsel %vm591, %v637, 0.0
    %v654 = vsel %vm579, %v652, 0.0
    %655 = vadd.xlane.f32.xlu0 %v654
    %v656 = vpop.xlane.xlu0 %655
    %v657 = vsel %vm579, %v653, 0.0
    %658 = vadd.xlane.f32.xlu0 %v657
    %v659 = vpop.xlane.xlu0 %658
    %v660 = vrcp.pop %v656
    %v661 = vrcp.pop %v659
    %v662 = vsel %vm591, %v660, 0.0
    %v663 = vsel %vm591, %v661, 0.0
    %v664 = vadd.f32 %v650, %v662
    %v665 = vadd.f32 %v651, %v663
    %v666 = vsel %vm605, %v635, 0.0
    %v667 = vsel %vm605, %v637, 0.0
    %v668 = vsel %vm579, %v666, 0.0
    %669 = vadd.xlane.f32.xlu0 %v668
    %v670 = vpop.xlane.xlu0 %669
    %v671 = vsel %vm579, %v667, 0.0
    %672 = vadd.xlane.f32.xlu0 %v671
    %v673 = vpop.xlane.xlu0 %672
    %v674 = vrcp.pop %v670
    %v675 = vrcp.pop %v673
    %v676 = vsel %vm605, %v674, 0.0
    %v677 = vsel %vm605, %v675, 0.0
    %v678 = vadd.f32 %v664, %v676
    %v679 = vadd.f32 %v665, %v677
    %v680 = vsel %vm619, %v635, 0.0
    %v681 = vsel %vm619, %v637, 0.0
    %v682 = vsel %vm579, %v680, 0.0
    %683 = vadd.xlane.f32.xlu0 %v682
    %v684 = vpop.xlane.xlu0 %683
    %v685 = vsel %vm579, %v681, 0.0
    %686 = vadd.xlane.f32.xlu0 %v685
    %v687 = vpop.xlane.xlu0 %686
    %v688 = vrcp.pop %v684
    %v689 = vrcp.pop %v687
    %v690 = vsel %vm619, %v688, 0.0
    %v691 = vsel %vm619, %v689, 0.0
    %v692 = vadd.f32 %v678, %v690
    %v693 = vadd.f32 %v679, %v691
    %v694 = vmul.f32 %v635, %v692
    %v695 = vmul.f32 %v637, %v693
    %v697 = vsel %vm579, %v694, 0
    %v700 = vsel %vm579, %v695, 0
    %702 = vmatpush.msra.mxu0 0.0
    %703 = vmatpush.msra.mxu0 0.0
    %704 = vmatpush.msra.mxu0 0.0
    %705 = vmatpush.msra.mxu0 0.0
    %706 = vmatpush.msra.mxu0 0.0
    %707 = vmatpush.msra.mxu0 0.0
    %708 = vmatpush.msra.mxu0 0.0
    %709 = vmatpush.msra.mxu0 0.0
    %710 = vmatpush.msra.mxu0 %v547
    %711 = vmatpush.msra.mxu0 %v546
    %712 = vmatpush.msra.mxu0 %v545
    %713 = vmatpush.msra.mxu0 %v544
    %714 = vmatpush.msra.mxu0 %v543
    %715 = vmatpush.msra.mxu0 %v542
    %716 = vmatpush.msra.mxu0 %v541
    %717 = vmatpush.msra.mxu0 %v540
    %718 = vmatmul.f32.gmra.mxu0 %v697
    %v719 = vpop.f32.mrf.mxu0
    %v720 = vadd.f32 0.0, %v719
    %721 = vmatmul.f32.gmra.mxu0 %v700
    %v722 = vpop.f32.mrf.mxu0
    %v723 = vadd.f32 0.0, %v722
    %724 = vdwg.mxu0
    %v725 = vpack.c.bf16 %v723, %v720
    %v726 = vld [vmem:[#allocation2] sm:$0xf]
    %v727 = vld [vmem:[#allocation2 + $0x4] sm:$0xf]
    %v728 = vld [vmem:[#allocation2 + $0x8] sm:$0xf]
    %v729 = vld [vmem:[#allocation2 + $0xc] sm:$0xf]
    %v730 = vld [vmem:[#allocation2 + $0x10] sm:$0xf]
    %v731 = vld [vmem:[#allocation2 + $0x14] sm:$0xf]
    %v732 = vld [vmem:[#allocation2 + $0x18] sm:$0xf]
    %v733 = vld [vmem:[#allocation2 + $0x1c] sm:$0xf]
    %v734 = vld [vmem:[#allocation2 + $0x20] sm:$0xf]
    %v735 = vld [vmem:[#allocation2 + $0x24] sm:$0xf]
    %v736 = vld [vmem:[#allocation2 + $0x28] sm:$0xf]
    %v737 = vld [vmem:[#allocation2 + $0x2c] sm:$0xf]
    %v738 = vld [vmem:[#allocation2 + $0x30] sm:$0xf]
    %v739 = vld [vmem:[#allocation2 + $0x34] sm:$0xf]
    %v740 = vld [vmem:[#allocation2 + $0x38] sm:$0xf]
    %v741 = vld [vmem:[#allocation2 + $0x3c] sm:$0xf]
    %v742 = vld [vmem:[%s21] sm:$0x1]
    %v744 = vperm.slane %v742, 0
    %v762 = vunpack.c.l.b16 %v726
    %v763 = vunpack.c.l.b16 %v727
    %v764 = vunpack.c.l.b16 %v728
    %v765 = vunpack.c.l.b16 %v729
    %v766 = vunpack.c.l.b16 %v730
    %v767 = vunpack.c.l.b16 %v731
    %v768 = vunpack.c.l.b16 %v732
    %v769 = vunpack.c.l.b16 %v733
    %v770 = vunpack.c.l.b16 %v734
    %v771 = vunpack.c.l.b16 %v735
    %v772 = vunpack.c.l.b16 %v736
    %v773 = vunpack.c.l.b16 %v737
    %v774 = vunpack.c.l.b16 %v738
    %v775 = vunpack.c.l.b16 %v739
    %v776 = vunpack.c.l.b16 %v740
    %v777 = vunpack.c.l.b16 %v741
    %v778 = vpack.c.b16 %v763, %v762
    %v779 = vpack.c.b16 %v765, %v764
    %v780 = vpack.c.b16 %v767, %v766
    %v781 = vpack.c.b16 %v769, %v768
    %v782 = vpack.c.b16 %v771, %v770
    %v783 = vpack.c.b16 %v773, %v772
    %v784 = vpack.c.b16 %v775, %v774
    %v785 = vpack.c.b16 %v777, %v776
    %794 = vmatpush.bf16.msra.mxu0 %v785
    %795 = vmatpush.bf16.msra.mxu0 %v784
    %796 = vmatpush.bf16.msra.mxu0 %v783
    %797 = vmatpush.bf16.msra.mxu0 %v782
    %798 = vmatpush.bf16.msra.mxu0 %v781
    %799 = vmatpush.bf16.msra.mxu0 %v780
    %800 = vmatpush.bf16.msra.mxu0 %v779
    %801 = vmatpush.bf16.msra.mxu0 %v778
    %802 = vmatmul.bf16.gmra.mxu0 %v725
    %v803 = vpop.f32.mrf.mxu0
    %v804 = vadd.f32 %v744, %v803
    %v805 = vpop.f32.mrf.mxu0
    %v806 = vadd.f32 %v744, %v805
    %807 = vdwg.mxu0
    %v808 = vadd.f32 %v319, %v804
    %v809 = vadd.f32 %v320, %v806
    %v810 = vld [vmem:[%s23] sm:$0x1]
    %v811 = vld [vmem:[%s25] sm:$0x1]
    %812 = vadd.xlane.f32.xlu0 %v808
    %v813 = vpop.xlane.xlu0 %812
    %814 = vadd.xlane.f32.xlu0 %v809
    %v815 = vpop.xlane.xlu0 %814
    %v816 = vmul.f32 %v813, %v274
    %v817 = vmul.f32 %v815, %v274
    %v818 = vsub.f32 %v808, %v816
    %v819 = vsub.f32 %v809, %v817
    %v820 = vmul.f32 %v818, %v818
    %v821 = vmul.f32 %v819, %v819
    %822 = vadd.xlane.f32.xlu0 %v820
    %v823 = vpop.xlane.xlu0 %822
    %824 = vadd.xlane.f32.xlu0 %v821
    %v825 = vpop.xlane.xlu0 %824
    %v826 = vmul.f32 %v823, %v274
    %v827 = vmul.f32 %v825, %v274
    %v828 = vadd.f32 %v826, 1e-05
    %v829 = vadd.f32 %v827, 1e-05
    %v830 = vrsqrt.pop %v828
    %v831 = vmul.f32 %v830, %v828
    %v832 = vmul.f32 %v831, %v830
    %v833 = vmul.f32 0.5, %v832
    %v834 = vsub.f32 1.5, %v833
    %v835 = vmul.f32 %v830, %v834
    %vm836 = vweird.f32 %v828
    %vm837 = vweird.f32 %v830
    %vm838 = vmor %vm836, %vm837
    %v839 = vsel %vm838, %v830, %v835
    %v840 = vrsqrt.pop %v829
    %v841 = vmul.f32 %v840, %v829
    %v842 = vmul.f32 %v841, %v840
    %v843 = vmul.f32 0.5, %v842
    %v844 = vsub.f32 1.5, %v843
    %v845 = vmul.f32 %v840, %v844
    %vm846 = vweird.f32 %v829
    %vm847 = vweird.f32 %v840
    %vm848 = vmor %vm846, %vm847
    %v849 = vsel %vm848, %v840, %v845
    %v850 = vmul.f32 %v818, %v839
    %v851 = vmul.f32 %v819, %v849
    %v853 = vperm.slane %v810, 0
    %v855 = vmul.f32 %v850, %v853
    %v856 = vmul.f32 %v851, %v853
    %v858 = vperm.slane %v811, 0
    %v860 = vadd.f32 %v855, %v858
    %v861 = vadd.f32 %v856, %v858
    %v862 = vpack.c.bf16 %v861, %v860
    %v863 = vld [vmem:[#allocation5] sm:$0xf]
    %v864 = vld [vmem:[#allocation5 + $0x4] sm:$0xf]
    %v865 = vld [vmem:[#allocation5 + $0x8] sm:$0xf]
    %v866 = vld [vmem:[#allocation5 + $0xc] sm:$0xf]
    %v867 = vld [vmem:[#allocation5 + $0x10] sm:$0xf]
    %v868 = vld [vmem:[#allocation5 + $0x14] sm:$0xf]
    %v869 = vld [vmem:[#allocation5 + $0x18] sm:$0xf]
    %v870 = vld [vmem:[#allocation5 + $0x1c] sm:$0xf]
    %v871 = vld [vmem:[#allocation5 + $0x20] sm:$0xf]
    %v872 = vld [vmem:[#allocation5 + $0x24] sm:$0xf]
    %v873 = vld [vmem:[#allocation5 + $0x28] sm:$0xf]
    %v874 = vld [vmem:[#allocation5 + $0x2c] sm:$0xf]
    %v875 = vld [vmem:[#allocation5 + $0x30] sm:$0xf]
    %v876 = vld [vmem:[#allocation5 + $0x34] sm:$0xf]
    %v877 = vld [vmem:[#allocation5 + $0x38] sm:$0xf]
    %v878 = vld [vmem:[#allocation5 + $0x3c] sm:$0xf]
    %v879 = vld [vmem:[%s29] sm:$0x1]
    %v881 = vperm.slane %v879, 0
    %v899 = vunpack.c.l.b16 %v863
    %v900 = vunpack.c.l.b16 %v864
    %v901 = vunpack.c.l.b16 %v865
    %v902 = vunpack.c.l.b16 %v866
    %v903 = vunpack.c.l.b16 %v867
    %v904 = vunpack.c.l.b16 %v868
    %v905 = vunpack.c.l.b16 %v869
    %v906 = vunpack.c.l.b16 %v870
    %v907 = vunpack.c.l.b16 %v871
    %v908 = vunpack.c.l.b16 %v872
    %v909 = vunpack.c.l.b16 %v873
    %v910 = vunpack.c.l.b16 %v874
    %v911 = vunpack.c.l.b16 %v875
    %v912 = vunpack.c.l.b16 %v876
    %v913 = vunpack.c.l.b16 %v877
    %v914 = vunpack.c.l.b16 %v878
    %v915 = vpack.c.b16 %v900, %v899
    %v916 = vpack.c.b16 %v902, %v901
    %v917 = vpack.c.b16 %v904, %v903
    %v918 = vpack.c.b16 %v906, %v905
    %v919 = vpack.c.b16 %v908, %v907
    %v920 = vpack.c.b16 %v910, %v909
    %v921 = vpack.c.b16 %v912, %v911
    %v922 = vpack.c.b16 %v914, %v913
    %931 = vmatpush.bf16.msra.mxu0 %v922
    %932 = vmatpush.bf16.msra.mxu0 %v921
    %933 = vmatpush.bf16.msra.mxu0 %v920
    %934 = vmatpush.bf16.msra.mxu0 %v919
    %935 = vmatpush.bf16.msra.mxu0 %v918
    %936 = vmatpush.bf16.msra.mxu0 %v917
    %937 = vmatpush.bf16.msra.mxu0 %v916
    %938 = vmatpush.bf16.msra.mxu0 %v915
    %939 = vmatmul.bf16.gmra.mxu0 %v862
    %v940 = vpop.f32.mrf.mxu0
    %v941 = vadd.f32 %v881, %v940
    %v942 = vpop.f32.mrf.mxu0
    %v943 = vadd.f32 %v881, %v942
    %944 = vdwg.mxu0
    %v945 = vld [vmem:[%s31] sm:$0xff]
    %v946 = vld [vmem:[%s31 + $0x8] sm:$0xff]
    %v947 = vld [vmem:[%s31 + $0x10] sm:$0xff]
    %v948 = vld [vmem:[%s31 + $0x18] sm:$0xff]
    %v949 = vld [vmem:[%s31 + $0x20] sm:$0xff]
    %v950 = vld [vmem:[%s31 + $0x28] sm:$0xff]
    %v951 = vld [vmem:[%s31 + $0x30] sm:$0xff]
    %v952 = vld [vmem:[%s31 + $0x38] sm:$0xff]
    %v953 = vld [vmem:[%s31 + $0x40] sm:$0xff]
    %v954 = vld [vmem:[%s31 + $0x48] sm:$0xff]
    %v955 = vld [vmem:[%s31 + $0x50] sm:$0xff]
    %v956 = vld [vmem:[%s31 + $0x58] sm:$0xff]
    %v957 = vld [vmem:[%s31 + $0x60] sm:$0xff]
    %v958 = vld [vmem:[%s31 + $0x68] sm:$0xff]
    %v959 = vld [vmem:[%s31 + $0x70] sm:$0xff]
    %v960 = vld [vmem:[%s31 + $0x78] sm:$0xff]
    %v961 = vld [vmem:[%s33] sm:$0x3]
    %v963 = vperm.slane %v961, 0
    %v964 = vperm.slane %v961, 1
    %v983 = vunpack.c.l.b16 %v945
    %v984 = vunpack.c.h.b16 %v945
    %v985 = vunpack.c.l.b16 %v946
    %v986 = vunpack.c.h.b16 %v946
    %v987 = vunpack.c.l.b16 %v947
    %v988 = vunpack.c.h.b16 %v947
    %v989 = vunpack.c.l.b16 %v948
    %v990 = vunpack.c.h.b16 %v948
    %v991 = vunpack.c.l.b16 %v949
    %v992 = vunpack.c.h.b16 %v949
    %v993 = vunpack.c.l.b16 %v950
    %v994 = vunpack.c.h.b16 %v950
    %v995 = vunpack.c.l.b16 %v951
    %v996 = vunpack.c.h.b16 %v951
    %v997 = vunpack.c.l.b16 %v952
    %v998 = vunpack.c.h.b16 %v952
    %v999 = vunpack.c.l.b16 %v953
    %v1000 = vunpack.c.h.b16 %v953
    %v1001 = vunpack.c.l.b16 %v954
    %v1002 = vunpack.c.h.b16 %v954
    %v1003 = vunpack.c.l.b16 %v955
    %v1004 = vunpack.c.h.b16 %v955
    %v1005 = vunpack.c.l.b16 %v956
    %v1006 = vunpack.c.h.b16 %v956
    %v1007 = vunpack.c.l.b16 %v957
    %v1008 = vunpack.c.h.b16 %v957
    %v1009 = vunpack.c.l.b16 %v958
    %v1010 = vunpack.c.h.b16 %v958
    %v1011 = vunpack.c.l.b16 %v959
    %v1012 = vunpack.c.h.b16 %v959
    %v1013 = vunpack.c.l.b16 %v960
    %v1014 = vunpack.c.h.b16 %v960
    %v1015 = vpack.c.b16 %v985, %v983
    %v1016 = vpack.c.b16 %v986, %v984
    %v1017 = vpack.c.b16 %v989, %v987
    %v1018 = vpack.c.b16 %v990, %v988
    %v1019 = vpack.c.b16 %v993, %v991
    %v1020 = vpack.c.b16 %v994, %v992
    %v1021 = vpack.c.b16 %v997, %v995
    %v1022 = vpack.c.b16 %v998, %v996
    %v1023 = vpack.c.b16 %v1001, %v999
    %v1024 = vpack.c.b16 %v1002, %v1000
    %v1025 = vpack.c.b16 %v1005, %v1003
    %v1026 = vpack.c.b16 %v1006, %v1004
    %v1027 = vpack.c.b16 %v1009, %v1007
    %v1028 = vpack.c.b16 %v1010, %v1008
    %v1029 = vpack.c.b16 %v1013, %v1011
    %v1030 = vpack.c.b16 %v1014, %v1012
    %1047 = vmatpush.bf16.msra.mxu0 %v1029
    %1048 = vmatpush.bf16.msra.mxu0 %v1027
    %1049 = vmatpush.bf16.msra.mxu0 %v1025
    %1050 = vmatpush.bf16.msra.mxu0 %v1023
    %1051 = vmatpush.bf16.msra.mxu0 %v1021
    %1052 = vmatpush.bf16.msra.mxu0 %v1019
    %1053 = vmatpush.bf16.msra.mxu0 %v1017
    %1054 = vmatpush.bf16.msra.mxu0 %v1015
    %1055 = vmatmul.bf16.gmra.mxu0 %v259
    %v1056 = vpop.f32.mrf.mxu0
    %v1057 = vadd.f32 %v963, %v1056
    %v1058 = vpop.f32.mrf.mxu0
    %v1059 = vadd.f32 %v963, %v1058
    %1060 = vdwg.mxu0
    %1061 = vmatpush.bf16.msra.mxu0 %v1030
    %1062 = vmatpush.bf16.msra.mxu0 %v1028
    %1063 = vmatpush.bf16.msra.mxu0 %v1026
    %1064 = vmatpush.bf16.msra.mxu0 %v1024
    %1065 = vmatpush.bf16.msra.mxu0 %v1022
    %1066 = vmatpush.bf16.msra.mxu0 %v1020
    %1067 = vmatpush.bf16.msra.mxu0 %v1018
    %1068 = vmatpush.bf16.msra.mxu0 %v1016
    %1069 = vmatmul.bf16.gmra.mxu0 %v259
    %v1070 = vpop.f32.mrf.mxu0
    %v1071 = vadd.f32 %v964, %v1070
    %v1072 = vpop.f32.mrf.mxu0
    %v1073 = vadd.f32 %v964, %v1072
    %1074 = vdwg.mxu0
    %v1075 = vmul.f32 %v1057, %v229
    %v1076 = vmul.f32 %v1059, %v229
    %v1077 = vmul.f32 %v1057, %v234
    %v1078 = vmul.f32 %v1059, %v234
    %v1079 = vmul.f32 %v1057, %v239
    %v1080 = vmul.f32 %v1059, %v239
    %v1081 = vmul.f32 %v1057, %v244
    %v1082 = vmul.f32 %v1059, %v244
    %v1083 = vmul.f32 %v1071, %v229
    %v1084 = vmul.f32 %v1073, %v229
    %v1085 = vmul.f32 %v1071, %v234
    %v1086 = vmul.f32 %v1073, %v234
    %v1087 = vmul.f32 %v1071, %v239
    %v1088 = vmul.f32 %v1073, %v239
    %v1089 = vmul.f32 %v1071, %v244
    %v1090 = vmul.f32 %v1073, %v244
    %1091 = vmatpush.xpose.msra.mxu0 0.0
    %1092 = vmatpush.xpose.msra.mxu0 0.0
    %1093 = vmatpush.xpose.msra.mxu0 0.0
    %1094 = vmatpush.xpose.msra.mxu0 0.0
    %1095 = vmatpush.xpose.msra.mxu0 0.0
    %1096 = vmatpush.xpose.msra.mxu0 0.0
    %1097 = vmatpush.xpose.msra.mxu0 0.0
    %1098 = vmatpush.xpose.msra.mxu0 0.0
    %1099 = vmatpush.xpose.msra.mxu0 %v1082
    %1100 = vmatpush.xpose.msra.mxu0 %v1081
    %1101 = vmatpush.xpose.msra.mxu0 %v1080
    %1102 = vmatpush.xpose.msra.mxu0 %v1079
    %1103 = vmatpush.xpose.msra.mxu0 %v1078
    %1104 = vmatpush.xpose.msra.mxu0 %v1077
    %1105 = vmatpush.xpose.msra.mxu0 %v1076
    %1106 = vmatpush.xpose.msra.mxu0 %v1075
    %1107 = vmatmul.f32.gmra.mxu0 %v941
    %v1108 = vpop.f32.mrf.mxu0
    %v1109 = vadd.f32 0.0, %v1108
    %1110 = vmatmul.f32.gmra.mxu0 %v943
    %v1111 = vpop.f32.mrf.mxu0
    %v1112 = vadd.f32 0.0, %v1111
    %1113 = vdwg.mxu0
    %v1114 = vmul.f32 %v1109, 0.17677669
    %v1115 = vmul.f32 %v1112, 0.17677669
    %v1116 = vadd.f32 %v1114, %v255
    %v1117 = vadd.f32 %v1115, %v256
    %v1118 = vsel %vm576, %v1116, -1e+30
    %v1119 = vsel %vm576, %v1117, -1e+30
    %v1120 = vsel %vm579, %v1118, -inf
    %1121 = vmax.xlane.f32.xlu0 %v1120
    %v1122 = vpop.xlane.xlu0 %1121
    %v1123 = vsel %vm579, %v1119, -inf
    %1124 = vmax.xlane.f32.xlu0 %v1123
    %v1125 = vpop.xlane.xlu0 %1124
    %v1126 = vsel %vm576, %v1122, 0.0
    %v1127 = vsel %vm576, %v1125, 0.0
    %v1128 = vadd.f32 %v1126, 0.0
    %v1129 = vadd.f32 %v1127, 0.0
    %v1130 = vsel %vm591, %v1116, -1e+30
    %v1131 = vsel %vm591, %v1117, -1e+30
    %v1132 = vsel %vm579, %v1130, -inf
    %1133 = vmax.xlane.f32.xlu0 %v1132
    %v1134 = vpop.xlane.xlu0 %1133
    %v1135 = vsel %vm579, %v1131, -inf
    %1136 = vmax.xlane.f32.xlu0 %v1135
    %v1137 = vpop.xlane.xlu0 %1136
    %v1138 = vsel %vm591, %v1134, 0.0
    %v1139 = vsel %vm591, %v1137, 0.0
    %v1140 = vadd.f32 %v1128, %v1138
    %v1141 = vadd.f32 %v1129, %v1139
    %v1142 = vsel %vm605, %v1116, -1e+30
    %v1143 = vsel %vm605, %v1117, -1e+30
    %v1144 = vsel %vm579, %v1142, -inf
    %1145 = vmax.xlane.f32.xlu0 %v1144
    %v1146 = vpop.xlane.xlu0 %1145
    %v1147 = vsel %vm579, %v1143, -inf
    %1148 = vmax.xlane.f32.xlu0 %v1147
    %v1149 = vpop.xlane.xlu0 %1148
    %v1150 = vsel %vm605, %v1146, 0.0
    %v1151 = vsel %vm605, %v1149, 0.0
    %v1152 = vadd.f32 %v1140, %v1150
    %v1153 = vadd.f32 %v1141, %v1151
    %v1154 = vsel %vm619, %v1116, -1e+30
    %v1155 = vsel %vm619, %v1117, -1e+30
    %v1156 = vsel %vm579, %v1154, -inf
    %1157 = vmax.xlane.f32.xlu0 %v1156
    %v1158 = vpop.xlane.xlu0 %1157
    %v1159 = vsel %vm579, %v1155, -inf
    %1160 = vmax.xlane.f32.xlu0 %v1159
    %v1161 = vpop.xlane.xlu0 %1160
    %v1162 = vsel %vm619, %v1158, 0.0
    %v1163 = vsel %vm619, %v1161, 0.0
    %v1164 = vadd.f32 %v1152, %v1162
    %v1165 = vadd.f32 %v1153, %v1163
    %v1166 = vsub.f32 %v1116, %v1164
    %v1167 = vsub.f32 %v1117, %v1165
    %v1168 = vmul.f32 %v1166, 1.442695
    %v1169 = vpow.pop %v1168
    %v1170 = vmul.f32 %v1167, 1.442695
    %v1171 = vpow.pop %v1170
    %v1172 = vsel %vm576, %v1169, 0.0
    %v1173 = vsel %vm576, %v1171, 0.0
    %v1174 = vsel %vm579, %v1172, 0.0
    %1175 = vadd.xlane.f32.xlu0 %v1174
    %v1176 = vpop.xlane.xlu0 %1175
    %v1177 = vsel %vm579, %v1173, 0.0
    %1178 = vadd.xlane.f32.xlu0 %v1177
    %v1179 = vpop.xlane.xlu0 %1178
    %v1180 = vrcp.pop %v1176
    %v1181 = vrcp.pop %v1179
    %v1182 = vsel %vm576, %v1180, 0.0
    %v1183 = vsel %vm576, %v1181, 0.0
    %v1184 = vadd.f32 %v1182, 0.0
    %v1185 = vadd.f32 %v1183, 0.0
    %v1186 = vsel %vm591, %v1169, 0.0
    %v1187 = vsel %vm591, %v1171, 0.0
    %v1188 = vsel %vm579, %v1186, 0.0
    %1189 = vadd.xlane.f32.xlu0 %v1188
    %v1190 = vpop.xlane.xlu0 %1189
    %v1191 = vsel %vm579, %v1187, 0.0
    %1192 = vadd.xlane.f32.xlu0 %v1191
    %v1193 = vpop.xlane.xlu0 %1192
    %v1194 = vrcp.pop %v1190
    %v1195 = vrcp.pop %v1193
    %v1196 = vsel %vm591, %v1194, 0.0
    %v1197 = vsel %vm591, %v1195, 0.0
    %v1198 = vadd.f32 %v1184, %v1196
    %v1199 = vadd.f32 %v1185, %v1197
    %v1200 = vsel %vm605, %v1169, 0.0
    %v1201 = vsel %vm605, %v1171, 0.0
    %v1202 = vsel %vm579, %v1200, 0.0
    %1203 = vadd.xlane.f32.xlu0 %v1202
    %v1204 = vpop.xlane.xlu0 %1203
    %v1205 = vsel %vm579, %v1201, 0.0
    %1206 = vadd.xlane.f32.xlu0 %v1205
    %v1207 = vpop.xlane.xlu0 %1206
    %v1208 = vrcp.pop %v1204
    %v1209 = vrcp.pop %v1207
    %v1210 = vsel %vm605, %v1208, 0.0
    %v1211 = vsel %vm605, %v1209, 0.0
    %v1212 = vadd.f32 %v1198, %v1210
    %v1213 = vadd.f32 %v1199, %v1211
    %v1214 = vsel %vm619, %v1169, 0.0
    %v1215 = vsel %vm619, %v1171, 0.0
    %v1216 = vsel %vm579, %v1214, 0.0
    %1217 = vadd.xlane.f32.xlu0 %v1216
    %v1218 = vpop.xlane.xlu0 %1217
    %v1219 = vsel %vm579, %v1215, 0.0
    %1220 = vadd.xlane.f32.xlu0 %v1219
    %v1221 = vpop.xlane.xlu0 %1220
    %v1222 = vrcp.pop %v1218
    %v1223 = vrcp.pop %v1221
    %v1224 = vsel %vm619, %v1222, 0.0
    %v1225 = vsel %vm619, %v1223, 0.0
    %v1226 = vadd.f32 %v1212, %v1224
    %v1227 = vadd.f32 %v1213, %v1225
    %v1228 = vmul.f32 %v1169, %v1226
    %v1229 = vmul.f32 %v1171, %v1227
    %v1231 = vsel %vm579, %v1228, 0
    %v1234 = vsel %vm579, %v1229, 0
    %1236 = vmatpush.msra.mxu0 0.0
    %1237 = vmatpush.msra.mxu0 0.0
    %1238 = vmatpush.msra.mxu0 0.0
    %1239 = vmatpush.msra.mxu0 0.0
    %1240 = vmatpush.msra.mxu0 0.0
    %1241 = vmatpush.msra.mxu0 0.0
    %1242 = vmatpush.msra.mxu0 0.0
    %1243 = vmatpush.msra.mxu0 0.0
    %1244 = vmatpush.msra.mxu0 %v1090
    %1245 = vmatpush.msra.mxu0 %v1089
    %1246 = vmatpush.msra.mxu0 %v1088
    %1247 = vmatpush.msra.mxu0 %v1087
    %1248 = vmatpush.msra.mxu0 %v1086
    %1249 = vmatpush.msra.mxu0 %v1085
    %1250 = vmatpush.msra.mxu0 %v1084
    %1251 = vmatpush.msra.mxu0 %v1083
    %1252 = vmatmul.f32.gmra.mxu0 %v1231
    %v1253 = vpop.f32.mrf.mxu0
    %v1254 = vadd.f32 0.0, %v1253
    %1255 = vmatmul.f32.gmra.mxu0 %v1234
    %v1256 = vpop.f32.mrf.mxu0
    %v1257 = vadd.f32 0.0, %v1256
    %1258 = vdwg.mxu0
    %v1259 = vpack.c.bf16 %v1257, %v1254
    %v1260 = vld [vmem:[#allocation7] sm:$0xf]
    %v1261 = vld [vmem:[#allocation7 + $0x4] sm:$0xf]
    %v1262 = vld [vmem:[#allocation7 + $0x8] sm:$0xf]
    %v1263 = vld [vmem:[#allocation7 + $0xc] sm:$0xf]
    %v1264 = vld [vmem:[#allocation7 + $0x10] sm:$0xf]
    %v1265 = vld [vmem:[#allocation7 + $0x14] sm:$0xf]
    %v1266 = vld [vmem:[#allocation7 + $0x18] sm:$0xf]
    %v1267 = vld [vmem:[#allocation7 + $0x1c] sm:$0xf]
    %v1268 = vld [vmem:[#allocation7 + $0x20] sm:$0xf]
    %v1269 = vld [vmem:[#allocation7 + $0x24] sm:$0xf]
    %v1270 = vld [vmem:[#allocation7 + $0x28] sm:$0xf]
    %v1271 = vld [vmem:[#allocation7 + $0x2c] sm:$0xf]
    %v1272 = vld [vmem:[#allocation7 + $0x30] sm:$0xf]
    %v1273 = vld [vmem:[#allocation7 + $0x34] sm:$0xf]
    %v1274 = vld [vmem:[#allocation7 + $0x38] sm:$0xf]
    %v1275 = vld [vmem:[#allocation7 + $0x3c] sm:$0xf]
    %v1276 = vld [vmem:[%s37] sm:$0x1]
    %v1278 = vperm.slane %v1276, 0
    %v1296 = vunpack.c.l.b16 %v1260
    %v1297 = vunpack.c.l.b16 %v1261
    %v1298 = vunpack.c.l.b16 %v1262
    %v1299 = vunpack.c.l.b16 %v1263
    %v1300 = vunpack.c.l.b16 %v1264
    %v1301 = vunpack.c.l.b16 %v1265
    %v1302 = vunpack.c.l.b16 %v1266
    %v1303 = vunpack.c.l.b16 %v1267
    %v1304 = vunpack.c.l.b16 %v1268
    %v1305 = vunpack.c.l.b16 %v1269
    %v1306 = vunpack.c.l.b16 %v1270
    %v1307 = vunpack.c.l.b16 %v1271
    %v1308 = vunpack.c.l.b16 %v1272
    %v1309 = vunpack.c.l.b16 %v1273
    %v1310 = vunpack.c.l.b16 %v1274
    %v1311 = vunpack.c.l.b16 %v1275
    %v1312 = vpack.c.b16 %v1297, %v1296
    %v1313 = vpack.c.b16 %v1299, %v1298
    %v1314 = vpack.c.b16 %v1301, %v1300
    %v1315 = vpack.c.b16 %v1303, %v1302
    %v1316 = vpack.c.b16 %v1305, %v1304
    %v1317 = vpack.c.b16 %v1307, %v1306
    %v1318 = vpack.c.b16 %v1309, %v1308
    %v1319 = vpack.c.b16 %v1311, %v1310
    %1328 = vmatpush.bf16.msra.mxu0 %v1319
    %1329 = vmatpush.bf16.msra.mxu0 %v1318
    %1330 = vmatpush.bf16.msra.mxu0 %v1317
    %1331 = vmatpush.bf16.msra.mxu0 %v1316
    %1332 = vmatpush.bf16.msra.mxu0 %v1315
    %1333 = vmatpush.bf16.msra.mxu0 %v1314
    %1334 = vmatpush.bf16.msra.mxu0 %v1313
    %1335 = vmatpush.bf16.msra.mxu0 %v1312
    %1336 = vmatmul.bf16.gmra.mxu0 %v1259
    %v1337 = vpop.f32.mrf.mxu0
    %v1338 = vadd.f32 %v1278, %v1337
    %v1339 = vpop.f32.mrf.mxu0
    %v1340 = vadd.f32 %v1278, %v1339
    %1341 = vdwg.mxu0
    %v1342 = vadd.f32 %v860, %v1338
    %v1343 = vadd.f32 %v861, %v1340
    %v1344 = vld [vmem:[%s39] sm:$0x1]
    %v1345 = vld [vmem:[%s41] sm:$0x1]
    %1346 = vadd.xlane.f32.xlu0 %v1342
    %v1347 = vpop.xlane.xlu0 %1346
    %1348 = vadd.xlane.f32.xlu0 %v1343
    %v1349 = vpop.xlane.xlu0 %1348
    %v1350 = vmul.f32 %v1347, %v274
    %v1351 = vmul.f32 %v1349, %v274
    %v1352 = vsub.f32 %v1342, %v1350
    %v1353 = vsub.f32 %v1343, %v1351
    %v1354 = vmul.f32 %v1352, %v1352
    %v1355 = vmul.f32 %v1353, %v1353
    %1356 = vadd.xlane.f32.xlu0 %v1354
    %v1357 = vpop.xlane.xlu0 %1356
    %1358 = vadd.xlane.f32.xlu0 %v1355
    %v1359 = vpop.xlane.xlu0 %1358
    %v1360 = vmul.f32 %v1357, %v274
    %v1361 = vmul.f32 %v1359, %v274
    %v1362 = vadd.f32 %v1360, 1e-05
    %v1363 = vadd.f32 %v1361, 1e-05
    %v1364 = vrsqrt.pop %v1362
    %v1365 = vmul.f32 %v1364, %v1362
    %v1366 = vmul.f32 %v1365, %v1364
    %v1367 = vmul.f32 0.5, %v1366
    %v1368 = vsub.f32 1.5, %v1367
    %v1369 = vmul.f32 %v1364, %v1368
    %vm1370 = vweird.f32 %v1362
    %vm1371 = vweird.f32 %v1364
    %vm1372 = vmor %vm1370, %vm1371
    %v1373 = vsel %vm1372, %v1364, %v1369
    %v1374 = vrsqrt.pop %v1363
    %v1375 = vmul.f32 %v1374, %v1363
    %v1376 = vmul.f32 %v1375, %v1374
    %v1377 = vmul.f32 0.5, %v1376
    %v1378 = vsub.f32 1.5, %v1377
    %v1379 = vmul.f32 %v1374, %v1378
    %vm1380 = vweird.f32 %v1363
    %vm1381 = vweird.f32 %v1374
    %vm1382 = vmor %vm1380, %vm1381
    %v1383 = vsel %vm1382, %v1374, %v1379
    %v1384 = vmul.f32 %v1352, %v1373
    %v1385 = vmul.f32 %v1353, %v1383
    %v1387 = vperm.slane %v1344, 0
    %v1389 = vmul.f32 %v1384, %v1387
    %v1390 = vmul.f32 %v1385, %v1387
    %v1392 = vperm.slane %v1345, 0
    %v1394 = vadd.f32 %v1389, %v1392
    %v1395 = vadd.f32 %v1390, %v1392
    %v1396 = vpack.c.bf16 %v1395, %v1394
    %v1397 = vld [vmem:[#allocation8] sm:$0xff]
    %v1398 = vld [vmem:[#allocation8 + $0x8] sm:$0xff]
    %v1399 = vld [vmem:[#allocation8 + $0x10] sm:$0xff]
    %v1400 = vld [vmem:[#allocation8 + $0x18] sm:$0xff]
    %v1401 = vld [vmem:[#allocation8 + $0x20] sm:$0xff]
    %v1402 = vld [vmem:[#allocation8 + $0x28] sm:$0xff]
    %v1403 = vld [vmem:[#allocation8 + $0x30] sm:$0xff]
    %v1404 = vld [vmem:[#allocation8 + $0x38] sm:$0xff]
    %v1405 = vld [vmem:[#allocation8 + $0x40] sm:$0xff]
    %v1406 = vld [vmem:[#allocation8 + $0x48] sm:$0xff]
    %v1407 = vld [vmem:[#allocation8 + $0x50] sm:$0xff]
    %v1408 = vld [vmem:[#allocation8 + $0x58] sm:$0xff]
    %v1409 = vld [vmem:[#allocation8 + $0x60] sm:$0xff]
    %v1410 = vld [vmem:[#allocation8 + $0x68] sm:$0xff]
    %v1411 = vld [vmem:[#allocation8 + $0x70] sm:$0xff]
    %v1412 = vld [vmem:[#allocation8 + $0x78] sm:$0xff]
    %v1413 = vld [vmem:[%s45] sm:$0x3]
    %v1415 = vperm.slane %v1413, 0
    %v1416 = vperm.slane %v1413, 1
    %v1435 = vunpack.c.l.b16 %v1397
    %v1436 = vunpack.c.h.b16 %v1397
    %v1437 = vunpack.c.l.b16 %v1398
    %v1438 = vunpack.c.h.b16 %v1398
    %v1439 = vunpack.c.l.b16 %v1399
    %v1440 = vunpack.c.h.b16 %v1399
    %v1441 = vunpack.c.l.b16 %v1400
    %v1442 = vunpack.c.h.b16 %v1400
    %v1443 = vunpack.c.l.b16 %v1401
    %v1444 = vunpack.c.h.b16 %v1401
    %v1445 = vunpack.c.l.b16 %v1402
    %v1446 = vunpack.c.h.b16 %v1402
    %v1447 = vunpack.c.l.b16 %v1403
    %v1448 = vunpack.c.h.b16 %v1403
    %v1449 = vunpack.c.l.b16 %v1404
    %v1450 = vunpack.c.h.b16 %v1404
    %v1451 = vunpack.c.l.b16 %v1405
    %v1452 = vunpack.c.h.b16 %v1405
    %v1453 = vunpack.c.l.b16 %v1406
    %v1454 = vunpack.c.h.b16 %v1406
    %v1455 = vunpack.c.l.b16 %v1407
    %v1456 = vunpack.c.h.b16 %v1407
    %v1457 = vunpack.c.l.b16 %v1408
    %v1458 = vunpack.c.h.b16 %v1408
    %v1459 = vunpack.c.l.b16 %v1409
    %v1460 = vunpack.c.h.b16 %v1409
    %v1461 = vunpack.c.l.b16 %v1410
    %v1462 = vunpack.c.h.b16 %v1410
    %v1463 = vunpack.c.l.b16 %v1411
    %v1464 = vunpack.c.h.b16 %v1411
    %v1465 = vunpack.c.l.b16 %v1412
    %v1466 = vunpack.c.h.b16 %v1412
    %v1467 = vpack.c.b16 %v1437, %v1435
    %v1468 = vpack.c.b16 %v1438, %v1436
    %v1469 = vpack.c.b16 %v1441, %v1439
    %v1470 = vpack.c.b16 %v1442, %v1440
    %v1471 = vpack.c.b16 %v1445, %v1443
    %v1472 = vpack.c.b16 %v1446, %v1444
    %v1473 = vpack.c.b16 %v1449, %v1447
    %v1474 = vpack.c.b16 %v1450, %v1448
    %v1475 = vpack.c.b16 %v1453, %v1451
    %v1476 = vpack.c.b16 %v1454, %v1452
    %v1477 = vpack.c.b16 %v1457, %v1455
    %v1478 = vpack.c.b16 %v1458, %v1456
    %v1479 = vpack.c.b16 %v1461, %v1459
    %v1480 = vpack.c.b16 %v1462, %v1460
    %v1481 = vpack.c.b16 %v1465, %v1463
    %v1482 = vpack.c.b16 %v1466, %v1464
    %1499 = vmatpush.bf16.msra.mxu0 %v1481
    %1500 = vmatpush.bf16.msra.mxu0 %v1479
    %1501 = vmatpush.bf16.msra.mxu0 %v1477
    %1502 = vmatpush.bf16.msra.mxu0 %v1475
    %1503 = vmatpush.bf16.msra.mxu0 %v1473
    %1504 = vmatpush.bf16.msra.mxu0 %v1471
    %1505 = vmatpush.bf16.msra.mxu0 %v1469
    %1506 = vmatpush.bf16.msra.mxu0 %v1467
    %1507 = vmatmul.bf16.gmra.mxu0 %v1396
    %v1508 = vpop.f32.mrf.mxu0
    %v1509 = vadd.f32 %v1415, %v1508
    %v1510 = vpop.f32.mrf.mxu0
    %v1511 = vadd.f32 %v1415, %v1510
    %1512 = vdwg.mxu0
    %1513 = vmatpush.bf16.msra.mxu0 %v1482
    %1514 = vmatpush.bf16.msra.mxu0 %v1480
    %1515 = vmatpush.bf16.msra.mxu0 %v1478
    %1516 = vmatpush.bf16.msra.mxu0 %v1476
    %1517 = vmatpush.bf16.msra.mxu0 %v1474
    %1518 = vmatpush.bf16.msra.mxu0 %v1472
    %1519 = vmatpush.bf16.msra.mxu0 %v1470
    %1520 = vmatpush.bf16.msra.mxu0 %v1468
    %1521 = vmatmul.bf16.gmra.mxu0 %v1396
    %v1522 = vpop.f32.mrf.mxu0
    %v1523 = vadd.f32 %v1416, %v1522
    %v1524 = vpop.f32.mrf.mxu0
    %v1525 = vadd.f32 %v1416, %v1524
    %1526 = vdwg.mxu0
    %v1527 = vmul.f32 %v1509, 0.5
    %v1528 = vmul.f32 %v1523, 0.5
    %v1529 = vmul.f32 %v1511, 0.5
    %v1530 = vmul.f32 %v1525, 0.5
    %v1531 = vmul.f32 %v1509, 0.044715
    %v1532 = vmul.f32 %v1523, 0.044715
    %v1533 = vmul.f32 %v1511, 0.044715
    %v1534 = vmul.f32 %v1525, 0.044715
    %v1535 = vmul.f32 %v1531, %v1509
    %v1536 = vmul.f32 %v1532, %v1523
    %v1537 = vmul.f32 %v1533, %v1511
    %v1538 = vmul.f32 %v1534, %v1525
    %v1539 = vmul.f32 %v1535, %v1509
    %v1540 = vmul.f32 %v1536, %v1523
    %v1541 = vmul.f32 %v1537, %v1511
    %v1542 = vmul.f32 %v1538, %v1525
    %v1543 = vadd.f32 %v1509, %v1539
    %v1544 = vadd.f32 %v1523, %v1540
    %v1545 = vadd.f32 %v1511, %v1541
    %v1546 = vadd.f32 %v1525, %v1542
    %v1547 = vmul.f32 %v1543, 0.7978846
    %v1548 = vmul.f32 %v1544, 0.7978846
    %v1549 = vmul.f32 %v1545, 0.7978846
    %v1550 = vmul.f32 %v1546, 0.7978846
    %v1551 = vtanh.pop %v1547
    %v1552 = vtanh.pop %v1548
    %v1553 = vtanh.pop %v1549
    %v1554 = vtanh.pop %v1550
    %v1555 = vadd.f32 %v1551, 1.0
    %v1556 = vadd.f32 %v1552, 1.0
    %v1557 = vadd.f32 %v1553, 1.0
    %v1558 = vadd.f32 %v1554, 1.0
    %v1559 = vmul.f32 %v1527, %v1555
    %v1560 = vmul.f32 %v1528, %v1556
    %v1561 = vmul.f32 %v1529, %v1557
    %v1562 = vmul.f32 %v1530, %v1558
    %v1563 = vpack.c.bf16 %v1561, %v1559
    %v1564 = vpack.c.bf16 %v1562, %v1560
    %v1565 = vld [vmem:[#allocation10] sm:$0xf]
    %v1566 = vld [vmem:[#allocation10 + $0x4] sm:$0xf]
    %v1567 = vld [vmem:[#allocation10 + $0x8] sm:$0xf]
    %v1568 = vld [vmem:[#allocation10 + $0xc] sm:$0xf]
    %v1569 = vld [vmem:[#allocation10 + $0x10] sm:$0xf]
    %v1570 = vld [vmem:[#allocation10 + $0x14] sm:$0xf]
    %v1571 = vld [vmem:[#allocation10 + $0x18] sm:$0xf]
    %v1572 = vld [vmem:[#allocation10 + $0x1c] sm:$0xf]
    %v1573 = vld [vmem:[#allocation10 + $0x20] sm:$0xf]
    %v1574 = vld [vmem:[#allocation10 + $0x24] sm:$0xf]
    %v1575 = vld [vmem:[#allocation10 + $0x28] sm:$0xf]
    %v1576 = vld [vmem:[#allocation10 + $0x2c] sm:$0xf]
    %v1577 = vld [vmem:[#allocation10 + $0x30] sm:$0xf]
    %v1578 = vld [vmem:[#allocation10 + $0x34] sm:$0xf]
    %v1579 = vld [vmem:[#allocation10 + $0x38] sm:$0xf]
    %v1580 = vld [vmem:[#allocation10 + $0x3c] sm:$0xf]
    %v1581 = vld [vmem:[#allocation10 + $0x40] sm:$0xf]
    %v1582 = vld [vmem:[#allocation10 + $0x44] sm:$0xf]
    %v1583 = vld [vmem:[#allocation10 + $0x48] sm:$0xf]
    %v1584 = vld [vmem:[#allocation10 + $0x4c] sm:$0xf]
    %v1585 = vld [vmem:[#allocation10 + $0x50] sm:$0xf]
    %v1586 = vld [vmem:[#allocation10 + $0x54] sm:$0xf]
    %v1587 = vld [vmem:[#allocation10 + $0x58] sm:$0xf]
    %v1588 = vld [vmem:[#allocation10 + $0x5c] sm:$0xf]
    %v1589 = vld [vmem:[#allocation10 + $0x60] sm:$0xf]
    %v1590 = vld [vmem:[#allocation10 + $0x64] sm:$0xf]
    %v1591 = vld [vmem:[#allocation10 + $0x68] sm:$0xf]
    %v1592 = vld [vmem:[#allocation10 + $0x6c] sm:$0xf]
    %v1593 = vld [vmem:[#allocation10 + $0x70] sm:$0xf]
    %v1594 = vld [vmem:[#allocation10 + $0x74] sm:$0xf]
    %v1595 = vld [vmem:[#allocation10 + $0x78] sm:$0xf]
    %v1596 = vld [vmem:[#allocation10 + $0x7c] sm:$0xf]
    %v1597 = vld [vmem:[%s49] sm:$0x1]
    %v1599 = vperm.slane %v1597, 0
    %v1633 = vunpack.c.l.b16 %v1565
    %v1634 = vunpack.c.l.b16 %v1566
    %v1635 = vunpack.c.l.b16 %v1567
    %v1636 = vunpack.c.l.b16 %v1568
    %v1637 = vunpack.c.l.b16 %v1569
    %v1638 = vunpack.c.l.b16 %v1570
    %v1639 = vunpack.c.l.b16 %v1571
    %v1640 = vunpack.c.l.b16 %v1572
    %v1641 = vunpack.c.l.b16 %v1573
    %v1642 = vunpack.c.l.b16 %v1574
    %v1643 = vunpack.c.l.b16 %v1575
    %v1644 = vunpack.c.l.b16 %v1576
    %v1645 = vunpack.c.l.b16 %v1577
    %v1646 = vunpack.c.l.b16 %v1578
    %v1647 = vunpack.c.l.b16 %v1579
    %v1648 = vunpack.c.l.b16 %v1580
    %v1649 = vunpack.c.l.b16 %v1581
    %v1650 = vunpack.c.l.b16 %v1582
    %v1651 = vunpack.c.l.b16 %v1583
    %v1652 = vunpack.c.l.b16 %v1584
    %v1653 = vunpack.c.l.b16 %v1585
    %v1654 = vunpack.c.l.b16 %v1586
    %v1655 = vunpack.c.l.b16 %v1587
    %v1656 = vunpack.c.l.b16 %v1588
    %v1657 = vunpack.c.l.b16 %v1589
    %v1658 = vunpack.c.l.b16 %v1590
    %v1659 = vunpack.c.l.b16 %v1591
    %v1660 = vunpack.c.l.b16 %v1592
    %v1661 = vunpack.c.l.b16 %v1593
    %v1662 = vunpack.c.l.b16 %v1594
    %v1663 = vunpack.c.l.b16 %v1595
    %v1664 = vunpack.c.l.b16 %v1596
    %v1665 = vpack.c.b16 %v1634, %v1633
    %v1666 = vpack.c.b16 %v1636, %v1635
    %v1667 = vpack.c.b16 %v1638, %v1637
    %v1668 = vpack.c.b16 %v1640, %v1639
    %v1669 = vpack.c.b16 %v1642, %v1641
    %v1670 = vpack.c.b16 %v1644, %v1643
    %v1671 = vpack.c.b16 %v1646, %v1645
    %v1672 = vpack.c.b16 %v1648, %v1647
    %v1673 = vpack.c.b16 %v1650, %v1649
    %v1674 = vpack.c.b16 %v1652, %v1651
    %v1675 = vpack.c.b16 %v1654, %v1653
    %v1676 = vpack.c.b16 %v1656, %v1655
    %v1677 = vpack.c.b16 %v1658, %v1657
    %v1678 = vpack.c.b16 %v1660, %v1659
    %v1679 = vpack.c.b16 %v1662, %v1661
    %v1680 = vpack.c.b16 %v1664, %v1663
    %1697 = vmatpush.bf16.msra.mxu0 %v1672
    %1698 = vmatpush.bf16.msra.mxu0 %v1671
    %1699 = vmatpush.bf16.msra.mxu0 %v1670
    %1700 = vmatpush.bf16.msra.mxu0 %v1669
    %1701 = vmatpush.bf16.msra.mxu0 %v1668
    %1702 = vmatpush.bf16.msra.mxu0 %v1667
    %1703 = vmatpush.bf16.msra.mxu0 %v1666
    %1704 = vmatpush.bf16.msra.mxu0 %v1665
    %1705 = vmatmul.bf16.gmra.mxu0 %v1563
    %v1706 = vpop.f32.mrf.mxu0
    %v1707 = vadd.f32 %v1599, %v1706
    %v1708 = vpop.f32.mrf.mxu0
    %v1709 = vadd.f32 %v1599, %v1708
    %1710 = vdwg.mxu0
    %1711 = vmatpush.bf16.msra.mxu0 %v1680
    %1712 = vmatpush.bf16.msra.mxu0 %v1679
    %1713 = vmatpush.bf16.msra.mxu0 %v1678
    %1714 = vmatpush.bf16.msra.mxu0 %v1677
    %1715 = vmatpush.bf16.msra.mxu0 %v1676
    %1716 = vmatpush.bf16.msra.mxu0 %v1675
    %1717 = vmatpush.bf16.msra.mxu0 %v1674
    %1718 = vmatpush.bf16.msra.mxu0 %v1673
    %1719 = vmatmul.bf16.gmra.mxu0 %v1564
    %v1720 = vpop.f32.mrf.mxu0
    %v1721 = vadd.f32 %v1707, %v1720
    %v1722 = vpop.f32.mrf.mxu0
    %v1723 = vadd.f32 %v1709, %v1722
    %1724 = vdwg.mxu0
    %v1725 = vadd.f32 %v1394, %v1721
    %v1726 = vadd.f32 %v1395, %v1723
    %v1727 = vld [vmem:[%s51] sm:$0x1]
    %v1728 = vld [vmem:[%s53] sm:$0x1]
    %1729 = vadd.xlane.f32.xlu0 %v1725
    %v1730 = vpop.xlane.xlu0 %1729
    %1731 = vadd.xlane.f32.xlu0 %v1726
    %v1732 = vpop.xlane.xlu0 %1731
    %v1733 = vmul.f32 %v1730, %v274
    %v1734 = vmul.f32 %v1732, %v274
    %v1735 = vsub.f32 %v1725, %v1733
    %v1736 = vsub.f32 %v1726, %v1734
    %v1737 = vmul.f32 %v1735, %v1735
    %v1738 = vmul.f32 %v1736, %v1736
    %1739 = vadd.xlane.f32.xlu0 %v1737
    %v1740 = vpop.xlane.xlu0 %1739
    %1741 = vadd.xlane.f32.xlu0 %v1738
    %v1742 = vpop.xlane.xlu0 %1741
    %v1743 = vmul.f32 %v1740, %v274
    %v1744 = vmul.f32 %v1742, %v274
    %v1745 = vadd.f32 %v1743, 1e-05
    %v1746 = vadd.f32 %v1744, 1e-05
    %v1747 = vrsqrt.pop %v1745
    %v1748 = vmul.f32 %v1747, %v1745
    %v1749 = vmul.f32 %v1748, %v1747
    %v1750 = vmul.f32 0.5, %v1749
    %v1751 = vsub.f32 1.5, %v1750
    %v1752 = vmul.f32 %v1747, %v1751
    %vm1753 = vweird.f32 %v1745
    %vm1754 = vweird.f32 %v1747
    %vm1755 = vmor %vm1753, %vm1754
    %v1756 = vsel %vm1755, %v1747, %v1752
    %v1757 = vrsqrt.pop %v1746
    %v1758 = vmul.f32 %v1757, %v1746
    %v1759 = vmul.f32 %v1758, %v1757
    %v1760 = vmul.f32 0.5, %v1759
    %v1761 = vsub.f32 1.5, %v1760
    %v1762 = vmul.f32 %v1757, %v1761
    %vm1763 = vweird.f32 %v1746
    %vm1764 = vweird.f32 %v1757
    %vm1765 = vmor %vm1763, %vm1764
    %v1766 = vsel %vm1765, %v1757, %v1762
    %v1767 = vmul.f32 %v1735, %v1756
    %v1768 = vmul.f32 %v1736, %v1766
    %v1770 = vperm.slane %v1727, 0
    %v1772 = vmul.f32 %v1767, %v1770
    %v1773 = vmul.f32 %v1768, %v1770
    %v1775 = vperm.slane %v1728, 0
    %v1777 = vadd.f32 %v1772, %v1775
    %v1778 = vadd.f32 %v1773, %v1775
    %v1779 = vpack.c.bf16 %v1778, %v1777
    %s1780 = scalar_lea.vmem %s15, 192
    %v1781 = vld [vmem:[%s1780] sm:$0xff]
    %v1782 = vld [vmem:[%s1780 + $0x8] sm:$0xf]
    %v1783 = vld [vmem:[%s1780 + $0xc] sm:$0xff]
    %v1784 = vld [vmem:[%s1780 + $0x14] sm:$0xf]
    %v1785 = vld [vmem:[%s1780 + $0x18] sm:$0xff]
    %v1786 = vld [vmem:[%s1780 + $0x20] sm:$0xf]
    %v1787 = vld [vmem:[%s1780 + $0x24] sm:$0xff]
    %v1788 = vld [vmem:[%s1780 + $0x2c] sm:$0xf]
    %v1789 = vld [vmem:[%s1780 + $0x30] sm:$0xff]
    %v1790 = vld [vmem:[%s1780 + $0x38] sm:$0xf]
    %v1791 = vld [vmem:[%s1780 + $0x3c] sm:$0xff]
    %v1792 = vld [vmem:[%s1780 + $0x44] sm:$0xf]
    %v1793 = vld [vmem:[%s1780 + $0x48] sm:$0xff]
    %v1794 = vld [vmem:[%s1780 + $0x50] sm:$0xf]
    %v1795 = vld [vmem:[%s1780 + $0x54] sm:$0xff]
    %v1796 = vld [vmem:[%s1780 + $0x5c] sm:$0xf]
    %v1797 = vld [vmem:[%s1780 + $0x60] sm:$0xff]
    %v1798 = vld [vmem:[%s1780 + $0x68] sm:$0xf]
    %v1799 = vld [vmem:[%s1780 + $0x6c] sm:$0xff]
    %v1800 = vld [vmem:[%s1780 + $0x74] sm:$0xf]
    %v1801 = vld [vmem:[%s1780 + $0x78] sm:$0xff]
    %v1802 = vld [vmem:[%s1780 + $0x80] sm:$0xf]
    %v1803 = vld [vmem:[%s1780 + $0x84] sm:$0xff]
    %v1804 = vld [vmem:[%s1780 + $0x8c] sm:$0xf]
    %v1805 = vld [vmem:[%s1780 + $0x90] sm:$0xff]
    %v1806 = vld [vmem:[%s1780 + $0x98] sm:$0xf]
    %v1807 = vld [vmem:[%s1780 + $0x9c] sm:$0xff]
    %v1808 = vld [vmem:[%s1780 + $0xa4] sm:$0xf]
    %v1809 = vld [vmem:[%s1780 + $0xa8] sm:$0xff]
    %v1810 = vld [vmem:[%s1780 + $0xb0] sm:$0xf]
    %v1811 = vld [vmem:[%s1780 + $0xb4] sm:$0xff]
    %v1812 = vld [vmem:[%s1780 + $0xbc] sm:$0xf]
    %s1813 = scalar_lea.vmem %s17, 3
    %v1814 = vld [vmem:[%s1813] sm:$0x7]
    %v1816 = vperm.slane %v1814, 0
    %v1817 = vperm.slane %v1814, 1
    %v1818 = vperm.slane %v1814, 2
    %v1854 = vunpack.c.l.b16 %v1781
    %v1855 = vunpack.c.h.b16 %v1781
    %v1856 = vunpack.c.l.b16 %v1782
    %v1857 = vunpack.c.l.b16 %v1783
    %v1858 = vunpack.c.h.b16 %v1783
    %v1859 = vunpack.c.l.b16 %v1784
    %v1860 = vunpack.c.l.b16 %v1785
    %v1861 = vunpack.c.h.b16 %v1785
    %v1862 = vunpack.c.l.b16 %v1786
    %v1863 = vunpack.c.l.b16 %v1787
    %v1864 = vunpack.c.h.b16 %v1787
    %v1865 = vunpack.c.l.b16 %v1788
    %v1866 = vunpack.c.l.b16 %v1789
    %v1867 = vunpack.c.h.b16 %v1789
    %v1868 = vunpack.c.l.b16 %v1790
    %v1869 = vunpack.c.l.b16 %v1791
    %v1870 = vunpack.c.h.b16 %v1791
    %v1871 = vunpack.c.l.b16 %v1792
    %v1872 = vunpack.c.l.b16 %v1793
    %v1873 = vunpack.c.h.b16 %v1793
    %v1874 = vunpack.c.l.b16 %v1794
    %v1875 = vunpack.c.l.b16 %v1795
    %v1876 = vunpack.c.h.b16 %v1795
    %v1877 = vunpack.c.l.b16 %v1796
    %v1878 = vunpack.c.l.b16 %v1797
    %v1879 = vunpack.c.h.b16 %v1797
    %v1880 = vunpack.c.l.b16 %v1798
    %v1881 = vunpack.c.l.b16 %v1799
    %v1882 = vunpack.c.h.b16 %v1799
    %v1883 = vunpack.c.l.b16 %v1800
    %v1884 = vunpack.c.l.b16 %v1801
    %v1885 = vunpack.c.h.b16 %v1801
    %v1886 = vunpack.c.l.b16 %v1802
    %v1887 = vunpack.c.l.b16 %v1803
    %v1888 = vunpack.c.h.b16 %v1803
    %v1889 = vunpack.c.l.b16 %v1804
    %v1890 = vunpack.c.l.b16 %v1805
    %v1891 = vunpack.c.h.b16 %v1805
    %v1892 = vunpack.c.l.b16 %v1806
    %v1893 = vunpack.c.l.b16 %v1807
    %v1894 = vunpack.c.h.b16 %v1807
    %v1895 = vunpack.c.l.b16 %v1808
    %v1896 = vunpack.c.l.b16 %v1809
    %v1897 = vunpack.c.h.b16 %v1809
    %v1898 = vunpack.c.l.b16 %v1810
    %v1899 = vunpack.c.l.b16 %v1811
    %v1900 = vunpack.c.h.b16 %v1811
    %v1901 = vunpack.c.l.b16 %v1812
    %v1902 = vpack.c.b16 %v1857, %v1854
    %v1903 = vpack.c.b16 %v1858, %v1855
    %v1904 = vpack.c.b16 %v1859, %v1856
    %v1905 = vpack.c.b16 %v1863, %v1860
    %v1906 = vpack.c.b16 %v1864, %v1861
    %v1907 = vpack.c.b16 %v1865, %v1862
    %v1908 = vpack.c.b16 %v1869, %v1866
    %v1909 = vpack.c.b16 %v1870, %v1867
    %v1910 = vpack.c.b16 %v1871, %v1868
    %v1911 = vpack.c.b16 %v1875, %v1872
    %v1912 = vpack.c.b16 %v1876, %v1873
    %v1913 = vpack.c.b16 %v1877, %v1874
    %v1914 = vpack.c.b16 %v1881, %v1878
    %v1915 = vpack.c.b16 %v1882, %v1879
    %v1916 = vpack.c.b16 %v1883, %v1880
    %v1917 = vpack.c.b16 %v1887, %v1884
    %v1918 = vpack.c.b16 %v1888, %v1885
    %v1919 = vpack.c.b16 %v1889, %v1886
    %v1920 = vpack.c.b16 %v1893, %v1890
    %v1921 = vpack.c.b16 %v1894, %v1891
    %v1922 = vpack.c.b16 %v1895, %v1892
    %v1923 = vpack.c.b16 %v1899, %v1896
    %v1924 = vpack.c.b16 %v1900, %v1897
    %v1925 = vpack.c.b16 %v1901, %v1898
    %1950 = vmatpush.bf16.msra.mxu0 %v1923
    %1951 = vmatpush.bf16.msra.mxu0 %v1920
    %1952 = vmatpush.bf16.msra.mxu0 %v1917
    %1953 = vmatpush.bf16.msra.mxu0 %v1914
    %1954 = vmatpush.bf16.msra.mxu0 %v1911
    %1955 = vmatpush.bf16.msra.mxu0 %v1908
    %1956 = vmatpush.bf16.msra.mxu0 %v1905
    %1957 = vmatpush.bf16.msra.mxu0 %v1902
    %1958 = vmatmul.bf16.gmra.mxu0 %v1779
    %v1959 = vpop.f32.mrf.mxu0
    %v1960 = vadd.f32 %v1816, %v1959
    %v1961 = vpop.f32.mrf.mxu0
    %v1962 = vadd.f32 %v1816, %v1961
    %1963 = vdwg.mxu0
    %1964 = vmatpush.bf16.msra.mxu0 %v1924
    %1965 = vmatpush.bf16.msra.mxu0 %v1921
    %1966 = vmatpush.bf16.msra.mxu0 %v1918
    %1967 = vmatpush.bf16.msra.mxu0 %v1915
    %1968 = vmatpush.bf16.msra.mxu0 %v1912
    %1969 = vmatpush.bf16.msra.mxu0 %v1909
    %1970 = vmatpush.bf16.msra.mxu0 %v1906
    %1971 = vmatpush.bf16.msra.mxu0 %v1903
    %1972 = vmatmul.bf16.gmra.mxu0 %v1779
    %v1973 = vpop.f32.mrf.mxu0
    %v1974 = vadd.f32 %v1817, %v1973
    %v1975 = vpop.f32.mrf.mxu0
    %v1976 = vadd.f32 %v1817, %v1975
    %1977 = vdwg.mxu0
    %1978 = vmatpush.bf16.msra.mxu0 %v1925
    %1979 = vmatpush.bf16.msra.mxu0 %v1922
    %1980 = vmatpush.bf16.msra.mxu0 %v1919
    %1981 = vmatpush.bf16.msra.mxu0 %v1916
    %1982 = vmatpush.bf16.msra.mxu0 %v1913
    %1983 = vmatpush.bf16.msra.mxu0 %v1910
    %1984 = vmatpush.bf16.msra.mxu0 %v1907
    %1985 = vmatpush.bf16.msra.mxu0 %v1904
    %1986 = vmatmul.bf16.gmra.mxu0 %v1779
    %v1987 = vpop.f32.mrf.mxu0
    %v1988 = vadd.f32 %v1818, %v1987
    %v1989 = vpop.f32.mrf.mxu0
    %v1990 = vadd.f32 %v1818, %v1989
    %1991 = vdwg.mxu0
    %v1992 = vmul.f32 %v1974, %v229
    %v1993 = vmul.f32 %v1976, %v229
    %v1994 = vmul.f32 %v1974, %v234
    %v1995 = vmul.f32 %v1976, %v234
    %v1996 = vmul.f32 %v1974, %v239
    %v1997 = vmul.f32 %v1976, %v239
    %v1998 = vmul.f32 %v1974, %v244
    %v1999 = vmul.f32 %v1976, %v244
    %v2000 = vmul.f32 %v1988, %v229
    %v2001 = vmul.f32 %v1990, %v229
    %v2002 = vmul.f32 %v1988, %v234
    %v2003 = vmul.f32 %v1990, %v234
    %v2004 = vmul.f32 %v1988, %v239
    %v2005 = vmul.f32 %v1990, %v239
    %v2006 = vmul.f32 %v1988, %v244
    %v2007 = vmul.f32 %v1990, %v244
    %2008 = vmatpush.xpose.msra.mxu0 0.0
    %2009 = vmatpush.xpose.msra.mxu0 0.0
    %2010 = vmatpush.xpose.msra.mxu0 0.0
    %2011 = vmatpush.xpose.msra.mxu0 0.0
    %2012 = vmatpush.xpose.msra.mxu0 0.0
    %2013 = vmatpush.xpose.msra.mxu0 0.0
    %2014 = vmatpush.xpose.msra.mxu0 0.0
    %2015 = vmatpush.xpose.msra.mxu0 0.0
    %2016 = vmatpush.xpose.msra.mxu0 %v1999
    %2017 = vmatpush.xpose.msra.mxu0 %v1998
    %2018 = vmatpush.xpose.msra.mxu0 %v1997
    %2019 = vmatpush.xpose.msra.mxu0 %v1996
    %2020 = vmatpush.xpose.msra.mxu0 %v1995
    %2021 = vmatpush.xpose.msra.mxu0 %v1994
    %2022 = vmatpush.xpose.msra.mxu0 %v1993
    %2023 = vmatpush.xpose.msra.mxu0 %v1992
    %2024 = vmatmul.f32.gmra.mxu0 %v1960
    %v2025 = vpop.f32.mrf.mxu0
    %v2026 = vadd.f32 0.0, %v2025
    %2027 = vmatmul.f32.gmra.mxu0 %v1962
    %v2028 = vpop.f32.mrf.mxu0
    %v2029 = vadd.f32 0.0, %v2028
    %2030 = vdwg.mxu0
    %v2031 = vmul.f32 %v2026, 0.17677669
    %v2032 = vmul.f32 %v2029, 0.17677669
    %v2033 = vadd.f32 %v2031, %v253
    %v2034 = vadd.f32 %v2032, %v254
    %v2035 = vsel %vm576, %v2033, -1e+30
    %v2036 = vsel %vm576, %v2034, -1e+30
    %v2037 = vsel %vm579, %v2035, -inf
    %2038 = vmax.xlane.f32.xlu0 %v2037
    %v2039 = vpop.xlane.xlu0 %2038
    %v2040 = vsel %vm579, %v2036, -inf
    %2041 = vmax.xlane.f32.xlu0 %v2040
    %v2042 = vpop.xlane.xlu0 %2041
    %v2043 = vsel %vm576, %v2039, 0.0
    %v2044 = vsel %vm576, %v2042, 0.0
    %v2045 = vadd.f32 %v2043, 0.0
    %v2046 = vadd.f32 %v2044, 0.0
    %v2047 = vsel %vm591, %v2033, -1e+30
    %v2048 = vsel %vm591, %v2034, -1e+30
    %v2049 = vsel %vm579, %v2047, -inf
    %2050 = vmax.xlane.f32.xlu0 %v2049
    %v2051 = vpop.xlane.xlu0 %2050
    %v2052 = vsel %vm579, %v2048, -inf
    %2053 = vmax.xlane.f32.xlu0 %v2052
    %v2054 = vpop.xlane.xlu0 %2053
    %v2055 = vsel %vm591, %v2051, 0.0
    %v2056 = vsel %vm591, %v2054, 0.0
    %v2057 = vadd.f32 %v2045, %v2055
    %v2058 = vadd.f32 %v2046, %v2056
    %v2059 = vsel %vm605, %v2033, -1e+30
    %v2060 = vsel %vm605, %v2034, -1e+30
    %v2061 = vsel %vm579, %v2059, -inf
    %2062 = vmax.xlane.f32.xlu0 %v2061
    %v2063 = vpop.xlane.xlu0 %2062
    %v2064 = vsel %vm579, %v2060, -inf
    %2065 = vmax.xlane.f32.xlu0 %v2064
    %v2066 = vpop.xlane.xlu0 %2065
    %v2067 = vsel %vm605, %v2063, 0.0
    %v2068 = vsel %vm605, %v2066, 0.0
    %v2069 = vadd.f32 %v2057, %v2067
    %v2070 = vadd.f32 %v2058, %v2068
    %v2071 = vsel %vm619, %v2033, -1e+30
    %v2072 = vsel %vm619, %v2034, -1e+30
    %v2073 = vsel %vm579, %v2071, -inf
    %2074 = vmax.xlane.f32.xlu0 %v2073
    %v2075 = vpop.xlane.xlu0 %2074
    %v2076 = vsel %vm579, %v2072, -inf
    %2077 = vmax.xlane.f32.xlu0 %v2076
    %v2078 = vpop.xlane.xlu0 %2077
    %v2079 = vsel %vm619, %v2075, 0.0
    %v2080 = vsel %vm619, %v2078, 0.0
    %v2081 = vadd.f32 %v2069, %v2079
    %v2082 = vadd.f32 %v2070, %v2080
    %v2083 = vsub.f32 %v2033, %v2081
    %v2084 = vsub.f32 %v2034, %v2082
    %v2085 = vmul.f32 %v2083, 1.442695
    %v2086 = vpow.pop %v2085
    %v2087 = vmul.f32 %v2084, 1.442695
    %v2088 = vpow.pop %v2087
    %v2089 = vsel %vm576, %v2086, 0.0
    %v2090 = vsel %vm576, %v2088, 0.0
    %v2091 = vsel %vm579, %v2089, 0.0
    %2092 = vadd.xlane.f32.xlu0 %v2091
    %v2093 = vpop.xlane.xlu0 %2092
    %v2094 = vsel %vm579, %v2090, 0.0
    %2095 = vadd.xlane.f32.xlu0 %v2094
    %v2096 = vpop.xlane.xlu0 %2095
    %v2097 = vrcp.pop %v2093
    %v2098 = vrcp.pop %v2096
    %v2099 = vsel %vm576, %v2097, 0.0
    %v2100 = vsel %vm576, %v2098, 0.0
    %v2101 = vadd.f32 %v2099, 0.0
    %v2102 = vadd.f32 %v2100, 0.0
    %v2103 = vsel %vm591, %v2086, 0.0
    %v2104 = vsel %vm591, %v2088, 0.0
    %v2105 = vsel %vm579, %v2103, 0.0
    %2106 = vadd.xlane.f32.xlu0 %v2105
    %v2107 = vpop.xlane.xlu0 %2106
    %v2108 = vsel %vm579, %v2104, 0.0
    %2109 = vadd.xlane.f32.xlu0 %v2108
    %v2110 = vpop.xlane.xlu0 %2109
    %v2111 = vrcp.pop %v2107
    %v2112 = vrcp.pop %v2110
    %v2113 = vsel %vm591, %v2111, 0.0
    %v2114 = vsel %vm591, %v2112, 0.0
    %v2115 = vadd.f32 %v2101, %v2113
    %v2116 = vadd.f32 %v2102, %v2114
    %v2117 = vsel %vm605, %v2086, 0.0
    %v2118 = vsel %vm605, %v2088, 0.0
    %v2119 = vsel %vm579, %v2117, 0.0
    %2120 = vadd.xlane.f32.xlu0 %v2119
    %v2121 = vpop.xlane.xlu0 %2120
    %v2122 = vsel %vm579, %v2118, 0.0
    %2123 = vadd.xlane.f32.xlu0 %v2122
    %v2124 = vpop.xlane.xlu0 %2123
    %v2125 = vrcp.pop %v2121
    %v2126 = vrcp.pop %v2124
    %v2127 = vsel %vm605, %v2125, 0.0
    %v2128 = vsel %vm605, %v2126, 0.0
    %v2129 = vadd.f32 %v2115, %v2127
    %v2130 = vadd.f32 %v2116, %v2128
    %v2131 = vsel %vm619, %v2086, 0.0
    %v2132 = vsel %vm619, %v2088, 0.0
    %v2133 = vsel %vm579, %v2131, 0.0
    %2134 = vadd.xlane.f32.xlu0 %v2133
    %v2135 = vpop.xlane.xlu0 %2134
    %v2136 = vsel %vm579, %v2132, 0.0
    %2137 = vadd.xlane.f32.xlu0 %v2136
    %v2138 = vpop.xlane.xlu0 %2137
    %v2139 = vrcp.pop %v2135
    %v2140 = vrcp.pop %v2138
    %v2141 = vsel %vm619, %v2139, 0.0
    %v2142 = vsel %vm619, %v2140, 0.0
    %v2143 = vadd.f32 %v2129, %v2141
    %v2144 = vadd.f32 %v2130, %v2142
    %v2145 = vmul.f32 %v2086, %v2143
    %v2146 = vmul.f32 %v2088, %v2144
    %v2148 = vsel %vm579, %v2145, 0
    %v2151 = vsel %vm579, %v2146, 0
    %2153 = vmatpush.msra.mxu0 0.0
    %2154 = vmatpush.msra.mxu0 0.0
    %2155 = vmatpush.msra.mxu0 0.0
    %2156 = vmatpush.msra.mxu0 0.0
    %2157 = vmatpush.msra.mxu0 0.0
    %2158 = vmatpush.msra.mxu0 0.0
    %2159 = vmatpush.msra.mxu0 0.0
    %2160 = vmatpush.msra.mxu0 0.0
    %2161 = vmatpush.msra.mxu0 %v2007
    %2162 = vmatpush.msra.mxu0 %v2006
    %2163 = vmatpush.msra.mxu0 %v2005
    %2164 = vmatpush.msra.mxu0 %v2004
    %2165 = vmatpush.msra.mxu0 %v2003
    %2166 = vmatpush.msra.mxu0 %v2002
    %2167 = vmatpush.msra.mxu0 %v2001
    %2168 = vmatpush.msra.mxu0 %v2000
    %2169 = vmatmul.f32.gmra.mxu0 %v2148
    %v2170 = vpop.f32.mrf.mxu0
    %v2171 = vadd.f32 0.0, %v2170
    %2172 = vmatmul.f32.gmra.mxu0 %v2151
    %v2173 = vpop.f32.mrf.mxu0
    %v2174 = vadd.f32 0.0, %v2173
    %2175 = vdwg.mxu0
    %v2176 = vpack.c.bf16 %v2174, %v2171
    %s2177 = scalar_lea.vmem [#allocation2], 64
    %v2178 = vld [vmem:[%s2177] sm:$0xf]
    %v2179 = vld [vmem:[%s2177 + $0x4] sm:$0xf]
    %v2180 = vld [vmem:[%s2177 + $0x8] sm:$0xf]
    %v2181 = vld [vmem:[%s2177 + $0xc] sm:$0xf]
    %v2182 = vld [vmem:[%s2177 + $0x10] sm:$0xf]
    %v2183 = vld [vmem:[%s2177 + $0x14] sm:$0xf]
    %v2184 = vld [vmem:[%s2177 + $0x18] sm:$0xf]
    %v2185 = vld [vmem:[%s2177 + $0x1c] sm:$0xf]
    %v2186 = vld [vmem:[%s2177 + $0x20] sm:$0xf]
    %v2187 = vld [vmem:[%s2177 + $0x24] sm:$0xf]
    %v2188 = vld [vmem:[%s2177 + $0x28] sm:$0xf]
    %v2189 = vld [vmem:[%s2177 + $0x2c] sm:$0xf]
    %v2190 = vld [vmem:[%s2177 + $0x30] sm:$0xf]
    %v2191 = vld [vmem:[%s2177 + $0x34] sm:$0xf]
    %v2192 = vld [vmem:[%s2177 + $0x38] sm:$0xf]
    %v2193 = vld [vmem:[%s2177 + $0x3c] sm:$0xf]
    %s2194 = scalar_lea.vmem %s21, 1
    %v2195 = vld [vmem:[%s2194] sm:$0x1]
    %v2197 = vperm.slane %v2195, 0
    %v2215 = vunpack.c.l.b16 %v2178
    %v2216 = vunpack.c.l.b16 %v2179
    %v2217 = vunpack.c.l.b16 %v2180
    %v2218 = vunpack.c.l.b16 %v2181
    %v2219 = vunpack.c.l.b16 %v2182
    %v2220 = vunpack.c.l.b16 %v2183
    %v2221 = vunpack.c.l.b16 %v2184
    %v2222 = vunpack.c.l.b16 %v2185
    %v2223 = vunpack.c.l.b16 %v2186
    %v2224 = vunpack.c.l.b16 %v2187
    %v2225 = vunpack.c.l.b16 %v2188
    %v2226 = vunpack.c.l.b16 %v2189
    %v2227 = vunpack.c.l.b16 %v2190
    %v2228 = vunpack.c.l.b16 %v2191
    %v2229 = vunpack.c.l.b16 %v2192
    %v2230 = vunpack.c.l.b16 %v2193
    %v2231 = vpack.c.b16 %v2216, %v2215
    %v2232 = vpack.c.b16 %v2218, %v2217
    %v2233 = vpack.c.b16 %v2220, %v2219
    %v2234 = vpack.c.b16 %v2222, %v2221
    %v2235 = vpack.c.b16 %v2224, %v2223
    %v2236 = vpack.c.b16 %v2226, %v2225
    %v2237 = vpack.c.b16 %v2228, %v2227
    %v2238 = vpack.c.b16 %v2230, %v2229
    %2247 = vmatpush.bf16.msra.mxu0 %v2238
    %2248 = vmatpush.bf16.msra.mxu0 %v2237
    %2249 = vmatpush.bf16.msra.mxu0 %v2236
    %2250 = vmatpush.bf16.msra.mxu0 %v2235
    %2251 = vmatpush.bf16.msra.mxu0 %v2234
    %2252 = vmatpush.bf16.msra.mxu0 %v2233
    %2253 = vmatpush.bf16.msra.mxu0 %v2232
    %2254 = vmatpush.bf16.msra.mxu0 %v2231
    %2255 = vmatmul.bf16.gmra.mxu0 %v2176
    %v2256 = vpop.f32.mrf.mxu0
    %v2257 = vadd.f32 %v2197, %v2256
    %v2258 = vpop.f32.mrf.mxu0
    %v2259 = vadd.f32 %v2197, %v2258
    %2260 = vdwg.mxu0
    %v2261 = vadd.f32 %v1777, %v2257
    %v2262 = vadd.f32 %v1778, %v2259
    %s2263 = scalar_lea.vmem %s23, 1
    %v2264 = vld [vmem:[%s2263] sm:$0x1]
    %s2265 = scalar_lea.vmem %s25, 1
    %v2266 = vld [vmem:[%s2265] sm:$0x1]
    %2267 = vadd.xlane.f32.xlu0 %v2261
    %v2268 = vpop.xlane.xlu0 %2267
    %2269 = vadd.xlane.f32.xlu0 %v2262
    %v2270 = vpop.xlane.xlu0 %2269
    %v2271 = vmul.f32 %v2268, %v274
    %v2272 = vmul.f32 %v2270, %v274
    %v2273 = vsub.f32 %v2261, %v2271
    %v2274 = vsub.f32 %v2262, %v2272
    %v2275 = vmul.f32 %v2273, %v2273
    %v2276 = vmul.f32 %v2274, %v2274
    %2277 = vadd.xlane.f32.xlu0 %v2275
    %v2278 = vpop.xlane.xlu0 %2277
    %2279 = vadd.xlane.f32.xlu0 %v2276
    %v2280 = vpop.xlane.xlu0 %2279
    %v2281 = vmul.f32 %v2278, %v274
    %v2282 = vmul.f32 %v2280, %v274
    %v2283 = vadd.f32 %v2281, 1e-05
    %v2284 = vadd.f32 %v2282, 1e-05
    %v2285 = vrsqrt.pop %v2283
    %v2286 = vmul.f32 %v2285, %v2283
    %v2287 = vmul.f32 %v2286, %v2285
    %v2288 = vmul.f32 0.5, %v2287
    %v2289 = vsub.f32 1.5, %v2288
    %v2290 = vmul.f32 %v2285, %v2289
    %vm2291 = vweird.f32 %v2283
    %vm2292 = vweird.f32 %v2285
    %vm2293 = vmor %vm2291, %vm2292
    %v2294 = vsel %vm2293, %v2285, %v2290
    %v2295 = vrsqrt.pop %v2284
    %v2296 = vmul.f32 %v2295, %v2284
    %v2297 = vmul.f32 %v2296, %v2295
    %v2298 = vmul.f32 0.5, %v2297
    %v2299 = vsub.f32 1.5, %v2298
    %v2300 = vmul.f32 %v2295, %v2299
    %vm2301 = vweird.f32 %v2284
    %vm2302 = vweird.f32 %v2295
    %vm2303 = vmor %vm2301, %vm2302
    %v2304 = vsel %vm2303, %v2295, %v2300
    %v2305 = vmul.f32 %v2273, %v2294
    %v2306 = vmul.f32 %v2274, %v2304
    %v2308 = vperm.slane %v2264, 0
    %v2310 = vmul.f32 %v2305, %v2308
    %v2311 = vmul.f32 %v2306, %v2308
    %v2313 = vperm.slane %v2266, 0
    %v2315 = vadd.f32 %v2310, %v2313
    %v2316 = vadd.f32 %v2311, %v2313
    %v2317 = vpack.c.bf16 %v2316, %v2315
    %s2318 = scalar_lea.vmem [#allocation5], 64
    %v2319 = vld [vmem:[%s2318] sm:$0xf]
    %v2320 = vld [vmem:[%s2318 + $0x4] sm:$0xf]
    %v2321 = vld [vmem:[%s2318 + $0x8] sm:$0xf]
    %v2322 = vld [vmem:[%s2318 + $0xc] sm:$0xf]
    %v2323 = vld [vmem:[%s2318 + $0x10] sm:$0xf]
    %v2324 = vld [vmem:[%s2318 + $0x14] sm:$0xf]
    %v2325 = vld [vmem:[%s2318 + $0x18] sm:$0xf]
    %v2326 = vld [vmem:[%s2318 + $0x1c] sm:$0xf]
    %v2327 = vld [vmem:[%s2318 + $0x20] sm:$0xf]
    %v2328 = vld [vmem:[%s2318 + $0x24] sm:$0xf]
    %v2329 = vld [vmem:[%s2318 + $0x28] sm:$0xf]
    %v2330 = vld [vmem:[%s2318 + $0x2c] sm:$0xf]
    %v2331 = vld [vmem:[%s2318 + $0x30] sm:$0xf]
    %v2332 = vld [vmem:[%s2318 + $0x34] sm:$0xf]
    %v2333 = vld [vmem:[%s2318 + $0x38] sm:$0xf]
    %v2334 = vld [vmem:[%s2318 + $0x3c] sm:$0xf]
    %s2335 = scalar_lea.vmem %s29, 1
    %v2336 = vld [vmem:[%s2335] sm:$0x1]
    %v2338 = vperm.slane %v2336, 0
    %v2356 = vunpack.c.l.b16 %v2319
    %v2357 = vunpack.c.l.b16 %v2320
    %v2358 = vunpack.c.l.b16 %v2321
    %v2359 = vunpack.c.l.b16 %v2322
    %v2360 = vunpack.c.l.b16 %v2323
    %v2361 = vunpack.c.l.b16 %v2324
    %v2362 = vunpack.c.l.b16 %v2325
    %v2363 = vunpack.c.l.b16 %v2326
    %v2364 = vunpack.c.l.b16 %v2327
    %v2365 = vunpack.c.l.b16 %v2328
    %v2366 = vunpack.c.l.b16 %v2329
    %v2367 = vunpack.c.l.b16 %v2330
    %v2368 = vunpack.c.l.b16 %v2331
    %v2369 = vunpack.c.l.b16 %v2332
    %v2370 = vunpack.c.l.b16 %v2333
    %v2371 = vunpack.c.l.b16 %v2334
    %v2372 = vpack.c.b16 %v2357, %v2356
    %v2373 = vpack.c.b16 %v2359, %v2358
    %v2374 = vpack.c.b16 %v2361, %v2360
    %v2375 = vpack.c.b16 %v2363, %v2362
    %v2376 = vpack.c.b16 %v2365, %v2364
    %v2377 = vpack.c.b16 %v2367, %v2366
    %v2378 = vpack.c.b16 %v2369, %v2368
    %v2379 = vpack.c.b16 %v2371, %v2370
    %2388 = vmatpush.bf16.msra.mxu0 %v2379
    %2389 = vmatpush.bf16.msra.mxu0 %v2378
    %2390 = vmatpush.bf16.msra.mxu0 %v2377
    %2391 = vmatpush.bf16.msra.mxu0 %v2376
    %2392 = vmatpush.bf16.msra.mxu0 %v2375
    %2393 = vmatpush.bf16.msra.mxu0 %v2374
    %2394 = vmatpush.bf16.msra.mxu0 %v2373
    %2395 = vmatpush.bf16.msra.mxu0 %v2372
    %2396 = vmatmul.bf16.gmra.mxu0 %v2317
    %v2397 = vpop.f32.mrf.mxu0
    %v2398 = vadd.f32 %v2338, %v2397
    %v2399 = vpop.f32.mrf.mxu0
    %v2400 = vadd.f32 %v2338, %v2399
    %2401 = vdwg.mxu0
    %s2402 = scalar_lea.vmem %s31, 128
    %v2403 = vld [vmem:[%s2402] sm:$0xff]
    %v2404 = vld [vmem:[%s2402 + $0x8] sm:$0xff]
    %v2405 = vld [vmem:[%s2402 + $0x10] sm:$0xff]
    %v2406 = vld [vmem:[%s2402 + $0x18] sm:$0xff]
    %v2407 = vld [vmem:[%s2402 + $0x20] sm:$0xff]
    %v2408 = vld [vmem:[%s2402 + $0x28] sm:$0xff]
    %v2409 = vld [vmem:[%s2402 + $0x30] sm:$0xff]
    %v2410 = vld [vmem:[%s2402 + $0x38] sm:$0xff]
    %v2411 = vld [vmem:[%s2402 + $0x40] sm:$0xff]
    %v2412 = vld [vmem:[%s2402 + $0x48] sm:$0xff]
    %v2413 = vld [vmem:[%s2402 + $0x50] sm:$0xff]
    %v2414 = vld [vmem:[%s2402 + $0x58] sm:$0xff]
    %v2415 = vld [vmem:[%s2402 + $0x60] sm:$0xff]
    %v2416 = vld [vmem:[%s2402 + $0x68] sm:$0xff]
    %v2417 = vld [vmem:[%s2402 + $0x70] sm:$0xff]
    %v2418 = vld [vmem:[%s2402 + $0x78] sm:$0xff]
    %s2419 = scalar_lea.vmem %s33, 2
    %v2420 = vld [vmem:[%s2419] sm:$0x3]
    %v2422 = vperm.slane %v2420, 0
    %v2423 = vperm.slane %v2420, 1
    %v2442 = vunpack.c.l.b16 %v2403
    %v2443 = vunpack.c.h.b16 %v2403
    %v2444 = vunpack.c.l.b16 %v2404
    %v2445 = vunpack.c.h.b16 %v2404
    %v2446 = vunpack.c.l.b16 %v2405
    %v2447 = vunpack.c.h.b16 %v2405
    %v2448 = vunpack.c.l.b16 %v2406
    %v2449 = vunpack.c.h.b16 %v2406
    %v2450 = vunpack.c.l.b16 %v2407
    %v2451 = vunpack.c.h.b16 %v2407
    %v2452 = vunpack.c.l.b16 %v2408
    %v2453 = vunpack.c.h.b16 %v2408
    %v2454 = vunpack.c.l.b16 %v2409
    %v2455 = vunpack.c.h.b16 %v2409
    %v2456 = vunpack.c.l.b16 %v2410
    %v2457 = vunpack.c.h.b16 %v2410
    %v2458 = vunpack.c.l.b16 %v2411
    %v2459 = vunpack.c.h.b16 %v2411
    %v2460 = vunpack.c.l.b16 %v2412
    %v2461 = vunpack.c.h.b16 %v2412
    %v2462 = vunpack.c.l.b16 %v2413
    %v2463 = vunpack.c.h.b16 %v2413
    %v2464 = vunpack.c.l.b16 %v2414
    %v2465 = vunpack.c.h.b16 %v2414
    %v2466 = vunpack.c.l.b16 %v2415
    %v2467 = vunpack.c.h.b16 %v2415
    %v2468 = vunpack.c.l.b16 %v2416
    %v2469 = vunpack.c.h.b16 %v2416
    %v2470 = vunpack.c.l.b16 %v2417
    %v2471 = vunpack.c.h.b16 %v2417
    %v2472 = vunpack.c.l.b16 %v2418
    %v2473 = vunpack.c.h.b16 %v2418
    %v2474 = vpack.c.b16 %v2444, %v2442
    %v2475 = vpack.c.b16 %v2445, %v2443
    %v2476 = vpack.c.b16 %v2448, %v2446
    %v2477 = vpack.c.b16 %v2449, %v2447
    %v2478 = vpack.c.b16 %v2452, %v2450
    %v2479 = vpack.c.b16 %v2453, %v2451
    %v2480 = vpack.c.b16 %v2456, %v2454
    %v2481 = vpack.c.b16 %v2457, %v2455
    %v2482 = vpack.c.b16 %v2460, %v2458
    %v2483 = vpack.c.b16 %v2461, %v2459
    %v2484 = vpack.c.b16 %v2464, %v2462
    %v2485 = vpack.c.b16 %v2465, %v2463
    %v2486 = vpack.c.b16 %v2468, %v2466
    %v2487 = vpack.c.b16 %v2469, %v2467
    %v2488 = vpack.c.b16 %v2472, %v2470
    %v2489 = vpack.c.b16 %v2473, %v2471
    %2506 = vmatpush.bf16.msra.mxu0 %v2488
    %2507 = vmatpush.bf16.msra.mxu0 %v2486
    %2508 = vmatpush.bf16.msra.mxu0 %v2484
    %2509 = vmatpush.bf16.msra.mxu0 %v2482
    %2510 = vmatpush.bf16.msra.mxu0 %v2480
    %2511 = vmatpush.bf16.msra.mxu0 %v2478
    %2512 = vmatpush.bf16.msra.mxu0 %v2476
    %2513 = vmatpush.bf16.msra.mxu0 %v2474
    %2514 = vmatmul.bf16.gmra.mxu0 %v259
    %v2515 = vpop.f32.mrf.mxu0
    %v2516 = vadd.f32 %v2422, %v2515
    %v2517 = vpop.f32.mrf.mxu0
    %v2518 = vadd.f32 %v2422, %v2517
    %2519 = vdwg.mxu0
    %2520 = vmatpush.bf16.msra.mxu0 %v2489
    %2521 = vmatpush.bf16.msra.mxu0 %v2487
    %2522 = vmatpush.bf16.msra.mxu0 %v2485
    %2523 = vmatpush.bf16.msra.mxu0 %v2483
    %2524 = vmatpush.bf16.msra.mxu0 %v2481
    %2525 = vmatpush.bf16.msra.mxu0 %v2479
    %2526 = vmatpush.bf16.msra.mxu0 %v2477
    %2527 = vmatpush.bf16.msra.mxu0 %v2475
    %2528 = vmatmul.bf16.gmra.mxu0 %v259
    %v2529 = vpop.f32.mrf.mxu0
    %v2530 = vadd.f32 %v2423, %v2529
    %v2531 = vpop.f32.mrf.mxu0
    %v2532 = vadd.f32 %v2423, %v2531
    %2533 = vdwg.mxu0
    %v2534 = vmul.f32 %v2516, %v229
    %v2535 = vmul.f32 %v2518, %v229
    %v2536 = vmul.f32 %v2516, %v234
    %v2537 = vmul.f32 %v2518, %v234
    %v2538 = vmul.f32 %v2516, %v239
    %v2539 = vmul.f32 %v2518, %v239
    %v2540 = vmul.f32 %v2516, %v244
    %v2541 = vmul.f32 %v2518, %v244
    %v2542 = vmul.f32 %v2530, %v229
    %v2543 = vmul.f32 %v2532, %v229
    %v2544 = vmul.f32 %v2530, %v234
    %v2545 = vmul.f32 %v2532, %v234
    %v2546 = vmul.f32 %v2530, %v239
    %v2547 = vmul.f32 %v2532, %v239
    %v2548 = vmul.f32 %v2530, %v244
    %v2549 = vmul.f32 %v2532, %v244
    %2550 = vmatpush.xpose.msra.mxu0 0.0
    %2551 = vmatpush.xpose.msra.mxu0 0.0
    %2552 = vmatpush.xpose.msra.mxu0 0.0
    %2553 = vmatpush.xpose.msra.mxu0 0.0
    %2554 = vmatpush.xpose.msra.mxu0 0.0
    %2555 = vmatpush.xpose.msra.mxu0 0.0
    %2556 = vmatpush.xpose.msra.mxu0 0.0
    %2557 = vmatpush.xpose.msra.mxu0 0.0
    %2558 = vmatpush.xpose.msra.mxu0 %v2541
    %2559 = vmatpush.xpose.msra.mxu0 %v2540
    %2560 = vmatpush.xpose.msra.mxu0 %v2539
    %2561 = vmatpush.xpose.msra.mxu0 %v2538
    %2562 = vmatpush.xpose.msra.mxu0 %v2537
    %2563 = vmatpush.xpose.msra.mxu0 %v2536
    %2564 = vmatpush.xpose.msra.mxu0 %v2535
    %2565 = vmatpush.xpose.msra.mxu0 %v2534
    %2566 = vmatmul.f32.gmra.mxu0 %v2398
    %v2567 = vpop.f32.mrf.mxu0
    %v2568 = vadd.f32 0.0, %v2567
    %2569 = vmatmul.f32.gmra.mxu0 %v2400
    %v2570 = vpop.f32.mrf.mxu0
    %v2571 = vadd.f32 0.0, %v2570
    %2572 = vdwg.mxu0
    %v2573 = vmul.f32 %v2568, 0.17677669
    %v2574 = vmul.f32 %v2571, 0.17677669
    %v2575 = vadd.f32 %v2573, %v255
    %v2576 = vadd.f32 %v2574, %v256
    %v2577 = vsel %vm576, %v2575, -1e+30
    %v2578 = vsel %vm576, %v2576, -1e+30
    %v2579 = vsel %vm579, %v2577, -inf
    %2580 = vmax.xlane.f32.xlu0 %v2579
    %v2581 = vpop.xlane.xlu0 %2580
    %v2582 = vsel %vm579, %v2578, -inf
    %2583 = vmax.xlane.f32.xlu0 %v2582
    %v2584 = vpop.xlane.xlu0 %2583
    %v2585 = vsel %vm576, %v2581, 0.0
    %v2586 = vsel %vm576, %v2584, 0.0
    %v2587 = vadd.f32 %v2585, 0.0
    %v2588 = vadd.f32 %v2586, 0.0
    %v2589 = vsel %vm591, %v2575, -1e+30
    %v2590 = vsel %vm591, %v2576, -1e+30
    %v2591 = vsel %vm579, %v2589, -inf
    %2592 = vmax.xlane.f32.xlu0 %v2591
    %v2593 = vpop.xlane.xlu0 %2592
    %v2594 = vsel %vm579, %v2590, -inf
    %2595 = vmax.xlane.f32.xlu0 %v2594
    %v2596 = vpop.xlane.xlu0 %2595
    %v2597 = vsel %vm591, %v2593, 0.0
    %v2598 = vsel %vm591, %v2596, 0.0
    %v2599 = vadd.f32 %v2587, %v2597
    %v2600 = vadd.f32 %v2588, %v2598
    %v2601 = vsel %vm605, %v2575, -1e+30
    %v2602 = vsel %vm605, %v2576, -1e+30
    %v2603 = vsel %vm579, %v2601, -inf
    %2604 = vmax.xlane.f32.xlu0 %v2603
    %v2605 = vpop.xlane.xlu0 %2604
    %v2606 = vsel %vm579, %v2602, -inf
    %2607 = vmax.xlane.f32.xlu0 %v2606
    %v2608 = vpop.xlane.xlu0 %2607
    %v2609 = vsel %vm605, %v2605, 0.0
    %v2610 = vsel %vm605, %v2608, 0.0
    %v2611 = vadd.f32 %v2599, %v2609
    %v2612 = vadd.f32 %v2600, %v2610
    %v2613 = vsel %vm619, %v2575, -1e+30
    %v2614 = vsel %vm619, %v2576, -1e+30
    %v2615 = vsel %vm579, %v2613, -inf
    %2616 = vmax.xlane.f32.xlu0 %v2615
    %v2617 = vpop.xlane.xlu0 %2616
    %v2618 = vsel %vm579, %v2614, -inf
    %2619 = vmax.xlane.f32.xlu0 %v2618
    %v2620 = vpop.xlane.xlu0 %2619
    %v2621 = vsel %vm619, %v2617, 0.0
    %v2622 = vsel %vm619, %v2620, 0.0
    %v2623 = vadd.f32 %v2611, %v2621
    %v2624 = vadd.f32 %v2612, %v2622
    %v2625 = vsub.f32 %v2575, %v2623
    %v2626 = vsub.f32 %v2576, %v2624
    %v2627 = vmul.f32 %v2625, 1.442695
    %v2628 = vpow.pop %v2627
    %v2629 = vmul.f32 %v2626, 1.442695
    %v2630 = vpow.pop %v2629
    %v2631 = vsel %vm576, %v2628, 0.0
    %v2632 = vsel %vm576, %v2630, 0.0
    %v2633 = vsel %vm579, %v2631, 0.0
    %2634 = vadd.xlane.f32.xlu0 %v2633
    %v2635 = vpop.xlane.xlu0 %2634
    %v2636 = vsel %vm579, %v2632, 0.0
    %2637 = vadd.xlane.f32.xlu0 %v2636
    %v2638 = vpop.xlane.xlu0 %2637
    %v2639 = vrcp.pop %v2635
    %v2640 = vrcp.pop %v2638
    %v2641 = vsel %vm576, %v2639, 0.0
    %v2642 = vsel %vm576, %v2640, 0.0
    %v2643 = vadd.f32 %v2641, 0.0
    %v2644 = vadd.f32 %v2642, 0.0
    %v2645 = vsel %vm591, %v2628, 0.0
    %v2646 = vsel %vm591, %v2630, 0.0
    %v2647 = vsel %vm579, %v2645, 0.0
    %2648 = vadd.xlane.f32.xlu0 %v2647
    %v2649 = vpop.xlane.xlu0 %2648
    %v2650 = vsel %vm579, %v2646, 0.0
    %2651 = vadd.xlane.f32.xlu0 %v2650
    %v2652 = vpop.xlane.xlu0 %2651
    %v2653 = vrcp.pop %v2649
    %v2654 = vrcp.pop %v2652
    %v2655 = vsel %vm591, %v2653, 0.0
    %v2656 = vsel %vm591, %v2654, 0.0
    %v2657 = vadd.f32 %v2643, %v2655
    %v2658 = vadd.f32 %v2644, %v2656
    %v2659 = vsel %vm605, %v2628, 0.0
    %v2660 = vsel %vm605, %v2630, 0.0
    %v2661 = vsel %vm579, %v2659, 0.0
    %2662 = vadd.xlane.f32.xlu0 %v2661
    %v2663 = vpop.xlane.xlu0 %2662
    %v2664 = vsel %vm579, %v2660, 0.0
    %2665 = vadd.xlane.f32.xlu0 %v2664
    %v2666 = vpop.xlane.xlu0 %2665
    %v2667 = vrcp.pop %v2663
    %v2668 = vrcp.pop %v2666
    %v2669 = vsel %vm605, %v2667, 0.0
    %v2670 = vsel %vm605, %v2668, 0.0
    %v2671 = vadd.f32 %v2657, %v2669
    %v2672 = vadd.f32 %v2658, %v2670
    %v2673 = vsel %vm619, %v2628, 0.0
    %v2674 = vsel %vm619, %v2630, 0.0
    %v2675 = vsel %vm579, %v2673, 0.0
    %2676 = vadd.xlane.f32.xlu0 %v2675
    %v2677 = vpop.xlane.xlu0 %2676
    %v2678 = vsel %vm579, %v2674, 0.0
    %2679 = vadd.xlane.f32.xlu0 %v2678
    %v2680 = vpop.xlane.xlu0 %2679
    %v2681 = vrcp.pop %v2677
    %v2682 = vrcp.pop %v2680
    %v2683 = vsel %vm619, %v2681, 0.0
    %v2684 = vsel %vm619, %v2682, 0.0
    %v2685 = vadd.f32 %v2671, %v2683
    %v2686 = vadd.f32 %v2672, %v2684
    %v2687 = vmul.f32 %v2628, %v2685
    %v2688 = vmul.f32 %v2630, %v2686
    %v2690 = vsel %vm579, %v2687, 0
    %v2693 = vsel %vm579, %v2688, 0
    %2695 = vmatpush.msra.mxu0 0.0
    %2696 = vmatpush.msra.mxu0 0.0
    %2697 = vmatpush.msra.mxu0 0.0
    %2698 = vmatpush.msra.mxu0 0.0
    %2699 = vmatpush.msra.mxu0 0.0
    %2700 = vmatpush.msra.mxu0 0.0
    %2701 = vmatpush.msra.mxu0 0.0
    %2702 = vmatpush.msra.mxu0 0.0
    %2703 = vmatpush.msra.mxu0 %v2549
    %2704 = vmatpush.msra.mxu0 %v2548
    %2705 = vmatpush.msra.mxu0 %v2547
    %2706 = vmatpush.msra.mxu0 %v2546
    %2707 = vmatpush.msra.mxu0 %v2545
    %2708 = vmatpush.msra.mxu0 %v2544
    %2709 = vmatpush.msra.mxu0 %v2543
    %2710 = vmatpush.msra.mxu0 %v2542
    %2711 = vmatmul.f32.gmra.mxu0 %v2690
    %v2712 = vpop.f32.mrf.mxu0
    %v2713 = vadd.f32 0.0, %v2712
    %2714 = vmatmul.f32.gmra.mxu0 %v2693
    %v2715 = vpop.f32.mrf.mxu0
    %v2716 = vadd.f32 0.0, %v2715
    %2717 = vdwg.mxu0
    %v2718 = vpack.c.bf16 %v2716, %v2713
    %s2719 = scalar_lea.vmem [#allocation7], 64
    %v2720 = vld [vmem:[%s2719] sm:$0xf]
    %v2721 = vld [vmem:[%s2719 + $0x4] sm:$0xf]
    %v2722 = vld [vmem:[%s2719 + $0x8] sm:$0xf]
    %v2723 = vld [vmem:[%s2719 + $0xc] sm:$0xf]
    %v2724 = vld [vmem:[%s2719 + $0x10] sm:$0xf]
    %v2725 = vld [vmem:[%s2719 + $0x14] sm:$0xf]
    %v2726 = vld [vmem:[%s2719 + $0x18] sm:$0xf]
    %v2727 = vld [vmem:[%s2719 + $0x1c] sm:$0xf]
    %v2728 = vld [vmem:[%s2719 + $0x20] sm:$0xf]
    %v2729 = vld [vmem:[%s2719 + $0x24] sm:$0xf]
    %v2730 = vld [vmem:[%s2719 + $0x28] sm:$0xf]
    %v2731 = vld [vmem:[%s2719 + $0x2c] sm:$0xf]
    %v2732 = vld [vmem:[%s2719 + $0x30] sm:$0xf]
    %v2733 = vld [vmem:[%s2719 + $0x34] sm:$0xf]
    %v2734 = vld [vmem:[%s2719 + $0x38] sm:$0xf]
    %v2735 = vld [vmem:[%s2719 + $0x3c] sm:$0xf]
    %s2736 = scalar_lea.vmem %s37, 1
    %v2737 = vld [vmem:[%s2736] sm:$0x1]
    %v2739 = vperm.slane %v2737, 0
    %v2757 = vunpack.c.l.b16 %v2720
    %v2758 = vunpack.c.l.b16 %v2721
    %v2759 = vunpack.c.l.b16 %v2722
    %v2760 = vunpack.c.l.b16 %v2723
    %v2761 = vunpack.c.l.b16 %v2724
    %v2762 = vunpack.c.l.b16 %v2725
    %v2763 = vunpack.c.l.b16 %v2726
    %v2764 = vunpack.c.l.b16 %v2727
    %v2765 = vunpack.c.l.b16 %v2728
    %v2766 = vunpack.c.l.b16 %v2729
    %v2767 = vunpack.c.l.b16 %v2730
    %v2768 = vunpack.c.l.b16 %v2731
    %v2769 = vunpack.c.l.b16 %v2732
    %v2770 = vunpack.c.l.b16 %v2733
    %v2771 = vunpack.c.l.b16 %v2734
    %v2772 = vunpack.c.l.b16 %v2735
    %v2773 = vpack.c.b16 %v2758, %v2757
    %v2774 = vpack.c.b16 %v2760, %v2759
    %v2775 = vpack.c.b16 %v2762, %v2761
    %v2776 = vpack.c.b16 %v2764, %v2763
    %v2777 = vpack.c.b16 %v2766, %v2765
    %v2778 = vpack.c.b16 %v2768, %v2767
    %v2779 = vpack.c.b16 %v2770, %v2769
    %v2780 = vpack.c.b16 %v2772, %v2771
    %2789 = vmatpush.bf16.msra.mxu0 %v2780
    %2790 = vmatpush.bf16.msra.mxu0 %v2779
    %2791 = vmatpush.bf16.msra.mxu0 %v2778
    %2792 = vmatpush.bf16.msra.mxu0 %v2777
    %2793 = vmatpush.bf16.msra.mxu0 %v2776
    %2794 = vmatpush.bf16.msra.mxu0 %v2775
    %2795 = vmatpush.bf16.msra.mxu0 %v2774
    %2796 = vmatpush.bf16.msra.mxu0 %v2773
    %2797 = vmatmul.bf16.gmra.mxu0 %v2718
    %v2798 = vpop.f32.mrf.mxu0
    %v2799 = vadd.f32 %v2739, %v2798
    %v2800 = vpop.f32.mrf.mxu0
    %v2801 = vadd.f32 %v2739, %v2800
    %2802 = vdwg.mxu0
    %v2803 = vadd.f32 %v2315, %v2799
    %v2804 = vadd.f32 %v2316, %v2801
    %s2805 = scalar_lea.vmem %s39, 1
    %v2806 = vld [vmem:[%s2805] sm:$0x1]
    %s2807 = scalar_lea.vmem %s41, 1
    %v2808 = vld [vmem:[%s2807] sm:$0x1]
    %2809 = vadd.xlane.f32.xlu0 %v2803
    %v2810 = vpop.xlane.xlu0 %2809
    %2811 = vadd.xlane.f32.xlu0 %v2804
    %v2812 = vpop.xlane.xlu0 %2811
    %v2813 = vmul.f32 %v2810, %v274
    %v2814 = vmul.f32 %v2812, %v274
    %v2815 = vsub.f32 %v2803, %v2813
    %v2816 = vsub.f32 %v2804, %v2814
    %v2817 = vmul.f32 %v2815, %v2815
    %v2818 = vmul.f32 %v2816, %v2816
    %2819 = vadd.xlane.f32.xlu0 %v2817
    %v2820 = vpop.xlane.xlu0 %2819
    %2821 = vadd.xlane.f32.xlu0 %v2818
    %v2822 = vpop.xlane.xlu0 %2821
    %v2823 = vmul.f32 %v2820, %v274
    %v2824 = vmul.f32 %v2822, %v274
    %v2825 = vadd.f32 %v2823, 1e-05
    %v2826 = vadd.f32 %v2824, 1e-05
    %v2827 = vrsqrt.pop %v2825
    %v2828 = vmul.f32 %v2827, %v2825
    %v2829 = vmul.f32 %v2828, %v2827
    %v2830 = vmul.f32 0.5, %v2829
    %v2831 = vsub.f32 1.5, %v2830
    %v2832 = vmul.f32 %v2827, %v2831
    %vm2833 = vweird.f32 %v2825
    %vm2834 = vweird.f32 %v2827
    %vm2835 = vmor %vm2833, %vm2834
    %v2836 = vsel %vm2835, %v2827, %v2832
    %v2837 = vrsqrt.pop %v2826
    %v2838 = vmul.f32 %v2837, %v2826
    %v2839 = vmul.f32 %v2838, %v2837
    %v2840 = vmul.f32 0.5, %v2839
    %v2841 = vsub.f32 1.5, %v2840
    %v2842 = vmul.f32 %v2837, %v2841
    %vm2843 = vweird.f32 %v2826
    %vm2844 = vweird.f32 %v2837
    %vm2845 = vmor %vm2843, %vm2844
    %v2846 = vsel %vm2845, %v2837, %v2842
    %v2847 = vmul.f32 %v2815, %v2836
    %v2848 = vmul.f32 %v2816, %v2846
    %v2850 = vperm.slane %v2806, 0
    %v2852 = vmul.f32 %v2847, %v2850
    %v2853 = vmul.f32 %v2848, %v2850
    %v2855 = vperm.slane %v2808, 0
    %v2857 = vadd.f32 %v2852, %v2855
    %v2858 = vadd.f32 %v2853, %v2855
    %v2859 = vpack.c.bf16 %v2858, %v2857
    %s2860 = scalar_lea.vmem [#allocation8], 128
    %v2861 = vld [vmem:[%s2860] sm:$0xff]
    %v2862 = vld [vmem:[%s2860 + $0x8] sm:$0xff]
    %v2863 = vld [vmem:[%s2860 + $0x10] sm:$0xff]
    %v2864 = vld [vmem:[%s2860 + $0x18] sm:$0xff]
    %v2865 = vld [vmem:[%s2860 + $0x20] sm:$0xff]
    %v2866 = vld [vmem:[%s2860 + $0x28] sm:$0xff]
    %v2867 = vld [vmem:[%s2860 + $0x30] sm:$0xff]
    %v2868 = vld [vmem:[%s2860 + $0x38] sm:$0xff]
    %v2869 = vld [vmem:[%s2860 + $0x40] sm:$0xff]
    %v2870 = vld [vmem:[%s2860 + $0x48] sm:$0xff]
    %v2871 = vld [vmem:[%s2860 + $0x50] sm:$0xff]
    %v2872 = vld [vmem:[%s2860 + $0x58] sm:$0xff]
    %v2873 = vld [vmem:[%s2860 + $0x60] sm:$0xff]
    %v2874 = vld [vmem:[%s2860 + $0x68] sm:$0xff]
    %v2875 = vld [vmem:[%s2860 + $0x70] sm:$0xff]
    %v2876 = vld [vmem:[%s2860 + $0x78] sm:$0xff]
    %s2877 = scalar_lea.vmem %s45, 2
    %v2878 = vld [vmem:[%s2877] sm:$0x3]
    %v2880 = vperm.slane %v2878, 0
    %v2881 = vperm.slane %v2878, 1
    %v2900 = vunpack.c.l.b16 %v2861
    %v2901 = vunpack.c.h.b16 %v2861
    %v2902 = vunpack.c.l.b16 %v2862
    %v2903 = vunpack.c.h.b16 %v2862
    %v2904 = vunpack.c.l.b16 %v2863
    %v2905 = vunpack.c.h.b16 %v2863
    %v2906 = vunpack.c.l.b16 %v2864
    %v2907 = vunpack.c.h.b16 %v2864
    %v2908 = vunpack.c.l.b16 %v2865
    %v2909 = vunpack.c.h.b16 %v2865
    %v2910 = vunpack.c.l.b16 %v2866
    %v2911 = vunpack.c.h.b16 %v2866
    %v2912 = vunpack.c.l.b16 %v2867
    %v2913 = vunpack.c.h.b16 %v2867
    %v2914 = vunpack.c.l.b16 %v2868
    %v2915 = vunpack.c.h.b16 %v2868
    %v2916 = vunpack.c.l.b16 %v2869
    %v2917 = vunpack.c.h.b16 %v2869
    %v2918 = vunpack.c.l.b16 %v2870
    %v2919 = vunpack.c.h.b16 %v2870
    %v2920 = vunpack.c.l.b16 %v2871
    %v2921 = vunpack.c.h.b16 %v2871
    %v2922 = vunpack.c.l.b16 %v2872
    %v2923 = vunpack.c.h.b16 %v2872
    %v2924 = vunpack.c.l.b16 %v2873
    %v2925 = vunpack.c.h.b16 %v2873
    %v2926 = vunpack.c.l.b16 %v2874
    %v2927 = vunpack.c.h.b16 %v2874
    %v2928 = vunpack.c.l.b16 %v2875
    %v2929 = vunpack.c.h.b16 %v2875
    %v2930 = vunpack.c.l.b16 %v2876
    %v2931 = vunpack.c.h.b16 %v2876
    %v2932 = vpack.c.b16 %v2902, %v2900
    %v2933 = vpack.c.b16 %v2903, %v2901
    %v2934 = vpack.c.b16 %v2906, %v2904
    %v2935 = vpack.c.b16 %v2907, %v2905
    %v2936 = vpack.c.b16 %v2910, %v2908
    %v2937 = vpack.c.b16 %v2911, %v2909
    %v2938 = vpack.c.b16 %v2914, %v2912
    %v2939 = vpack.c.b16 %v2915, %v2913
    %v2940 = vpack.c.b16 %v2918, %v2916
    %v2941 = vpack.c.b16 %v2919, %v2917
    %v2942 = vpack.c.b16 %v2922, %v2920
    %v2943 = vpack.c.b16 %v2923, %v2921
    %v2944 = vpack.c.b16 %v2926, %v2924
    %v2945 = vpack.c.b16 %v2927, %v2925
    %v2946 = vpack.c.b16 %v2930, %v2928
    %v2947 = vpack.c.b16 %v2931, %v2929
    %2964 = vmatpush.bf16.msra.mxu0 %v2946
    %2965 = vmatpush.bf16.msra.mxu0 %v2944
    %2966 = vmatpush.bf16.msra.mxu0 %v2942
    %2967 = vmatpush.bf16.msra.mxu0 %v2940
    %2968 = vmatpush.bf16.msra.mxu0 %v2938
    %2969 = vmatpush.bf16.msra.mxu0 %v2936
    %2970 = vmatpush.bf16.msra.mxu0 %v2934
    %2971 = vmatpush.bf16.msra.mxu0 %v2932
    %2972 = vmatmul.bf16.gmra.mxu0 %v2859
    %v2973 = vpop.f32.mrf.mxu0
    %v2974 = vadd.f32 %v2880, %v2973
    %v2975 = vpop.f32.mrf.mxu0
    %v2976 = vadd.f32 %v2880, %v2975
    %2977 = vdwg.mxu0
    %2978 = vmatpush.bf16.msra.mxu0 %v2947
    %2979 = vmatpush.bf16.msra.mxu0 %v2945
    %2980 = vmatpush.bf16.msra.mxu0 %v2943
    %2981 = vmatpush.bf16.msra.mxu0 %v2941
    %2982 = vmatpush.bf16.msra.mxu0 %v2939
    %2983 = vmatpush.bf16.msra.mxu0 %v2937
    %2984 = vmatpush.bf16.msra.mxu0 %v2935
    %2985 = vmatpush.bf16.msra.mxu0 %v2933
    %2986 = vmatmul.bf16.gmra.mxu0 %v2859
    %v2987 = vpop.f32.mrf.mxu0
    %v2988 = vadd.f32 %v2881, %v2987
    %v2989 = vpop.f32.mrf.mxu0
    %v2990 = vadd.f32 %v2881, %v2989
    %2991 = vdwg.mxu0
    %v2992 = vmul.f32 %v2974, 0.5
    %v2993 = vmul.f32 %v2988, 0.5
    %v2994 = vmul.f32 %v2976, 0.5
    %v2995 = vmul.f32 %v2990, 0.5
    %v2996 = vmul.f32 %v2974, 0.044715
    %v2997 = vmul.f32 %v2988, 0.044715
    %v2998 = vmul.f32 %v2976, 0.044715
    %v2999 = vmul.f32 %v2990, 0.044715
    %v3000 = vmul.f32 %v2996, %v2974
    %v3001 = vmul.f32 %v2997, %v2988
    %v3002 = vmul.f32 %v2998, %v2976
    %v3003 = vmul.f32 %v2999, %v2990
    %v3004 = vmul.f32 %v3000, %v2974
    %v3005 = vmul.f32 %v3001, %v2988
    %v3006 = vmul.f32 %v3002, %v2976
    %v3007 = vmul.f32 %v3003, %v2990
    %v3008 = vadd.f32 %v2974, %v3004
    %v3009 = vadd.f32 %v2988, %v3005
    %v3010 = vadd.f32 %v2976, %v3006
    %v3011 = vadd.f32 %v2990, %v3007
    %v3012 = vmul.f32 %v3008, 0.7978846
    %v3013 = vmul.f32 %v3009, 0.7978846
    %v3014 = vmul.f32 %v3010, 0.7978846
    %v3015 = vmul.f32 %v3011, 0.7978846
    %v3016 = vtanh.pop %v3012
    %v3017 = vtanh.pop %v3013
    %v3018 = vtanh.pop %v3014
    %v3019 = vtanh.pop %v3015
    %v3020 = vadd.f32 %v3016, 1.0
    %v3021 = vadd.f32 %v3017, 1.0
    %v3022 = vadd.f32 %v3018, 1.0
    %v3023 = vadd.f32 %v3019, 1.0
    %v3024 = vmul.f32 %v2992, %v3020
    %v3025 = vmul.f32 %v2993, %v3021
    %v3026 = vmul.f32 %v2994, %v3022
    %v3027 = vmul.f32 %v2995, %v3023
    %v3028 = vpack.c.bf16 %v3026, %v3024
    %v3029 = vpack.c.bf16 %v3027, %v3025
    %s3030 = scalar_lea.vmem [#allocation10], 128
    %v3031 = vld [vmem:[%s3030] sm:$0xf]
    %v3032 = vld [vmem:[%s3030 + $0x4] sm:$0xf]
    %v3033 = vld [vmem:[%s3030 + $0x8] sm:$0xf]
    %v3034 = vld [vmem:[%s3030 + $0xc] sm:$0xf]
    %v3035 = vld [vmem:[%s3030 + $0x10] sm:$0xf]
    %v3036 = vld [vmem:[%s3030 + $0x14] sm:$0xf]
    %v3037 = vld [vmem:[%s3030 + $0x18] sm:$0xf]
    %v3038 = vld [vmem:[%s3030 + $0x1c] sm:$0xf]
    %v3039 = vld [vmem:[%s3030 + $0x20] sm:$0xf]
    %v3040 = vld [vmem:[%s3030 + $0x24] sm:$0xf]
    %v3041 = vld [vmem:[%s3030 + $0x28] sm:$0xf]
    %v3042 = vld [vmem:[%s3030 + $0x2c] sm:$0xf]
    %v3043 = vld [vmem:[%s3030 + $0x30] sm:$0xf]
    %v3044 = vld [vmem:[%s3030 + $0x34] sm:$0xf]
    %v3045 = vld [vmem:[%s3030 + $0x38] sm:$0xf]
    %v3046 = vld [vmem:[%s3030 + $0x3c] sm:$0xf]
    %v3047 = vld [vmem:[%s3030 + $0x40] sm:$0xf]
    %v3048 = vld [vmem:[%s3030 + $0x44] sm:$0xf]
    %v3049 = vld [vmem:[%s3030 + $0x48] sm:$0xf]
    %v3050 = vld [vmem:[%s3030 + $0x4c] sm:$0xf]
    %v3051 = vld [vmem:[%s3030 + $0x50] sm:$0xf]
    %v3052 = vld [vmem:[%s3030 + $0x54] sm:$0xf]
    %v3053 = vld [vmem:[%s3030 + $0x58] sm:$0xf]
    %v3054 = vld [vmem:[%s3030 + $0x5c] sm:$0xf]
    %v3055 = vld [vmem:[%s3030 + $0x60] sm:$0xf]
    %v3056 = vld [vmem:[%s3030 + $0x64] sm:$0xf]
    %v3057 = vld [vmem:[%s3030 + $0x68] sm:$0xf]
    %v3058 = vld [vmem:[%s3030 + $0x6c] sm:$0xf]
    %v3059 = vld [vmem:[%s3030 + $0x70] sm:$0xf]
    %v3060 = vld [vmem:[%s3030 + $0x74] sm:$0xf]
    %v3061 = vld [vmem:[%s3030 + $0x78] sm:$0xf]
    %v3062 = vld [vmem:[%s3030 + $0x7c] sm:$0xf]
    %s3063 = scalar_lea.vmem %s49, 1
    %v3064 = vld [vmem:[%s3063] sm:$0x1]
    %v3066 = vperm.slane %v3064, 0
    %v3100 = vunpack.c.l.b16 %v3031
    %v3101 = vunpack.c.l.b16 %v3032
    %v3102 = vunpack.c.l.b16 %v3033
    %v3103 = vunpack.c.l.b16 %v3034
    %v3104 = vunpack.c.l.b16 %v3035
    %v3105 = vunpack.c.l.b16 %v3036
    %v3106 = vunpack.c.l.b16 %v3037
    %v3107 = vunpack.c.l.b16 %v3038
    %v3108 = vunpack.c.l.b16 %v3039
    %v3109 = vunpack.c.l.b16 %v3040
    %v3110 = vunpack.c.l.b16 %v3041
    %v3111 = vunpack.c.l.b16 %v3042
    %v3112 = vunpack.c.l.b16 %v3043
    %v3113 = vunpack.c.l.b16 %v3044
    %v3114 = vunpack.c.l.b16 %v3045
    %v3115 = vunpack.c.l.b16 %v3046
    %v3116 = vunpack.c.l.b16 %v3047
    %v3117 = vunpack.c.l.b16 %v3048
    %v3118 = vunpack.c.l.b16 %v3049
    %v3119 = vunpack.c.l.b16 %v3050
    %v3120 = vunpack.c.l.b16 %v3051
    %v3121 = vunpack.c.l.b16 %v3052
    %v3122 = vunpack.c.l.b16 %v3053
    %v3123 = vunpack.c.l.b16 %v3054
    %v3124 = vunpack.c.l.b16 %v3055
    %v3125 = vunpack.c.l.b16 %v3056
    %v3126 = vunpack.c.l.b16 %v3057
    %v3127 = vunpack.c.l.b16 %v3058
    %v3128 = vunpack.c.l.b16 %v3059
    %v3129 = vunpack.c.l.b16 %v3060
    %v3130 = vunpack.c.l.b16 %v3061
    %v3131 = vunpack.c.l.b16 %v3062
    %v3132 = vpack.c.b16 %v3101, %v3100
    %v3133 = vpack.c.b16 %v3103, %v3102
    %v3134 = vpack.c.b16 %v3105, %v3104
    %v3135 = vpack.c.b16 %v3107, %v3106
    %v3136 = vpack.c.b16 %v3109, %v3108
    %v3137 = vpack.c.b16 %v3111, %v3110
    %v3138 = vpack.c.b16 %v3113, %v3112
    %v3139 = vpack.c.b16 %v3115, %v3114
    %v3140 = vpack.c.b16 %v3117, %v3116
    %v3141 = vpack.c.b16 %v3119, %v3118
    %v3142 = vpack.c.b16 %v3121, %v3120
    %v3143 = vpack.c.b16 %v3123, %v3122
    %v3144 = vpack.c.b16 %v3125, %v3124
    %v3145 = vpack.c.b16 %v3127, %v3126
    %v3146 = vpack.c.b16 %v3129, %v3128
    %v3147 = vpack.c.b16 %v3131, %v3130
    %3164 = vmatpush.bf16.msra.mxu0 %v3139
    %3165 = vmatpush.bf16.msra.mxu0 %v3138
    %3166 = vmatpush.bf16.msra.mxu0 %v3137
    %3167 = vmatpush.bf16.msra.mxu0 %v3136
    %3168 = vmatpush.bf16.msra.mxu0 %v3135
    %3169 = vmatpush.bf16.msra.mxu0 %v3134
    %3170 = vmatpush.bf16.msra.mxu0 %v3133
    %3171 = vmatpush.bf16.msra.mxu0 %v3132
    %3172 = vmatmul.bf16.gmra.mxu0 %v3028
    %v3173 = vpop.f32.mrf.mxu0
    %v3174 = vadd.f32 %v3066, %v3173
    %v3175 = vpop.f32.mrf.mxu0
    %v3176 = vadd.f32 %v3066, %v3175
    %3177 = vdwg.mxu0
    %3178 = vmatpush.bf16.msra.mxu0 %v3147
    %3179 = vmatpush.bf16.msra.mxu0 %v3146
    %3180 = vmatpush.bf16.msra.mxu0 %v3145
    %3181 = vmatpush.bf16.msra.mxu0 %v3144
    %3182 = vmatpush.bf16.msra.mxu0 %v3143
    %3183 = vmatpush.bf16.msra.mxu0 %v3142
    %3184 = vmatpush.bf16.msra.mxu0 %v3141
    %3185 = vmatpush.bf16.msra.mxu0 %v3140
    %3186 = vmatmul.bf16.gmra.mxu0 %v3029
    %v3187 = vpop.f32.mrf.mxu0
    %v3188 = vadd.f32 %v3174, %v3187
    %v3189 = vpop.f32.mrf.mxu0
    %v3190 = vadd.f32 %v3176, %v3189
    %3191 = vdwg.mxu0
    %v3192 = vadd.f32 %v2857, %v3188
    %v3193 = vadd.f32 %v2858, %v3190
    %s3194 = scalar_lea.vmem %s51, 1
    %v3195 = vld [vmem:[%s3194] sm:$0x1]
    %s3196 = scalar_lea.vmem %s53, 1
    %v3197 = vld [vmem:[%s3196] sm:$0x1]
    %3198 = vadd.xlane.f32.xlu0 %v3192
    %v3199 = vpop.xlane.xlu0 %3198
    %3200 = vadd.xlane.f32.xlu0 %v3193
    %v3201 = vpop.xlane.xlu0 %3200
    %v3202 = vmul.f32 %v3199, %v274
    %v3203 = vmul.f32 %v3201, %v274
    %v3204 = vsub.f32 %v3192, %v3202
    %v3205 = vsub.f32 %v3193, %v3203
    %v3206 = vmul.f32 %v3204, %v3204
    %v3207 = vmul.f32 %v3205, %v3205
    %3208 = vadd.xlane.f32.xlu0 %v3206
    %v3209 = vpop.xlane.xlu0 %3208
    %3210 = vadd.xlane.f32.xlu0 %v3207
    %v3211 = vpop.xlane.xlu0 %3210
    %v3212 = vmul.f32 %v3209, %v274
    %v3213 = vmul.f32 %v3211, %v274
    %v3214 = vadd.f32 %v3212, 1e-05
    %v3215 = vadd.f32 %v3213, 1e-05
    %v3216 = vrsqrt.pop %v3214
    %v3217 = vmul.f32 %v3216, %v3214
    %v3218 = vmul.f32 %v3217, %v3216
    %v3219 = vmul.f32 0.5, %v3218
    %v3220 = vsub.f32 1.5, %v3219
    %v3221 = vmul.f32 %v3216, %v3220
    %vm3222 = vweird.f32 %v3214
    %vm3223 = vweird.f32 %v3216
    %vm3224 = vmor %vm3222, %vm3223
    %v3225 = vsel %vm3224, %v3216, %v3221
    %v3226 = vrsqrt.pop %v3215
    %v3227 = vmul.f32 %v3226, %v3215
    %v3228 = vmul.f32 %v3227, %v3226
    %v3229 = vmul.f32 0.5, %v3228
    %v3230 = vsub.f32 1.5, %v3229
    %v3231 = vmul.f32 %v3226, %v3230
    %vm3232 = vweird.f32 %v3215
    %vm3233 = vweird.f32 %v3226
    %vm3234 = vmor %vm3232, %vm3233
    %v3235 = vsel %vm3234, %v3226, %v3231
    %v3236 = vmul.f32 %v3204, %v3225
    %v3237 = vmul.f32 %v3205, %v3235
    %v3239 = vperm.slane %v3195, 0
    %v3241 = vmul.f32 %v3236, %v3239
    %v3242 = vmul.f32 %v3237, %v3239
    %v3244 = vperm.slane %v3197, 0
    %v3246 = vadd.f32 %v3241, %v3244
    %v3247 = vadd.f32 %v3242, %v3244
    %3248 = vst [vmem:[#allocation13] sm:$0xff] %v3246
    %3249 = vst [vmem:[#allocation13 + $0x8] sm:$0xff] %v3247
    %v3250 = vpack.c.bf16 %v3247, %v3246
    %v3251 = vld [vmem:[#allocation11] sm:$0xf]
    %v3252 = vld [vmem:[#allocation11 + $0x4] sm:$0xf]
    %v3253 = vld [vmem:[#allocation11 + $0x8] sm:$0xf]
    %v3254 = vld [vmem:[#allocation11 + $0xc] sm:$0xf]
    %v3255 = vld [vmem:[#allocation11 + $0x10] sm:$0xf]
    %v3256 = vld [vmem:[#allocation11 + $0x14] sm:$0xf]
    %v3257 = vld [vmem:[#allocation11 + $0x18] sm:$0xf]
    %v3258 = vld [vmem:[#allocation11 + $0x1c] sm:$0xf]
    %v3259 = vld [vmem:[#allocation11 + $0x20] sm:$0xf]
    %v3260 = vld [vmem:[#allocation11 + $0x24] sm:$0xf]
    %v3261 = vld [vmem:[#allocation11 + $0x28] sm:$0xf]
    %v3262 = vld [vmem:[#allocation11 + $0x2c] sm:$0xf]
    %v3263 = vld [vmem:[#allocation11 + $0x30] sm:$0xf]
    %v3264 = vld [vmem:[#allocation11 + $0x34] sm:$0xf]
    %v3265 = vld [vmem:[#allocation11 + $0x38] sm:$0xf]
    %v3266 = vld [vmem:[#allocation11 + $0x3c] sm:$0xf]
    %v3267 = vld [vmem:[%s57] sm:$0x1]
    %v3269 = vperm.slane %v3267, 0
    %v3287 = vunpack.c.l.b16 %v3251
    %v3288 = vunpack.c.l.b16 %v3252
    %v3289 = vunpack.c.l.b16 %v3253
    %v3290 = vunpack.c.l.b16 %v3254
    %v3291 = vunpack.c.l.b16 %v3255
    %v3292 = vunpack.c.l.b16 %v3256
    %v3293 = vunpack.c.l.b16 %v3257
    %v3294 = vunpack.c.l.b16 %v3258
    %v3295 = vunpack.c.l.b16 %v3259
    %v3296 = vunpack.c.l.b16 %v3260
    %v3297 = vunpack.c.l.b16 %v3261
    %v3298 = vunpack.c.l.b16 %v3262
    %v3299 = vunpack.c.l.b16 %v3263
    %v3300 = vunpack.c.l.b16 %v3264
    %v3301 = vunpack.c.l.b16 %v3265
    %v3302 = vunpack.c.l.b16 %v3266
    %v3303 = vpack.c.b16 %v3288, %v3287
    %v3304 = vpack.c.b16 %v3290, %v3289
    %v3305 = vpack.c.b16 %v3292, %v3291
    %v3306 = vpack.c.b16 %v3294, %v3293
    %v3307 = vpack.c.b16 %v3296, %v3295
    %v3308 = vpack.c.b16 %v3298, %v3297
    %v3309 = vpack.c.b16 %v3300, %v3299
    %v3310 = vpack.c.b16 %v3302, %v3301
    %3319 = vmatpush.bf16.msra.mxu0 %v3310
    %3320 = vmatpush.bf16.msra.mxu0 %v3309
    %3321 = vmatpush.bf16.msra.mxu0 %v3308
    %3322 = vmatpush.bf16.msra.mxu0 %v3307
    %3323 = vmatpush.bf16.msra.mxu0 %v3306
    %3324 = vmatpush.bf16.msra.mxu0 %v3305
    %3325 = vmatpush.bf16.msra.mxu0 %v3304
    %3326 = vmatpush.bf16.msra.mxu0 %v3303
    %3327 = vmatmul.bf16.gmra.mxu0 %v3250
    %v3328 = vpop.f32.mrf.mxu0
    %v3329 = vadd.f32 %v3269, %v3328
    %v3330 = vpop.f32.mrf.mxu0
    %v3331 = vadd.f32 %v3269, %v3330
    %3332 = vdwg.mxu0
    %3333 = vst [vmem:[#allocation14] sm:$0xff] %v3329
    %3334 = vst [vmem:[#allocation14 + $0x8] sm:$0xff] %v3331
    %3335 = vmax.xlane.f32.xlu0 %v3329
    %v3336 = vpop.xlane.xlu0 %3335
    %3337 = vmax.xlane.f32.xlu0 %v3331
    %v3338 = vpop.xlane.xlu0 %3337
    %vm3339 = vcmp.ge.f32.partialorder %v3329, %v3336
    %vm3340 = vcmp.ge.f32.partialorder %v3331, %v3338
    %v3341 = vsel %vm3339, %v224, 128
    %v3342 = vsel %vm3340, %v224, 128
    %v3343 = vand.u32 %v3341, 65535
    %v3344 = vshra.s32 %v3341, 16
    %v3345 = vcvt.s32.f32 %v3343
    %v3346 = vcvt.s32.f32 %v3344
    %3347 = vmin.xlane.f32.xlu0 %v3346
    %v3348 = vpop.xlane.xlu0 %3347
    %vm3349 = vcmp.eq.f32.partialorder %v3346, %v3348
    %v3350 = vsel %vm3349, %v3345, inf
    %3351 = vmin.xlane.f32.xlu0 %v3350
    %v3352 = vpop.xlane.xlu0 %3351
    %v3353 = vcvt.f32.s32 %v3352
    %v3354 = vcvt.f32.s32 %v3348
    %v3355 = vshll.u32 %v3354, 16
    %v3356 = vadd.s32 %v3355, %v3353
    %v3357 = vand.u32 %v3342, 65535
    %v3358 = vshra.s32 %v3342, 16
    %v3359 = vcvt.s32.f32 %v3357
    %v3360 = vcvt.s32.f32 %v3358
    %3361 = vmin.xlane.f32.xlu0 %v3360
    %v3362 = vpop.xlane.xlu0 %3361
    %vm3363 = vcmp.eq.f32.partialorder %v3360, %v3362
    %v3364 = vsel %vm3363, %v3359, inf
    %3365 = vmin.xlane.f32.xlu0 %v3364
    %v3366 = vpop.xlane.xlu0 %3365
    %v3367 = vcvt.f32.s32 %v3366
    %v3368 = vcvt.f32.s32 %v3362
    %v3369 = vshll.u32 %v3368, 16
    %v3370 = vadd.s32 %v3369, %v3367
    %v3371 = vld [vmem:[%s5] sm:$0xff]
    %v3372 = vld [vmem:[%s5 + $0x8] sm:$0xff]
    %v3373 = vsub.f32 %v3329, %v3336
    %v3374 = vsub.f32 %v3331, %v3338
    %v3375 = vmul.f32 %v3373, 1.442695
    %v3376 = vpow.pop %v3375
    %v3377 = vmul.f32 %v3374, 1.442695
    %v3378 = vpow.pop %v3377
    %3379 = vadd.xlane.f32.xlu0 %v3376
    %v3380 = vpop.xlane.xlu0 %3379
    %3381 = vadd.xlane.f32.xlu0 %v3378
    %v3382 = vpop.xlane.xlu0 %3381
    %v3383 = vlog2.pop %v3380
    %v3384 = vmul.f32 %v3383, 0.6931472
    %v3385 = vlog2.pop %v3382
    %v3386 = vmul.f32 %v3385, 0.6931472
    %v3387 = vadd.f32 %v3384, %v3336
    %v3388 = vadd.f32 %v3386, %v3338
    %3389 = vset.pattern.permute.xlu0 0
    %3390 = vperm.xlu0 %3389, %v3371
    %v3391 = vpop.permute.xlu0 %3390
    %3392 = vset.pattern.permute.xlu0 0
    %3393 = vperm.xlu0 %3392, %v3372
    %v3394 = vpop.permute.xlu0 %3393
    %vm3395 = vcmp.eq.s32.totalorder %v224, %v3391
    %vm3396 = vcmp.eq.s32.totalorder %v224, %v3394
    %v3397 = vsel %vm3395, 1, 0
    %v3398 = vsel %vm3396, 1, 0
    %v3399 = vcvt.s32.f32 %v3397
    %v3400 = vcvt.s32.f32 %v3398
    %v3401 = vmul.f32 %v3399, %v3329
    %v3402 = vmul.f32 %v3400, %v3331
    %3403 = vadd.xlane.f32.xlu0 %v3401
    %v3404 = vpop.xlane.xlu0 %3403
    %3405 = vadd.xlane.f32.xlu0 %v3402
    %v3406 = vpop.xlane.xlu0 %3405
    %v3407 = vsub.f32 %v3387, %v3404
    %v3408 = vsub.f32 %v3388, %v3406
    %vm3409 = vcmp.ne.s32.totalorder %v3371, 1
    %vm3410 = vcmp.ne.s32.totalorder %v3372, 1
    %v3411 = vsel %vm3409, 1, 0
    %v3412 = vsel %vm3410, 1, 0
    %v3413 = vcvt.s32.f32 %v3411
    %v3414 = vcvt.s32.f32 %v3412
    %v3415 = vmul.f32 %v3407, %v3413
    %v3416 = vmul.f32 %v3408, %v3414
    %vm3417 = vcmask 7168
    %v3418 = vsel %vm3417, %v3415, 0.0
    %v3419 = vsel %vm3417, %v3416, 0.0
    %v3420 = vadd.f32 %v3418, %v3419
    %3421 = vadd.xlane.f32.xlu0 %v3420
    %v3422 = vpop.xlane.xlu0 %3421
    %v3423 = vrot.slane %v3422, 4
    %v3424 = vadd.f32 %v3422, %v3423
    %v3425 = vrot.slane %v3424, 2
    %v3426 = vadd.f32 %v3424, %v3425
    %v3427 = vrot.slane %v3426, 1
    %v3428 = vadd.f32 %v3426, %v3427
    %s3429 = vtos %v3428
    %v3430 = vsel %vm3417, %v3413, 0.0
    %v3431 = vsel %vm3417, %v3414, 0.0
    %v3432 = vadd.f32 %v3430, %v3431
    %3433 = vadd.xlane.f32.xlu0 %v3432
    %v3434 = vpop.xlane.xlu0 %3433
    %v3435 = vrot.slane %v3434, 4
    %v3436 = vadd.f32 %v3434, %v3435
    %v3437 = vrot.slane %v3436, 2
    %v3438 = vadd.f32 %v3436, %v3437
    %v3439 = vrot.slane %v3438, 1
    %v3440 = vadd.f32 %v3438, %v3439
    %s3441 = vtos %v3440
    %vm3442 = vcmp.eq.s32.totalorder %v3356, %v3371
    %vm3443 = vcmp.eq.s32.totalorder %v3370, %v3372
    %vm3444 = vcmp.ne.s32.totalorder %v3356, 3
    %vm3445 = vcmp.ne.s32.totalorder %v3370, 3
    %vm3446 = vmand %vm3442, %vm3444
    %vm3447 = vmand %vm3443, %vm3445
    %v3448 = vsel %vm3446, 1, 0
    %v3449 = vsel %vm3447, 1, 0
    %v3450 = vcvt.s32.f32 %v3448
    %v3451 = vcvt.s32.f32 %v3449
    %v3452 = vmul.f32 %v3450, %v3413
    %v3453 = vmul.f32 %v3451, %v3414
    %v3454 = vsel %vm3417, %v3452, 0.0
    %v3455 = vsel %vm3417, %v3453, 0.0
    %v3456 = vadd.f32 %v3454, %v3455
    %3457 = vadd.xlane.f32.xlu0 %v3456
    %v3458 = vpop.xlane.xlu0 %3457
    %v3459 = vrot.slane %v3458, 4
    %v3460 = vadd.f32 %v3458, %v3459
    %v3461 = vrot.slane %v3460, 2
    %v3462 = vadd.f32 %v3460, %v3461
    %v3463 = vrot.slane %v3462, 1
    %v3464 = vadd.f32 %v3462, %v3463
    %s3465 = vtos %v3464
    %v3466 = vsel %vm3409, %v3450, 1.0
    %v3467 = vsel %vm3410, %v3451, 1.0
    %v3468 = vsel %vm3417, %v3466, inf
    %3469 = vmin.xlane.f32.xlu0 %v3468
    %v3470 = vpop.xlane.xlu0 %3469
    %v3471 = vrot.slane %v3470, 4
    %v3472 = vmin.f32 %v3470, %v3471
    %v3473 = vrot.slane %v3472, 2
    %v3474 = vmin.f32 %v3472, %v3473
    %v3475 = vrot.slane %v3474, 1
    %v3476 = vmin.f32 %v3474, %v3475
    %s3477 = vtos %v3476
    %s3478 = sadd.f32 %s3477, 0.0
    %v3479 = vsel %vm3417, %v3467, inf
    %3480 = vmin.xlane.f32.xlu0 %v3479
    %v3481 = vpop.xlane.xlu0 %3480
    %v3482 = vrot.slane %v3481, 4
    %v3483 = vmin.f32 %v3481, %v3482
    %v3484 = vrot.slane %v3483, 2
    %v3485 = vmin.f32 %v3483, %v3484
    %v3486 = vrot.slane %v3485, 1
    %v3487 = vmin.f32 %v3485, %v3486
    %s3488 = vtos %v3487
    %s3489 = sadd.f32 %s3478, %s3488
    %vm3490 = vcmp.eq.s32.totalorder %v224, 0
    %v3491 = vstv %s3429
    %v3492 = vsel %vm3490, %v3491, 0.0
    %vm3493 = vcmp.eq.s32.totalorder %v224, 1
    %v3494 = vstv %s3441
    %v3495 = vsel %vm3493, %v3494, 0.0
    %v3496 = vadd.f32 %v3492, %v3495
    %vm3497 = vcmp.eq.s32.totalorder %v224, 2
    %v3498 = vstv %s3465
    %v3499 = vsel %vm3497, %v3498, 0.0
    %v3500 = vadd.f32 %v3496, %v3499
    %vm3501 = vcmp.eq.s32.totalorder %v224, 3
    %v3502 = vsel %vm3501, %v3494, 0.0
    %v3503 = vadd.f32 %v3500, %v3502
    %vm3504 = vcmp.eq.s32.totalorder %v224, 4
    %v3505 = vstv %s3489
    %v3506 = vsel %vm3504, %v3505, 0.0
    %v3507 = vadd.f32 %v3503, %v3506
    %vm3508 = vcmp.eq.s32.totalorder %v224, 5
    %v3509 = vsel %vm3508, 2.0, 0.0
    %v3510 = vadd.f32 %v3507, %v3509
    %3511 = vst [vmem:[%s63] sm:$0x1] %v3510
    // Predicated region
    $region142: #{bart_generator_train_forward.3} parent=1 // pred_check
      _
    $region143: #{bart_generator_train_forward.3} parent=1 // pred_check_branch
      %3513 = sbr.rel (0) target = $region145
    $region144: #{bart_generator_train_forward.3} parent=1 // pred_region
      %3515 = vsyncadd [#allocation4], 0
      %s3516 = sshll.u32 [#allocation13], 4
      %s3517 = int_to_ptr.vmem [resolvable:$true] %s3516
      %s3518 = sshll.u32 %s59, 4
      %s3519 = int_to_ptr.hbm [resolvable:$true] %s3518
      %3524 = dma.vmem_to_hbm [thread:$0]  %s3517, 256, %s3519, [#allocation4], 128, 128, 8
    $region145: #{bart_generator_train_forward.3} parent=1 // pred_fallthru
      _
    // Predicated region
    $region146: #{bart_generator_train_forward.3} parent=1 // pred_check
      _
    $region147: #{bart_generator_train_forward.3} parent=1 // pred_check_branch
      %3526 = sbr.rel (0) target = $region149
    $region148: #{bart_generator_train_forward.3} parent=1 // pred_region
      %3528 = vsyncadd [#allocation15], 0
      %s3529 = sshll.u32 [#allocation14], 4
      %s3530 = int_to_ptr.vmem [resolvable:$true] %s3529
      %s3531 = sshll.u32 %s61, 4
      %s3532 = int_to_ptr.hbm [resolvable:$true] %s3531
      %3537 = dma.vmem_to_hbm [thread:$0]  %s3530, 256, %s3532, [#allocation15], 128, 128, 8
    $region149: #{bart_generator_train_forward.3} parent=1 // pred_fallthru
      _
    // Predicated region
    $region150: #{bart_generator_train_forward.3} parent=1 // pred_check
      _
    $region151: #{bart_generator_train_forward.3} parent=1 // pred_check_branch
      %3539 = sbr.rel (0) target = $region153
    $region152: #{bart_generator_train_forward.3} parent=1 // pred_region
      _
    $region153: #{bart_generator_train_forward.3} parent=1 // pred_fallthru
      _
    // Predicated region
    $region154: #{bart_generator_train_forward.3} parent=1 // pred_check
      _
    $region155: #{bart_generator_train_forward.3} parent=1 // pred_check_branch
      %3541 = sbr.rel (0) target = $region157
    $region156: #{bart_generator_train_forward.3} parent=1 // pred_region
      %3543 = dma.done [#allocation4], 256
    $region157: #{bart_generator_train_forward.3} parent=1 // pred_fallthru
      _
    // Predicated region
    $region158: #{bart_generator_train_forward.3} parent=1 // pred_check
      _
    $region159: #{bart_generator_train_forward.3} parent=1 // pred_check_branch
      %3545 = sbr.rel (0) target = $region161
    $region160: #{bart_generator_train_forward.3} parent=1 // pred_region
      %3547 = dma.done [#allocation15], 256
    $region161: #{bart_generator_train_forward.3} parent=1 // pred_fallthru
      _
    // Predicated region
    $region162: #{bart_generator_train_forward.3} parent=1 // pred_check
      _
    $region163: #{bart_generator_train_forward.3} parent=1 // pred_check_branch
      %3549 = sbr.rel (0) target = $region165
    $region164: #{bart_generator_train_forward.3} parent=1 // pred_region
      _
    $region165: #{bart_generator_train_forward.3} parent=1 // pred_fallthru
      _
    %3550 = vsyncpa [#allocation3], 1
    %3551 = vsyncpa [#allocation6], 1
    %3552 = vsyncpa [#allocation9], 1
    %3553 = vsyncpa [#allocation12], 1
    %3554 = vsyncpa [#allocation4], 1
    %3555 = vsyncpa [#allocation15], 1

</llo_original>
